<compile_context>
chip_gen: v7x
topology: tpu7x:2x2x1
jax: 0.10.0
libtpu: 0.0.40
codegen_flags: <defaults>
</compile_context>

<pallas_src>
from functools import partial

import jax
import jax.numpy as jnp
from jax.experimental import pallas as pl
from jax.experimental.pallas import tpu as pltpu

NUM_SAMPLES = 256
NUM_CHANNELS = 9
FEATURES = NUM_CHANNELS * NUM_SAMPLES  # 2304
NUM_LAYERS = 3


def _fused_mlp_kernel(x_ref, w_ref, b_ref, o_ref, act_in, act_out, *, tn):
    """Grid = (layer, n_tile).  One full-K x (K, tn) MXU matmul per step."""
    l = pl.program_id(0)
    n = pl.program_id(1)
    last_l = pl.num_programs(0) - 1
    last_n = pl.num_programs(1) - 1

    # Load the flattened input into the resident activation buffer once.
    @pl.when((l == 0) & (n == 0))
    def _():
        act_in[...] = x_ref[...].astype(act_in.dtype)

    # bf16 MXU matmul with f32 accumulation, then bias add in f32.
    y = jnp.dot(act_in[...], w_ref[...], preferred_element_type=jnp.float32)
    y = y + b_ref[...].astype(jnp.float32)

    off = pl.multiple_of(n * tn, tn)

    # Hidden layers: ReLU, stash tile as the next layer's (bf16) input.
    @pl.when(l < last_l)
    def _():
        act_out[:, pl.ds(off, tn)] = jnp.maximum(y, 0.0).astype(act_out.dtype)

    # Final layer: linear output written into the resident f32 output block.
    @pl.when(l == last_l)
    def _():
        o_ref[:, pl.ds(off, tn)] = y.astype(o_ref.dtype)

    # Layer boundary: promote the just-finished layer output to the input slot.
    @pl.when((n == last_n) & (l < last_l))
    def _():
        act_in[...] = act_out[...]


def mlp_forward_flat(x2d, w_stack, b_stack, *, tn=1152):
    """x2d: (B, 2304) f32; w_stack: (3, 2304, 2304) bf16; b_stack: (3, 1, 2304) bf16."""
    B, K = x2d.shape
    L, Kw, N = w_stack.shape
    assert K == Kw == FEATURES and N == FEATURES and L == NUM_LAYERS
    assert N % tn == 0 and tn % 128 == 0

    flops = 2 * B * K * N * L
    bytes_accessed = (
        w_stack.size * w_stack.dtype.itemsize
        + b_stack.size * b_stack.dtype.itemsize
        + x2d.size * x2d.dtype.itemsize
        + B * N * 4
    )

    kernel = partial(_fused_mlp_kernel, tn=tn)
    return pl.pallas_call(
        kernel,
        out_shape=jax.ShapeDtypeStruct((B, N), jnp.float32),
        grid_spec=pltpu.PrefetchScalarGridSpec(
            num_scalar_prefetch=0,
            grid=(L, N // tn),                                      # layers outer, N tiles inner
            in_specs=[
                pl.BlockSpec((B, K), lambda l, n: (0, 0)),          # resident flattened input
                pl.BlockSpec((None, K, tn), lambda l, n: (l, 0, n)),  # streamed weight tile
                pl.BlockSpec((None, 1, tn), lambda l, n: (l, 0, n)),  # bias tile
            ],
            out_specs=pl.BlockSpec((B, N), lambda l, n: (0, 0)),    # resident output block
            scratch_shapes=[
                pltpu.VMEM((B, K), jnp.bfloat16),                   # act_in
                pltpu.VMEM((B, K), jnp.bfloat16),                   # act_out
            ],
        ),
        compiler_params=pltpu.CompilerParams(
            dimension_semantics=("arbitrary", "arbitrary"),         # sequential (layer dep)
            vmem_limit_bytes=32 * 1024 * 1024,
        ),
        cost_estimate=pl.CostEstimate(
            flops=flops, transcendentals=0, bytes_accessed=bytes_accessed
        ),
    )(x2d, w_stack, b_stack)


def init_params(key):
    """nn.Linear-style U(-1/sqrt(in), 1/sqrt(in)) init; weights stored as
    (in_features, out_features), stacked per layer, cast to bf16 to halve the
    HBM weight stream (kernel accumulates in f32)."""
    bound = 1.0 / jnp.sqrt(jnp.float32(FEATURES))
    ws, bs = [], []
    for _ in range(NUM_LAYERS):
        key, kw, kb = jax.random.split(key, 3)
        w = jax.random.uniform(kw, (FEATURES, FEATURES), jnp.float32,
                               minval=-bound, maxval=bound)
        b = jax.random.uniform(kb, (FEATURES,), jnp.float32,
                               minval=-bound, maxval=bound)
        ws.append(w.astype(jnp.bfloat16))
        bs.append(b.astype(jnp.bfloat16))
    return jnp.stack(ws), jnp.stack(bs).reshape(NUM_LAYERS, 1, FEATURES)


@jax.jit
def neural_network_forward(x, w_stack, b_stack):
    """x: (B, NUM_SAMPLES, NUM_CHANNELS) -> (B, NUM_SAMPLES, NUM_CHANNELS)."""
    B = x.shape[0]
    h = x.reshape(B, FEATURES)                       # flatten (matches torch.flatten)
    out = mlp_forward_flat(h, w_stack, b_stack)
    return out.reshape(B, NUM_SAMPLES, NUM_CHANNELS)  # unflatten


def _reference_forward(x, w_stack, b_stack):
    """Pure-JAX reference using the same bf16-rounded weights / activations
    (f32 accumulation) so the comparison isolates kernel correctness."""
    B = x.shape[0]
    h = x.reshape(B, FEATURES).astype(jnp.float32)
    for i in range(NUM_LAYERS):
        hb = h.astype(jnp.bfloat16).astype(jnp.float32)
        w = w_stack[i].astype(jnp.float32)
        b = b_stack[i, 0].astype(jnp.float32)
        h = jnp.dot(hb, w, precision=jax.lax.Precision.HIGHEST) + b
        if i < NUM_LAYERS - 1:
            h = jnp.maximum(h, 0.0)
    return h.reshape(B, NUM_SAMPLES, NUM_CHANNELS)


if __name__ == "__main__":
    key = jax.random.PRNGKey(0)
    kx, kp = jax.random.split(key)

    batch = 2
    x = jax.random.normal(kx, (batch, NUM_SAMPLES, NUM_CHANNELS), jnp.float32)
    w_stack, b_stack = init_params(kp)

    out = jax.block_until_ready(neural_network_forward(x, w_stack, b_stack))
    ref = _reference_forward(x, w_stack, b_stack)

    assert out.shape == (batch, NUM_SAMPLES, NUM_CHANNELS)
    max_err = float(jnp.max(jnp.abs(out - ref)))
    assert jnp.allclose(out, ref, atol=1e-2, rtol=1e-2), max_err

    print("KERNEL_OK")
</pallas_src>

<mosaic_0001>
module attributes {stable_mosaic.version = 11 : i64} {
  func.func @_fused_mlp_kernel(%arg0: i32, %arg1: i32, %arg2: memref<2x2304xf32, #tpu.memory_space<vmem>>, %arg3: memref<1x2304x1152xbf16, #tpu.memory_space<vmem>>, %arg4: memref<1x1x1152xbf16, #tpu.memory_space<vmem>>, %arg5: memref<2x2304xf32, #tpu.memory_space<vmem>>, %arg6: memref<2x2304xbf16, #tpu.memory_space<vmem>>, %arg7: memref<2x2304xbf16, #tpu.memory_space<vmem>>) attributes {dimension_semantics = [#tpu.dimension_semantics<arbitrary>, #tpu.dimension_semantics<arbitrary>], iteration_bounds = array<i64: 3, 2>, scalar_prefetch = 0 : i64, scratch_operands = 2 : i64, tpu.core_type = #tpu.core_type<tc>, window_params = [{pipeline_mode = #tpu.pipeline_mode<synchronous>, transform_indices = @transform_0, window_bounds = array<i64: 2, 2304>}, {transform_indices = @transform_1, window_bounds = array<i64: 1, 2304, 1152>}, {transform_indices = @transform_2, window_bounds = array<i64: 1, 1, 1152>}, {pipeline_mode = #tpu.pipeline_mode<synchronous>, transform_indices = @transform_3, window_bounds = array<i64: 2, 2304>}]} {
    %c0_i32 = arith.constant 0 : i32
    %0 = arith.cmpi eq, %arg0, %c0_i32 : i32
    %c0_i32_0 = arith.constant 0 : i32
    %1 = arith.cmpi eq, %arg1, %c0_i32_0 : i32
    %2 = arith.andi %0, %1 : i1
    %3 = arith.extui %2 : i1 to i32
    %c0_i32_1 = arith.constant 0 : i32
    %4 = arith.cmpi ne, %3, %c0_i32_1 : i32
    scf.if %4 {
      %c0_14 = arith.constant 0 : index
      %c0_15 = arith.constant 0 : index
      %27 = vector.load %arg2[%c0_14, %c0_15] : memref<2x2304xf32, #tpu.memory_space<vmem>>, vector<2x2304xf32>
      %28 = arith.truncf %27 : vector<2x2304xf32> to vector<2x2304xbf16>
      %c0_16 = arith.constant 0 : index
      %c0_17 = arith.constant 0 : index
      %29 = vector.load %arg6[%c0_16, %c0_17] : memref<2x2304xbf16, #tpu.memory_space<vmem>>, vector<2x2304xbf16>
      tpu.vector_store %arg6[%c0_16, %c0_17], %28 {strides = array<i32>} : memref<2x2304xbf16, #tpu.memory_space<vmem>>, vector<2x2304xbf16>,
    } else {
    }
    %c0 = arith.constant 0 : index
    %c0_2 = arith.constant 0 : index
    %5 = vector.load %arg6[%c0, %c0_2] : memref<2x2304xbf16, #tpu.memory_space<vmem>>, vector<2x2304xbf16>
    %c0_3 = arith.constant 0 : index
    %c0_4 = arith.constant 0 : index
    %c0_5 = arith.constant 0 : index
    %6 = vector.load %arg3[%c0_3, %c0_4, %c0_5] : memref<1x2304x1152xbf16, #tpu.memory_space<vmem>>, vector<1x2304x1152xbf16>
    %7 = vector.shape_cast %6 : vector<1x2304x1152xbf16> to vector<2304x1152xbf16>
    %cst = arith.constant dense<0.000000e+00> : vector<2x1152xf32>
    %8 = tpu.matmul %5, %7, %cst {dimension_numbers = #tpu.dot_dimension_numbers<[1], [0], [0], [1], [0, 0, 1, 1], [], []>} : vector<2x2304xbf16>, vector<2304x1152xbf16>, vector<2x1152xf32> -> vector<2x1152xf32>
    %c0_6 = arith.constant 0 : index
    %c0_7 = arith.constant 0 : index
    %c0_8 = arith.constant 0 : index
    %9 = vector.load %arg4[%c0_6, %c0_7, %c0_8] : memref<1x1x1152xbf16, #tpu.memory_space<vmem>>, vector<1x1x1152xbf16>
    %10 = vector.shape_cast %9 : vector<1x1x1152xbf16> to vector<1x1152xbf16>
    %11 = arith.extf %10 : vector<1x1152xbf16> to vector<1x1152xf32>
    %12 = vector.broadcast %11 : vector<1x1152xf32> to vector<2x1152xf32>
    %13 = arith.addf %8, %12 : vector<2x1152xf32>
    %c1152_i32 = arith.constant 1152 : i32
    %14 = arith.muli %arg1, %c1152_i32 : i32
    %15 = tpu.assume_multiple %14, 1152 : i32
    %c2_i32 = arith.constant 2 : i32
    %16 = arith.cmpi slt, %arg0, %c2_i32 : i32
    %17 = arith.extui %16 : i1 to i32
    %c0_i32_9 = arith.constant 0 : i32
    %18 = arith.cmpi ne, %17, %c0_i32_9 : i32
    scf.if %18 {
      %cst_14 = arith.constant 0.000000e+00 : f32
      %27 = vector.broadcast %cst_14 : f32 to vector<2x1152xf32>
      %28 = arith.maximumf %13, %27 : vector<2x1152xf32>
      %29 = arith.truncf %28 : vector<2x1152xf32> to vector<2x1152xbf16>
      %c0_15 = arith.constant 0 : index
      %30 = arith.index_cast %15 : i32 to index
      %31 = vector.load %arg7[%c0_15, %30] : memref<2x2304xbf16, #tpu.memory_space<vmem>>, vector<2x1152xbf16>
      tpu.vector_store %arg7[%c0_15, %30], %29 {strides = array<i32>} : memref<2x2304xbf16, #tpu.memory_space<vmem>>, vector<2x1152xbf16>,
    } else {
    }
    %c2_i32_10 = arith.constant 2 : i32
    %19 = arith.cmpi eq, %arg0, %c2_i32_10 : i32
    %20 = arith.extui %19 : i1 to i32
    %c0_i32_11 = arith.constant 0 : i32
    %21 = arith.cmpi ne, %20, %c0_i32_11 : i32
    scf.if %21 {
      %c0_14 = arith.constant 0 : index
      %27 = arith.index_cast %15 : i32 to index
      %28 = vector.load %arg5[%c0_14, %27] : memref<2x2304xf32, #tpu.memory_space<vmem>>, vector<2x1152xf32>
      tpu.vector_store %arg5[%c0_14, %27], %13 {strides = array<i32>} : memref<2x2304xf32, #tpu.memory_space<vmem>>, vector<2x1152xf32>,
    } else {
    }
    %c1_i32 = arith.constant 1 : i32
    %22 = arith.cmpi eq, %arg1, %c1_i32 : i32
    %c2_i32_12 = arith.constant 2 : i32
    %23 = arith.cmpi slt, %arg0, %c2_i32_12 : i32
    %24 = arith.andi %22, %23 : i1
    %25 = arith.extui %24 : i1 to i32
    %c0_i32_13 = arith.constant 0 : i32
    %26 = arith.cmpi ne, %25, %c0_i32_13 : i32
    scf.if %26 {
      %c0_14 = arith.constant 0 : index
      %c0_15 = arith.constant 0 : index
      %27 = vector.load %arg7[%c0_14, %c0_15] : memref<2x2304xbf16, #tpu.memory_space<vmem>>, vector<2x2304xbf16>
      %c0_16 = arith.constant 0 : index
      %c0_17 = arith.constant 0 : index
      %28 = vector.load %arg6[%c0_16, %c0_17] : memref<2x2304xbf16, #tpu.memory_space<vmem>>, vector<2x2304xbf16>
      tpu.vector_store %arg6[%c0_16, %c0_17], %27 {strides = array<i32>} : memref<2x2304xbf16, #tpu.memory_space<vmem>>, vector<2x2304xbf16>,
    } else {
    }
    return
  }
  func.func @transform_0(%arg0: i32, %arg1: i32) -> (i32, i32) {
    %c0_i32 = arith.constant 0 : i32
    %c0_i32_0 = arith.constant 0 : i32
    %c0_i32_1 = arith.constant 0 : i32
    return %c0_i32, %c0_i32_0 : i32, i32
  }
  func.func @transform_1(%arg0: i32, %arg1: i32) -> (i32, i32, i32) {
    %c0_i32 = arith.constant 0 : i32
    %c0_i32_0 = arith.constant 0 : i32
    return %arg0, %c0_i32, %arg1 : i32, i32, i32
  }
  func.func @transform_2(%arg0: i32, %arg1: i32) -> (i32, i32, i32) {
    %c0_i32 = arith.constant 0 : i32
    %c0_i32_0 = arith.constant 0 : i32
    return %arg0, %c0_i32, %arg1 : i32, i32, i32
  }
  func.func @transform_3(%arg0: i32, %arg1: i32) -> (i32, i32) {
    %c0_i32 = arith.constant 0 : i32
    %c0_i32_0 = arith.constant 0 : i32
    %c0_i32_1 = arith.constant 0 : i32
    return %c0_i32, %c0_i32_0 : i32, i32
  }
}

</mosaic_0001>

<llo_original>
// kernel: neural_network_forward.1
$region0: #{neural_network_forward.1}
  #allocation0 [shape = 'u32[]', space=smem, size = 0x4, offset = 0x4, fixed_abs, tag = 'smem constant byte address 0x4 - core index']
  #allocation1 [shape = 'u32[144,128]{1,0:T(1,128)}', space=vmem, size = 0x12000, scoped, tag = 'internal scratch']
  #allocation2 [shape = 'bf16[2,2304]{1,0:T(2,128)(2,1)}', space=vmem, size = 0x2400, scoped, tag = 'scratch operand']
  #allocation3 [shape = 'bf16[2,2304]{1,0:T(2,128)(2,1)}', space=vmem, size = 0x2400, scoped, tag = 'scratch operand']
  %s0 = inlined_call_operand.vmem [shape: f32[2,2304], index: 0, kind: input, shape index: {}]
  %s1 = inlined_call_operand.hbm [shape: bf16[3,2304,2304], index: 1, kind: input, shape index: {}]
  %s2 = inlined_call_operand.vmem [shape: bf16[3,1,2304], index: 2, kind: input, shape index: {}]
  %s3 = inlined_call_operand.vmem [shape: f32[2,2304], index: 3, kind: output, shape index: {}]
  %s4 = sld [smem:[#allocation0]]
  $region65: #{neural_network_forward.1} parent=0
    _
  %s6 = ssub.s32 1, %s4
  %s7 = scalar_select 0, %s6, %s4
  $region1: #{neural_network_forward.1} parent=0
    #allocation4 [shape = 'u8[10616832]{0}', space=vmem, size = 0xa20000, scoped, tag = 'input window, operand 1']
    #allocation5 [shape = 's32[2]{0}', space=sflag, size = 0x8, scoped, tag = 'scoped memory for neural_network_forward.1']
    %8 = vsyncpa [#allocation5], 0
    %s9 = scalar_lea.sflag [#allocation5], 1
    %10 = vsyncpa %s9, 0
    loop: start=0, step=1, limit=8
    $region2: #{neural_network_forward.1} parent=1 // loop_pre_header
      _
    $region3: #{neural_network_forward.1} parent=1 // loop_header
      %s12 = sphi 0, %s16
      %p13 = scmp.ge.s32.totalorder %s12, 8
      %s19 = sphi 0, %s31
      %s20 = sphi 0, %s27
      %s21 = sphi 0, %s19
      %s22 = sphi 0, %s20
      %s23 = sphi 0, %s21
      %s24 = sphi 0, %s22
      %s32 = sphi 0, %s32
      %s34 = sphi 0, %s32
      %s35 = sphi 0, %s34
      %s49 = sphi 0, %s35
      %s57 = sphi 0, %s59
      %s60 = sphi 0, %s57
      %s61 = sphi 0, %s60
      %s77 = sphi 0, %s61
      %s85 = sphi 0, %s87
      %s88 = sphi 0, %s85
      %s89 = sphi 0, %s88
      %s105 = sphi 0, %s89
      %s109 = sphi 0, %s109
      %s111 = sphi 0, %s109
      %s112 = sphi 0, %s111
      %s126 = sphi 0, %s112
    $region4: #{neural_network_forward.1} parent=1 // loop_header_branch
      %15 = sbr.rel (%p13) target = $region8
    $region5: #{neural_network_forward.1} parent=1 // loop_body
      %s17 = ssub.s32 %s12, 1
      %s18 = ssub.s32 %s12, 2
      %s25 = sadd.s32 1, %s20
      %p26 = scmp.ge.s32.totalorder %s25, 2
      %s27 = scalar_select %p26, 0, %s25
      %s28 = sadd.s32 1, %s19
      %s29 = scalar_select %p26, %s28, %s19
      %p30 = scmp.ge.s32.totalorder %s29, 3
      %s31 = scalar_select %p30, 0, %s29
      %s33 = sadd.s32 %s32, 1
      %p36 = scmp.eq.s32.totalorder %s12, 5
      %p37 = scmp.ne.s32.totalorder %s32, %s34
      %p38 = scmp.eq.s32.totalorder %s12, 0
      %p39 = por %p37, %p38
      %p40 = scmp.ne.s32.totalorder %s32, %s34
      %p41 = scmp.eq.s32.totalorder %s17, 5
      %p42 = por %p40, %p41
      %p43 = scmp.ne.s32.totalorder %s34, %s35
      %p44 = scmp.eq.s32.totalorder %s17, 0
      %p45 = por %p43, %p44
      %p46 = scmp.ne.s32.totalorder %s34, %s35
      %p47 = scmp.eq.s32.totalorder %s18, 5
      %p48 = por %p46, %p47
      %p50 = scmp.ne.s32.totalorder %s35, %s49
      %p51 = scmp.eq.s32.totalorder %s18, 0
      %p52 = por %p50, %p51
      %s53 = ssub.s32 %s19, %s31
      %s54 = ssub.s32 %s20, %s27
      %s55 = sor.u32 %s53, %s54
      %p56 = scmp.eq.s32.totalorder %s55, 0
      %s58 = sadd.s32 %s57, 1
      %s59 = scalar_select %p56, %s57, %s58
      %p62 = pneg %p56
      %p63 = scmp.eq.s32.totalorder %s12, 5
      %p64 = por %p62, %p63
      %p65 = scmp.ne.s32.totalorder %s57, %s60
      %p66 = scmp.eq.s32.totalorder %s12, 0
      %p67 = por %p65, %p66
      %p68 = scmp.ne.s32.totalorder %s57, %s60
      %p69 = scmp.eq.s32.totalorder %s17, 5
      %p70 = por %p68, %p69
      %p71 = scmp.ne.s32.totalorder %s60, %s61
      %p72 = scmp.eq.s32.totalorder %s17, 0
      %p73 = por %p71, %p72
      %p74 = scmp.ne.s32.totalorder %s60, %s61
      %p75 = scmp.eq.s32.totalorder %s18, 5
      %p76 = por %p74, %p75
      %p78 = scmp.ne.s32.totalorder %s61, %s77
      %p79 = scmp.eq.s32.totalorder %s18, 0
      %p80 = por %p78, %p79
      %s81 = ssub.s32 %s19, %s31
      %s82 = ssub.s32 %s20, %s27
      %s83 = sor.u32 %s81, %s82
      %p84 = scmp.eq.s32.totalorder %s83, 0
      %s86 = sadd.s32 %s85, 1
      %s87 = scalar_select %p84, %s85, %s86
      %p90 = pneg %p84
      %p91 = scmp.eq.s32.totalorder %s12, 5
      %p92 = por %p90, %p91
      %p93 = scmp.ne.s32.totalorder %s85, %s88
      %p94 = scmp.eq.s32.totalorder %s12, 0
      %p95 = por %p93, %p94
      %p96 = scmp.ne.s32.totalorder %s85, %s88
      %p97 = scmp.eq.s32.totalorder %s17, 5
      %p98 = por %p96, %p97
      %p99 = scmp.ne.s32.totalorder %s88, %s89
      %p100 = scmp.eq.s32.totalorder %s17, 0
      %p101 = por %p99, %p100
      %p102 = scmp.ne.s32.totalorder %s88, %s89
      %p103 = scmp.eq.s32.totalorder %s18, 5
      %p104 = por %p102, %p103
      %p106 = scmp.ne.s32.totalorder %s89, %s105
      %p107 = scmp.eq.s32.totalorder %s18, 0
      %p108 = por %p106, %p107
      %s110 = sadd.s32 %s109, 1
      %p113 = scmp.eq.s32.totalorder %s12, 5
      %p114 = scmp.ne.s32.totalorder %s109, %s111
      %p115 = scmp.eq.s32.totalorder %s12, 0
      %p116 = por %p114, %p115
      %p117 = scmp.ne.s32.totalorder %s109, %s111
      %p118 = scmp.eq.s32.totalorder %s17, 5
      %p119 = por %p117, %p118
      %p120 = scmp.ne.s32.totalorder %s111, %s112
      %p121 = scmp.eq.s32.totalorder %s17, 0
      %p122 = por %p120, %p121
      %p123 = scmp.ne.s32.totalorder %s111, %s112
      %p124 = scmp.eq.s32.totalorder %s18, 5
      %p125 = por %p123, %p124
      %p127 = scmp.ne.s32.totalorder %s112, %s126
      %p128 = scmp.eq.s32.totalorder %s18, 0
      %p129 = por %p127, %p128
      %p130 = scmp.le.s32.totalorder 1, %s12
      %p131 = scmp.lt.s32.totalorder %s12, 7
      %p132 = pnand %p130, %p131
      %p133 = pneg %p132
      // Predicated region
      $region9: #{neural_network_forward.1} parent=5 // pred_check
        _
      $region10: #{neural_network_forward.1} parent=5 // pred_check_branch
        %135 = sbr.rel (%p132) target = $region12
      $region11: #{neural_network_forward.1} parent=5 // pred_region
        %s136 = ssub.s32 %s12, 1
        // Predicated region
        $region13: #{neural_network_forward.1} parent=11 // pred_check
          %p137 = pneg %p45
        $region14: #{neural_network_forward.1} parent=11 // pred_check_branch
          %139 = sbr.rel (%p137) target = $region16
        $region15: #{neural_network_forward.1} parent=11 // pred_region
          _
        $region16: #{neural_network_forward.1} parent=11 // pred_fallthru
          _
      $region12: #{neural_network_forward.1} parent=5 // pred_fallthru
        _
      %p140 = scmp.lt.s32.totalorder %s12, 6
      // Predicated region
      $region17: #{neural_network_forward.1} parent=5 // pred_check
        %p141 = pneg %p140
      $region18: #{neural_network_forward.1} parent=5 // pred_check_branch
        %143 = sbr.rel (%p141) target = $region20
      $region19: #{neural_network_forward.1} parent=5 // pred_region
        // Predicated region
        $region21: #{neural_network_forward.1} parent=19 // pred_check
          %p144 = pneg %p67
        $region22: #{neural_network_forward.1} parent=19 // pred_check_branch
          %146 = sbr.rel (%p144) target = $region24
        $region23: #{neural_network_forward.1} parent=19 // pred_region
          %s147 = sand.u32 %s57, 1
          %s148 = scalar_lea.sflag [#allocation5], %s147
          %s149 = sand.u32 %s57, 1
          %s150 = smul.addr %s149, 10368
          %s151 = scalar_lea.vmem [#allocation4], %s150
          %s152 = smul.u32 9, %s20
          %s154 = ssub.s32 165888, 165888
          %155 = vsyncadd %s148, %s154
          %s156 = smul.addr %s19, 5184
          %s157 = sadd.s32 %s152, %s156
          %s158 = smul.addr %s157, 64
          %s159 = scalar_lea.hbm %s1, %s158
          %s160 = sshll.u32 %s151, 4
          %s161 = int_to_ptr.vmem [resolvable:$true] %s160
          %166 = dma.hbm_to_vmem [thread:$0]  %s159, 165888, %s161, %s148, 1152, 576, 36
        $region24: #{neural_network_forward.1} parent=19 // pred_fallthru
          _
        // Predicated region
        $region25: #{neural_network_forward.1} parent=19 // pred_check
          %p167 = pneg %p95
        $region26: #{neural_network_forward.1} parent=19 // pred_check_branch
          %169 = sbr.rel (%p167) target = $region28
        $region27: #{neural_network_forward.1} parent=19 // pred_region
          %s170 = smul.u32 9, %s20
          %p171 = scmp.lt.s32.totalorder %s19, 2
          %s172 = scalar_select %p171, %s19, 2
          %p173 = scmp.lt.s32.totalorder %s170, 17
          %s174 = scalar_select %p173, %s170, 17
          %s175 = smul.addr %s172, 18
          %s176 = sadd.s32 %s174, %s175
          %s177 = scalar_lea.vmem %s2, %s176
          %s178 = smul.u32 9, %s20
        $region28: #{neural_network_forward.1} parent=19 // pred_fallthru
          _
      $region20: #{neural_network_forward.1} parent=5 // pred_fallthru
        _
      %p179 = scmp.le.s32.totalorder 1, %s12
      %p180 = scmp.lt.s32.totalorder %s12, 7
      %p181 = pnand %p179, %p180
      %p182 = pneg %p181
      // Predicated region
      $region29: #{neural_network_forward.1} parent=5 // pred_check
        _
      $region30: #{neural_network_forward.1} parent=5 // pred_check_branch
        %184 = sbr.rel (%p181) target = $region32
      $region31: #{neural_network_forward.1} parent=5 // pred_region
        %s185 = ssub.s32 %s12, 1
        %s186 = sand.u32 %s60, 1
        %s187 = scalar_lea.sflag [#allocation5], %s186
        %s188 = sand.u32 %s60, 1
        %s189 = smul.addr %s188, 10368
        %s190 = scalar_lea.vmem [#allocation4], %s189
        // Predicated region
        $region33: #{neural_network_forward.1} parent=31 // pred_check
          %p191 = pneg %p73
        $region34: #{neural_network_forward.1} parent=31 // pred_check_branch
          %193 = sbr.rel (%p191) target = $region36
        $region35: #{neural_network_forward.1} parent=31 // pred_region
          %194 = dma.done %s187, 165888
        $region36: #{neural_network_forward.1} parent=31 // pred_fallthru
          _
        %p195 = pneg %p45
        %p196 = pneg %p42
        %s197 = sand.u32 %s60, 1
        %s198 = scalar_lea.sflag [#allocation5], %s197
        %s199 = sand.u32 %s60, 1
        %s200 = smul.addr %s199, 10368
        %s201 = scalar_lea.vmem [#allocation4], %s200
        %p202 = pneg %p73
        %p203 = pneg %p70
        %s204 = smul.u32 9, %s22
        %p205 = scmp.lt.s32.totalorder %s21, 2
        %s206 = scalar_select %p205, %s21, 2
        %p207 = scmp.lt.s32.totalorder %s204, 17
        %s208 = scalar_select %p207, %s204, 17
        %s209 = smul.addr %s206, 18
        %s210 = sadd.s32 %s208, %s209
        %s211 = scalar_lea.vmem %s2, %s210
        %p212 = pneg %p101
        %p213 = pneg %p98
        %p214 = pneg %p122
        %p215 = pneg %p119
        %s216 = smul.u32 9, %s22
        %s217 = smul.u32 9, %s22
        %p218 = scmp.lt.s32.totalorder %s21, 2
        %s219 = scalar_select %p218, %s21, 2
        %p220 = scmp.lt.s32.totalorder %s217, 17
        %s221 = scalar_select %p220, %s217, 17
        %s222 = smul.addr %s219, 18
        %s223 = sadd.s32 %s221, %s222
        %s224 = scalar_lea.vmem %s2, %s223
        %s225 = smul.u32 9, %s22
        %p227 = scmp.eq.s32.totalorder %s21, 0
        %p228 = scmp.eq.s32.totalorder %s22, 0
        %p229 = pnand %p227, %p228
        %p230 = pneg %p229
        // Predicated region
        $region37: #{neural_network_forward.1} parent=31 // pred_check
          _
        $region38: #{neural_network_forward.1} parent=31 // pred_check_branch
          %232 = sbr.rel (%p229) target = $region40
        $region39: #{neural_network_forward.1} parent=31 // pred_region
          %v233 = vld [vmem:[%s0] sm:$0xff]
          %v234 = vld [vmem:[%s0 + $0x8] sm:$0xff]
          %v235 = vld [vmem:[%s0 + $0x10] sm:$0xff]
          %v236 = vld [vmem:[%s0 + $0x18] sm:$0xff]
          %v237 = vld [vmem:[%s0 + $0x20] sm:$0xf]
          %v243 = vcombine.high %v233, %v233
          %v245 = vunpack.c.l.s4 1983009808
          %v246 = vunpack.c.0.s8 %v245
          %v247 = vlaneseq
          %v248 = vshrl.u32 %v247, 7
          %v249 = vsub.s32 %v246, %v248
          %v250 = vrot.slane %v233, %v249
          %v252 = vunpack.c.l.s4 1983009808
          %v253 = vunpack.c.0.s8 %v252
          %v254 = vlaneseq
          %v255 = vshrl.u32 %v254, 7
          %v256 = vsub.s32 %v253, %v255
          %v257 = vrot.slane %v243, %v256
          %v258 = vcombine.high %v250, %v250
          %v259 = vcombine.high %v257, %v257
          %v260 = vcombine.high %v234, %v234
          %v262 = vunpack.c.l.s4 1983009808
          %v263 = vunpack.c.0.s8 %v262
          %v264 = vlaneseq
          %v265 = vshrl.u32 %v264, 7
          %v266 = vsub.s32 %v263, %v265
          %v267 = vrot.slane %v234, %v266
          %v269 = vunpack.c.l.s4 1983009808
          %v270 = vunpack.c.0.s8 %v269
          %v271 = vlaneseq
          %v272 = vshrl.u32 %v271, 7
          %v273 = vsub.s32 %v270, %v272
          %v274 = vrot.slane %v260, %v273
          %v275 = vcombine.high %v267, %v267
          %v276 = vcombine.high %v274, %v274
          %v277 = vcombine.high %v235, %v235
          %v279 = vunpack.c.l.s4 1983009808
          %v280 = vunpack.c.0.s8 %v279
          %v281 = vlaneseq
          %v282 = vshrl.u32 %v281, 7
          %v283 = vsub.s32 %v280, %v282
          %v284 = vrot.slane %v235, %v283
          %v286 = vunpack.c.l.s4 1983009808
          %v287 = vunpack.c.0.s8 %v286
          %v288 = vlaneseq
          %v289 = vshrl.u32 %v288, 7
          %v290 = vsub.s32 %v287, %v289
          %v291 = vrot.slane %v277, %v290
          %v292 = vcombine.high %v284, %v284
          %v293 = vcombine.high %v291, %v291
          %v294 = vcombine.high %v236, %v236
          %v296 = vunpack.c.l.s4 1983009808
          %v297 = vunpack.c.0.s8 %v296
          %v298 = vlaneseq
          %v299 = vshrl.u32 %v298, 7
          %v300 = vsub.s32 %v297, %v299
          %v301 = vrot.slane %v236, %v300
          %v303 = vunpack.c.l.s4 1983009808
          %v304 = vunpack.c.0.s8 %v303
          %v305 = vlaneseq
          %v306 = vshrl.u32 %v305, 7
          %v307 = vsub.s32 %v304, %v306
          %v308 = vrot.slane %v294, %v307
          %v309 = vcombine.high %v301, %v301
          %v310 = vcombine.high %v308, %v308
          %v312 = vunpack.c.l.s4 1983009808
          %v313 = vunpack.c.0.s8 %v312
          %v314 = vlaneseq
          %v315 = vshrl.u32 %v314, 7
          %v316 = vsub.s32 %v313, %v315
          %v317 = vrot.slane %v237, %v316
          %v318 = vcombine.high %v317, %v317
          %v337 = vpack.c.bf16 %v250, %v250
          %v338 = vpack.c.bf16 %v258, %v258
          %v339 = vpack.c.bf16 %v257, %v257
          %v340 = vpack.c.bf16 %v259, %v259
          %v341 = vpack.c.bf16 %v267, %v267
          %v342 = vpack.c.bf16 %v275, %v275
          %v343 = vpack.c.bf16 %v274, %v274
          %v344 = vpack.c.bf16 %v276, %v276
          %v345 = vpack.c.bf16 %v284, %v284
          %v346 = vpack.c.bf16 %v292, %v292
          %v347 = vpack.c.bf16 %v291, %v291
          %v348 = vpack.c.bf16 %v293, %v293
          %v349 = vpack.c.bf16 %v301, %v301
          %v350 = vpack.c.bf16 %v309, %v309
          %v351 = vpack.c.bf16 %v308, %v308
          %v352 = vpack.c.bf16 %v310, %v310
          %v353 = vpack.c.bf16 %v317, %v317
          %v354 = vpack.c.bf16 %v318, %v318
          %v373 = vcombine.low %v337, %v338
          %v374 = vcombine.low %v339, %v340
          %v375 = vcombine.low %v341, %v342
          %v376 = vcombine.low %v343, %v344
          %v378 = vunpack.c.l.s4 1966171168
          %v379 = vunpack.c.0.s8 %v378
          %v380 = vlaneseq
          %v381 = vshrl.u32 %v380, 7
          %v382 = vsub.s32 %v379, %v381
          %v383 = vrot.slane %v373, %v382
          %v385 = vunpack.c.l.s4 1966171168
          %v386 = vunpack.c.0.s8 %v385
          %v387 = vlaneseq
          %v388 = vshrl.u32 %v387, 7
          %v389 = vsub.s32 %v386, %v388
          %v390 = vrot.slane %v374, %v389
          %v392 = vunpack.c.l.s4 1966171168
          %v393 = vunpack.c.0.s8 %v392
          %v394 = vlaneseq
          %v395 = vshrl.u32 %v394, 7
          %v396 = vsub.s32 %v393, %v395
          %v397 = vrot.slane %v375, %v396
          %v399 = vunpack.c.l.s4 1966171168
          %v400 = vunpack.c.0.s8 %v399
          %v401 = vlaneseq
          %v402 = vshrl.u32 %v401, 7
          %v403 = vsub.s32 %v400, %v402
          %v404 = vrot.slane %v376, %v403
          %v405 = vcombine.low %v383, %v390
          %v406 = vcombine.low %v397, %v404
          %v408 = vunpack.c.l.s4 1966171168
          %v409 = vunpack.c.0.s8 %v408
          %v410 = vlaneseq
          %v411 = vshrl.u32 %v410, 7
          %v412 = vsub.s32 %v409, %v411
          %v413 = vrot.slane %v405, %v412
          %v415 = vunpack.c.l.s4 1966171168
          %v416 = vunpack.c.0.s8 %v415
          %v417 = vlaneseq
          %v418 = vshrl.u32 %v417, 7
          %v419 = vsub.s32 %v416, %v418
          %v420 = vrot.slane %v406, %v419
          %v421 = vcombine.low %v413, %v420
          %v422 = vcombine.low %v345, %v346
          %v423 = vcombine.low %v347, %v348
          %v424 = vcombine.low %v349, %v350
          %v425 = vcombine.low %v351, %v352
          %v427 = vunpack.c.l.s4 1966171168
          %v428 = vunpack.c.0.s8 %v427
          %v429 = vlaneseq
          %v430 = vshrl.u32 %v429, 7
          %v431 = vsub.s32 %v428, %v430
          %v432 = vrot.slane %v422, %v431
          %v434 = vunpack.c.l.s4 1966171168
          %v435 = vunpack.c.0.s8 %v434
          %v436 = vlaneseq
          %v437 = vshrl.u32 %v436, 7
          %v438 = vsub.s32 %v435, %v437
          %v439 = vrot.slane %v423, %v438
          %v441 = vunpack.c.l.s4 1966171168
          %v442 = vunpack.c.0.s8 %v441
          %v443 = vlaneseq
          %v444 = vshrl.u32 %v443, 7
          %v445 = vsub.s32 %v442, %v444
          %v446 = vrot.slane %v424, %v445
          %v448 = vunpack.c.l.s4 1966171168
          %v449 = vunpack.c.0.s8 %v448
          %v450 = vlaneseq
          %v451 = vshrl.u32 %v450, 7
          %v452 = vsub.s32 %v449, %v451
          %v453 = vrot.slane %v425, %v452
          %v454 = vcombine.low %v432, %v439
          %v455 = vcombine.low %v446, %v453
          %v457 = vunpack.c.l.s4 1966171168
          %v458 = vunpack.c.0.s8 %v457
          %v459 = vlaneseq
          %v460 = vshrl.u32 %v459, 7
          %v461 = vsub.s32 %v458, %v460
          %v462 = vrot.slane %v454, %v461
          %v464 = vunpack.c.l.s4 1966171168
          %v465 = vunpack.c.0.s8 %v464
          %v466 = vlaneseq
          %v467 = vshrl.u32 %v466, 7
          %v468 = vsub.s32 %v465, %v467
          %v469 = vrot.slane %v455, %v468
          %v470 = vcombine.low %v462, %v469
          %v471 = vcombine.low %v353, %v354
          %v473 = vunpack.c.l.s4 1966171168
          %v474 = vunpack.c.0.s8 %v473
          %v475 = vlaneseq
          %v476 = vshrl.u32 %v475, 7
          %v477 = vsub.s32 %v474, %v476
          %v478 = vrot.slane %v471, %v477
          %v480 = vunpack.c.l.s4 1966171168
          %v481 = vunpack.c.0.s8 %v480
          %v482 = vlaneseq
          %v483 = vshrl.u32 %v482, 7
          %v484 = vsub.s32 %v481, %v483
          %v485 = vrot.slane %v478, %v484
          %489 = vst [vmem:[#allocation2] sm:$0xff] %v421
          %490 = vst [vmem:[#allocation2 + $0x8] sm:$0xff] %v470
          %491 = vst [vmem:[#allocation2 + $0x10] sm:$0x3] %v485
        $region40: #{neural_network_forward.1} parent=31 // pred_fallthru
          _
        %v492 = vld [vmem:[#allocation2] sm:$0xff]
        %v493 = vld [vmem:[#allocation2 + $0x8] sm:$0xff]
        %v494 = vld [vmem:[#allocation2 + $0x10] sm:$0x3]
        %v495 = vld [vmem:[%s190] sm:$0xff]
        %v496 = vld [vmem:[%s190 + $0x8] sm:$0xff]
        %v497 = vld [vmem:[%s190 + $0x10] sm:$0xff]
        %v498 = vld [vmem:[%s190 + $0x18] sm:$0xff]
        %v499 = vld [vmem:[%s190 + $0x20] sm:$0xf]
        %v500 = vld [vmem:[%s190 + $0x24] sm:$0xff]
        %v501 = vld [vmem:[%s190 + $0x2c] sm:$0xff]
        %v502 = vld [vmem:[%s190 + $0x34] sm:$0xff]
        %v503 = vld [vmem:[%s190 + $0x3c] sm:$0xff]
        %v504 = vld [vmem:[%s190 + $0x44] sm:$0xf]
        %v505 = vld [vmem:[%s190 + $0x48] sm:$0xff]
        %v506 = vld [vmem:[%s190 + $0x50] sm:$0xff]
        %v507 = vld [vmem:[%s190 + $0x58] sm:$0xff]
        %v508 = vld [vmem:[%s190 + $0x60] sm:$0xff]
        %v509 = vld [vmem:[%s190 + $0x68] sm:$0xf]
        %v510 = vld [vmem:[%s190 + $0x6c] sm:$0xff]
        %v511 = vld [vmem:[%s190 + $0x74] sm:$0xff]
        %v512 = vld [vmem:[%s190 + $0x7c] sm:$0xff]
        %v513 = vld [vmem:[%s190 + $0x84] sm:$0xff]
        %v514 = vld [vmem:[%s190 + $0x8c] sm:$0xf]
        %v515 = vld [vmem:[%s190 + $0x90] sm:$0xff]
        %v516 = vld [vmem:[%s190 + $0x98] sm:$0xff]
        %v517 = vld [vmem:[%s190 + $0xa0] sm:$0xff]
        %v518 = vld [vmem:[%s190 + $0xa8] sm:$0xff]
        %v519 = vld [vmem:[%s190 + $0xb0] sm:$0xf]
        %v520 = vld [vmem:[%s190 + $0xb4] sm:$0xff]
        %v521 = vld [vmem:[%s190 + $0xbc] sm:$0xff]
        %v522 = vld [vmem:[%s190 + $0xc4] sm:$0xff]
        %v523 = vld [vmem:[%s190 + $0xcc] sm:$0xff]
        %v524 = vld [vmem:[%s190 + $0xd4] sm:$0xf]
        %v525 = vld [vmem:[%s190 + $0xd8] sm:$0xff]
        %v526 = vld [vmem:[%s190 + $0xe0] sm:$0xff]
        %v527 = vld [vmem:[%s190 + $0xe8] sm:$0xff]
        %v528 = vld [vmem:[%s190 + $0xf0] sm:$0xff]
        %v529 = vld [vmem:[%s190 + $0xf8] sm:$0xf]
        %v530 = vld [vmem:[%s190 + $0xfc] sm:$0xff]
        %v531 = vld [vmem:[%s190 + $0x104] sm:$0xff]
        %v532 = vld [vmem:[%s190 + $0x10c] sm:$0xff]
        %v533 = vld [vmem:[%s190 + $0x114] sm:$0xff]
        %v534 = vld [vmem:[%s190 + $0x11c] sm:$0xf]
        %v535 = vld [vmem:[%s190 + $0x120] sm:$0xff]
        %v536 = vld [vmem:[%s190 + $0x128] sm:$0xff]
        %v537 = vld [vmem:[%s190 + $0x130] sm:$0xff]
        %v538 = vld [vmem:[%s190 + $0x138] sm:$0xff]
        %v539 = vld [vmem:[%s190 + $0x140] sm:$0xf]
        %v540 = vld [vmem:[%s190 + $0x144] sm:$0xff]
        %v541 = vld [vmem:[%s190 + $0x14c] sm:$0xff]
        %v542 = vld [vmem:[%s190 + $0x154] sm:$0xff]
        %v543 = vld [vmem:[%s190 + $0x15c] sm:$0xff]
        %v544 = vld [vmem:[%s190 + $0x164] sm:$0xf]
        %v545 = vld [vmem:[%s190 + $0x168] sm:$0xff]
        %v546 = vld [vmem:[%s190 + $0x170] sm:$0xff]
        %v547 = vld [vmem:[%s190 + $0x178] sm:$0xff]
        %v548 = vld [vmem:[%s190 + $0x180] sm:$0xff]
        %v549 = vld [vmem:[%s190 + $0x188] sm:$0xf]
        %v550 = vld [vmem:[%s190 + $0x18c] sm:$0xff]
        %v551 = vld [vmem:[%s190 + $0x194] sm:$0xff]
        %v552 = vld [vmem:[%s190 + $0x19c] sm:$0xff]
        %v553 = vld [vmem:[%s190 + $0x1a4] sm:$0xff]
        %v554 = vld [vmem:[%s190 + $0x1ac] sm:$0xf]
        %v555 = vld [vmem:[%s190 + $0x1b0] sm:$0xff]
        %v556 = vld [vmem:[%s190 + $0x1b8] sm:$0xff]
        %v557 = vld [vmem:[%s190 + $0x1c0] sm:$0xff]
        %v558 = vld [vmem:[%s190 + $0x1c8] sm:$0xff]
        %v559 = vld [vmem:[%s190 + $0x1d0] sm:$0xf]
        %v560 = vld [vmem:[%s190 + $0x1d4] sm:$0xff]
        %v561 = vld [vmem:[%s190 + $0x1dc] sm:$0xff]
        %v562 = vld [vmem:[%s190 + $0x1e4] sm:$0xff]
        %v563 = vld [vmem:[%s190 + $0x1ec] sm:$0xff]
        %v564 = vld [vmem:[%s190 + $0x1f4] sm:$0xf]
        %v565 = vld [vmem:[%s190 + $0x1f8] sm:$0xff]
        %v566 = vld [vmem:[%s190 + $0x200] sm:$0xff]
        %v567 = vld [vmem:[%s190 + $0x208] sm:$0xff]
        %v568 = vld [vmem:[%s190 + $0x210] sm:$0xff]
        %v569 = vld [vmem:[%s190 + $0x218] sm:$0xf]
        %v570 = vld [vmem:[%s190 + $0x21c] sm:$0xff]
        %v571 = vld [vmem:[%s190 + $0x224] sm:$0xff]
        %v572 = vld [vmem:[%s190 + $0x22c] sm:$0xff]
        %v573 = vld [vmem:[%s190 + $0x234] sm:$0xff]
        %v574 = vld [vmem:[%s190 + $0x23c] sm:$0xf]
        %v575 = vld [vmem:[%s190 + $0x240] sm:$0xff]
        %v576 = vld [vmem:[%s190 + $0x248] sm:$0xff]
        %v577 = vld [vmem:[%s190 + $0x250] sm:$0xff]
        %v578 = vld [vmem:[%s190 + $0x258] sm:$0xff]
        %v579 = vld [vmem:[%s190 + $0x260] sm:$0xf]
        %v580 = vld [vmem:[%s190 + $0x264] sm:$0xff]
        %v581 = vld [vmem:[%s190 + $0x26c] sm:$0xff]
        %v582 = vld [vmem:[%s190 + $0x274] sm:$0xff]
        %v583 = vld [vmem:[%s190 + $0x27c] sm:$0xff]
        %v584 = vld [vmem:[%s190 + $0x284] sm:$0xf]
        %v585 = vld [vmem:[%s190 + $0x288] sm:$0xff]
        %v586 = vld [vmem:[%s190 + $0x290] sm:$0xff]
        %v587 = vld [vmem:[%s190 + $0x298] sm:$0xff]
        %v588 = vld [vmem:[%s190 + $0x2a0] sm:$0xff]
        %v589 = vld [vmem:[%s190 + $0x2a8] sm:$0xf]
        %v590 = vld [vmem:[%s190 + $0x2ac] sm:$0xff]
        %v591 = vld [vmem:[%s190 + $0x2b4] sm:$0xff]
        %v592 = vld [vmem:[%s190 + $0x2bc] sm:$0xff]
        %v593 = vld [vmem:[%s190 + $0x2c4] sm:$0xff]
        %v594 = vld [vmem:[%s190 + $0x2cc] sm:$0xf]
        %v595 = vld [vmem:[%s190 + $0x2d0] sm:$0xff]
        %v596 = vld [vmem:[%s190 + $0x2d8] sm:$0xff]
        %v597 = vld [vmem:[%s190 + $0x2e0] sm:$0xff]
        %v598 = vld [vmem:[%s190 + $0x2e8] sm:$0xff]
        %v599 = vld [vmem:[%s190 + $0x2f0] sm:$0xf]
        %v600 = vld [vmem:[%s190 + $0x2f4] sm:$0xff]
        %v601 = vld [vmem:[%s190 + $0x2fc] sm:$0xff]
        %v602 = vld [vmem:[%s190 + $0x304] sm:$0xff]
        %v603 = vld [vmem:[%s190 + $0x30c] sm:$0xff]
        %v604 = vld [vmem:[%s190 + $0x314] sm:$0xf]
        %v605 = vld [vmem:[%s190 + $0x318] sm:$0xff]
        %v606 = vld [vmem:[%s190 + $0x320] sm:$0xff]
        %v607 = vld [vmem:[%s190 + $0x328] sm:$0xff]
        %v608 = vld [vmem:[%s190 + $0x330] sm:$0xff]
        %v609 = vld [vmem:[%s190 + $0x338] sm:$0xf]
        %v610 = vld [vmem:[%s190 + $0x33c] sm:$0xff]
        %v611 = vld [vmem:[%s190 + $0x344] sm:$0xff]
        %v612 = vld [vmem:[%s190 + $0x34c] sm:$0xff]
        %v613 = vld [vmem:[%s190 + $0x354] sm:$0xff]
        %v614 = vld [vmem:[%s190 + $0x35c] sm:$0xf]
        %v615 = vld [vmem:[%s190 + $0x360] sm:$0xff]
        %v616 = vld [vmem:[%s190 + $0x368] sm:$0xff]
        %v617 = vld [vmem:[%s190 + $0x370] sm:$0xff]
        %v618 = vld [vmem:[%s190 + $0x378] sm:$0xff]
        %v619 = vld [vmem:[%s190 + $0x380] sm:$0xf]
        %v620 = vld [vmem:[%s190 + $0x384] sm:$0xff]
        %v621 = vld [vmem:[%s190 + $0x38c] sm:$0xff]
        %v622 = vld [vmem:[%s190 + $0x394] sm:$0xff]
        %v623 = vld [vmem:[%s190 + $0x39c] sm:$0xff]
        %v624 = vld [vmem:[%s190 + $0x3a4] sm:$0xf]
        %v625 = vld [vmem:[%s190 + $0x3a8] sm:$0xff]
        %v626 = vld [vmem:[%s190 + $0x3b0] sm:$0xff]
        %v627 = vld [vmem:[%s190 + $0x3b8] sm:$0xff]
        %v628 = vld [vmem:[%s190 + $0x3c0] sm:$0xff]
        %v629 = vld [vmem:[%s190 + $0x3c8] sm:$0xf]
        %v630 = vld [vmem:[%s190 + $0x3cc] sm:$0xff]
        %v631 = vld [vmem:[%s190 + $0x3d4] sm:$0xff]
        %v632 = vld [vmem:[%s190 + $0x3dc] sm:$0xff]
        %v633 = vld [vmem:[%s190 + $0x3e4] sm:$0xff]
        %v634 = vld [vmem:[%s190 + $0x3ec] sm:$0xf]
        %v635 = vld [vmem:[%s190 + $0x3f0] sm:$0xff]
        %v636 = vld [vmem:[%s190 + $0x3f8] sm:$0xff]
        %v637 = vld [vmem:[%s190 + $0x400] sm:$0xff]
        %v638 = vld [vmem:[%s190 + $0x408] sm:$0xff]
        %v639 = vld [vmem:[%s190 + $0x410] sm:$0xf]
        %v640 = vld [vmem:[%s190 + $0x414] sm:$0xff]
        %v641 = vld [vmem:[%s190 + $0x41c] sm:$0xff]
        %v642 = vld [vmem:[%s190 + $0x424] sm:$0xff]
        %v643 = vld [vmem:[%s190 + $0x42c] sm:$0xff]
        %v644 = vld [vmem:[%s190 + $0x434] sm:$0xf]
        %v645 = vld [vmem:[%s190 + $0x438] sm:$0xff]
        %v646 = vld [vmem:[%s190 + $0x440] sm:$0xff]
        %v647 = vld [vmem:[%s190 + $0x448] sm:$0xff]
        %v648 = vld [vmem:[%s190 + $0x450] sm:$0xff]
        %v649 = vld [vmem:[%s190 + $0x458] sm:$0xf]
        %v650 = vld [vmem:[%s190 + $0x45c] sm:$0xff]
        %v651 = vld [vmem:[%s190 + $0x464] sm:$0xff]
        %v652 = vld [vmem:[%s190 + $0x46c] sm:$0xff]
        %v653 = vld [vmem:[%s190 + $0x474] sm:$0xff]
        %v654 = vld [vmem:[%s190 + $0x47c] sm:$0xf]
        %v655 = vld [vmem:[%s190 + $0x480] sm:$0xff]
        %v656 = vld [vmem:[%s190 + $0x488] sm:$0xff]
        %v657 = vld [vmem:[%s190 + $0x490] sm:$0xff]
        %v658 = vld [vmem:[%s190 + $0x498] sm:$0xff]
        %v659 = vld [vmem:[%s190 + $0x4a0] sm:$0xf]
        %v660 = vld [vmem:[%s190 + $0x4a4] sm:$0xff]
        %v661 = vld [vmem:[%s190 + $0x4ac] sm:$0xff]
        %v662 = vld [vmem:[%s190 + $0x4b4] sm:$0xff]
        %v663 = vld [vmem:[%s190 + $0x4bc] sm:$0xff]
        %v664 = vld [vmem:[%s190 + $0x4c4] sm:$0xf]
        %v665 = vld [vmem:[%s190 + $0x4c8] sm:$0xff]
        %v666 = vld [vmem:[%s190 + $0x4d0] sm:$0xff]
        %v667 = vld [vmem:[%s190 + $0x4d8] sm:$0xff]
        %v668 = vld [vmem:[%s190 + $0x4e0] sm:$0xff]
        %v669 = vld [vmem:[%s190 + $0x4e8] sm:$0xf]
        %v670 = vld [vmem:[%s190 + $0x4ec] sm:$0xff]
        %v671 = vld [vmem:[%s190 + $0x4f4] sm:$0xff]
        %v672 = vld [vmem:[%s190 + $0x4fc] sm:$0xff]
        %v673 = vld [vmem:[%s190 + $0x504] sm:$0xff]
        %v674 = vld [vmem:[%s190 + $0x50c] sm:$0xf]
        %v675 = vld [vmem:[%s190 + $0x510] sm:$0xff]
        %v676 = vld [vmem:[%s190 + $0x518] sm:$0xff]
        %v677 = vld [vmem:[%s190 + $0x520] sm:$0xff]
        %v678 = vld [vmem:[%s190 + $0x528] sm:$0xff]
        %v679 = vld [vmem:[%s190 + $0x530] sm:$0xf]
        %v680 = vld [vmem:[%s190 + $0x534] sm:$0xff]
        %v681 = vld [vmem:[%s190 + $0x53c] sm:$0xff]
        %v682 = vld [vmem:[%s190 + $0x544] sm:$0xff]
        %v683 = vld [vmem:[%s190 + $0x54c] sm:$0xff]
        %v684 = vld [vmem:[%s190 + $0x554] sm:$0xf]
        %v685 = vld [vmem:[%s190 + $0x558] sm:$0xff]
        %v686 = vld [vmem:[%s190 + $0x560] sm:$0xff]
        %v687 = vld [vmem:[%s190 + $0x568] sm:$0xff]
        %v688 = vld [vmem:[%s190 + $0x570] sm:$0xff]
        %v689 = vld [vmem:[%s190 + $0x578] sm:$0xf]
        %v690 = vld [vmem:[%s190 + $0x57c] sm:$0xff]
        %v691 = vld [vmem:[%s190 + $0x584] sm:$0xff]
        %v692 = vld [vmem:[%s190 + $0x58c] sm:$0xff]
        %v693 = vld [vmem:[%s190 + $0x594] sm:$0xff]
        %v694 = vld [vmem:[%s190 + $0x59c] sm:$0xf]
        %v695 = vld [vmem:[%s190 + $0x5a0] sm:$0xff]
        %v696 = vld [vmem:[%s190 + $0x5a8] sm:$0xff]
        %v697 = vld [vmem:[%s190 + $0x5b0] sm:$0xff]
        %v698 = vld [vmem:[%s190 + $0x5b8] sm:$0xff]
        %v699 = vld [vmem:[%s190 + $0x5c0] sm:$0xf]
        %v700 = vld [vmem:[%s190 + $0x5c4] sm:$0xff]
        %v701 = vld [vmem:[%s190 + $0x5cc] sm:$0xff]
        %v702 = vld [vmem:[%s190 + $0x5d4] sm:$0xff]
        %v703 = vld [vmem:[%s190 + $0x5dc] sm:$0xff]
        %v704 = vld [vmem:[%s190 + $0x5e4] sm:$0xf]
        %v705 = vld [vmem:[%s190 + $0x5e8] sm:$0xff]
        %v706 = vld [vmem:[%s190 + $0x5f0] sm:$0xff]
        %v707 = vld [vmem:[%s190 + $0x5f8] sm:$0xff]
        %v708 = vld [vmem:[%s190 + $0x600] sm:$0xff]
        %v709 = vld [vmem:[%s190 + $0x608] sm:$0xf]
        %v710 = vld [vmem:[%s190 + $0x60c] sm:$0xff]
        %v711 = vld [vmem:[%s190 + $0x614] sm:$0xff]
        %v712 = vld [vmem:[%s190 + $0x61c] sm:$0xff]
        %v713 = vld [vmem:[%s190 + $0x624] sm:$0xff]
        %v714 = vld [vmem:[%s190 + $0x62c] sm:$0xf]
        %v715 = vld [vmem:[%s190 + $0x630] sm:$0xff]
        %v716 = vld [vmem:[%s190 + $0x638] sm:$0xff]
        %v717 = vld [vmem:[%s190 + $0x640] sm:$0xff]
        %v718 = vld [vmem:[%s190 + $0x648] sm:$0xff]
        %v719 = vld [vmem:[%s190 + $0x650] sm:$0xf]
        %v720 = vld [vmem:[%s190 + $0x654] sm:$0xff]
        %v721 = vld [vmem:[%s190 + $0x65c] sm:$0xff]
        %v722 = vld [vmem:[%s190 + $0x664] sm:$0xff]
        %v723 = vld [vmem:[%s190 + $0x66c] sm:$0xff]
        %v724 = vld [vmem:[%s190 + $0x674] sm:$0xf]
        %v725 = vld [vmem:[%s190 + $0x678] sm:$0xff]
        %v726 = vld [vmem:[%s190 + $0x680] sm:$0xff]
        %v727 = vld [vmem:[%s190 + $0x688] sm:$0xff]
        %v728 = vld [vmem:[%s190 + $0x690] sm:$0xff]
        %v729 = vld [vmem:[%s190 + $0x698] sm:$0xf]
        %v730 = vld [vmem:[%s190 + $0x69c] sm:$0xff]
        %v731 = vld [vmem:[%s190 + $0x6a4] sm:$0xff]
        %v732 = vld [vmem:[%s190 + $0x6ac] sm:$0xff]
        %v733 = vld [vmem:[%s190 + $0x6b4] sm:$0xff]
        %v734 = vld [vmem:[%s190 + $0x6bc] sm:$0xf]
        %v735 = vld [vmem:[%s190 + $0x6c0] sm:$0xff]
        %v736 = vld [vmem:[%s190 + $0x6c8] sm:$0xff]
        %v737 = vld [vmem:[%s190 + $0x6d0] sm:$0xff]
        %v738 = vld [vmem:[%s190 + $0x6d8] sm:$0xff]
        %v739 = vld [vmem:[%s190 + $0x6e0] sm:$0xf]
        %v740 = vld [vmem:[%s190 + $0x6e4] sm:$0xff]
        %v741 = vld [vmem:[%s190 + $0x6ec] sm:$0xff]
        %v742 = vld [vmem:[%s190 + $0x6f4] sm:$0xff]
        %v743 = vld [vmem:[%s190 + $0x6fc] sm:$0xff]
        %v744 = vld [vmem:[%s190 + $0x704] sm:$0xf]
        %v745 = vld [vmem:[%s190 + $0x708] sm:$0xff]
        %v746 = vld [vmem:[%s190 + $0x710] sm:$0xff]
        %v747 = vld [vmem:[%s190 + $0x718] sm:$0xff]
        %v748 = vld [vmem:[%s190 + $0x720] sm:$0xff]
        %v749 = vld [vmem:[%s190 + $0x728] sm:$0xf]
        %v750 = vld [vmem:[%s190 + $0x72c] sm:$0xff]
        %v751 = vld [vmem:[%s190 + $0x734] sm:$0xff]
        %v752 = vld [vmem:[%s190 + $0x73c] sm:$0xff]
        %v753 = vld [vmem:[%s190 + $0x744] sm:$0xff]
        %v754 = vld [vmem:[%s190 + $0x74c] sm:$0xf]
        %v755 = vld [vmem:[%s190 + $0x750] sm:$0xff]
        %v756 = vld [vmem:[%s190 + $0x758] sm:$0xff]
        %v757 = vld [vmem:[%s190 + $0x760] sm:$0xff]
        %v758 = vld [vmem:[%s190 + $0x768] sm:$0xff]
        %v759 = vld [vmem:[%s190 + $0x770] sm:$0xf]
        %v760 = vld [vmem:[%s190 + $0x774] sm:$0xff]
        %v761 = vld [vmem:[%s190 + $0x77c] sm:$0xff]
        %v762 = vld [vmem:[%s190 + $0x784] sm:$0xff]
        %v763 = vld [vmem:[%s190 + $0x78c] sm:$0xff]
        %v764 = vld [vmem:[%s190 + $0x794] sm:$0xf]
        %v765 = vld [vmem:[%s190 + $0x798] sm:$0xff]
        %v766 = vld [vmem:[%s190 + $0x7a0] sm:$0xff]
        %v767 = vld [vmem:[%s190 + $0x7a8] sm:$0xff]
        %v768 = vld [vmem:[%s190 + $0x7b0] sm:$0xff]
        %v769 = vld [vmem:[%s190 + $0x7b8] sm:$0xf]
        %v770 = vld [vmem:[%s190 + $0x7bc] sm:$0xff]
        %v771 = vld [vmem:[%s190 + $0x7c4] sm:$0xff]
        %v772 = vld [vmem:[%s190 + $0x7cc] sm:$0xff]
        %v773 = vld [vmem:[%s190 + $0x7d4] sm:$0xff]
        %v774 = vld [vmem:[%s190 + $0x7dc] sm:$0xf]
        %v775 = vld [vmem:[%s190 + $0x7e0] sm:$0xff]
        %v776 = vld [vmem:[%s190 + $0x7e8] sm:$0xff]
        %v777 = vld [vmem:[%s190 + $0x7f0] sm:$0xff]
        %v778 = vld [vmem:[%s190 + $0x7f8] sm:$0xff]
        %v779 = vld [vmem:[%s190 + $0x800] sm:$0xf]
        %v780 = vld [vmem:[%s190 + $0x804] sm:$0xff]
        %v781 = vld [vmem:[%s190 + $0x80c] sm:$0xff]
        %v782 = vld [vmem:[%s190 + $0x814] sm:$0xff]
        %v783 = vld [vmem:[%s190 + $0x81c] sm:$0xff]
        %v784 = vld [vmem:[%s190 + $0x824] sm:$0xf]
        %v785 = vld [vmem:[%s190 + $0x828] sm:$0xff]
        %v786 = vld [vmem:[%s190 + $0x830] sm:$0xff]
        %v787 = vld [vmem:[%s190 + $0x838] sm:$0xff]
        %v788 = vld [vmem:[%s190 + $0x840] sm:$0xff]
        %v789 = vld [vmem:[%s190 + $0x848] sm:$0xf]
        %v790 = vld [vmem:[%s190 + $0x84c] sm:$0xff]
        %v791 = vld [vmem:[%s190 + $0x854] sm:$0xff]
        %v792 = vld [vmem:[%s190 + $0x85c] sm:$0xff]
        %v793 = vld [vmem:[%s190 + $0x864] sm:$0xff]
        %v794 = vld [vmem:[%s190 + $0x86c] sm:$0xf]
        %v795 = vld [vmem:[%s190 + $0x870] sm:$0xff]
        %v796 = vld [vmem:[%s190 + $0x878] sm:$0xff]
        %v797 = vld [vmem:[%s190 + $0x880] sm:$0xff]
        %v798 = vld [vmem:[%s190 + $0x888] sm:$0xff]
        %v799 = vld [vmem:[%s190 + $0x890] sm:$0xf]
        %v800 = vld [vmem:[%s190 + $0x894] sm:$0xff]
        %v801 = vld [vmem:[%s190 + $0x89c] sm:$0xff]
        %v802 = vld [vmem:[%s190 + $0x8a4] sm:$0xff]
        %v803 = vld [vmem:[%s190 + $0x8ac] sm:$0xff]
        %v804 = vld [vmem:[%s190 + $0x8b4] sm:$0xf]
        %v805 = vld [vmem:[%s190 + $0x8b8] sm:$0xff]
        %v806 = vld [vmem:[%s190 + $0x8c0] sm:$0xff]
        %v807 = vld [vmem:[%s190 + $0x8c8] sm:$0xff]
        %v808 = vld [vmem:[%s190 + $0x8d0] sm:$0xff]
        %v809 = vld [vmem:[%s190 + $0x8d8] sm:$0xf]
        %v810 = vld [vmem:[%s190 + $0x8dc] sm:$0xff]
        %v811 = vld [vmem:[%s190 + $0x8e4] sm:$0xff]
        %v812 = vld [vmem:[%s190 + $0x8ec] sm:$0xff]
        %v813 = vld [vmem:[%s190 + $0x8f4] sm:$0xff]
        %v814 = vld [vmem:[%s190 + $0x8fc] sm:$0xf]
        %v815 = vld [vmem:[%s190 + $0x900] sm:$0xff]
        %v816 = vld [vmem:[%s190 + $0x908] sm:$0xff]
        %v817 = vld [vmem:[%s190 + $0x910] sm:$0xff]
        %v818 = vld [vmem:[%s190 + $0x918] sm:$0xff]
        %v819 = vld [vmem:[%s190 + $0x920] sm:$0xf]
        %v820 = vld [vmem:[%s190 + $0x924] sm:$0xff]
        %v821 = vld [vmem:[%s190 + $0x92c] sm:$0xff]
        %v822 = vld [vmem:[%s190 + $0x934] sm:$0xff]
        %v823 = vld [vmem:[%s190 + $0x93c] sm:$0xff]
        %v824 = vld [vmem:[%s190 + $0x944] sm:$0xf]
        %v825 = vld [vmem:[%s190 + $0x948] sm:$0xff]
        %v826 = vld [vmem:[%s190 + $0x950] sm:$0xff]
        %v827 = vld [vmem:[%s190 + $0x958] sm:$0xff]
        %v828 = vld [vmem:[%s190 + $0x960] sm:$0xff]
        %v829 = vld [vmem:[%s190 + $0x968] sm:$0xf]
        %v830 = vld [vmem:[%s190 + $0x96c] sm:$0xff]
        %v831 = vld [vmem:[%s190 + $0x974] sm:$0xff]
        %v832 = vld [vmem:[%s190 + $0x97c] sm:$0xff]
        %v833 = vld [vmem:[%s190 + $0x984] sm:$0xff]
        %v834 = vld [vmem:[%s190 + $0x98c] sm:$0xf]
        %v835 = vld [vmem:[%s190 + $0x990] sm:$0xff]
        %v836 = vld [vmem:[%s190 + $0x998] sm:$0xff]
        %v837 = vld [vmem:[%s190 + $0x9a0] sm:$0xff]
        %v838 = vld [vmem:[%s190 + $0x9a8] sm:$0xff]
        %v839 = vld [vmem:[%s190 + $0x9b0] sm:$0xf]
        %v840 = vld [vmem:[%s190 + $0x9b4] sm:$0xff]
        %v841 = vld [vmem:[%s190 + $0x9bc] sm:$0xff]
        %v842 = vld [vmem:[%s190 + $0x9c4] sm:$0xff]
        %v843 = vld [vmem:[%s190 + $0x9cc] sm:$0xff]
        %v844 = vld [vmem:[%s190 + $0x9d4] sm:$0xf]
        %v845 = vld [vmem:[%s190 + $0x9d8] sm:$0xff]
        %v846 = vld [vmem:[%s190 + $0x9e0] sm:$0xff]
        %v847 = vld [vmem:[%s190 + $0x9e8] sm:$0xff]
        %v848 = vld [vmem:[%s190 + $0x9f0] sm:$0xff]
        %v849 = vld [vmem:[%s190 + $0x9f8] sm:$0xf]
        %v850 = vld [vmem:[%s190 + $0x9fc] sm:$0xff]
        %v851 = vld [vmem:[%s190 + $0xa04] sm:$0xff]
        %v852 = vld [vmem:[%s190 + $0xa0c] sm:$0xff]
        %v853 = vld [vmem:[%s190 + $0xa14] sm:$0xff]
        %v854 = vld [vmem:[%s190 + $0xa1c] sm:$0xf]
        %v855 = vld [vmem:[%s190 + $0xa20] sm:$0xff]
        %v856 = vld [vmem:[%s190 + $0xa28] sm:$0xff]
        %v857 = vld [vmem:[%s190 + $0xa30] sm:$0xff]
        %v858 = vld [vmem:[%s190 + $0xa38] sm:$0xff]
        %v859 = vld [vmem:[%s190 + $0xa40] sm:$0xf]
        %v860 = vld [vmem:[%s190 + $0xa44] sm:$0xff]
        %v861 = vld [vmem:[%s190 + $0xa4c] sm:$0xff]
        %v862 = vld [vmem:[%s190 + $0xa54] sm:$0xff]
        %v863 = vld [vmem:[%s190 + $0xa5c] sm:$0xff]
        %v864 = vld [vmem:[%s190 + $0xa64] sm:$0xf]
        %v865 = vld [vmem:[%s190 + $0xa68] sm:$0xff]
        %v866 = vld [vmem:[%s190 + $0xa70] sm:$0xff]
        %v867 = vld [vmem:[%s190 + $0xa78] sm:$0xff]
        %v868 = vld [vmem:[%s190 + $0xa80] sm:$0xff]
        %v869 = vld [vmem:[%s190 + $0xa88] sm:$0xf]
        %v870 = vld [vmem:[%s190 + $0xa8c] sm:$0xff]
        %v871 = vld [vmem:[%s190 + $0xa94] sm:$0xff]
        %v872 = vld [vmem:[%s190 + $0xa9c] sm:$0xff]
        %v873 = vld [vmem:[%s190 + $0xaa4] sm:$0xff]
        %v874 = vld [vmem:[%s190 + $0xaac] sm:$0xf]
        %v875 = vld [vmem:[%s190 + $0xab0] sm:$0xff]
        %v876 = vld [vmem:[%s190 + $0xab8] sm:$0xff]
        %v877 = vld [vmem:[%s190 + $0xac0] sm:$0xff]
        %v878 = vld [vmem:[%s190 + $0xac8] sm:$0xff]
        %v879 = vld [vmem:[%s190 + $0xad0] sm:$0xf]
        %v880 = vld [vmem:[%s190 + $0xad4] sm:$0xff]
        %v881 = vld [vmem:[%s190 + $0xadc] sm:$0xff]
        %v882 = vld [vmem:[%s190 + $0xae4] sm:$0xff]
        %v883 = vld [vmem:[%s190 + $0xaec] sm:$0xff]
        %v884 = vld [vmem:[%s190 + $0xaf4] sm:$0xf]
        %v885 = vld [vmem:[%s190 + $0xaf8] sm:$0xff]
        %v886 = vld [vmem:[%s190 + $0xb00] sm:$0xff]
        %v887 = vld [vmem:[%s190 + $0xb08] sm:$0xff]
        %v888 = vld [vmem:[%s190 + $0xb10] sm:$0xff]
        %v889 = vld [vmem:[%s190 + $0xb18] sm:$0xf]
        %v890 = vld [vmem:[%s190 + $0xb1c] sm:$0xff]
        %v891 = vld [vmem:[%s190 + $0xb24] sm:$0xff]
        %v892 = vld [vmem:[%s190 + $0xb2c] sm:$0xff]
        %v893 = vld [vmem:[%s190 + $0xb34] sm:$0xff]
        %v894 = vld [vmem:[%s190 + $0xb3c] sm:$0xf]
        %v895 = vld [vmem:[%s190 + $0xb40] sm:$0xff]
        %v896 = vld [vmem:[%s190 + $0xb48] sm:$0xff]
        %v897 = vld [vmem:[%s190 + $0xb50] sm:$0xff]
        %v898 = vld [vmem:[%s190 + $0xb58] sm:$0xff]
        %v899 = vld [vmem:[%s190 + $0xb60] sm:$0xf]
        %v900 = vld [vmem:[%s190 + $0xb64] sm:$0xff]
        %v901 = vld [vmem:[%s190 + $0xb6c] sm:$0xff]
        %v902 = vld [vmem:[%s190 + $0xb74] sm:$0xff]
        %v903 = vld [vmem:[%s190 + $0xb7c] sm:$0xff]
        %v904 = vld [vmem:[%s190 + $0xb84] sm:$0xf]
        %v905 = vld [vmem:[%s190 + $0xb88] sm:$0xff]
        %v906 = vld [vmem:[%s190 + $0xb90] sm:$0xff]
        %v907 = vld [vmem:[%s190 + $0xb98] sm:$0xff]
        %v908 = vld [vmem:[%s190 + $0xba0] sm:$0xff]
        %v909 = vld [vmem:[%s190 + $0xba8] sm:$0xf]
        %v910 = vld [vmem:[%s190 + $0xbac] sm:$0xff]
        %v911 = vld [vmem:[%s190 + $0xbb4] sm:$0xff]
        %v912 = vld [vmem:[%s190 + $0xbbc] sm:$0xff]
        %v913 = vld [vmem:[%s190 + $0xbc4] sm:$0xff]
        %v914 = vld [vmem:[%s190 + $0xbcc] sm:$0xf]
        %v915 = vld [vmem:[%s190 + $0xbd0] sm:$0xff]
        %v916 = vld [vmem:[%s190 + $0xbd8] sm:$0xff]
        %v917 = vld [vmem:[%s190 + $0xbe0] sm:$0xff]
        %v918 = vld [vmem:[%s190 + $0xbe8] sm:$0xff]
        %v919 = vld [vmem:[%s190 + $0xbf0] sm:$0xf]
        %v920 = vld [vmem:[%s190 + $0xbf4] sm:$0xff]
        %v921 = vld [vmem:[%s190 + $0xbfc] sm:$0xff]
        %v922 = vld [vmem:[%s190 + $0xc04] sm:$0xff]
        %v923 = vld [vmem:[%s190 + $0xc0c] sm:$0xff]
        %v924 = vld [vmem:[%s190 + $0xc14] sm:$0xf]
        %v925 = vld [vmem:[%s190 + $0xc18] sm:$0xff]
        %v926 = vld [vmem:[%s190 + $0xc20] sm:$0xff]
        %v927 = vld [vmem:[%s190 + $0xc28] sm:$0xff]
        %v928 = vld [vmem:[%s190 + $0xc30] sm:$0xff]
        %v929 = vld [vmem:[%s190 + $0xc38] sm:$0xf]
        %v930 = vld [vmem:[%s190 + $0xc3c] sm:$0xff]
        %v931 = vld [vmem:[%s190 + $0xc44] sm:$0xff]
        %v932 = vld [vmem:[%s190 + $0xc4c] sm:$0xff]
        %v933 = vld [vmem:[%s190 + $0xc54] sm:$0xff]
        %v934 = vld [vmem:[%s190 + $0xc5c] sm:$0xf]
        %v935 = vld [vmem:[%s190 + $0xc60] sm:$0xff]
        %v936 = vld [vmem:[%s190 + $0xc68] sm:$0xff]
        %v937 = vld [vmem:[%s190 + $0xc70] sm:$0xff]
        %v938 = vld [vmem:[%s190 + $0xc78] sm:$0xff]
        %v939 = vld [vmem:[%s190 + $0xc80] sm:$0xf]
        %v940 = vld [vmem:[%s190 + $0xc84] sm:$0xff]
        %v941 = vld [vmem:[%s190 + $0xc8c] sm:$0xff]
        %v942 = vld [vmem:[%s190 + $0xc94] sm:$0xff]
        %v943 = vld [vmem:[%s190 + $0xc9c] sm:$0xff]
        %v944 = vld [vmem:[%s190 + $0xca4] sm:$0xf]
        %v945 = vld [vmem:[%s190 + $0xca8] sm:$0xff]
        %v946 = vld [vmem:[%s190 + $0xcb0] sm:$0xff]
        %v947 = vld [vmem:[%s190 + $0xcb8] sm:$0xff]
        %v948 = vld [vmem:[%s190 + $0xcc0] sm:$0xff]
        %v949 = vld [vmem:[%s190 + $0xcc8] sm:$0xf]
        %v950 = vld [vmem:[%s190 + $0xccc] sm:$0xff]
        %v951 = vld [vmem:[%s190 + $0xcd4] sm:$0xff]
        %v952 = vld [vmem:[%s190 + $0xcdc] sm:$0xff]
        %v953 = vld [vmem:[%s190 + $0xce4] sm:$0xff]
        %v954 = vld [vmem:[%s190 + $0xcec] sm:$0xf]
        %v955 = vld [vmem:[%s190 + $0xcf0] sm:$0xff]
        %v956 = vld [vmem:[%s190 + $0xcf8] sm:$0xff]
        %v957 = vld [vmem:[%s190 + $0xd00] sm:$0xff]
        %v958 = vld [vmem:[%s190 + $0xd08] sm:$0xff]
        %v959 = vld [vmem:[%s190 + $0xd10] sm:$0xf]
        %v960 = vld [vmem:[%s190 + $0xd14] sm:$0xff]
        %v961 = vld [vmem:[%s190 + $0xd1c] sm:$0xff]
        %v962 = vld [vmem:[%s190 + $0xd24] sm:$0xff]
        %v963 = vld [vmem:[%s190 + $0xd2c] sm:$0xff]
        %v964 = vld [vmem:[%s190 + $0xd34] sm:$0xf]
        %v965 = vld [vmem:[%s190 + $0xd38] sm:$0xff]
        %v966 = vld [vmem:[%s190 + $0xd40] sm:$0xff]
        %v967 = vld [vmem:[%s190 + $0xd48] sm:$0xff]
        %v968 = vld [vmem:[%s190 + $0xd50] sm:$0xff]
        %v969 = vld [vmem:[%s190 + $0xd58] sm:$0xf]
        %v970 = vld [vmem:[%s190 + $0xd5c] sm:$0xff]
        %v971 = vld [vmem:[%s190 + $0xd64] sm:$0xff]
        %v972 = vld [vmem:[%s190 + $0xd6c] sm:$0xff]
        %v973 = vld [vmem:[%s190 + $0xd74] sm:$0xff]
        %v974 = vld [vmem:[%s190 + $0xd7c] sm:$0xf]
        %v975 = vld [vmem:[%s190 + $0xd80] sm:$0xff]
        %v976 = vld [vmem:[%s190 + $0xd88] sm:$0xff]
        %v977 = vld [vmem:[%s190 + $0xd90] sm:$0xff]
        %v978 = vld [vmem:[%s190 + $0xd98] sm:$0xff]
        %v979 = vld [vmem:[%s190 + $0xda0] sm:$0xf]
        %v980 = vld [vmem:[%s190 + $0xda4] sm:$0xff]
        %v981 = vld [vmem:[%s190 + $0xdac] sm:$0xff]
        %v982 = vld [vmem:[%s190 + $0xdb4] sm:$0xff]
        %v983 = vld [vmem:[%s190 + $0xdbc] sm:$0xff]
        %v984 = vld [vmem:[%s190 + $0xdc4] sm:$0xf]
        %v985 = vld [vmem:[%s190 + $0xdc8] sm:$0xff]
        %v986 = vld [vmem:[%s190 + $0xdd0] sm:$0xff]
        %v987 = vld [vmem:[%s190 + $0xdd8] sm:$0xff]
        %v988 = vld [vmem:[%s190 + $0xde0] sm:$0xff]
        %v989 = vld [vmem:[%s190 + $0xde8] sm:$0xf]
        %v990 = vld [vmem:[%s190 + $0xdec] sm:$0xff]
        %v991 = vld [vmem:[%s190 + $0xdf4] sm:$0xff]
        %v992 = vld [vmem:[%s190 + $0xdfc] sm:$0xff]
        %v993 = vld [vmem:[%s190 + $0xe04] sm:$0xff]
        %v994 = vld [vmem:[%s190 + $0xe0c] sm:$0xf]
        %v995 = vld [vmem:[%s190 + $0xe10] sm:$0xff]
        %v996 = vld [vmem:[%s190 + $0xe18] sm:$0xff]
        %v997 = vld [vmem:[%s190 + $0xe20] sm:$0xff]
        %v998 = vld [vmem:[%s190 + $0xe28] sm:$0xff]
        %v999 = vld [vmem:[%s190 + $0xe30] sm:$0xf]
        %v1000 = vld [vmem:[%s190 + $0xe34] sm:$0xff]
        %v1001 = vld [vmem:[%s190 + $0xe3c] sm:$0xff]
        %v1002 = vld [vmem:[%s190 + $0xe44] sm:$0xff]
        %v1003 = vld [vmem:[%s190 + $0xe4c] sm:$0xff]
        %v1004 = vld [vmem:[%s190 + $0xe54] sm:$0xf]
        %v1005 = vld [vmem:[%s190 + $0xe58] sm:$0xff]
        %v1006 = vld [vmem:[%s190 + $0xe60] sm:$0xff]
        %v1007 = vld [vmem:[%s190 + $0xe68] sm:$0xff]
        %v1008 = vld [vmem:[%s190 + $0xe70] sm:$0xff]
        %v1009 = vld [vmem:[%s190 + $0xe78] sm:$0xf]
        %v1010 = vld [vmem:[%s190 + $0xe7c] sm:$0xff]
        %v1011 = vld [vmem:[%s190 + $0xe84] sm:$0xff]
        %v1012 = vld [vmem:[%s190 + $0xe8c] sm:$0xff]
        %v1013 = vld [vmem:[%s190 + $0xe94] sm:$0xff]
        %v1014 = vld [vmem:[%s190 + $0xe9c] sm:$0xf]
        %v1015 = vld [vmem:[%s190 + $0xea0] sm:$0xff]
        %v1016 = vld [vmem:[%s190 + $0xea8] sm:$0xff]
        %v1017 = vld [vmem:[%s190 + $0xeb0] sm:$0xff]
        %v1018 = vld [vmem:[%s190 + $0xeb8] sm:$0xff]
        %v1019 = vld [vmem:[%s190 + $0xec0] sm:$0xf]
        %v1020 = vld [vmem:[%s190 + $0xec4] sm:$0xff]
        %v1021 = vld [vmem:[%s190 + $0xecc] sm:$0xff]
        %v1022 = vld [vmem:[%s190 + $0xed4] sm:$0xff]
        %v1023 = vld [vmem:[%s190 + $0xedc] sm:$0xff]
        %v1024 = vld [vmem:[%s190 + $0xee4] sm:$0xf]
        %v1025 = vld [vmem:[%s190 + $0xee8] sm:$0xff]
        %v1026 = vld [vmem:[%s190 + $0xef0] sm:$0xff]
        %v1027 = vld [vmem:[%s190 + $0xef8] sm:$0xff]
        %v1028 = vld [vmem:[%s190 + $0xf00] sm:$0xff]
        %v1029 = vld [vmem:[%s190 + $0xf08] sm:$0xf]
        %v1030 = vld [vmem:[%s190 + $0xf0c] sm:$0xff]
        %v1031 = vld [vmem:[%s190 + $0xf14] sm:$0xff]
        %v1032 = vld [vmem:[%s190 + $0xf1c] sm:$0xff]
        %v1033 = vld [vmem:[%s190 + $0xf24] sm:$0xff]
        %v1034 = vld [vmem:[%s190 + $0xf2c] sm:$0xf]
        %v1035 = vld [vmem:[%s190 + $0xf30] sm:$0xff]
        %v1036 = vld [vmem:[%s190 + $0xf38] sm:$0xff]
        %v1037 = vld [vmem:[%s190 + $0xf40] sm:$0xff]
        %v1038 = vld [vmem:[%s190 + $0xf48] sm:$0xff]
        %v1039 = vld [vmem:[%s190 + $0xf50] sm:$0xf]
        %v1040 = vld [vmem:[%s190 + $0xf54] sm:$0xff]
        %v1041 = vld [vmem:[%s190 + $0xf5c] sm:$0xff]
        %v1042 = vld [vmem:[%s190 + $0xf64] sm:$0xff]
        %v1043 = vld [vmem:[%s190 + $0xf6c] sm:$0xff]
        %v1044 = vld [vmem:[%s190 + $0xf74] sm:$0xf]
        %v1045 = vld [vmem:[%s190 + $0xf78] sm:$0xff]
        %v1046 = vld [vmem:[%s190 + $0xf80] sm:$0xff]
        %v1047 = vld [vmem:[%s190 + $0xf88] sm:$0xff]
        %v1048 = vld [vmem:[%s190 + $0xf90] sm:$0xff]
        %v1049 = vld [vmem:[%s190 + $0xf98] sm:$0xf]
        %v1050 = vld [vmem:[%s190 + $0xf9c] sm:$0xff]
        %v1051 = vld [vmem:[%s190 + $0xfa4] sm:$0xff]
        %v1052 = vld [vmem:[%s190 + $0xfac] sm:$0xff]
        %v1053 = vld [vmem:[%s190 + $0xfb4] sm:$0xff]
        %v1054 = vld [vmem:[%s190 + $0xfbc] sm:$0xf]
        %v1055 = vld [vmem:[%s190 + $0xfc0] sm:$0xff]
        %v1056 = vld [vmem:[%s190 + $0xfc8] sm:$0xff]
        %v1057 = vld [vmem:[%s190 + $0xfd0] sm:$0xff]
        %v1058 = vld [vmem:[%s190 + $0xfd8] sm:$0xff]
        %v1059 = vld [vmem:[%s190 + $0xfe0] sm:$0xf]
        %v1060 = vld [vmem:[%s190 + $0xfe4] sm:$0xff]
        %v1061 = vld [vmem:[%s190 + $0xfec] sm:$0xff]
        %v1062 = vld [vmem:[%s190 + $0xff4] sm:$0xff]
        %v1063 = vld [vmem:[%s190 + $0xffc] sm:$0xff]
        %v1064 = vld [vmem:[%s190 + $0x1004] sm:$0xf]
        %v1065 = vld [vmem:[%s190 + $0x1008] sm:$0xff]
        %v1066 = vld [vmem:[%s190 + $0x1010] sm:$0xff]
        %v1067 = vld [vmem:[%s190 + $0x1018] sm:$0xff]
        %v1068 = vld [vmem:[%s190 + $0x1020] sm:$0xff]
        %v1069 = vld [vmem:[%s190 + $0x1028] sm:$0xf]
        %v1070 = vld [vmem:[%s190 + $0x102c] sm:$0xff]
        %v1071 = vld [vmem:[%s190 + $0x1034] sm:$0xff]
        %v1072 = vld [vmem:[%s190 + $0x103c] sm:$0xff]
        %v1073 = vld [vmem:[%s190 + $0x1044] sm:$0xff]
        %v1074 = vld [vmem:[%s190 + $0x104c] sm:$0xf]
        %v1075 = vld [vmem:[%s190 + $0x1050] sm:$0xff]
        %v1076 = vld [vmem:[%s190 + $0x1058] sm:$0xff]
        %v1077 = vld [vmem:[%s190 + $0x1060] sm:$0xff]
        %v1078 = vld [vmem:[%s190 + $0x1068] sm:$0xff]
        %v1079 = vld [vmem:[%s190 + $0x1070] sm:$0xf]
        %v1080 = vld [vmem:[%s190 + $0x1074] sm:$0xff]
        %v1081 = vld [vmem:[%s190 + $0x107c] sm:$0xff]
        %v1082 = vld [vmem:[%s190 + $0x1084] sm:$0xff]
        %v1083 = vld [vmem:[%s190 + $0x108c] sm:$0xff]
        %v1084 = vld [vmem:[%s190 + $0x1094] sm:$0xf]
        %v1085 = vld [vmem:[%s190 + $0x1098] sm:$0xff]
        %v1086 = vld [vmem:[%s190 + $0x10a0] sm:$0xff]
        %v1087 = vld [vmem:[%s190 + $0x10a8] sm:$0xff]
        %v1088 = vld [vmem:[%s190 + $0x10b0] sm:$0xff]
        %v1089 = vld [vmem:[%s190 + $0x10b8] sm:$0xf]
        %v1090 = vld [vmem:[%s190 + $0x10bc] sm:$0xff]
        %v1091 = vld [vmem:[%s190 + $0x10c4] sm:$0xff]
        %v1092 = vld [vmem:[%s190 + $0x10cc] sm:$0xff]
        %v1093 = vld [vmem:[%s190 + $0x10d4] sm:$0xff]
        %v1094 = vld [vmem:[%s190 + $0x10dc] sm:$0xf]
        %v1095 = vld [vmem:[%s190 + $0x10e0] sm:$0xff]
        %v1096 = vld [vmem:[%s190 + $0x10e8] sm:$0xff]
        %v1097 = vld [vmem:[%s190 + $0x10f0] sm:$0xff]
        %v1098 = vld [vmem:[%s190 + $0x10f8] sm:$0xff]
        %v1099 = vld [vmem:[%s190 + $0x1100] sm:$0xf]
        %v1100 = vld [vmem:[%s190 + $0x1104] sm:$0xff]
        %v1101 = vld [vmem:[%s190 + $0x110c] sm:$0xff]
        %v1102 = vld [vmem:[%s190 + $0x1114] sm:$0xff]
        %v1103 = vld [vmem:[%s190 + $0x111c] sm:$0xff]
        %v1104 = vld [vmem:[%s190 + $0x1124] sm:$0xf]
        %v1105 = vld [vmem:[%s190 + $0x1128] sm:$0xff]
        %v1106 = vld [vmem:[%s190 + $0x1130] sm:$0xff]
        %v1107 = vld [vmem:[%s190 + $0x1138] sm:$0xff]
        %v1108 = vld [vmem:[%s190 + $0x1140] sm:$0xff]
        %v1109 = vld [vmem:[%s190 + $0x1148] sm:$0xf]
        %v1110 = vld [vmem:[%s190 + $0x114c] sm:$0xff]
        %v1111 = vld [vmem:[%s190 + $0x1154] sm:$0xff]
        %v1112 = vld [vmem:[%s190 + $0x115c] sm:$0xff]
        %v1113 = vld [vmem:[%s190 + $0x1164] sm:$0xff]
        %v1114 = vld [vmem:[%s190 + $0x116c] sm:$0xf]
        %v1115 = vld [vmem:[%s190 + $0x1170] sm:$0xff]
        %v1116 = vld [vmem:[%s190 + $0x1178] sm:$0xff]
        %v1117 = vld [vmem:[%s190 + $0x1180] sm:$0xff]
        %v1118 = vld [vmem:[%s190 + $0x1188] sm:$0xff]
        %v1119 = vld [vmem:[%s190 + $0x1190] sm:$0xf]
        %v1120 = vld [vmem:[%s190 + $0x1194] sm:$0xff]
        %v1121 = vld [vmem:[%s190 + $0x119c] sm:$0xff]
        %v1122 = vld [vmem:[%s190 + $0x11a4] sm:$0xff]
        %v1123 = vld [vmem:[%s190 + $0x11ac] sm:$0xff]
        %v1124 = vld [vmem:[%s190 + $0x11b4] sm:$0xf]
        %v1125 = vld [vmem:[%s190 + $0x11b8] sm:$0xff]
        %v1126 = vld [vmem:[%s190 + $0x11c0] sm:$0xff]
        %v1127 = vld [vmem:[%s190 + $0x11c8] sm:$0xff]
        %v1128 = vld [vmem:[%s190 + $0x11d0] sm:$0xff]
        %v1129 = vld [vmem:[%s190 + $0x11d8] sm:$0xf]
        %v1130 = vld [vmem:[%s190 + $0x11dc] sm:$0xff]
        %v1131 = vld [vmem:[%s190 + $0x11e4] sm:$0xff]
        %v1132 = vld [vmem:[%s190 + $0x11ec] sm:$0xff]
        %v1133 = vld [vmem:[%s190 + $0x11f4] sm:$0xff]
        %v1134 = vld [vmem:[%s190 + $0x11fc] sm:$0xf]
        %v1135 = vld [vmem:[%s190 + $0x1200] sm:$0xff]
        %v1136 = vld [vmem:[%s190 + $0x1208] sm:$0xff]
        %v1137 = vld [vmem:[%s190 + $0x1210] sm:$0xff]
        %v1138 = vld [vmem:[%s190 + $0x1218] sm:$0xff]
        %v1139 = vld [vmem:[%s190 + $0x1220] sm:$0xf]
        %v1140 = vld [vmem:[%s190 + $0x1224] sm:$0xff]
        %v1141 = vld [vmem:[%s190 + $0x122c] sm:$0xff]
        %v1142 = vld [vmem:[%s190 + $0x1234] sm:$0xff]
        %v1143 = vld [vmem:[%s190 + $0x123c] sm:$0xff]
        %v1144 = vld [vmem:[%s190 + $0x1244] sm:$0xf]
        %v1145 = vld [vmem:[%s190 + $0x1248] sm:$0xff]
        %v1146 = vld [vmem:[%s190 + $0x1250] sm:$0xff]
        %v1147 = vld [vmem:[%s190 + $0x1258] sm:$0xff]
        %v1148 = vld [vmem:[%s190 + $0x1260] sm:$0xff]
        %v1149 = vld [vmem:[%s190 + $0x1268] sm:$0xf]
        %v1150 = vld [vmem:[%s190 + $0x126c] sm:$0xff]
        %v1151 = vld [vmem:[%s190 + $0x1274] sm:$0xff]
        %v1152 = vld [vmem:[%s190 + $0x127c] sm:$0xff]
        %v1153 = vld [vmem:[%s190 + $0x1284] sm:$0xff]
        %v1154 = vld [vmem:[%s190 + $0x128c] sm:$0xf]
        %v1155 = vld [vmem:[%s190 + $0x1290] sm:$0xff]
        %v1156 = vld [vmem:[%s190 + $0x1298] sm:$0xff]
        %v1157 = vld [vmem:[%s190 + $0x12a0] sm:$0xff]
        %v1158 = vld [vmem:[%s190 + $0x12a8] sm:$0xff]
        %v1159 = vld [vmem:[%s190 + $0x12b0] sm:$0xf]
        %v1160 = vld [vmem:[%s190 + $0x12b4] sm:$0xff]
        %v1161 = vld [vmem:[%s190 + $0x12bc] sm:$0xff]
        %v1162 = vld [vmem:[%s190 + $0x12c4] sm:$0xff]
        %v1163 = vld [vmem:[%s190 + $0x12cc] sm:$0xff]
        %v1164 = vld [vmem:[%s190 + $0x12d4] sm:$0xf]
        %v1165 = vld [vmem:[%s190 + $0x12d8] sm:$0xff]
        %v1166 = vld [vmem:[%s190 + $0x12e0] sm:$0xff]
        %v1167 = vld [vmem:[%s190 + $0x12e8] sm:$0xff]
        %v1168 = vld [vmem:[%s190 + $0x12f0] sm:$0xff]
        %v1169 = vld [vmem:[%s190 + $0x12f8] sm:$0xf]
        %v1170 = vld [vmem:[%s190 + $0x12fc] sm:$0xff]
        %v1171 = vld [vmem:[%s190 + $0x1304] sm:$0xff]
        %v1172 = vld [vmem:[%s190 + $0x130c] sm:$0xff]
        %v1173 = vld [vmem:[%s190 + $0x1314] sm:$0xff]
        %v1174 = vld [vmem:[%s190 + $0x131c] sm:$0xf]
        %v1175 = vld [vmem:[%s190 + $0x1320] sm:$0xff]
        %v1176 = vld [vmem:[%s190 + $0x1328] sm:$0xff]
        %v1177 = vld [vmem:[%s190 + $0x1330] sm:$0xff]
        %v1178 = vld [vmem:[%s190 + $0x1338] sm:$0xff]
        %v1179 = vld [vmem:[%s190 + $0x1340] sm:$0xf]
        %v1180 = vld [vmem:[%s190 + $0x1344] sm:$0xff]
        %v1181 = vld [vmem:[%s190 + $0x134c] sm:$0xff]
        %v1182 = vld [vmem:[%s190 + $0x1354] sm:$0xff]
        %v1183 = vld [vmem:[%s190 + $0x135c] sm:$0xff]
        %v1184 = vld [vmem:[%s190 + $0x1364] sm:$0xf]
        %v1185 = vld [vmem:[%s190 + $0x1368] sm:$0xff]
        %v1186 = vld [vmem:[%s190 + $0x1370] sm:$0xff]
        %v1187 = vld [vmem:[%s190 + $0x1378] sm:$0xff]
        %v1188 = vld [vmem:[%s190 + $0x1380] sm:$0xff]
        %v1189 = vld [vmem:[%s190 + $0x1388] sm:$0xf]
        %v1190 = vld [vmem:[%s190 + $0x138c] sm:$0xff]
        %v1191 = vld [vmem:[%s190 + $0x1394] sm:$0xff]
        %v1192 = vld [vmem:[%s190 + $0x139c] sm:$0xff]
        %v1193 = vld [vmem:[%s190 + $0x13a4] sm:$0xff]
        %v1194 = vld [vmem:[%s190 + $0x13ac] sm:$0xf]
        %v1195 = vld [vmem:[%s190 + $0x13b0] sm:$0xff]
        %v1196 = vld [vmem:[%s190 + $0x13b8] sm:$0xff]
        %v1197 = vld [vmem:[%s190 + $0x13c0] sm:$0xff]
        %v1198 = vld [vmem:[%s190 + $0x13c8] sm:$0xff]
        %v1199 = vld [vmem:[%s190 + $0x13d0] sm:$0xf]
        %v1200 = vld [vmem:[%s190 + $0x13d4] sm:$0xff]
        %v1201 = vld [vmem:[%s190 + $0x13dc] sm:$0xff]
        %v1202 = vld [vmem:[%s190 + $0x13e4] sm:$0xff]
        %v1203 = vld [vmem:[%s190 + $0x13ec] sm:$0xff]
        %v1204 = vld [vmem:[%s190 + $0x13f4] sm:$0xf]
        %v1205 = vld [vmem:[%s190 + $0x13f8] sm:$0xff]
        %v1206 = vld [vmem:[%s190 + $0x1400] sm:$0xff]
        %v1207 = vld [vmem:[%s190 + $0x1408] sm:$0xff]
        %v1208 = vld [vmem:[%s190 + $0x1410] sm:$0xff]
        %v1209 = vld [vmem:[%s190 + $0x1418] sm:$0xf]
        %v1210 = vld [vmem:[%s190 + $0x141c] sm:$0xff]
        %v1211 = vld [vmem:[%s190 + $0x1424] sm:$0xff]
        %v1212 = vld [vmem:[%s190 + $0x142c] sm:$0xff]
        %v1213 = vld [vmem:[%s190 + $0x1434] sm:$0xff]
        %v1214 = vld [vmem:[%s190 + $0x143c] sm:$0xf]
        %v1215 = vld [vmem:[%s190 + $0x1440] sm:$0xff]
        %v1216 = vld [vmem:[%s190 + $0x1448] sm:$0xff]
        %v1217 = vld [vmem:[%s190 + $0x1450] sm:$0xff]
        %v1218 = vld [vmem:[%s190 + $0x1458] sm:$0xff]
        %v1219 = vld [vmem:[%s190 + $0x1460] sm:$0xf]
        %v1220 = vld [vmem:[%s190 + $0x1464] sm:$0xff]
        %v1221 = vld [vmem:[%s190 + $0x146c] sm:$0xff]
        %v1222 = vld [vmem:[%s190 + $0x1474] sm:$0xff]
        %v1223 = vld [vmem:[%s190 + $0x147c] sm:$0xff]
        %v1224 = vld [vmem:[%s190 + $0x1484] sm:$0xf]
        %v1225 = vld [vmem:[%s190 + $0x1488] sm:$0xff]
        %v1226 = vld [vmem:[%s190 + $0x1490] sm:$0xff]
        %v1227 = vld [vmem:[%s190 + $0x1498] sm:$0xff]
        %v1228 = vld [vmem:[%s190 + $0x14a0] sm:$0xff]
        %v1229 = vld [vmem:[%s190 + $0x14a8] sm:$0xf]
        %v1230 = vld [vmem:[%s190 + $0x14ac] sm:$0xff]
        %v1231 = vld [vmem:[%s190 + $0x14b4] sm:$0xff]
        %v1232 = vld [vmem:[%s190 + $0x14bc] sm:$0xff]
        %v1233 = vld [vmem:[%s190 + $0x14c4] sm:$0xff]
        %v1234 = vld [vmem:[%s190 + $0x14cc] sm:$0xf]
        %v1235 = vld [vmem:[%s190 + $0x14d0] sm:$0xff]
        %v1236 = vld [vmem:[%s190 + $0x14d8] sm:$0xff]
        %v1237 = vld [vmem:[%s190 + $0x14e0] sm:$0xff]
        %v1238 = vld [vmem:[%s190 + $0x14e8] sm:$0xff]
        %v1239 = vld [vmem:[%s190 + $0x14f0] sm:$0xf]
        %v1240 = vld [vmem:[%s190 + $0x14f4] sm:$0xff]
        %v1241 = vld [vmem:[%s190 + $0x14fc] sm:$0xff]
        %v1242 = vld [vmem:[%s190 + $0x1504] sm:$0xff]
        %v1243 = vld [vmem:[%s190 + $0x150c] sm:$0xff]
        %v1244 = vld [vmem:[%s190 + $0x1514] sm:$0xf]
        %v1245 = vld [vmem:[%s190 + $0x1518] sm:$0xff]
        %v1246 = vld [vmem:[%s190 + $0x1520] sm:$0xff]
        %v1247 = vld [vmem:[%s190 + $0x1528] sm:$0xff]
        %v1248 = vld [vmem:[%s190 + $0x1530] sm:$0xff]
        %v1249 = vld [vmem:[%s190 + $0x1538] sm:$0xf]
        %v1250 = vld [vmem:[%s190 + $0x153c] sm:$0xff]
        %v1251 = vld [vmem:[%s190 + $0x1544] sm:$0xff]
        %v1252 = vld [vmem:[%s190 + $0x154c] sm:$0xff]
        %v1253 = vld [vmem:[%s190 + $0x1554] sm:$0xff]
        %v1254 = vld [vmem:[%s190 + $0x155c] sm:$0xf]
        %v1255 = vld [vmem:[%s190 + $0x1560] sm:$0xff]
        %v1256 = vld [vmem:[%s190 + $0x1568] sm:$0xff]
        %v1257 = vld [vmem:[%s190 + $0x1570] sm:$0xff]
        %v1258 = vld [vmem:[%s190 + $0x1578] sm:$0xff]
        %v1259 = vld [vmem:[%s190 + $0x1580] sm:$0xf]
        %v1260 = vld [vmem:[%s190 + $0x1584] sm:$0xff]
        %v1261 = vld [vmem:[%s190 + $0x158c] sm:$0xff]
        %v1262 = vld [vmem:[%s190 + $0x1594] sm:$0xff]
        %v1263 = vld [vmem:[%s190 + $0x159c] sm:$0xff]
        %v1264 = vld [vmem:[%s190 + $0x15a4] sm:$0xf]
        %v1265 = vld [vmem:[%s190 + $0x15a8] sm:$0xff]
        %v1266 = vld [vmem:[%s190 + $0x15b0] sm:$0xff]
        %v1267 = vld [vmem:[%s190 + $0x15b8] sm:$0xff]
        %v1268 = vld [vmem:[%s190 + $0x15c0] sm:$0xff]
        %v1269 = vld [vmem:[%s190 + $0x15c8] sm:$0xf]
        %v1270 = vld [vmem:[%s190 + $0x15cc] sm:$0xff]
        %v1271 = vld [vmem:[%s190 + $0x15d4] sm:$0xff]
        %v1272 = vld [vmem:[%s190 + $0x15dc] sm:$0xff]
        %v1273 = vld [vmem:[%s190 + $0x15e4] sm:$0xff]
        %v1274 = vld [vmem:[%s190 + $0x15ec] sm:$0xf]
        %v1275 = vld [vmem:[%s190 + $0x15f0] sm:$0xff]
        %v1276 = vld [vmem:[%s190 + $0x15f8] sm:$0xff]
        %v1277 = vld [vmem:[%s190 + $0x1600] sm:$0xff]
        %v1278 = vld [vmem:[%s190 + $0x1608] sm:$0xff]
        %v1279 = vld [vmem:[%s190 + $0x1610] sm:$0xf]
        %v1280 = vld [vmem:[%s190 + $0x1614] sm:$0xff]
        %v1281 = vld [vmem:[%s190 + $0x161c] sm:$0xff]
        %v1282 = vld [vmem:[%s190 + $0x1624] sm:$0xff]
        %v1283 = vld [vmem:[%s190 + $0x162c] sm:$0xff]
        %v1284 = vld [vmem:[%s190 + $0x1634] sm:$0xf]
        %v1285 = vld [vmem:[%s190 + $0x1638] sm:$0xff]
        %v1286 = vld [vmem:[%s190 + $0x1640] sm:$0xff]
        %v1287 = vld [vmem:[%s190 + $0x1648] sm:$0xff]
        %v1288 = vld [vmem:[%s190 + $0x1650] sm:$0xff]
        %v1289 = vld [vmem:[%s190 + $0x1658] sm:$0xf]
        %v1290 = vld [vmem:[%s190 + $0x165c] sm:$0xff]
        %v1291 = vld [vmem:[%s190 + $0x1664] sm:$0xff]
        %v1292 = vld [vmem:[%s190 + $0x166c] sm:$0xff]
        %v1293 = vld [vmem:[%s190 + $0x1674] sm:$0xff]
        %v1294 = vld [vmem:[%s190 + $0x167c] sm:$0xf]
        %v1295 = vld [vmem:[%s190 + $0x1680] sm:$0xff]
        %v1296 = vld [vmem:[%s190 + $0x1688] sm:$0xff]
        %v1297 = vld [vmem:[%s190 + $0x1690] sm:$0xff]
        %v1298 = vld [vmem:[%s190 + $0x1698] sm:$0xff]
        %v1299 = vld [vmem:[%s190 + $0x16a0] sm:$0xf]
        %v1300 = vld [vmem:[%s190 + $0x16a4] sm:$0xff]
        %v1301 = vld [vmem:[%s190 + $0x16ac] sm:$0xff]
        %v1302 = vld [vmem:[%s190 + $0x16b4] sm:$0xff]
        %v1303 = vld [vmem:[%s190 + $0x16bc] sm:$0xff]
        %v1304 = vld [vmem:[%s190 + $0x16c4] sm:$0xf]
        %v1305 = vld [vmem:[%s190 + $0x16c8] sm:$0xff]
        %v1306 = vld [vmem:[%s190 + $0x16d0] sm:$0xff]
        %v1307 = vld [vmem:[%s190 + $0x16d8] sm:$0xff]
        %v1308 = vld [vmem:[%s190 + $0x16e0] sm:$0xff]
        %v1309 = vld [vmem:[%s190 + $0x16e8] sm:$0xf]
        %v1310 = vld [vmem:[%s190 + $0x16ec] sm:$0xff]
        %v1311 = vld [vmem:[%s190 + $0x16f4] sm:$0xff]
        %v1312 = vld [vmem:[%s190 + $0x16fc] sm:$0xff]
        %v1313 = vld [vmem:[%s190 + $0x1704] sm:$0xff]
        %v1314 = vld [vmem:[%s190 + $0x170c] sm:$0xf]
        %v1315 = vld [vmem:[%s190 + $0x1710] sm:$0xff]
        %v1316 = vld [vmem:[%s190 + $0x1718] sm:$0xff]
        %v1317 = vld [vmem:[%s190 + $0x1720] sm:$0xff]
        %v1318 = vld [vmem:[%s190 + $0x1728] sm:$0xff]
        %v1319 = vld [vmem:[%s190 + $0x1730] sm:$0xf]
        %v1320 = vld [vmem:[%s190 + $0x1734] sm:$0xff]
        %v1321 = vld [vmem:[%s190 + $0x173c] sm:$0xff]
        %v1322 = vld [vmem:[%s190 + $0x1744] sm:$0xff]
        %v1323 = vld [vmem:[%s190 + $0x174c] sm:$0xff]
        %v1324 = vld [vmem:[%s190 + $0x1754] sm:$0xf]
        %v1325 = vld [vmem:[%s190 + $0x1758] sm:$0xff]
        %v1326 = vld [vmem:[%s190 + $0x1760] sm:$0xff]
        %v1327 = vld [vmem:[%s190 + $0x1768] sm:$0xff]
        %v1328 = vld [vmem:[%s190 + $0x1770] sm:$0xff]
        %v1329 = vld [vmem:[%s190 + $0x1778] sm:$0xf]
        %v1330 = vld [vmem:[%s190 + $0x177c] sm:$0xff]
        %v1331 = vld [vmem:[%s190 + $0x1784] sm:$0xff]
        %v1332 = vld [vmem:[%s190 + $0x178c] sm:$0xff]
        %v1333 = vld [vmem:[%s190 + $0x1794] sm:$0xff]
        %v1334 = vld [vmem:[%s190 + $0x179c] sm:$0xf]
        %v1335 = vld [vmem:[%s190 + $0x17a0] sm:$0xff]
        %v1336 = vld [vmem:[%s190 + $0x17a8] sm:$0xff]
        %v1337 = vld [vmem:[%s190 + $0x17b0] sm:$0xff]
        %v1338 = vld [vmem:[%s190 + $0x17b8] sm:$0xff]
        %v1339 = vld [vmem:[%s190 + $0x17c0] sm:$0xf]
        %v1340 = vld [vmem:[%s190 + $0x17c4] sm:$0xff]
        %v1341 = vld [vmem:[%s190 + $0x17cc] sm:$0xff]
        %v1342 = vld [vmem:[%s190 + $0x17d4] sm:$0xff]
        %v1343 = vld [vmem:[%s190 + $0x17dc] sm:$0xff]
        %v1344 = vld [vmem:[%s190 + $0x17e4] sm:$0xf]
        %v1345 = vld [vmem:[%s190 + $0x17e8] sm:$0xff]
        %v1346 = vld [vmem:[%s190 + $0x17f0] sm:$0xff]
        %v1347 = vld [vmem:[%s190 + $0x17f8] sm:$0xff]
        %v1348 = vld [vmem:[%s190 + $0x1800] sm:$0xff]
        %v1349 = vld [vmem:[%s190 + $0x1808] sm:$0xf]
        %v1350 = vld [vmem:[%s190 + $0x180c] sm:$0xff]
        %v1351 = vld [vmem:[%s190 + $0x1814] sm:$0xff]
        %v1352 = vld [vmem:[%s190 + $0x181c] sm:$0xff]
        %v1353 = vld [vmem:[%s190 + $0x1824] sm:$0xff]
        %v1354 = vld [vmem:[%s190 + $0x182c] sm:$0xf]
        %v1355 = vld [vmem:[%s190 + $0x1830] sm:$0xff]
        %v1356 = vld [vmem:[%s190 + $0x1838] sm:$0xff]
        %v1357 = vld [vmem:[%s190 + $0x1840] sm:$0xff]
        %v1358 = vld [vmem:[%s190 + $0x1848] sm:$0xff]
        %v1359 = vld [vmem:[%s190 + $0x1850] sm:$0xf]
        %v1360 = vld [vmem:[%s190 + $0x1854] sm:$0xff]
        %v1361 = vld [vmem:[%s190 + $0x185c] sm:$0xff]
        %v1362 = vld [vmem:[%s190 + $0x1864] sm:$0xff]
        %v1363 = vld [vmem:[%s190 + $0x186c] sm:$0xff]
        %v1364 = vld [vmem:[%s190 + $0x1874] sm:$0xf]
        %v1365 = vld [vmem:[%s190 + $0x1878] sm:$0xff]
        %v1366 = vld [vmem:[%s190 + $0x1880] sm:$0xff]
        %v1367 = vld [vmem:[%s190 + $0x1888] sm:$0xff]
        %v1368 = vld [vmem:[%s190 + $0x1890] sm:$0xff]
        %v1369 = vld [vmem:[%s190 + $0x1898] sm:$0xf]
        %v1370 = vld [vmem:[%s190 + $0x189c] sm:$0xff]
        %v1371 = vld [vmem:[%s190 + $0x18a4] sm:$0xff]
        %v1372 = vld [vmem:[%s190 + $0x18ac] sm:$0xff]
        %v1373 = vld [vmem:[%s190 + $0x18b4] sm:$0xff]
        %v1374 = vld [vmem:[%s190 + $0x18bc] sm:$0xf]
        %v1375 = vld [vmem:[%s190 + $0x18c0] sm:$0xff]
        %v1376 = vld [vmem:[%s190 + $0x18c8] sm:$0xff]
        %v1377 = vld [vmem:[%s190 + $0x18d0] sm:$0xff]
        %v1378 = vld [vmem:[%s190 + $0x18d8] sm:$0xff]
        %v1379 = vld [vmem:[%s190 + $0x18e0] sm:$0xf]
        %v1380 = vld [vmem:[%s190 + $0x18e4] sm:$0xff]
        %v1381 = vld [vmem:[%s190 + $0x18ec] sm:$0xff]
        %v1382 = vld [vmem:[%s190 + $0x18f4] sm:$0xff]
        %v1383 = vld [vmem:[%s190 + $0x18fc] sm:$0xff]
        %v1384 = vld [vmem:[%s190 + $0x1904] sm:$0xf]
        %v1385 = vld [vmem:[%s190 + $0x1908] sm:$0xff]
        %v1386 = vld [vmem:[%s190 + $0x1910] sm:$0xff]
        %v1387 = vld [vmem:[%s190 + $0x1918] sm:$0xff]
        %v1388 = vld [vmem:[%s190 + $0x1920] sm:$0xff]
        %v1389 = vld [vmem:[%s190 + $0x1928] sm:$0xf]
        %v1390 = vld [vmem:[%s190 + $0x192c] sm:$0xff]
        %v1391 = vld [vmem:[%s190 + $0x1934] sm:$0xff]
        %v1392 = vld [vmem:[%s190 + $0x193c] sm:$0xff]
        %v1393 = vld [vmem:[%s190 + $0x1944] sm:$0xff]
        %v1394 = vld [vmem:[%s190 + $0x194c] sm:$0xf]
        %v1395 = vld [vmem:[%s190 + $0x1950] sm:$0xff]
        %v1396 = vld [vmem:[%s190 + $0x1958] sm:$0xff]
        %v1397 = vld [vmem:[%s190 + $0x1960] sm:$0xff]
        %v1398 = vld [vmem:[%s190 + $0x1968] sm:$0xff]
        %v1399 = vld [vmem:[%s190 + $0x1970] sm:$0xf]
        %v1400 = vld [vmem:[%s190 + $0x1974] sm:$0xff]
        %v1401 = vld [vmem:[%s190 + $0x197c] sm:$0xff]
        %v1402 = vld [vmem:[%s190 + $0x1984] sm:$0xff]
        %v1403 = vld [vmem:[%s190 + $0x198c] sm:$0xff]
        %v1404 = vld [vmem:[%s190 + $0x1994] sm:$0xf]
        %v1405 = vld [vmem:[%s190 + $0x1998] sm:$0xff]
        %v1406 = vld [vmem:[%s190 + $0x19a0] sm:$0xff]
        %v1407 = vld [vmem:[%s190 + $0x19a8] sm:$0xff]
        %v1408 = vld [vmem:[%s190 + $0x19b0] sm:$0xff]
        %v1409 = vld [vmem:[%s190 + $0x19b8] sm:$0xf]
        %v1410 = vld [vmem:[%s190 + $0x19bc] sm:$0xff]
        %v1411 = vld [vmem:[%s190 + $0x19c4] sm:$0xff]
        %v1412 = vld [vmem:[%s190 + $0x19cc] sm:$0xff]
        %v1413 = vld [vmem:[%s190 + $0x19d4] sm:$0xff]
        %v1414 = vld [vmem:[%s190 + $0x19dc] sm:$0xf]
        %v1415 = vld [vmem:[%s190 + $0x19e0] sm:$0xff]
        %v1416 = vld [vmem:[%s190 + $0x19e8] sm:$0xff]
        %v1417 = vld [vmem:[%s190 + $0x19f0] sm:$0xff]
        %v1418 = vld [vmem:[%s190 + $0x19f8] sm:$0xff]
        %v1419 = vld [vmem:[%s190 + $0x1a00] sm:$0xf]
        %v1420 = vld [vmem:[%s190 + $0x1a04] sm:$0xff]
        %v1421 = vld [vmem:[%s190 + $0x1a0c] sm:$0xff]
        %v1422 = vld [vmem:[%s190 + $0x1a14] sm:$0xff]
        %v1423 = vld [vmem:[%s190 + $0x1a1c] sm:$0xff]
        %v1424 = vld [vmem:[%s190 + $0x1a24] sm:$0xf]
        %v1425 = vld [vmem:[%s190 + $0x1a28] sm:$0xff]
        %v1426 = vld [vmem:[%s190 + $0x1a30] sm:$0xff]
        %v1427 = vld [vmem:[%s190 + $0x1a38] sm:$0xff]
        %v1428 = vld [vmem:[%s190 + $0x1a40] sm:$0xff]
        %v1429 = vld [vmem:[%s190 + $0x1a48] sm:$0xf]
        %v1430 = vld [vmem:[%s190 + $0x1a4c] sm:$0xff]
        %v1431 = vld [vmem:[%s190 + $0x1a54] sm:$0xff]
        %v1432 = vld [vmem:[%s190 + $0x1a5c] sm:$0xff]
        %v1433 = vld [vmem:[%s190 + $0x1a64] sm:$0xff]
        %v1434 = vld [vmem:[%s190 + $0x1a6c] sm:$0xf]
        %v1435 = vld [vmem:[%s190 + $0x1a70] sm:$0xff]
        %v1436 = vld [vmem:[%s190 + $0x1a78] sm:$0xff]
        %v1437 = vld [vmem:[%s190 + $0x1a80] sm:$0xff]
        %v1438 = vld [vmem:[%s190 + $0x1a88] sm:$0xff]
        %v1439 = vld [vmem:[%s190 + $0x1a90] sm:$0xf]
        %v1440 = vld [vmem:[%s190 + $0x1a94] sm:$0xff]
        %v1441 = vld [vmem:[%s190 + $0x1a9c] sm:$0xff]
        %v1442 = vld [vmem:[%s190 + $0x1aa4] sm:$0xff]
        %v1443 = vld [vmem:[%s190 + $0x1aac] sm:$0xff]
        %v1444 = vld [vmem:[%s190 + $0x1ab4] sm:$0xf]
        %v1445 = vld [vmem:[%s190 + $0x1ab8] sm:$0xff]
        %v1446 = vld [vmem:[%s190 + $0x1ac0] sm:$0xff]
        %v1447 = vld [vmem:[%s190 + $0x1ac8] sm:$0xff]
        %v1448 = vld [vmem:[%s190 + $0x1ad0] sm:$0xff]
        %v1449 = vld [vmem:[%s190 + $0x1ad8] sm:$0xf]
        %v1450 = vld [vmem:[%s190 + $0x1adc] sm:$0xff]
        %v1451 = vld [vmem:[%s190 + $0x1ae4] sm:$0xff]
        %v1452 = vld [vmem:[%s190 + $0x1aec] sm:$0xff]
        %v1453 = vld [vmem:[%s190 + $0x1af4] sm:$0xff]
        %v1454 = vld [vmem:[%s190 + $0x1afc] sm:$0xf]
        %v1455 = vld [vmem:[%s190 + $0x1b00] sm:$0xff]
        %v1456 = vld [vmem:[%s190 + $0x1b08] sm:$0xff]
        %v1457 = vld [vmem:[%s190 + $0x1b10] sm:$0xff]
        %v1458 = vld [vmem:[%s190 + $0x1b18] sm:$0xff]
        %v1459 = vld [vmem:[%s190 + $0x1b20] sm:$0xf]
        %v1460 = vld [vmem:[%s190 + $0x1b24] sm:$0xff]
        %v1461 = vld [vmem:[%s190 + $0x1b2c] sm:$0xff]
        %v1462 = vld [vmem:[%s190 + $0x1b34] sm:$0xff]
        %v1463 = vld [vmem:[%s190 + $0x1b3c] sm:$0xff]
        %v1464 = vld [vmem:[%s190 + $0x1b44] sm:$0xf]
        %v1465 = vld [vmem:[%s190 + $0x1b48] sm:$0xff]
        %v1466 = vld [vmem:[%s190 + $0x1b50] sm:$0xff]
        %v1467 = vld [vmem:[%s190 + $0x1b58] sm:$0xff]
        %v1468 = vld [vmem:[%s190 + $0x1b60] sm:$0xff]
        %v1469 = vld [vmem:[%s190 + $0x1b68] sm:$0xf]
        %v1470 = vld [vmem:[%s190 + $0x1b6c] sm:$0xff]
        %v1471 = vld [vmem:[%s190 + $0x1b74] sm:$0xff]
        %v1472 = vld [vmem:[%s190 + $0x1b7c] sm:$0xff]
        %v1473 = vld [vmem:[%s190 + $0x1b84] sm:$0xff]
        %v1474 = vld [vmem:[%s190 + $0x1b8c] sm:$0xf]
        %v1475 = vld [vmem:[%s190 + $0x1b90] sm:$0xff]
        %v1476 = vld [vmem:[%s190 + $0x1b98] sm:$0xff]
        %v1477 = vld [vmem:[%s190 + $0x1ba0] sm:$0xff]
        %v1478 = vld [vmem:[%s190 + $0x1ba8] sm:$0xff]
        %v1479 = vld [vmem:[%s190 + $0x1bb0] sm:$0xf]
        %v1480 = vld [vmem:[%s190 + $0x1bb4] sm:$0xff]
        %v1481 = vld [vmem:[%s190 + $0x1bbc] sm:$0xff]
        %v1482 = vld [vmem:[%s190 + $0x1bc4] sm:$0xff]
        %v1483 = vld [vmem:[%s190 + $0x1bcc] sm:$0xff]
        %v1484 = vld [vmem:[%s190 + $0x1bd4] sm:$0xf]
        %v1485 = vld [vmem:[%s190 + $0x1bd8] sm:$0xff]
        %v1486 = vld [vmem:[%s190 + $0x1be0] sm:$0xff]
        %v1487 = vld [vmem:[%s190 + $0x1be8] sm:$0xff]
        %v1488 = vld [vmem:[%s190 + $0x1bf0] sm:$0xff]
        %v1489 = vld [vmem:[%s190 + $0x1bf8] sm:$0xf]
        %v1490 = vld [vmem:[%s190 + $0x1bfc] sm:$0xff]
        %v1491 = vld [vmem:[%s190 + $0x1c04] sm:$0xff]
        %v1492 = vld [vmem:[%s190 + $0x1c0c] sm:$0xff]
        %v1493 = vld [vmem:[%s190 + $0x1c14] sm:$0xff]
        %v1494 = vld [vmem:[%s190 + $0x1c1c] sm:$0xf]
        %v1495 = vld [vmem:[%s190 + $0x1c20] sm:$0xff]
        %v1496 = vld [vmem:[%s190 + $0x1c28] sm:$0xff]
        %v1497 = vld [vmem:[%s190 + $0x1c30] sm:$0xff]
        %v1498 = vld [vmem:[%s190 + $0x1c38] sm:$0xff]
        %v1499 = vld [vmem:[%s190 + $0x1c40] sm:$0xf]
        %v1500 = vld [vmem:[%s190 + $0x1c44] sm:$0xff]
        %v1501 = vld [vmem:[%s190 + $0x1c4c] sm:$0xff]
        %v1502 = vld [vmem:[%s190 + $0x1c54] sm:$0xff]
        %v1503 = vld [vmem:[%s190 + $0x1c5c] sm:$0xff]
        %v1504 = vld [vmem:[%s190 + $0x1c64] sm:$0xf]
        %v1505 = vld [vmem:[%s190 + $0x1c68] sm:$0xff]
        %v1506 = vld [vmem:[%s190 + $0x1c70] sm:$0xff]
        %v1507 = vld [vmem:[%s190 + $0x1c78] sm:$0xff]
        %v1508 = vld [vmem:[%s190 + $0x1c80] sm:$0xff]
        %v1509 = vld [vmem:[%s190 + $0x1c88] sm:$0xf]
        %v1510 = vld [vmem:[%s190 + $0x1c8c] sm:$0xff]
        %v1511 = vld [vmem:[%s190 + $0x1c94] sm:$0xff]
        %v1512 = vld [vmem:[%s190 + $0x1c9c] sm:$0xff]
        %v1513 = vld [vmem:[%s190 + $0x1ca4] sm:$0xff]
        %v1514 = vld [vmem:[%s190 + $0x1cac] sm:$0xf]
        %v1515 = vld [vmem:[%s190 + $0x1cb0] sm:$0xff]
        %v1516 = vld [vmem:[%s190 + $0x1cb8] sm:$0xff]
        %v1517 = vld [vmem:[%s190 + $0x1cc0] sm:$0xff]
        %v1518 = vld [vmem:[%s190 + $0x1cc8] sm:$0xff]
        %v1519 = vld [vmem:[%s190 + $0x1cd0] sm:$0xf]
        %v1520 = vld [vmem:[%s190 + $0x1cd4] sm:$0xff]
        %v1521 = vld [vmem:[%s190 + $0x1cdc] sm:$0xff]
        %v1522 = vld [vmem:[%s190 + $0x1ce4] sm:$0xff]
        %v1523 = vld [vmem:[%s190 + $0x1cec] sm:$0xff]
        %v1524 = vld [vmem:[%s190 + $0x1cf4] sm:$0xf]
        %v1525 = vld [vmem:[%s190 + $0x1cf8] sm:$0xff]
        %v1526 = vld [vmem:[%s190 + $0x1d00] sm:$0xff]
        %v1527 = vld [vmem:[%s190 + $0x1d08] sm:$0xff]
        %v1528 = vld [vmem:[%s190 + $0x1d10] sm:$0xff]
        %v1529 = vld [vmem:[%s190 + $0x1d18] sm:$0xf]
        %v1530 = vld [vmem:[%s190 + $0x1d1c] sm:$0xff]
        %v1531 = vld [vmem:[%s190 + $0x1d24] sm:$0xff]
        %v1532 = vld [vmem:[%s190 + $0x1d2c] sm:$0xff]
        %v1533 = vld [vmem:[%s190 + $0x1d34] sm:$0xff]
        %v1534 = vld [vmem:[%s190 + $0x1d3c] sm:$0xf]
        %v1535 = vld [vmem:[%s190 + $0x1d40] sm:$0xff]
        %v1536 = vld [vmem:[%s190 + $0x1d48] sm:$0xff]
        %v1537 = vld [vmem:[%s190 + $0x1d50] sm:$0xff]
        %v1538 = vld [vmem:[%s190 + $0x1d58] sm:$0xff]
        %v1539 = vld [vmem:[%s190 + $0x1d60] sm:$0xf]
        %v1540 = vld [vmem:[%s190 + $0x1d64] sm:$0xff]
        %v1541 = vld [vmem:[%s190 + $0x1d6c] sm:$0xff]
        %v1542 = vld [vmem:[%s190 + $0x1d74] sm:$0xff]
        %v1543 = vld [vmem:[%s190 + $0x1d7c] sm:$0xff]
        %v1544 = vld [vmem:[%s190 + $0x1d84] sm:$0xf]
        %v1545 = vld [vmem:[%s190 + $0x1d88] sm:$0xff]
        %v1546 = vld [vmem:[%s190 + $0x1d90] sm:$0xff]
        %v1547 = vld [vmem:[%s190 + $0x1d98] sm:$0xff]
        %v1548 = vld [vmem:[%s190 + $0x1da0] sm:$0xff]
        %v1549 = vld [vmem:[%s190 + $0x1da8] sm:$0xf]
        %v1550 = vld [vmem:[%s190 + $0x1dac] sm:$0xff]
        %v1551 = vld [vmem:[%s190 + $0x1db4] sm:$0xff]
        %v1552 = vld [vmem:[%s190 + $0x1dbc] sm:$0xff]
        %v1553 = vld [vmem:[%s190 + $0x1dc4] sm:$0xff]
        %v1554 = vld [vmem:[%s190 + $0x1dcc] sm:$0xf]
        %v1555 = vld [vmem:[%s190 + $0x1dd0] sm:$0xff]
        %v1556 = vld [vmem:[%s190 + $0x1dd8] sm:$0xff]
        %v1557 = vld [vmem:[%s190 + $0x1de0] sm:$0xff]
        %v1558 = vld [vmem:[%s190 + $0x1de8] sm:$0xff]
        %v1559 = vld [vmem:[%s190 + $0x1df0] sm:$0xf]
        %v1560 = vld [vmem:[%s190 + $0x1df4] sm:$0xff]
        %v1561 = vld [vmem:[%s190 + $0x1dfc] sm:$0xff]
        %v1562 = vld [vmem:[%s190 + $0x1e04] sm:$0xff]
        %v1563 = vld [vmem:[%s190 + $0x1e0c] sm:$0xff]
        %v1564 = vld [vmem:[%s190 + $0x1e14] sm:$0xf]
        %v1565 = vld [vmem:[%s190 + $0x1e18] sm:$0xff]
        %v1566 = vld [vmem:[%s190 + $0x1e20] sm:$0xff]
        %v1567 = vld [vmem:[%s190 + $0x1e28] sm:$0xff]
        %v1568 = vld [vmem:[%s190 + $0x1e30] sm:$0xff]
        %v1569 = vld [vmem:[%s190 + $0x1e38] sm:$0xf]
        %v1570 = vld [vmem:[%s190 + $0x1e3c] sm:$0xff]
        %v1571 = vld [vmem:[%s190 + $0x1e44] sm:$0xff]
        %v1572 = vld [vmem:[%s190 + $0x1e4c] sm:$0xff]
        %v1573 = vld [vmem:[%s190 + $0x1e54] sm:$0xff]
        %v1574 = vld [vmem:[%s190 + $0x1e5c] sm:$0xf]
        %v1575 = vld [vmem:[%s190 + $0x1e60] sm:$0xff]
        %v1576 = vld [vmem:[%s190 + $0x1e68] sm:$0xff]
        %v1577 = vld [vmem:[%s190 + $0x1e70] sm:$0xff]
        %v1578 = vld [vmem:[%s190 + $0x1e78] sm:$0xff]
        %v1579 = vld [vmem:[%s190 + $0x1e80] sm:$0xf]
        %v1580 = vld [vmem:[%s190 + $0x1e84] sm:$0xff]
        %v1581 = vld [vmem:[%s190 + $0x1e8c] sm:$0xff]
        %v1582 = vld [vmem:[%s190 + $0x1e94] sm:$0xff]
        %v1583 = vld [vmem:[%s190 + $0x1e9c] sm:$0xff]
        %v1584 = vld [vmem:[%s190 + $0x1ea4] sm:$0xf]
        %v1585 = vld [vmem:[%s190 + $0x1ea8] sm:$0xff]
        %v1586 = vld [vmem:[%s190 + $0x1eb0] sm:$0xff]
        %v1587 = vld [vmem:[%s190 + $0x1eb8] sm:$0xff]
        %v1588 = vld [vmem:[%s190 + $0x1ec0] sm:$0xff]
        %v1589 = vld [vmem:[%s190 + $0x1ec8] sm:$0xf]
        %v1590 = vld [vmem:[%s190 + $0x1ecc] sm:$0xff]
        %v1591 = vld [vmem:[%s190 + $0x1ed4] sm:$0xff]
        %v1592 = vld [vmem:[%s190 + $0x1edc] sm:$0xff]
        %v1593 = vld [vmem:[%s190 + $0x1ee4] sm:$0xff]
        %v1594 = vld [vmem:[%s190 + $0x1eec] sm:$0xf]
        %v1595 = vld [vmem:[%s190 + $0x1ef0] sm:$0xff]
        %v1596 = vld [vmem:[%s190 + $0x1ef8] sm:$0xff]
        %v1597 = vld [vmem:[%s190 + $0x1f00] sm:$0xff]
        %v1598 = vld [vmem:[%s190 + $0x1f08] sm:$0xff]
        %v1599 = vld [vmem:[%s190 + $0x1f10] sm:$0xf]
        %v1600 = vld [vmem:[%s190 + $0x1f14] sm:$0xff]
        %v1601 = vld [vmem:[%s190 + $0x1f1c] sm:$0xff]
        %v1602 = vld [vmem:[%s190 + $0x1f24] sm:$0xff]
        %v1603 = vld [vmem:[%s190 + $0x1f2c] sm:$0xff]
        %v1604 = vld [vmem:[%s190 + $0x1f34] sm:$0xf]
        %v1605 = vld [vmem:[%s190 + $0x1f38] sm:$0xff]
        %v1606 = vld [vmem:[%s190 + $0x1f40] sm:$0xff]
        %v1607 = vld [vmem:[%s190 + $0x1f48] sm:$0xff]
        %v1608 = vld [vmem:[%s190 + $0x1f50] sm:$0xff]
        %v1609 = vld [vmem:[%s190 + $0x1f58] sm:$0xf]
        %v1610 = vld [vmem:[%s190 + $0x1f5c] sm:$0xff]
        %v1611 = vld [vmem:[%s190 + $0x1f64] sm:$0xff]
        %v1612 = vld [vmem:[%s190 + $0x1f6c] sm:$0xff]
        %v1613 = vld [vmem:[%s190 + $0x1f74] sm:$0xff]
        %v1614 = vld [vmem:[%s190 + $0x1f7c] sm:$0xf]
        %v1615 = vld [vmem:[%s190 + $0x1f80] sm:$0xff]
        %v1616 = vld [vmem:[%s190 + $0x1f88] sm:$0xff]
        %v1617 = vld [vmem:[%s190 + $0x1f90] sm:$0xff]
        %v1618 = vld [vmem:[%s190 + $0x1f98] sm:$0xff]
        %v1619 = vld [vmem:[%s190 + $0x1fa0] sm:$0xf]
        %v1620 = vld [vmem:[%s190 + $0x1fa4] sm:$0xff]
        %v1621 = vld [vmem:[%s190 + $0x1fac] sm:$0xff]
        %v1622 = vld [vmem:[%s190 + $0x1fb4] sm:$0xff]
        %v1623 = vld [vmem:[%s190 + $0x1fbc] sm:$0xff]
        %v1624 = vld [vmem:[%s190 + $0x1fc4] sm:$0xf]
        %v1625 = vld [vmem:[%s190 + $0x1fc8] sm:$0xff]
        %v1626 = vld [vmem:[%s190 + $0x1fd0] sm:$0xff]
        %v1627 = vld [vmem:[%s190 + $0x1fd8] sm:$0xff]
        %v1628 = vld [vmem:[%s190 + $0x1fe0] sm:$0xff]
        %v1629 = vld [vmem:[%s190 + $0x1fe8] sm:$0xf]
        %v1630 = vld [vmem:[%s190 + $0x1fec] sm:$0xff]
        %v1631 = vld [vmem:[%s190 + $0x1ff4] sm:$0xff]
        %v1632 = vld [vmem:[%s190 + $0x1ffc] sm:$0xff]
        %v1633 = vld [vmem:[%s190 + $0x2004] sm:$0xff]
        %v1634 = vld [vmem:[%s190 + $0x200c] sm:$0xf]
        %v1635 = vld [vmem:[%s190 + $0x2010] sm:$0xff]
        %v1636 = vld [vmem:[%s190 + $0x2018] sm:$0xff]
        %v1637 = vld [vmem:[%s190 + $0x2020] sm:$0xff]
        %v1638 = vld [vmem:[%s190 + $0x2028] sm:$0xff]
        %v1639 = vld [vmem:[%s190 + $0x2030] sm:$0xf]
        %v1640 = vld [vmem:[%s190 + $0x2034] sm:$0xff]
        %v1641 = vld [vmem:[%s190 + $0x203c] sm:$0xff]
        %v1642 = vld [vmem:[%s190 + $0x2044] sm:$0xff]
        %v1643 = vld [vmem:[%s190 + $0x204c] sm:$0xff]
        %v1644 = vld [vmem:[%s190 + $0x2054] sm:$0xf]
        %v1645 = vld [vmem:[%s190 + $0x2058] sm:$0xff]
        %v1646 = vld [vmem:[%s190 + $0x2060] sm:$0xff]
        %v1647 = vld [vmem:[%s190 + $0x2068] sm:$0xff]
        %v1648 = vld [vmem:[%s190 + $0x2070] sm:$0xff]
        %v1649 = vld [vmem:[%s190 + $0x2078] sm:$0xf]
        %v1650 = vld [vmem:[%s190 + $0x207c] sm:$0xff]
        %v1651 = vld [vmem:[%s190 + $0x2084] sm:$0xff]
        %v1652 = vld [vmem:[%s190 + $0x208c] sm:$0xff]
        %v1653 = vld [vmem:[%s190 + $0x2094] sm:$0xff]
        %v1654 = vld [vmem:[%s190 + $0x209c] sm:$0xf]
        %v1655 = vld [vmem:[%s190 + $0x20a0] sm:$0xff]
        %v1656 = vld [vmem:[%s190 + $0x20a8] sm:$0xff]
        %v1657 = vld [vmem:[%s190 + $0x20b0] sm:$0xff]
        %v1658 = vld [vmem:[%s190 + $0x20b8] sm:$0xff]
        %v1659 = vld [vmem:[%s190 + $0x20c0] sm:$0xf]
        %v1660 = vld [vmem:[%s190 + $0x20c4] sm:$0xff]
        %v1661 = vld [vmem:[%s190 + $0x20cc] sm:$0xff]
        %v1662 = vld [vmem:[%s190 + $0x20d4] sm:$0xff]
        %v1663 = vld [vmem:[%s190 + $0x20dc] sm:$0xff]
        %v1664 = vld [vmem:[%s190 + $0x20e4] sm:$0xf]
        %v1665 = vld [vmem:[%s190 + $0x20e8] sm:$0xff]
        %v1666 = vld [vmem:[%s190 + $0x20f0] sm:$0xff]
        %v1667 = vld [vmem:[%s190 + $0x20f8] sm:$0xff]
        %v1668 = vld [vmem:[%s190 + $0x2100] sm:$0xff]
        %v1669 = vld [vmem:[%s190 + $0x2108] sm:$0xf]
        %v1670 = vld [vmem:[%s190 + $0x210c] sm:$0xff]
        %v1671 = vld [vmem:[%s190 + $0x2114] sm:$0xff]
        %v1672 = vld [vmem:[%s190 + $0x211c] sm:$0xff]
        %v1673 = vld [vmem:[%s190 + $0x2124] sm:$0xff]
        %v1674 = vld [vmem:[%s190 + $0x212c] sm:$0xf]
        %v1675 = vld [vmem:[%s190 + $0x2130] sm:$0xff]
        %v1676 = vld [vmem:[%s190 + $0x2138] sm:$0xff]
        %v1677 = vld [vmem:[%s190 + $0x2140] sm:$0xff]
        %v1678 = vld [vmem:[%s190 + $0x2148] sm:$0xff]
        %v1679 = vld [vmem:[%s190 + $0x2150] sm:$0xf]
        %v1680 = vld [vmem:[%s190 + $0x2154] sm:$0xff]
        %v1681 = vld [vmem:[%s190 + $0x215c] sm:$0xff]
        %v1682 = vld [vmem:[%s190 + $0x2164] sm:$0xff]
        %v1683 = vld [vmem:[%s190 + $0x216c] sm:$0xff]
        %v1684 = vld [vmem:[%s190 + $0x2174] sm:$0xf]
        %v1685 = vld [vmem:[%s190 + $0x2178] sm:$0xff]
        %v1686 = vld [vmem:[%s190 + $0x2180] sm:$0xff]
        %v1687 = vld [vmem:[%s190 + $0x2188] sm:$0xff]
        %v1688 = vld [vmem:[%s190 + $0x2190] sm:$0xff]
        %v1689 = vld [vmem:[%s190 + $0x2198] sm:$0xf]
        %v1690 = vld [vmem:[%s190 + $0x219c] sm:$0xff]
        %v1691 = vld [vmem:[%s190 + $0x21a4] sm:$0xff]
        %v1692 = vld [vmem:[%s190 + $0x21ac] sm:$0xff]
        %v1693 = vld [vmem:[%s190 + $0x21b4] sm:$0xff]
        %v1694 = vld [vmem:[%s190 + $0x21bc] sm:$0xf]
        %v1695 = vld [vmem:[%s190 + $0x21c0] sm:$0xff]
        %v1696 = vld [vmem:[%s190 + $0x21c8] sm:$0xff]
        %v1697 = vld [vmem:[%s190 + $0x21d0] sm:$0xff]
        %v1698 = vld [vmem:[%s190 + $0x21d8] sm:$0xff]
        %v1699 = vld [vmem:[%s190 + $0x21e0] sm:$0xf]
        %v1700 = vld [vmem:[%s190 + $0x21e4] sm:$0xff]
        %v1701 = vld [vmem:[%s190 + $0x21ec] sm:$0xff]
        %v1702 = vld [vmem:[%s190 + $0x21f4] sm:$0xff]
        %v1703 = vld [vmem:[%s190 + $0x21fc] sm:$0xff]
        %v1704 = vld [vmem:[%s190 + $0x2204] sm:$0xf]
        %v1705 = vld [vmem:[%s190 + $0x2208] sm:$0xff]
        %v1706 = vld [vmem:[%s190 + $0x2210] sm:$0xff]
        %v1707 = vld [vmem:[%s190 + $0x2218] sm:$0xff]
        %v1708 = vld [vmem:[%s190 + $0x2220] sm:$0xff]
        %v1709 = vld [vmem:[%s190 + $0x2228] sm:$0xf]
        %v1710 = vld [vmem:[%s190 + $0x222c] sm:$0xff]
        %v1711 = vld [vmem:[%s190 + $0x2234] sm:$0xff]
        %v1712 = vld [vmem:[%s190 + $0x223c] sm:$0xff]
        %v1713 = vld [vmem:[%s190 + $0x2244] sm:$0xff]
        %v1714 = vld [vmem:[%s190 + $0x224c] sm:$0xf]
        %v1715 = vld [vmem:[%s190 + $0x2250] sm:$0xff]
        %v1716 = vld [vmem:[%s190 + $0x2258] sm:$0xff]
        %v1717 = vld [vmem:[%s190 + $0x2260] sm:$0xff]
        %v1718 = vld [vmem:[%s190 + $0x2268] sm:$0xff]
        %v1719 = vld [vmem:[%s190 + $0x2270] sm:$0xf]
        %v1720 = vld [vmem:[%s190 + $0x2274] sm:$0xff]
        %v1721 = vld [vmem:[%s190 + $0x227c] sm:$0xff]
        %v1722 = vld [vmem:[%s190 + $0x2284] sm:$0xff]
        %v1723 = vld [vmem:[%s190 + $0x228c] sm:$0xff]
        %v1724 = vld [vmem:[%s190 + $0x2294] sm:$0xf]
        %v1725 = vld [vmem:[%s190 + $0x2298] sm:$0xff]
        %v1726 = vld [vmem:[%s190 + $0x22a0] sm:$0xff]
        %v1727 = vld [vmem:[%s190 + $0x22a8] sm:$0xff]
        %v1728 = vld [vmem:[%s190 + $0x22b0] sm:$0xff]
        %v1729 = vld [vmem:[%s190 + $0x22b8] sm:$0xf]
        %v1730 = vld [vmem:[%s190 + $0x22bc] sm:$0xff]
        %v1731 = vld [vmem:[%s190 + $0x22c4] sm:$0xff]
        %v1732 = vld [vmem:[%s190 + $0x22cc] sm:$0xff]
        %v1733 = vld [vmem:[%s190 + $0x22d4] sm:$0xff]
        %v1734 = vld [vmem:[%s190 + $0x22dc] sm:$0xf]
        %v1735 = vld [vmem:[%s190 + $0x22e0] sm:$0xff]
        %v1736 = vld [vmem:[%s190 + $0x22e8] sm:$0xff]
        %v1737 = vld [vmem:[%s190 + $0x22f0] sm:$0xff]
        %v1738 = vld [vmem:[%s190 + $0x22f8] sm:$0xff]
        %v1739 = vld [vmem:[%s190 + $0x2300] sm:$0xf]
        %v1740 = vld [vmem:[%s190 + $0x2304] sm:$0xff]
        %v1741 = vld [vmem:[%s190 + $0x230c] sm:$0xff]
        %v1742 = vld [vmem:[%s190 + $0x2314] sm:$0xff]
        %v1743 = vld [vmem:[%s190 + $0x231c] sm:$0xff]
        %v1744 = vld [vmem:[%s190 + $0x2324] sm:$0xf]
        %v1745 = vld [vmem:[%s190 + $0x2328] sm:$0xff]
        %v1746 = vld [vmem:[%s190 + $0x2330] sm:$0xff]
        %v1747 = vld [vmem:[%s190 + $0x2338] sm:$0xff]
        %v1748 = vld [vmem:[%s190 + $0x2340] sm:$0xff]
        %v1749 = vld [vmem:[%s190 + $0x2348] sm:$0xf]
        %v1750 = vld [vmem:[%s190 + $0x234c] sm:$0xff]
        %v1751 = vld [vmem:[%s190 + $0x2354] sm:$0xff]
        %v1752 = vld [vmem:[%s190 + $0x235c] sm:$0xff]
        %v1753 = vld [vmem:[%s190 + $0x2364] sm:$0xff]
        %v1754 = vld [vmem:[%s190 + $0x236c] sm:$0xf]
        %v1755 = vld [vmem:[%s190 + $0x2370] sm:$0xff]
        %v1756 = vld [vmem:[%s190 + $0x2378] sm:$0xff]
        %v1757 = vld [vmem:[%s190 + $0x2380] sm:$0xff]
        %v1758 = vld [vmem:[%s190 + $0x2388] sm:$0xff]
        %v1759 = vld [vmem:[%s190 + $0x2390] sm:$0xf]
        %v1760 = vld [vmem:[%s190 + $0x2394] sm:$0xff]
        %v1761 = vld [vmem:[%s190 + $0x239c] sm:$0xff]
        %v1762 = vld [vmem:[%s190 + $0x23a4] sm:$0xff]
        %v1763 = vld [vmem:[%s190 + $0x23ac] sm:$0xff]
        %v1764 = vld [vmem:[%s190 + $0x23b4] sm:$0xf]
        %v1765 = vld [vmem:[%s190 + $0x23b8] sm:$0xff]
        %v1766 = vld [vmem:[%s190 + $0x23c0] sm:$0xff]
        %v1767 = vld [vmem:[%s190 + $0x23c8] sm:$0xff]
        %v1768 = vld [vmem:[%s190 + $0x23d0] sm:$0xff]
        %v1769 = vld [vmem:[%s190 + $0x23d8] sm:$0xf]
        %v1770 = vld [vmem:[%s190 + $0x23dc] sm:$0xff]
        %v1771 = vld [vmem:[%s190 + $0x23e4] sm:$0xff]
        %v1772 = vld [vmem:[%s190 + $0x23ec] sm:$0xff]
        %v1773 = vld [vmem:[%s190 + $0x23f4] sm:$0xff]
        %v1774 = vld [vmem:[%s190 + $0x23fc] sm:$0xf]
        %v1775 = vld [vmem:[%s190 + $0x2400] sm:$0xff]
        %v1776 = vld [vmem:[%s190 + $0x2408] sm:$0xff]
        %v1777 = vld [vmem:[%s190 + $0x2410] sm:$0xff]
        %v1778 = vld [vmem:[%s190 + $0x2418] sm:$0xff]
        %v1779 = vld [vmem:[%s190 + $0x2420] sm:$0xf]
        %v1780 = vld [vmem:[%s190 + $0x2424] sm:$0xff]
        %v1781 = vld [vmem:[%s190 + $0x242c] sm:$0xff]
        %v1782 = vld [vmem:[%s190 + $0x2434] sm:$0xff]
        %v1783 = vld [vmem:[%s190 + $0x243c] sm:$0xff]
        %v1784 = vld [vmem:[%s190 + $0x2444] sm:$0xf]
        %v1785 = vld [vmem:[%s190 + $0x2448] sm:$0xff]
        %v1786 = vld [vmem:[%s190 + $0x2450] sm:$0xff]
        %v1787 = vld [vmem:[%s190 + $0x2458] sm:$0xff]
        %v1788 = vld [vmem:[%s190 + $0x2460] sm:$0xff]
        %v1789 = vld [vmem:[%s190 + $0x2468] sm:$0xf]
        %v1790 = vld [vmem:[%s190 + $0x246c] sm:$0xff]
        %v1791 = vld [vmem:[%s190 + $0x2474] sm:$0xff]
        %v1792 = vld [vmem:[%s190 + $0x247c] sm:$0xff]
        %v1793 = vld [vmem:[%s190 + $0x2484] sm:$0xff]
        %v1794 = vld [vmem:[%s190 + $0x248c] sm:$0xf]
        %v1795 = vld [vmem:[%s190 + $0x2490] sm:$0xff]
        %v1796 = vld [vmem:[%s190 + $0x2498] sm:$0xff]
        %v1797 = vld [vmem:[%s190 + $0x24a0] sm:$0xff]
        %v1798 = vld [vmem:[%s190 + $0x24a8] sm:$0xff]
        %v1799 = vld [vmem:[%s190 + $0x24b0] sm:$0xf]
        %v1800 = vld [vmem:[%s190 + $0x24b4] sm:$0xff]
        %v1801 = vld [vmem:[%s190 + $0x24bc] sm:$0xff]
        %v1802 = vld [vmem:[%s190 + $0x24c4] sm:$0xff]
        %v1803 = vld [vmem:[%s190 + $0x24cc] sm:$0xff]
        %v1804 = vld [vmem:[%s190 + $0x24d4] sm:$0xf]
        %v1805 = vld [vmem:[%s190 + $0x24d8] sm:$0xff]
        %v1806 = vld [vmem:[%s190 + $0x24e0] sm:$0xff]
        %v1807 = vld [vmem:[%s190 + $0x24e8] sm:$0xff]
        %v1808 = vld [vmem:[%s190 + $0x24f0] sm:$0xff]
        %v1809 = vld [vmem:[%s190 + $0x24f8] sm:$0xf]
        %v1810 = vld [vmem:[%s190 + $0x24fc] sm:$0xff]
        %v1811 = vld [vmem:[%s190 + $0x2504] sm:$0xff]
        %v1812 = vld [vmem:[%s190 + $0x250c] sm:$0xff]
        %v1813 = vld [vmem:[%s190 + $0x2514] sm:$0xff]
        %v1814 = vld [vmem:[%s190 + $0x251c] sm:$0xf]
        %v1815 = vld [vmem:[%s190 + $0x2520] sm:$0xff]
        %v1816 = vld [vmem:[%s190 + $0x2528] sm:$0xff]
        %v1817 = vld [vmem:[%s190 + $0x2530] sm:$0xff]
        %v1818 = vld [vmem:[%s190 + $0x2538] sm:$0xff]
        %v1819 = vld [vmem:[%s190 + $0x2540] sm:$0xf]
        %v1820 = vld [vmem:[%s190 + $0x2544] sm:$0xff]
        %v1821 = vld [vmem:[%s190 + $0x254c] sm:$0xff]
        %v1822 = vld [vmem:[%s190 + $0x2554] sm:$0xff]
        %v1823 = vld [vmem:[%s190 + $0x255c] sm:$0xff]
        %v1824 = vld [vmem:[%s190 + $0x2564] sm:$0xf]
        %v1825 = vld [vmem:[%s190 + $0x2568] sm:$0xff]
        %v1826 = vld [vmem:[%s190 + $0x2570] sm:$0xff]
        %v1827 = vld [vmem:[%s190 + $0x2578] sm:$0xff]
        %v1828 = vld [vmem:[%s190 + $0x2580] sm:$0xff]
        %v1829 = vld [vmem:[%s190 + $0x2588] sm:$0xf]
        %v1830 = vld [vmem:[%s190 + $0x258c] sm:$0xff]
        %v1831 = vld [vmem:[%s190 + $0x2594] sm:$0xff]
        %v1832 = vld [vmem:[%s190 + $0x259c] sm:$0xff]
        %v1833 = vld [vmem:[%s190 + $0x25a4] sm:$0xff]
        %v1834 = vld [vmem:[%s190 + $0x25ac] sm:$0xf]
        %v1835 = vld [vmem:[%s190 + $0x25b0] sm:$0xff]
        %v1836 = vld [vmem:[%s190 + $0x25b8] sm:$0xff]
        %v1837 = vld [vmem:[%s190 + $0x25c0] sm:$0xff]
        %v1838 = vld [vmem:[%s190 + $0x25c8] sm:$0xff]
        %v1839 = vld [vmem:[%s190 + $0x25d0] sm:$0xf]
        %v1840 = vld [vmem:[%s190 + $0x25d4] sm:$0xff]
        %v1841 = vld [vmem:[%s190 + $0x25dc] sm:$0xff]
        %v1842 = vld [vmem:[%s190 + $0x25e4] sm:$0xff]
        %v1843 = vld [vmem:[%s190 + $0x25ec] sm:$0xff]
        %v1844 = vld [vmem:[%s190 + $0x25f4] sm:$0xf]
        %v1845 = vld [vmem:[%s190 + $0x25f8] sm:$0xff]
        %v1846 = vld [vmem:[%s190 + $0x2600] sm:$0xff]
        %v1847 = vld [vmem:[%s190 + $0x2608] sm:$0xff]
        %v1848 = vld [vmem:[%s190 + $0x2610] sm:$0xff]
        %v1849 = vld [vmem:[%s190 + $0x2618] sm:$0xf]
        %v1850 = vld [vmem:[%s190 + $0x261c] sm:$0xff]
        %v1851 = vld [vmem:[%s190 + $0x2624] sm:$0xff]
        %v1852 = vld [vmem:[%s190 + $0x262c] sm:$0xff]
        %v1853 = vld [vmem:[%s190 + $0x2634] sm:$0xff]
        %v1854 = vld [vmem:[%s190 + $0x263c] sm:$0xf]
        %v1855 = vld [vmem:[%s190 + $0x2640] sm:$0xff]
        %v1856 = vld [vmem:[%s190 + $0x2648] sm:$0xff]
        %v1857 = vld [vmem:[%s190 + $0x2650] sm:$0xff]
        %v1858 = vld [vmem:[%s190 + $0x2658] sm:$0xff]
        %v1859 = vld [vmem:[%s190 + $0x2660] sm:$0xf]
        %v1860 = vld [vmem:[%s190 + $0x2664] sm:$0xff]
        %v1861 = vld [vmem:[%s190 + $0x266c] sm:$0xff]
        %v1862 = vld [vmem:[%s190 + $0x2674] sm:$0xff]
        %v1863 = vld [vmem:[%s190 + $0x267c] sm:$0xff]
        %v1864 = vld [vmem:[%s190 + $0x2684] sm:$0xf]
        %v1865 = vld [vmem:[%s190 + $0x2688] sm:$0xff]
        %v1866 = vld [vmem:[%s190 + $0x2690] sm:$0xff]
        %v1867 = vld [vmem:[%s190 + $0x2698] sm:$0xff]
        %v1868 = vld [vmem:[%s190 + $0x26a0] sm:$0xff]
        %v1869 = vld [vmem:[%s190 + $0x26a8] sm:$0xf]
        %v1870 = vld [vmem:[%s190 + $0x26ac] sm:$0xff]
        %v1871 = vld [vmem:[%s190 + $0x26b4] sm:$0xff]
        %v1872 = vld [vmem:[%s190 + $0x26bc] sm:$0xff]
        %v1873 = vld [vmem:[%s190 + $0x26c4] sm:$0xff]
        %v1874 = vld [vmem:[%s190 + $0x26cc] sm:$0xf]
        %v1875 = vld [vmem:[%s190 + $0x26d0] sm:$0xff]
        %v1876 = vld [vmem:[%s190 + $0x26d8] sm:$0xff]
        %v1877 = vld [vmem:[%s190 + $0x26e0] sm:$0xff]
        %v1878 = vld [vmem:[%s190 + $0x26e8] sm:$0xff]
        %v1879 = vld [vmem:[%s190 + $0x26f0] sm:$0xf]
        %v1880 = vld [vmem:[%s190 + $0x26f4] sm:$0xff]
        %v1881 = vld [vmem:[%s190 + $0x26fc] sm:$0xff]
        %v1882 = vld [vmem:[%s190 + $0x2704] sm:$0xff]
        %v1883 = vld [vmem:[%s190 + $0x270c] sm:$0xff]
        %v1884 = vld [vmem:[%s190 + $0x2714] sm:$0xf]
        %v1885 = vld [vmem:[%s190 + $0x2718] sm:$0xff]
        %v1886 = vld [vmem:[%s190 + $0x2720] sm:$0xff]
        %v1887 = vld [vmem:[%s190 + $0x2728] sm:$0xff]
        %v1888 = vld [vmem:[%s190 + $0x2730] sm:$0xff]
        %v1889 = vld [vmem:[%s190 + $0x2738] sm:$0xf]
        %v1890 = vld [vmem:[%s190 + $0x273c] sm:$0xff]
        %v1891 = vld [vmem:[%s190 + $0x2744] sm:$0xff]
        %v1892 = vld [vmem:[%s190 + $0x274c] sm:$0xff]
        %v1893 = vld [vmem:[%s190 + $0x2754] sm:$0xff]
        %v1894 = vld [vmem:[%s190 + $0x275c] sm:$0xf]
        %v1895 = vld [vmem:[%s190 + $0x2760] sm:$0xff]
        %v1896 = vld [vmem:[%s190 + $0x2768] sm:$0xff]
        %v1897 = vld [vmem:[%s190 + $0x2770] sm:$0xff]
        %v1898 = vld [vmem:[%s190 + $0x2778] sm:$0xff]
        %v1899 = vld [vmem:[%s190 + $0x2780] sm:$0xf]
        %v1900 = vld [vmem:[%s190 + $0x2784] sm:$0xff]
        %v1901 = vld [vmem:[%s190 + $0x278c] sm:$0xff]
        %v1902 = vld [vmem:[%s190 + $0x2794] sm:$0xff]
        %v1903 = vld [vmem:[%s190 + $0x279c] sm:$0xff]
        %v1904 = vld [vmem:[%s190 + $0x27a4] sm:$0xf]
        %v1905 = vld [vmem:[%s190 + $0x27a8] sm:$0xff]
        %v1906 = vld [vmem:[%s190 + $0x27b0] sm:$0xff]
        %v1907 = vld [vmem:[%s190 + $0x27b8] sm:$0xff]
        %v1908 = vld [vmem:[%s190 + $0x27c0] sm:$0xff]
        %v1909 = vld [vmem:[%s190 + $0x27c8] sm:$0xf]
        %v1910 = vld [vmem:[%s190 + $0x27cc] sm:$0xff]
        %v1911 = vld [vmem:[%s190 + $0x27d4] sm:$0xff]
        %v1912 = vld [vmem:[%s190 + $0x27dc] sm:$0xff]
        %v1913 = vld [vmem:[%s190 + $0x27e4] sm:$0xff]
        %v1914 = vld [vmem:[%s190 + $0x27ec] sm:$0xf]
        %v1915 = vld [vmem:[%s190 + $0x27f0] sm:$0xff]
        %v1916 = vld [vmem:[%s190 + $0x27f8] sm:$0xff]
        %v1917 = vld [vmem:[%s190 + $0x2800] sm:$0xff]
        %v1918 = vld [vmem:[%s190 + $0x2808] sm:$0xff]
        %v1919 = vld [vmem:[%s190 + $0x2810] sm:$0xf]
        %v1920 = vld [vmem:[%s190 + $0x2814] sm:$0xff]
        %v1921 = vld [vmem:[%s190 + $0x281c] sm:$0xff]
        %v1922 = vld [vmem:[%s190 + $0x2824] sm:$0xff]
        %v1923 = vld [vmem:[%s190 + $0x282c] sm:$0xff]
        %v1924 = vld [vmem:[%s190 + $0x2834] sm:$0xf]
        %v1925 = vld [vmem:[%s190 + $0x2838] sm:$0xff]
        %v1926 = vld [vmem:[%s190 + $0x2840] sm:$0xff]
        %v1927 = vld [vmem:[%s190 + $0x2848] sm:$0xff]
        %v1928 = vld [vmem:[%s190 + $0x2850] sm:$0xff]
        %v1929 = vld [vmem:[%s190 + $0x2858] sm:$0xf]
        %v1930 = vld [vmem:[%s190 + $0x285c] sm:$0xff]
        %v1931 = vld [vmem:[%s190 + $0x2864] sm:$0xff]
        %v1932 = vld [vmem:[%s190 + $0x286c] sm:$0xff]
        %v1933 = vld [vmem:[%s190 + $0x2874] sm:$0xff]
        %v1934 = vld [vmem:[%s190 + $0x287c] sm:$0xf]
        %v1935 = vld [vmem:[%s224] sm:$0xff]
        %v1936 = vld [vmem:[%s224 + $0x8] sm:$0x1]
        %v1937 = vunpack.c.l.bf16 %v1935
        %v1938 = vunpack.c.h.bf16 %v1935
        %v1939 = vunpack.c.l.bf16 %v1936
        %v1943 = vlaneseq
        %v1944 = vshrl.u32 %v1943, 7
        %v1945 = vsub.s32 0, %v1944
        %v1946 = vrot.slane %v1937, %v1945
        %v1947 = vlaneseq
        %v1948 = vshrl.u32 %v1947, 7
        %v1949 = vsub.s32 2, %v1948
        %v1950 = vrot.slane %v1937, %v1949
        %v1951 = vlaneseq
        %v1952 = vshrl.u32 %v1951, 7
        %v1953 = vsub.s32 4, %v1952
        %v1954 = vrot.slane %v1937, %v1953
        %v1955 = vlaneseq
        %v1956 = vshrl.u32 %v1955, 7
        %v1957 = vsub.s32 6, %v1956
        %v1958 = vrot.slane %v1937, %v1957
        %v1959 = vlaneseq
        %v1960 = vshrl.u32 %v1959, 7
        %v1961 = vsub.s32 0, %v1960
        %v1962 = vrot.slane %v1938, %v1961
        %v1963 = vlaneseq
        %v1964 = vshrl.u32 %v1963, 7
        %v1965 = vsub.s32 2, %v1964
        %v1966 = vrot.slane %v1938, %v1965
        %v1967 = vlaneseq
        %v1968 = vshrl.u32 %v1967, 7
        %v1969 = vsub.s32 4, %v1968
        %v1970 = vrot.slane %v1938, %v1969
        %v1971 = vlaneseq
        %v1972 = vshrl.u32 %v1971, 7
        %v1973 = vsub.s32 6, %v1972
        %v1974 = vrot.slane %v1938, %v1973
        %v1975 = vlaneseq
        %v1976 = vshrl.u32 %v1975, 7
        %v1977 = vsub.s32 0, %v1976
        %v1978 = vrot.slane %v1939, %v1977
        %v1988 = vlaneseq
        %v1989 = vshrl.u32 %v1988, 7
        %v1990 = vsub.s32 0, %v1989
        %v1991 = vrot.slane %v1946, %v1990
        %v1992 = vlaneseq
        %v1993 = vshrl.u32 %v1992, 7
        %v1994 = vsub.s32 0, %v1993
        %v1995 = vrot.slane %v1950, %v1994
        %v1996 = vlaneseq
        %v1997 = vshrl.u32 %v1996, 7
        %v1998 = vsub.s32 0, %v1997
        %v1999 = vrot.slane %v1954, %v1998
        %v2000 = vlaneseq
        %v2001 = vshrl.u32 %v2000, 7
        %v2002 = vsub.s32 0, %v2001
        %v2003 = vrot.slane %v1958, %v2002
        %v2004 = vlaneseq
        %v2005 = vshrl.u32 %v2004, 7
        %v2006 = vsub.s32 0, %v2005
        %v2007 = vrot.slane %v1962, %v2006
        %v2008 = vlaneseq
        %v2009 = vshrl.u32 %v2008, 7
        %v2010 = vsub.s32 0, %v2009
        %v2011 = vrot.slane %v1966, %v2010
        %v2012 = vlaneseq
        %v2013 = vshrl.u32 %v2012, 7
        %v2014 = vsub.s32 0, %v2013
        %v2015 = vrot.slane %v1970, %v2014
        %v2016 = vlaneseq
        %v2017 = vshrl.u32 %v2016, 7
        %v2018 = vsub.s32 0, %v2017
        %v2019 = vrot.slane %v1974, %v2018
        %v2020 = vlaneseq
        %v2021 = vshrl.u32 %v2020, 7
        %v2022 = vsub.s32 0, %v2021
        %v2023 = vrot.slane %v1978, %v2022
        %v2027 = vcombine.high %v492, %v492
        %v2029 = vunpack.c.l.s4 1966171168
        %v2030 = vunpack.c.0.s8 %v2029
        %v2031 = vlaneseq
        %v2032 = vshrl.u32 %v2031, 7
        %v2033 = vsub.s32 %v2030, %v2032
        %v2034 = vrot.slane %v492, %v2033
        %v2036 = vunpack.c.l.s4 1966171168
        %v2037 = vunpack.c.0.s8 %v2036
        %v2038 = vlaneseq
        %v2039 = vshrl.u32 %v2038, 7
        %v2040 = vsub.s32 %v2037, %v2039
        %v2041 = vrot.slane %v2027, %v2040
        %v2042 = vcombine.high %v2034, %v2034
        %v2043 = vcombine.high %v2041, %v2041
        %v2045 = vunpack.c.l.s4 1966171168
        %v2046 = vunpack.c.0.s8 %v2045
        %v2047 = vlaneseq
        %v2048 = vshrl.u32 %v2047, 7
        %v2049 = vsub.s32 %v2046, %v2048
        %v2050 = vrot.slane %v2034, %v2049
        %v2052 = vunpack.c.l.s4 1966171168
        %v2053 = vunpack.c.0.s8 %v2052
        %v2054 = vlaneseq
        %v2055 = vshrl.u32 %v2054, 7
        %v2056 = vsub.s32 %v2053, %v2055
        %v2057 = vrot.slane %v2041, %v2056
        %v2059 = vunpack.c.l.s4 1966171168
        %v2060 = vunpack.c.0.s8 %v2059
        %v2061 = vlaneseq
        %v2062 = vshrl.u32 %v2061, 7
        %v2063 = vsub.s32 %v2060, %v2062
        %v2064 = vrot.slane %v2042, %v2063
        %v2066 = vunpack.c.l.s4 1966171168
        %v2067 = vunpack.c.0.s8 %v2066
        %v2068 = vlaneseq
        %v2069 = vshrl.u32 %v2068, 7
        %v2070 = vsub.s32 %v2067, %v2069
        %v2071 = vrot.slane %v2043, %v2070
        %v2072 = vcombine.high %v2050, %v2050
        %v2073 = vcombine.high %v2057, %v2057
        %v2074 = vcombine.high %v2064, %v2064
        %v2075 = vcombine.high %v2071, %v2071
        %v2076 = vcombine.high %v493, %v493
        %v2078 = vunpack.c.l.s4 1966171168
        %v2079 = vunpack.c.0.s8 %v2078
        %v2080 = vlaneseq
        %v2081 = vshrl.u32 %v2080, 7
        %v2082 = vsub.s32 %v2079, %v2081
        %v2083 = vrot.slane %v493, %v2082
        %v2085 = vunpack.c.l.s4 1966171168
        %v2086 = vunpack.c.0.s8 %v2085
        %v2087 = vlaneseq
        %v2088 = vshrl.u32 %v2087, 7
        %v2089 = vsub.s32 %v2086, %v2088
        %v2090 = vrot.slane %v2076, %v2089
        %v2091 = vcombine.high %v2083, %v2083
        %v2092 = vcombine.high %v2090, %v2090
        %v2094 = vunpack.c.l.s4 1966171168
        %v2095 = vunpack.c.0.s8 %v2094
        %v2096 = vlaneseq
        %v2097 = vshrl.u32 %v2096, 7
        %v2098 = vsub.s32 %v2095, %v2097
        %v2099 = vrot.slane %v2083, %v2098
        %v2101 = vunpack.c.l.s4 1966171168
        %v2102 = vunpack.c.0.s8 %v2101
        %v2103 = vlaneseq
        %v2104 = vshrl.u32 %v2103, 7
        %v2105 = vsub.s32 %v2102, %v2104
        %v2106 = vrot.slane %v2090, %v2105
        %v2108 = vunpack.c.l.s4 1966171168
        %v2109 = vunpack.c.0.s8 %v2108
        %v2110 = vlaneseq
        %v2111 = vshrl.u32 %v2110, 7
        %v2112 = vsub.s32 %v2109, %v2111
        %v2113 = vrot.slane %v2091, %v2112
        %v2115 = vunpack.c.l.s4 1966171168
        %v2116 = vunpack.c.0.s8 %v2115
        %v2117 = vlaneseq
        %v2118 = vshrl.u32 %v2117, 7
        %v2119 = vsub.s32 %v2116, %v2118
        %v2120 = vrot.slane %v2092, %v2119
        %v2121 = vcombine.high %v2099, %v2099
        %v2122 = vcombine.high %v2106, %v2106
        %v2123 = vcombine.high %v2113, %v2113
        %v2124 = vcombine.high %v2120, %v2120
        %v2126 = vunpack.c.l.s4 1966171168
        %v2127 = vunpack.c.0.s8 %v2126
        %v2128 = vlaneseq
        %v2129 = vshrl.u32 %v2128, 7
        %v2130 = vsub.s32 %v2127, %v2129
        %v2131 = vrot.slane %v494, %v2130
        %v2132 = vcombine.high %v2131, %v2131
        %v2134 = vunpack.c.l.s4 1966171168
        %v2135 = vunpack.c.0.s8 %v2134
        %v2136 = vlaneseq
        %v2137 = vshrl.u32 %v2136, 7
        %v2138 = vsub.s32 %v2135, %v2137
        %v2139 = vrot.slane %v2131, %v2138
        %v2141 = vunpack.c.l.s4 1966171168
        %v2142 = vunpack.c.0.s8 %v2141
        %v2143 = vlaneseq
        %v2144 = vshrl.u32 %v2143, 7
        %v2145 = vsub.s32 %v2142, %v2144
        %v2146 = vrot.slane %v2132, %v2145
        %v3605 = vunpack.c.l.b16 %v495
        %v3606 = vunpack.c.h.b16 %v495
        %v3607 = vunpack.c.l.b16 %v496
        %v3608 = vunpack.c.h.b16 %v496
        %v3609 = vunpack.c.l.b16 %v497
        %v3610 = vunpack.c.h.b16 %v497
        %v3611 = vunpack.c.l.b16 %v498
        %v3612 = vunpack.c.h.b16 %v498
        %v3613 = vunpack.c.l.b16 %v499
        %v3614 = vunpack.c.l.b16 %v500
        %v3615 = vunpack.c.h.b16 %v500
        %v3616 = vunpack.c.l.b16 %v501
        %v3617 = vunpack.c.h.b16 %v501
        %v3618 = vunpack.c.l.b16 %v502
        %v3619 = vunpack.c.h.b16 %v502
        %v3620 = vunpack.c.l.b16 %v503
        %v3621 = vunpack.c.h.b16 %v503
        %v3622 = vunpack.c.l.b16 %v504
        %v3623 = vunpack.c.l.b16 %v505
        %v3624 = vunpack.c.h.b16 %v505
        %v3625 = vunpack.c.l.b16 %v506
        %v3626 = vunpack.c.h.b16 %v506
        %v3627 = vunpack.c.l.b16 %v507
        %v3628 = vunpack.c.h.b16 %v507
        %v3629 = vunpack.c.l.b16 %v508
        %v3630 = vunpack.c.h.b16 %v508
        %v3631 = vunpack.c.l.b16 %v509
        %v3632 = vunpack.c.l.b16 %v510
        %v3633 = vunpack.c.h.b16 %v510
        %v3634 = vunpack.c.l.b16 %v511
        %v3635 = vunpack.c.h.b16 %v511
        %v3636 = vunpack.c.l.b16 %v512
        %v3637 = vunpack.c.h.b16 %v512
        %v3638 = vunpack.c.l.b16 %v513
        %v3639 = vunpack.c.h.b16 %v513
        %v3640 = vunpack.c.l.b16 %v514
        %v3641 = vunpack.c.l.b16 %v515
        %v3642 = vunpack.c.h.b16 %v515
        %v3643 = vunpack.c.l.b16 %v516
        %v3644 = vunpack.c.h.b16 %v516
        %v3645 = vunpack.c.l.b16 %v517
        %v3646 = vunpack.c.h.b16 %v517
        %v3647 = vunpack.c.l.b16 %v518
        %v3648 = vunpack.c.h.b16 %v518
        %v3649 = vunpack.c.l.b16 %v519
        %v3650 = vunpack.c.l.b16 %v520
        %v3651 = vunpack.c.h.b16 %v520
        %v3652 = vunpack.c.l.b16 %v521
        %v3653 = vunpack.c.h.b16 %v521
        %v3654 = vunpack.c.l.b16 %v522
        %v3655 = vunpack.c.h.b16 %v522
        %v3656 = vunpack.c.l.b16 %v523
        %v3657 = vunpack.c.h.b16 %v523
        %v3658 = vunpack.c.l.b16 %v524
        %v3659 = vunpack.c.l.b16 %v525
        %v3660 = vunpack.c.h.b16 %v525
        %v3661 = vunpack.c.l.b16 %v526
        %v3662 = vunpack.c.h.b16 %v526
        %v3663 = vunpack.c.l.b16 %v527
        %v3664 = vunpack.c.h.b16 %v527
        %v3665 = vunpack.c.l.b16 %v528
        %v3666 = vunpack.c.h.b16 %v528
        %v3667 = vunpack.c.l.b16 %v529
        %v3668 = vunpack.c.l.b16 %v530
        %v3669 = vunpack.c.h.b16 %v530
        %v3670 = vunpack.c.l.b16 %v531
        %v3671 = vunpack.c.h.b16 %v531
        %v3672 = vunpack.c.l.b16 %v532
        %v3673 = vunpack.c.h.b16 %v532
        %v3674 = vunpack.c.l.b16 %v533
        %v3675 = vunpack.c.h.b16 %v533
        %v3676 = vunpack.c.l.b16 %v534
        %v3677 = vunpack.c.l.b16 %v535
        %v3678 = vunpack.c.h.b16 %v535
        %v3679 = vunpack.c.l.b16 %v536
        %v3680 = vunpack.c.h.b16 %v536
        %v3681 = vunpack.c.l.b16 %v537
        %v3682 = vunpack.c.h.b16 %v537
        %v3683 = vunpack.c.l.b16 %v538
        %v3684 = vunpack.c.h.b16 %v538
        %v3685 = vunpack.c.l.b16 %v539
        %v3686 = vunpack.c.l.b16 %v540
        %v3687 = vunpack.c.h.b16 %v540
        %v3688 = vunpack.c.l.b16 %v541
        %v3689 = vunpack.c.h.b16 %v541
        %v3690 = vunpack.c.l.b16 %v542
        %v3691 = vunpack.c.h.b16 %v542
        %v3692 = vunpack.c.l.b16 %v543
        %v3693 = vunpack.c.h.b16 %v543
        %v3694 = vunpack.c.l.b16 %v544
        %v3695 = vunpack.c.l.b16 %v545
        %v3696 = vunpack.c.h.b16 %v545
        %v3697 = vunpack.c.l.b16 %v546
        %v3698 = vunpack.c.h.b16 %v546
        %v3699 = vunpack.c.l.b16 %v547
        %v3700 = vunpack.c.h.b16 %v547
        %v3701 = vunpack.c.l.b16 %v548
        %v3702 = vunpack.c.h.b16 %v548
        %v3703 = vunpack.c.l.b16 %v549
        %v3704 = vunpack.c.l.b16 %v550
        %v3705 = vunpack.c.h.b16 %v550
        %v3706 = vunpack.c.l.b16 %v551
        %v3707 = vunpack.c.h.b16 %v551
        %v3708 = vunpack.c.l.b16 %v552
        %v3709 = vunpack.c.h.b16 %v552
        %v3710 = vunpack.c.l.b16 %v553
        %v3711 = vunpack.c.h.b16 %v553
        %v3712 = vunpack.c.l.b16 %v554
        %v3713 = vunpack.c.l.b16 %v555
        %v3714 = vunpack.c.h.b16 %v555
        %v3715 = vunpack.c.l.b16 %v556
        %v3716 = vunpack.c.h.b16 %v556
        %v3717 = vunpack.c.l.b16 %v557
        %v3718 = vunpack.c.h.b16 %v557
        %v3719 = vunpack.c.l.b16 %v558
        %v3720 = vunpack.c.h.b16 %v558
        %v3721 = vunpack.c.l.b16 %v559
        %v3722 = vunpack.c.l.b16 %v560
        %v3723 = vunpack.c.h.b16 %v560
        %v3724 = vunpack.c.l.b16 %v561
        %v3725 = vunpack.c.h.b16 %v561
        %v3726 = vunpack.c.l.b16 %v562
        %v3727 = vunpack.c.h.b16 %v562
        %v3728 = vunpack.c.l.b16 %v563
        %v3729 = vunpack.c.h.b16 %v563
        %v3730 = vunpack.c.l.b16 %v564
        %v3731 = vunpack.c.l.b16 %v565
        %v3732 = vunpack.c.h.b16 %v565
        %v3733 = vunpack.c.l.b16 %v566
        %v3734 = vunpack.c.h.b16 %v566
        %v3735 = vunpack.c.l.b16 %v567
        %v3736 = vunpack.c.h.b16 %v567
        %v3737 = vunpack.c.l.b16 %v568
        %v3738 = vunpack.c.h.b16 %v568
        %v3739 = vunpack.c.l.b16 %v569
        %v3740 = vunpack.c.l.b16 %v570
        %v3741 = vunpack.c.h.b16 %v570
        %v3742 = vunpack.c.l.b16 %v571
        %v3743 = vunpack.c.h.b16 %v571
        %v3744 = vunpack.c.l.b16 %v572
        %v3745 = vunpack.c.h.b16 %v572
        %v3746 = vunpack.c.l.b16 %v573
        %v3747 = vunpack.c.h.b16 %v573
        %v3748 = vunpack.c.l.b16 %v574
        %v3749 = vunpack.c.l.b16 %v575
        %v3750 = vunpack.c.h.b16 %v575
        %v3751 = vunpack.c.l.b16 %v576
        %v3752 = vunpack.c.h.b16 %v576
        %v3753 = vunpack.c.l.b16 %v577
        %v3754 = vunpack.c.h.b16 %v577
        %v3755 = vunpack.c.l.b16 %v578
        %v3756 = vunpack.c.h.b16 %v578
        %v3757 = vunpack.c.l.b16 %v579
        %v3758 = vunpack.c.l.b16 %v580
        %v3759 = vunpack.c.h.b16 %v580
        %v3760 = vunpack.c.l.b16 %v581
        %v3761 = vunpack.c.h.b16 %v581
        %v3762 = vunpack.c.l.b16 %v582
        %v3763 = vunpack.c.h.b16 %v582
        %v3764 = vunpack.c.l.b16 %v583
        %v3765 = vunpack.c.h.b16 %v583
        %v3766 = vunpack.c.l.b16 %v584
        %v3767 = vunpack.c.l.b16 %v585
        %v3768 = vunpack.c.h.b16 %v585
        %v3769 = vunpack.c.l.b16 %v586
        %v3770 = vunpack.c.h.b16 %v586
        %v3771 = vunpack.c.l.b16 %v587
        %v3772 = vunpack.c.h.b16 %v587
        %v3773 = vunpack.c.l.b16 %v588
        %v3774 = vunpack.c.h.b16 %v588
        %v3775 = vunpack.c.l.b16 %v589
        %v3776 = vunpack.c.l.b16 %v590
        %v3777 = vunpack.c.h.b16 %v590
        %v3778 = vunpack.c.l.b16 %v591
        %v3779 = vunpack.c.h.b16 %v591
        %v3780 = vunpack.c.l.b16 %v592
        %v3781 = vunpack.c.h.b16 %v592
        %v3782 = vunpack.c.l.b16 %v593
        %v3783 = vunpack.c.h.b16 %v593
        %v3784 = vunpack.c.l.b16 %v594
        %v3785 = vunpack.c.l.b16 %v595
        %v3786 = vunpack.c.h.b16 %v595
        %v3787 = vunpack.c.l.b16 %v596
        %v3788 = vunpack.c.h.b16 %v596
        %v3789 = vunpack.c.l.b16 %v597
        %v3790 = vunpack.c.h.b16 %v597
        %v3791 = vunpack.c.l.b16 %v598
        %v3792 = vunpack.c.h.b16 %v598
        %v3793 = vunpack.c.l.b16 %v599
        %v3794 = vunpack.c.l.b16 %v600
        %v3795 = vunpack.c.h.b16 %v600
        %v3796 = vunpack.c.l.b16 %v601
        %v3797 = vunpack.c.h.b16 %v601
        %v3798 = vunpack.c.l.b16 %v602
        %v3799 = vunpack.c.h.b16 %v602
        %v3800 = vunpack.c.l.b16 %v603
        %v3801 = vunpack.c.h.b16 %v603
        %v3802 = vunpack.c.l.b16 %v604
        %v3803 = vunpack.c.l.b16 %v605
        %v3804 = vunpack.c.h.b16 %v605
        %v3805 = vunpack.c.l.b16 %v606
        %v3806 = vunpack.c.h.b16 %v606
        %v3807 = vunpack.c.l.b16 %v607
        %v3808 = vunpack.c.h.b16 %v607
        %v3809 = vunpack.c.l.b16 %v608
        %v3810 = vunpack.c.h.b16 %v608
        %v3811 = vunpack.c.l.b16 %v609
        %v3812 = vunpack.c.l.b16 %v610
        %v3813 = vunpack.c.h.b16 %v610
        %v3814 = vunpack.c.l.b16 %v611
        %v3815 = vunpack.c.h.b16 %v611
        %v3816 = vunpack.c.l.b16 %v612
        %v3817 = vunpack.c.h.b16 %v612
        %v3818 = vunpack.c.l.b16 %v613
        %v3819 = vunpack.c.h.b16 %v613
        %v3820 = vunpack.c.l.b16 %v614
        %v3821 = vunpack.c.l.b16 %v615
        %v3822 = vunpack.c.h.b16 %v615
        %v3823 = vunpack.c.l.b16 %v616
        %v3824 = vunpack.c.h.b16 %v616
        %v3825 = vunpack.c.l.b16 %v617
        %v3826 = vunpack.c.h.b16 %v617
        %v3827 = vunpack.c.l.b16 %v618
        %v3828 = vunpack.c.h.b16 %v618
        %v3829 = vunpack.c.l.b16 %v619
        %v3830 = vunpack.c.l.b16 %v620
        %v3831 = vunpack.c.h.b16 %v620
        %v3832 = vunpack.c.l.b16 %v621
        %v3833 = vunpack.c.h.b16 %v621
        %v3834 = vunpack.c.l.b16 %v622
        %v3835 = vunpack.c.h.b16 %v622
        %v3836 = vunpack.c.l.b16 %v623
        %v3837 = vunpack.c.h.b16 %v623
        %v3838 = vunpack.c.l.b16 %v624
        %v3839 = vunpack.c.l.b16 %v625
        %v3840 = vunpack.c.h.b16 %v625
        %v3841 = vunpack.c.l.b16 %v626
        %v3842 = vunpack.c.h.b16 %v626
        %v3843 = vunpack.c.l.b16 %v627
        %v3844 = vunpack.c.h.b16 %v627
        %v3845 = vunpack.c.l.b16 %v628
        %v3846 = vunpack.c.h.b16 %v628
        %v3847 = vunpack.c.l.b16 %v629
        %v3848 = vunpack.c.l.b16 %v630
        %v3849 = vunpack.c.h.b16 %v630
        %v3850 = vunpack.c.l.b16 %v631
        %v3851 = vunpack.c.h.b16 %v631
        %v3852 = vunpack.c.l.b16 %v632
        %v3853 = vunpack.c.h.b16 %v632
        %v3854 = vunpack.c.l.b16 %v633
        %v3855 = vunpack.c.h.b16 %v633
        %v3856 = vunpack.c.l.b16 %v634
        %v3857 = vunpack.c.l.b16 %v635
        %v3858 = vunpack.c.h.b16 %v635
        %v3859 = vunpack.c.l.b16 %v636
        %v3860 = vunpack.c.h.b16 %v636
        %v3861 = vunpack.c.l.b16 %v637
        %v3862 = vunpack.c.h.b16 %v637
        %v3863 = vunpack.c.l.b16 %v638
        %v3864 = vunpack.c.h.b16 %v638
        %v3865 = vunpack.c.l.b16 %v639
        %v3866 = vunpack.c.l.b16 %v640
        %v3867 = vunpack.c.h.b16 %v640
        %v3868 = vunpack.c.l.b16 %v641
        %v3869 = vunpack.c.h.b16 %v641
        %v3870 = vunpack.c.l.b16 %v642
        %v3871 = vunpack.c.h.b16 %v642
        %v3872 = vunpack.c.l.b16 %v643
        %v3873 = vunpack.c.h.b16 %v643
        %v3874 = vunpack.c.l.b16 %v644
        %v3875 = vunpack.c.l.b16 %v645
        %v3876 = vunpack.c.h.b16 %v645
        %v3877 = vunpack.c.l.b16 %v646
        %v3878 = vunpack.c.h.b16 %v646
        %v3879 = vunpack.c.l.b16 %v647
        %v3880 = vunpack.c.h.b16 %v647
        %v3881 = vunpack.c.l.b16 %v648
        %v3882 = vunpack.c.h.b16 %v648
        %v3883 = vunpack.c.l.b16 %v649
        %v3884 = vunpack.c.l.b16 %v650
        %v3885 = vunpack.c.h.b16 %v650
        %v3886 = vunpack.c.l.b16 %v651
        %v3887 = vunpack.c.h.b16 %v651
        %v3888 = vunpack.c.l.b16 %v652
        %v3889 = vunpack.c.h.b16 %v652
        %v3890 = vunpack.c.l.b16 %v653
        %v3891 = vunpack.c.h.b16 %v653
        %v3892 = vunpack.c.l.b16 %v654
        %v3893 = vunpack.c.l.b16 %v655
        %v3894 = vunpack.c.h.b16 %v655
        %v3895 = vunpack.c.l.b16 %v656
        %v3896 = vunpack.c.h.b16 %v656
        %v3897 = vunpack.c.l.b16 %v657
        %v3898 = vunpack.c.h.b16 %v657
        %v3899 = vunpack.c.l.b16 %v658
        %v3900 = vunpack.c.h.b16 %v658
        %v3901 = vunpack.c.l.b16 %v659
        %v3902 = vunpack.c.l.b16 %v660
        %v3903 = vunpack.c.h.b16 %v660
        %v3904 = vunpack.c.l.b16 %v661
        %v3905 = vunpack.c.h.b16 %v661
        %v3906 = vunpack.c.l.b16 %v662
        %v3907 = vunpack.c.h.b16 %v662
        %v3908 = vunpack.c.l.b16 %v663
        %v3909 = vunpack.c.h.b16 %v663
        %v3910 = vunpack.c.l.b16 %v664
        %v3911 = vunpack.c.l.b16 %v665
        %v3912 = vunpack.c.h.b16 %v665
        %v3913 = vunpack.c.l.b16 %v666
        %v3914 = vunpack.c.h.b16 %v666
        %v3915 = vunpack.c.l.b16 %v667
        %v3916 = vunpack.c.h.b16 %v667
        %v3917 = vunpack.c.l.b16 %v668
        %v3918 = vunpack.c.h.b16 %v668
        %v3919 = vunpack.c.l.b16 %v669
        %v3920 = vunpack.c.l.b16 %v670
        %v3921 = vunpack.c.h.b16 %v670
        %v3922 = vunpack.c.l.b16 %v671
        %v3923 = vunpack.c.h.b16 %v671
        %v3924 = vunpack.c.l.b16 %v672
        %v3925 = vunpack.c.h.b16 %v672
        %v3926 = vunpack.c.l.b16 %v673
        %v3927 = vunpack.c.h.b16 %v673
        %v3928 = vunpack.c.l.b16 %v674
        %v3929 = vunpack.c.l.b16 %v675
        %v3930 = vunpack.c.h.b16 %v675
        %v3931 = vunpack.c.l.b16 %v676
        %v3932 = vunpack.c.h.b16 %v676
        %v3933 = vunpack.c.l.b16 %v677
        %v3934 = vunpack.c.h.b16 %v677
        %v3935 = vunpack.c.l.b16 %v678
        %v3936 = vunpack.c.h.b16 %v678
        %v3937 = vunpack.c.l.b16 %v679
        %v3938 = vunpack.c.l.b16 %v680
        %v3939 = vunpack.c.h.b16 %v680
        %v3940 = vunpack.c.l.b16 %v681
        %v3941 = vunpack.c.h.b16 %v681
        %v3942 = vunpack.c.l.b16 %v682
        %v3943 = vunpack.c.h.b16 %v682
        %v3944 = vunpack.c.l.b16 %v683
        %v3945 = vunpack.c.h.b16 %v683
        %v3946 = vunpack.c.l.b16 %v684
        %v3947 = vunpack.c.l.b16 %v685
        %v3948 = vunpack.c.h.b16 %v685
        %v3949 = vunpack.c.l.b16 %v686
        %v3950 = vunpack.c.h.b16 %v686
        %v3951 = vunpack.c.l.b16 %v687
        %v3952 = vunpack.c.h.b16 %v687
        %v3953 = vunpack.c.l.b16 %v688
        %v3954 = vunpack.c.h.b16 %v688
        %v3955 = vunpack.c.l.b16 %v689
        %v3956 = vunpack.c.l.b16 %v690
        %v3957 = vunpack.c.h.b16 %v690
        %v3958 = vunpack.c.l.b16 %v691
        %v3959 = vunpack.c.h.b16 %v691
        %v3960 = vunpack.c.l.b16 %v692
        %v3961 = vunpack.c.h.b16 %v692
        %v3962 = vunpack.c.l.b16 %v693
        %v3963 = vunpack.c.h.b16 %v693
        %v3964 = vunpack.c.l.b16 %v694
        %v3965 = vunpack.c.l.b16 %v695
        %v3966 = vunpack.c.h.b16 %v695
        %v3967 = vunpack.c.l.b16 %v696
        %v3968 = vunpack.c.h.b16 %v696
        %v3969 = vunpack.c.l.b16 %v697
        %v3970 = vunpack.c.h.b16 %v697
        %v3971 = vunpack.c.l.b16 %v698
        %v3972 = vunpack.c.h.b16 %v698
        %v3973 = vunpack.c.l.b16 %v699
        %v3974 = vunpack.c.l.b16 %v700
        %v3975 = vunpack.c.h.b16 %v700
        %v3976 = vunpack.c.l.b16 %v701
        %v3977 = vunpack.c.h.b16 %v701
        %v3978 = vunpack.c.l.b16 %v702
        %v3979 = vunpack.c.h.b16 %v702
        %v3980 = vunpack.c.l.b16 %v703
        %v3981 = vunpack.c.h.b16 %v703
        %v3982 = vunpack.c.l.b16 %v704
        %v3983 = vunpack.c.l.b16 %v705
        %v3984 = vunpack.c.h.b16 %v705
        %v3985 = vunpack.c.l.b16 %v706
        %v3986 = vunpack.c.h.b16 %v706
        %v3987 = vunpack.c.l.b16 %v707
        %v3988 = vunpack.c.h.b16 %v707
        %v3989 = vunpack.c.l.b16 %v708
        %v3990 = vunpack.c.h.b16 %v708
        %v3991 = vunpack.c.l.b16 %v709
        %v3992 = vunpack.c.l.b16 %v710
        %v3993 = vunpack.c.h.b16 %v710
        %v3994 = vunpack.c.l.b16 %v711
        %v3995 = vunpack.c.h.b16 %v711
        %v3996 = vunpack.c.l.b16 %v712
        %v3997 = vunpack.c.h.b16 %v712
        %v3998 = vunpack.c.l.b16 %v713
        %v3999 = vunpack.c.h.b16 %v713
        %v4000 = vunpack.c.l.b16 %v714
        %v4001 = vunpack.c.l.b16 %v715
        %v4002 = vunpack.c.h.b16 %v715
        %v4003 = vunpack.c.l.b16 %v716
        %v4004 = vunpack.c.h.b16 %v716
        %v4005 = vunpack.c.l.b16 %v717
        %v4006 = vunpack.c.h.b16 %v717
        %v4007 = vunpack.c.l.b16 %v718
        %v4008 = vunpack.c.h.b16 %v718
        %v4009 = vunpack.c.l.b16 %v719
        %v4010 = vunpack.c.l.b16 %v720
        %v4011 = vunpack.c.h.b16 %v720
        %v4012 = vunpack.c.l.b16 %v721
        %v4013 = vunpack.c.h.b16 %v721
        %v4014 = vunpack.c.l.b16 %v722
        %v4015 = vunpack.c.h.b16 %v722
        %v4016 = vunpack.c.l.b16 %v723
        %v4017 = vunpack.c.h.b16 %v723
        %v4018 = vunpack.c.l.b16 %v724
        %v4019 = vunpack.c.l.b16 %v725
        %v4020 = vunpack.c.h.b16 %v725
        %v4021 = vunpack.c.l.b16 %v726
        %v4022 = vunpack.c.h.b16 %v726
        %v4023 = vunpack.c.l.b16 %v727
        %v4024 = vunpack.c.h.b16 %v727
        %v4025 = vunpack.c.l.b16 %v728
        %v4026 = vunpack.c.h.b16 %v728
        %v4027 = vunpack.c.l.b16 %v729
        %v4028 = vunpack.c.l.b16 %v730
        %v4029 = vunpack.c.h.b16 %v730
        %v4030 = vunpack.c.l.b16 %v731
        %v4031 = vunpack.c.h.b16 %v731
        %v4032 = vunpack.c.l.b16 %v732
        %v4033 = vunpack.c.h.b16 %v732
        %v4034 = vunpack.c.l.b16 %v733
        %v4035 = vunpack.c.h.b16 %v733
        %v4036 = vunpack.c.l.b16 %v734
        %v4037 = vunpack.c.l.b16 %v735
        %v4038 = vunpack.c.h.b16 %v735
        %v4039 = vunpack.c.l.b16 %v736
        %v4040 = vunpack.c.h.b16 %v736
        %v4041 = vunpack.c.l.b16 %v737
        %v4042 = vunpack.c.h.b16 %v737
        %v4043 = vunpack.c.l.b16 %v738
        %v4044 = vunpack.c.h.b16 %v738
        %v4045 = vunpack.c.l.b16 %v739
        %v4046 = vunpack.c.l.b16 %v740
        %v4047 = vunpack.c.h.b16 %v740
        %v4048 = vunpack.c.l.b16 %v741
        %v4049 = vunpack.c.h.b16 %v741
        %v4050 = vunpack.c.l.b16 %v742
        %v4051 = vunpack.c.h.b16 %v742
        %v4052 = vunpack.c.l.b16 %v743
        %v4053 = vunpack.c.h.b16 %v743
        %v4054 = vunpack.c.l.b16 %v744
        %v4055 = vunpack.c.l.b16 %v745
        %v4056 = vunpack.c.h.b16 %v745
        %v4057 = vunpack.c.l.b16 %v746
        %v4058 = vunpack.c.h.b16 %v746
        %v4059 = vunpack.c.l.b16 %v747
        %v4060 = vunpack.c.h.b16 %v747
        %v4061 = vunpack.c.l.b16 %v748
        %v4062 = vunpack.c.h.b16 %v748
        %v4063 = vunpack.c.l.b16 %v749
        %v4064 = vunpack.c.l.b16 %v750
        %v4065 = vunpack.c.h.b16 %v750
        %v4066 = vunpack.c.l.b16 %v751
        %v4067 = vunpack.c.h.b16 %v751
        %v4068 = vunpack.c.l.b16 %v752
        %v4069 = vunpack.c.h.b16 %v752
        %v4070 = vunpack.c.l.b16 %v753
        %v4071 = vunpack.c.h.b16 %v753
        %v4072 = vunpack.c.l.b16 %v754
        %v4073 = vunpack.c.l.b16 %v755
        %v4074 = vunpack.c.h.b16 %v755
        %v4075 = vunpack.c.l.b16 %v756
        %v4076 = vunpack.c.h.b16 %v756
        %v4077 = vunpack.c.l.b16 %v757
        %v4078 = vunpack.c.h.b16 %v757
        %v4079 = vunpack.c.l.b16 %v758
        %v4080 = vunpack.c.h.b16 %v758
        %v4081 = vunpack.c.l.b16 %v759
        %v4082 = vunpack.c.l.b16 %v760
        %v4083 = vunpack.c.h.b16 %v760
        %v4084 = vunpack.c.l.b16 %v761
        %v4085 = vunpack.c.h.b16 %v761
        %v4086 = vunpack.c.l.b16 %v762
        %v4087 = vunpack.c.h.b16 %v762
        %v4088 = vunpack.c.l.b16 %v763
        %v4089 = vunpack.c.h.b16 %v763
        %v4090 = vunpack.c.l.b16 %v764
        %v4091 = vunpack.c.l.b16 %v765
        %v4092 = vunpack.c.h.b16 %v765
        %v4093 = vunpack.c.l.b16 %v766
        %v4094 = vunpack.c.h.b16 %v766
        %v4095 = vunpack.c.l.b16 %v767
        %v4096 = vunpack.c.h.b16 %v767
        %v4097 = vunpack.c.l.b16 %v768
        %v4098 = vunpack.c.h.b16 %v768
        %v4099 = vunpack.c.l.b16 %v769
        %v4100 = vunpack.c.l.b16 %v770
        %v4101 = vunpack.c.h.b16 %v770
        %v4102 = vunpack.c.l.b16 %v771
        %v4103 = vunpack.c.h.b16 %v771
        %v4104 = vunpack.c.l.b16 %v772
        %v4105 = vunpack.c.h.b16 %v772
        %v4106 = vunpack.c.l.b16 %v773
        %v4107 = vunpack.c.h.b16 %v773
        %v4108 = vunpack.c.l.b16 %v774
        %v4109 = vunpack.c.l.b16 %v775
        %v4110 = vunpack.c.h.b16 %v775
        %v4111 = vunpack.c.l.b16 %v776
        %v4112 = vunpack.c.h.b16 %v776
        %v4113 = vunpack.c.l.b16 %v777
        %v4114 = vunpack.c.h.b16 %v777
        %v4115 = vunpack.c.l.b16 %v778
        %v4116 = vunpack.c.h.b16 %v778
        %v4117 = vunpack.c.l.b16 %v779
        %v4118 = vunpack.c.l.b16 %v780
        %v4119 = vunpack.c.h.b16 %v780
        %v4120 = vunpack.c.l.b16 %v781
        %v4121 = vunpack.c.h.b16 %v781
        %v4122 = vunpack.c.l.b16 %v782
        %v4123 = vunpack.c.h.b16 %v782
        %v4124 = vunpack.c.l.b16 %v783
        %v4125 = vunpack.c.h.b16 %v783
        %v4126 = vunpack.c.l.b16 %v784
        %v4127 = vunpack.c.l.b16 %v785
        %v4128 = vunpack.c.h.b16 %v785
        %v4129 = vunpack.c.l.b16 %v786
        %v4130 = vunpack.c.h.b16 %v786
        %v4131 = vunpack.c.l.b16 %v787
        %v4132 = vunpack.c.h.b16 %v787
        %v4133 = vunpack.c.l.b16 %v788
        %v4134 = vunpack.c.h.b16 %v788
        %v4135 = vunpack.c.l.b16 %v789
        %v4136 = vunpack.c.l.b16 %v790
        %v4137 = vunpack.c.h.b16 %v790
        %v4138 = vunpack.c.l.b16 %v791
        %v4139 = vunpack.c.h.b16 %v791
        %v4140 = vunpack.c.l.b16 %v792
        %v4141 = vunpack.c.h.b16 %v792
        %v4142 = vunpack.c.l.b16 %v793
        %v4143 = vunpack.c.h.b16 %v793
        %v4144 = vunpack.c.l.b16 %v794
        %v4145 = vunpack.c.l.b16 %v795
        %v4146 = vunpack.c.h.b16 %v795
        %v4147 = vunpack.c.l.b16 %v796
        %v4148 = vunpack.c.h.b16 %v796
        %v4149 = vunpack.c.l.b16 %v797
        %v4150 = vunpack.c.h.b16 %v797
        %v4151 = vunpack.c.l.b16 %v798
        %v4152 = vunpack.c.h.b16 %v798
        %v4153 = vunpack.c.l.b16 %v799
        %v4154 = vunpack.c.l.b16 %v800
        %v4155 = vunpack.c.h.b16 %v800
        %v4156 = vunpack.c.l.b16 %v801
        %v4157 = vunpack.c.h.b16 %v801
        %v4158 = vunpack.c.l.b16 %v802
        %v4159 = vunpack.c.h.b16 %v802
        %v4160 = vunpack.c.l.b16 %v803
        %v4161 = vunpack.c.h.b16 %v803
        %v4162 = vunpack.c.l.b16 %v804
        %v4163 = vunpack.c.l.b16 %v805
        %v4164 = vunpack.c.h.b16 %v805
        %v4165 = vunpack.c.l.b16 %v806
        %v4166 = vunpack.c.h.b16 %v806
        %v4167 = vunpack.c.l.b16 %v807
        %v4168 = vunpack.c.h.b16 %v807
        %v4169 = vunpack.c.l.b16 %v808
        %v4170 = vunpack.c.h.b16 %v808
        %v4171 = vunpack.c.l.b16 %v809
        %v4172 = vunpack.c.l.b16 %v810
        %v4173 = vunpack.c.h.b16 %v810
        %v4174 = vunpack.c.l.b16 %v811
        %v4175 = vunpack.c.h.b16 %v811
        %v4176 = vunpack.c.l.b16 %v812
        %v4177 = vunpack.c.h.b16 %v812
        %v4178 = vunpack.c.l.b16 %v813
        %v4179 = vunpack.c.h.b16 %v813
        %v4180 = vunpack.c.l.b16 %v814
        %v4181 = vunpack.c.l.b16 %v815
        %v4182 = vunpack.c.h.b16 %v815
        %v4183 = vunpack.c.l.b16 %v816
        %v4184 = vunpack.c.h.b16 %v816
        %v4185 = vunpack.c.l.b16 %v817
        %v4186 = vunpack.c.h.b16 %v817
        %v4187 = vunpack.c.l.b16 %v818
        %v4188 = vunpack.c.h.b16 %v818
        %v4189 = vunpack.c.l.b16 %v819
        %v4190 = vunpack.c.l.b16 %v820
        %v4191 = vunpack.c.h.b16 %v820
        %v4192 = vunpack.c.l.b16 %v821
        %v4193 = vunpack.c.h.b16 %v821
        %v4194 = vunpack.c.l.b16 %v822
        %v4195 = vunpack.c.h.b16 %v822
        %v4196 = vunpack.c.l.b16 %v823
        %v4197 = vunpack.c.h.b16 %v823
        %v4198 = vunpack.c.l.b16 %v824
        %v4199 = vunpack.c.l.b16 %v825
        %v4200 = vunpack.c.h.b16 %v825
        %v4201 = vunpack.c.l.b16 %v826
        %v4202 = vunpack.c.h.b16 %v826
        %v4203 = vunpack.c.l.b16 %v827
        %v4204 = vunpack.c.h.b16 %v827
        %v4205 = vunpack.c.l.b16 %v828
        %v4206 = vunpack.c.h.b16 %v828
        %v4207 = vunpack.c.l.b16 %v829
        %v4208 = vunpack.c.l.b16 %v830
        %v4209 = vunpack.c.h.b16 %v830
        %v4210 = vunpack.c.l.b16 %v831
        %v4211 = vunpack.c.h.b16 %v831
        %v4212 = vunpack.c.l.b16 %v832
        %v4213 = vunpack.c.h.b16 %v832
        %v4214 = vunpack.c.l.b16 %v833
        %v4215 = vunpack.c.h.b16 %v833
        %v4216 = vunpack.c.l.b16 %v834
        %v4217 = vunpack.c.l.b16 %v835
        %v4218 = vunpack.c.h.b16 %v835
        %v4219 = vunpack.c.l.b16 %v836
        %v4220 = vunpack.c.h.b16 %v836
        %v4221 = vunpack.c.l.b16 %v837
        %v4222 = vunpack.c.h.b16 %v837
        %v4223 = vunpack.c.l.b16 %v838
        %v4224 = vunpack.c.h.b16 %v838
        %v4225 = vunpack.c.l.b16 %v839
        %v4226 = vunpack.c.l.b16 %v840
        %v4227 = vunpack.c.h.b16 %v840
        %v4228 = vunpack.c.l.b16 %v841
        %v4229 = vunpack.c.h.b16 %v841
        %v4230 = vunpack.c.l.b16 %v842
        %v4231 = vunpack.c.h.b16 %v842
        %v4232 = vunpack.c.l.b16 %v843
        %v4233 = vunpack.c.h.b16 %v843
        %v4234 = vunpack.c.l.b16 %v844
        %v4235 = vunpack.c.l.b16 %v845
        %v4236 = vunpack.c.h.b16 %v845
        %v4237 = vunpack.c.l.b16 %v846
        %v4238 = vunpack.c.h.b16 %v846
        %v4239 = vunpack.c.l.b16 %v847
        %v4240 = vunpack.c.h.b16 %v847
        %v4241 = vunpack.c.l.b16 %v848
        %v4242 = vunpack.c.h.b16 %v848
        %v4243 = vunpack.c.l.b16 %v849
        %v4244 = vunpack.c.l.b16 %v850
        %v4245 = vunpack.c.h.b16 %v850
        %v4246 = vunpack.c.l.b16 %v851
        %v4247 = vunpack.c.h.b16 %v851
        %v4248 = vunpack.c.l.b16 %v852
        %v4249 = vunpack.c.h.b16 %v852
        %v4250 = vunpack.c.l.b16 %v853
        %v4251 = vunpack.c.h.b16 %v853
        %v4252 = vunpack.c.l.b16 %v854
        %v4253 = vunpack.c.l.b16 %v855
        %v4254 = vunpack.c.h.b16 %v855
        %v4255 = vunpack.c.l.b16 %v856
        %v4256 = vunpack.c.h.b16 %v856
        %v4257 = vunpack.c.l.b16 %v857
        %v4258 = vunpack.c.h.b16 %v857
        %v4259 = vunpack.c.l.b16 %v858
        %v4260 = vunpack.c.h.b16 %v858
        %v4261 = vunpack.c.l.b16 %v859
        %v4262 = vunpack.c.l.b16 %v860
        %v4263 = vunpack.c.h.b16 %v860
        %v4264 = vunpack.c.l.b16 %v861
        %v4265 = vunpack.c.h.b16 %v861
        %v4266 = vunpack.c.l.b16 %v862
        %v4267 = vunpack.c.h.b16 %v862
        %v4268 = vunpack.c.l.b16 %v863
        %v4269 = vunpack.c.h.b16 %v863
        %v4270 = vunpack.c.l.b16 %v864
        %v4271 = vunpack.c.l.b16 %v865
        %v4272 = vunpack.c.h.b16 %v865
        %v4273 = vunpack.c.l.b16 %v866
        %v4274 = vunpack.c.h.b16 %v866
        %v4275 = vunpack.c.l.b16 %v867
        %v4276 = vunpack.c.h.b16 %v867
        %v4277 = vunpack.c.l.b16 %v868
        %v4278 = vunpack.c.h.b16 %v868
        %v4279 = vunpack.c.l.b16 %v869
        %v4280 = vunpack.c.l.b16 %v870
        %v4281 = vunpack.c.h.b16 %v870
        %v4282 = vunpack.c.l.b16 %v871
        %v4283 = vunpack.c.h.b16 %v871
        %v4284 = vunpack.c.l.b16 %v872
        %v4285 = vunpack.c.h.b16 %v872
        %v4286 = vunpack.c.l.b16 %v873
        %v4287 = vunpack.c.h.b16 %v873
        %v4288 = vunpack.c.l.b16 %v874
        %v4289 = vunpack.c.l.b16 %v875
        %v4290 = vunpack.c.h.b16 %v875
        %v4291 = vunpack.c.l.b16 %v876
        %v4292 = vunpack.c.h.b16 %v876
        %v4293 = vunpack.c.l.b16 %v877
        %v4294 = vunpack.c.h.b16 %v877
        %v4295 = vunpack.c.l.b16 %v878
        %v4296 = vunpack.c.h.b16 %v878
        %v4297 = vunpack.c.l.b16 %v879
        %v4298 = vunpack.c.l.b16 %v880
        %v4299 = vunpack.c.h.b16 %v880
        %v4300 = vunpack.c.l.b16 %v881
        %v4301 = vunpack.c.h.b16 %v881
        %v4302 = vunpack.c.l.b16 %v882
        %v4303 = vunpack.c.h.b16 %v882
        %v4304 = vunpack.c.l.b16 %v883
        %v4305 = vunpack.c.h.b16 %v883
        %v4306 = vunpack.c.l.b16 %v884
        %v4307 = vunpack.c.l.b16 %v885
        %v4308 = vunpack.c.h.b16 %v885
        %v4309 = vunpack.c.l.b16 %v886
        %v4310 = vunpack.c.h.b16 %v886
        %v4311 = vunpack.c.l.b16 %v887
        %v4312 = vunpack.c.h.b16 %v887
        %v4313 = vunpack.c.l.b16 %v888
        %v4314 = vunpack.c.h.b16 %v888
        %v4315 = vunpack.c.l.b16 %v889
        %v4316 = vunpack.c.l.b16 %v890
        %v4317 = vunpack.c.h.b16 %v890
        %v4318 = vunpack.c.l.b16 %v891
        %v4319 = vunpack.c.h.b16 %v891
        %v4320 = vunpack.c.l.b16 %v892
        %v4321 = vunpack.c.h.b16 %v892
        %v4322 = vunpack.c.l.b16 %v893
        %v4323 = vunpack.c.h.b16 %v893
        %v4324 = vunpack.c.l.b16 %v894
        %v4325 = vunpack.c.l.b16 %v895
        %v4326 = vunpack.c.h.b16 %v895
        %v4327 = vunpack.c.l.b16 %v896
        %v4328 = vunpack.c.h.b16 %v896
        %v4329 = vunpack.c.l.b16 %v897
        %v4330 = vunpack.c.h.b16 %v897
        %v4331 = vunpack.c.l.b16 %v898
        %v4332 = vunpack.c.h.b16 %v898
        %v4333 = vunpack.c.l.b16 %v899
        %v4334 = vunpack.c.l.b16 %v900
        %v4335 = vunpack.c.h.b16 %v900
        %v4336 = vunpack.c.l.b16 %v901
        %v4337 = vunpack.c.h.b16 %v901
        %v4338 = vunpack.c.l.b16 %v902
        %v4339 = vunpack.c.h.b16 %v902
        %v4340 = vunpack.c.l.b16 %v903
        %v4341 = vunpack.c.h.b16 %v903
        %v4342 = vunpack.c.l.b16 %v904
        %v4343 = vunpack.c.l.b16 %v905
        %v4344 = vunpack.c.h.b16 %v905
        %v4345 = vunpack.c.l.b16 %v906
        %v4346 = vunpack.c.h.b16 %v906
        %v4347 = vunpack.c.l.b16 %v907
        %v4348 = vunpack.c.h.b16 %v907
        %v4349 = vunpack.c.l.b16 %v908
        %v4350 = vunpack.c.h.b16 %v908
        %v4351 = vunpack.c.l.b16 %v909
        %v4352 = vunpack.c.l.b16 %v910
        %v4353 = vunpack.c.h.b16 %v910
        %v4354 = vunpack.c.l.b16 %v911
        %v4355 = vunpack.c.h.b16 %v911
        %v4356 = vunpack.c.l.b16 %v912
        %v4357 = vunpack.c.h.b16 %v912
        %v4358 = vunpack.c.l.b16 %v913
        %v4359 = vunpack.c.h.b16 %v913
        %v4360 = vunpack.c.l.b16 %v914
        %v4361 = vunpack.c.l.b16 %v915
        %v4362 = vunpack.c.h.b16 %v915
        %v4363 = vunpack.c.l.b16 %v916
        %v4364 = vunpack.c.h.b16 %v916
        %v4365 = vunpack.c.l.b16 %v917
        %v4366 = vunpack.c.h.b16 %v917
        %v4367 = vunpack.c.l.b16 %v918
        %v4368 = vunpack.c.h.b16 %v918
        %v4369 = vunpack.c.l.b16 %v919
        %v4370 = vunpack.c.l.b16 %v920
        %v4371 = vunpack.c.h.b16 %v920
        %v4372 = vunpack.c.l.b16 %v921
        %v4373 = vunpack.c.h.b16 %v921
        %v4374 = vunpack.c.l.b16 %v922
        %v4375 = vunpack.c.h.b16 %v922
        %v4376 = vunpack.c.l.b16 %v923
        %v4377 = vunpack.c.h.b16 %v923
        %v4378 = vunpack.c.l.b16 %v924
        %v4379 = vunpack.c.l.b16 %v925
        %v4380 = vunpack.c.h.b16 %v925
        %v4381 = vunpack.c.l.b16 %v926
        %v4382 = vunpack.c.h.b16 %v926
        %v4383 = vunpack.c.l.b16 %v927
        %v4384 = vunpack.c.h.b16 %v927
        %v4385 = vunpack.c.l.b16 %v928
        %v4386 = vunpack.c.h.b16 %v928
        %v4387 = vunpack.c.l.b16 %v929
        %v4388 = vunpack.c.l.b16 %v930
        %v4389 = vunpack.c.h.b16 %v930
        %v4390 = vunpack.c.l.b16 %v931
        %v4391 = vunpack.c.h.b16 %v931
        %v4392 = vunpack.c.l.b16 %v932
        %v4393 = vunpack.c.h.b16 %v932
        %v4394 = vunpack.c.l.b16 %v933
        %v4395 = vunpack.c.h.b16 %v933
        %v4396 = vunpack.c.l.b16 %v934
        %v4397 = vunpack.c.l.b16 %v935
        %v4398 = vunpack.c.h.b16 %v935
        %v4399 = vunpack.c.l.b16 %v936
        %v4400 = vunpack.c.h.b16 %v936
        %v4401 = vunpack.c.l.b16 %v937
        %v4402 = vunpack.c.h.b16 %v937
        %v4403 = vunpack.c.l.b16 %v938
        %v4404 = vunpack.c.h.b16 %v938
        %v4405 = vunpack.c.l.b16 %v939
        %v4406 = vunpack.c.l.b16 %v940
        %v4407 = vunpack.c.h.b16 %v940
        %v4408 = vunpack.c.l.b16 %v941
        %v4409 = vunpack.c.h.b16 %v941
        %v4410 = vunpack.c.l.b16 %v942
        %v4411 = vunpack.c.h.b16 %v942
        %v4412 = vunpack.c.l.b16 %v943
        %v4413 = vunpack.c.h.b16 %v943
        %v4414 = vunpack.c.l.b16 %v944
        %v4415 = vunpack.c.l.b16 %v945
        %v4416 = vunpack.c.h.b16 %v945
        %v4417 = vunpack.c.l.b16 %v946
        %v4418 = vunpack.c.h.b16 %v946
        %v4419 = vunpack.c.l.b16 %v947
        %v4420 = vunpack.c.h.b16 %v947
        %v4421 = vunpack.c.l.b16 %v948
        %v4422 = vunpack.c.h.b16 %v948
        %v4423 = vunpack.c.l.b16 %v949
        %v4424 = vunpack.c.l.b16 %v950
        %v4425 = vunpack.c.h.b16 %v950
        %v4426 = vunpack.c.l.b16 %v951
        %v4427 = vunpack.c.h.b16 %v951
        %v4428 = vunpack.c.l.b16 %v952
        %v4429 = vunpack.c.h.b16 %v952
        %v4430 = vunpack.c.l.b16 %v953
        %v4431 = vunpack.c.h.b16 %v953
        %v4432 = vunpack.c.l.b16 %v954
        %v4433 = vunpack.c.l.b16 %v955
        %v4434 = vunpack.c.h.b16 %v955
        %v4435 = vunpack.c.l.b16 %v956
        %v4436 = vunpack.c.h.b16 %v956
        %v4437 = vunpack.c.l.b16 %v957
        %v4438 = vunpack.c.h.b16 %v957
        %v4439 = vunpack.c.l.b16 %v958
        %v4440 = vunpack.c.h.b16 %v958
        %v4441 = vunpack.c.l.b16 %v959
        %v4442 = vunpack.c.l.b16 %v960
        %v4443 = vunpack.c.h.b16 %v960
        %v4444 = vunpack.c.l.b16 %v961
        %v4445 = vunpack.c.h.b16 %v961
        %v4446 = vunpack.c.l.b16 %v962
        %v4447 = vunpack.c.h.b16 %v962
        %v4448 = vunpack.c.l.b16 %v963
        %v4449 = vunpack.c.h.b16 %v963
        %v4450 = vunpack.c.l.b16 %v964
        %v4451 = vunpack.c.l.b16 %v965
        %v4452 = vunpack.c.h.b16 %v965
        %v4453 = vunpack.c.l.b16 %v966
        %v4454 = vunpack.c.h.b16 %v966
        %v4455 = vunpack.c.l.b16 %v967
        %v4456 = vunpack.c.h.b16 %v967
        %v4457 = vunpack.c.l.b16 %v968
        %v4458 = vunpack.c.h.b16 %v968
        %v4459 = vunpack.c.l.b16 %v969
        %v4460 = vunpack.c.l.b16 %v970
        %v4461 = vunpack.c.h.b16 %v970
        %v4462 = vunpack.c.l.b16 %v971
        %v4463 = vunpack.c.h.b16 %v971
        %v4464 = vunpack.c.l.b16 %v972
        %v4465 = vunpack.c.h.b16 %v972
        %v4466 = vunpack.c.l.b16 %v973
        %v4467 = vunpack.c.h.b16 %v973
        %v4468 = vunpack.c.l.b16 %v974
        %v4469 = vunpack.c.l.b16 %v975
        %v4470 = vunpack.c.h.b16 %v975
        %v4471 = vunpack.c.l.b16 %v976
        %v4472 = vunpack.c.h.b16 %v976
        %v4473 = vunpack.c.l.b16 %v977
        %v4474 = vunpack.c.h.b16 %v977
        %v4475 = vunpack.c.l.b16 %v978
        %v4476 = vunpack.c.h.b16 %v978
        %v4477 = vunpack.c.l.b16 %v979
        %v4478 = vunpack.c.l.b16 %v980
        %v4479 = vunpack.c.h.b16 %v980
        %v4480 = vunpack.c.l.b16 %v981
        %v4481 = vunpack.c.h.b16 %v981
        %v4482 = vunpack.c.l.b16 %v982
        %v4483 = vunpack.c.h.b16 %v982
        %v4484 = vunpack.c.l.b16 %v983
        %v4485 = vunpack.c.h.b16 %v983
        %v4486 = vunpack.c.l.b16 %v984
        %v4487 = vunpack.c.l.b16 %v985
        %v4488 = vunpack.c.h.b16 %v985
        %v4489 = vunpack.c.l.b16 %v986
        %v4490 = vunpack.c.h.b16 %v986
        %v4491 = vunpack.c.l.b16 %v987
        %v4492 = vunpack.c.h.b16 %v987
        %v4493 = vunpack.c.l.b16 %v988
        %v4494 = vunpack.c.h.b16 %v988
        %v4495 = vunpack.c.l.b16 %v989
        %v4496 = vunpack.c.l.b16 %v990
        %v4497 = vunpack.c.h.b16 %v990
        %v4498 = vunpack.c.l.b16 %v991
        %v4499 = vunpack.c.h.b16 %v991
        %v4500 = vunpack.c.l.b16 %v992
        %v4501 = vunpack.c.h.b16 %v992
        %v4502 = vunpack.c.l.b16 %v993
        %v4503 = vunpack.c.h.b16 %v993
        %v4504 = vunpack.c.l.b16 %v994
        %v4505 = vunpack.c.l.b16 %v995
        %v4506 = vunpack.c.h.b16 %v995
        %v4507 = vunpack.c.l.b16 %v996
        %v4508 = vunpack.c.h.b16 %v996
        %v4509 = vunpack.c.l.b16 %v997
        %v4510 = vunpack.c.h.b16 %v997
        %v4511 = vunpack.c.l.b16 %v998
        %v4512 = vunpack.c.h.b16 %v998
        %v4513 = vunpack.c.l.b16 %v999
        %v4514 = vunpack.c.l.b16 %v1000
        %v4515 = vunpack.c.h.b16 %v1000
        %v4516 = vunpack.c.l.b16 %v1001
        %v4517 = vunpack.c.h.b16 %v1001
        %v4518 = vunpack.c.l.b16 %v1002
        %v4519 = vunpack.c.h.b16 %v1002
        %v4520 = vunpack.c.l.b16 %v1003
        %v4521 = vunpack.c.h.b16 %v1003
        %v4522 = vunpack.c.l.b16 %v1004
        %v4523 = vunpack.c.l.b16 %v1005
        %v4524 = vunpack.c.h.b16 %v1005
        %v4525 = vunpack.c.l.b16 %v1006
        %v4526 = vunpack.c.h.b16 %v1006
        %v4527 = vunpack.c.l.b16 %v1007
        %v4528 = vunpack.c.h.b16 %v1007
        %v4529 = vunpack.c.l.b16 %v1008
        %v4530 = vunpack.c.h.b16 %v1008
        %v4531 = vunpack.c.l.b16 %v1009
        %v4532 = vunpack.c.l.b16 %v1010
        %v4533 = vunpack.c.h.b16 %v1010
        %v4534 = vunpack.c.l.b16 %v1011
        %v4535 = vunpack.c.h.b16 %v1011
        %v4536 = vunpack.c.l.b16 %v1012
        %v4537 = vunpack.c.h.b16 %v1012
        %v4538 = vunpack.c.l.b16 %v1013
        %v4539 = vunpack.c.h.b16 %v1013
        %v4540 = vunpack.c.l.b16 %v1014
        %v4541 = vunpack.c.l.b16 %v1015
        %v4542 = vunpack.c.h.b16 %v1015
        %v4543 = vunpack.c.l.b16 %v1016
        %v4544 = vunpack.c.h.b16 %v1016
        %v4545 = vunpack.c.l.b16 %v1017
        %v4546 = vunpack.c.h.b16 %v1017
        %v4547 = vunpack.c.l.b16 %v1018
        %v4548 = vunpack.c.h.b16 %v1018
        %v4549 = vunpack.c.l.b16 %v1019
        %v4550 = vunpack.c.l.b16 %v1020
        %v4551 = vunpack.c.h.b16 %v1020
        %v4552 = vunpack.c.l.b16 %v1021
        %v4553 = vunpack.c.h.b16 %v1021
        %v4554 = vunpack.c.l.b16 %v1022
        %v4555 = vunpack.c.h.b16 %v1022
        %v4556 = vunpack.c.l.b16 %v1023
        %v4557 = vunpack.c.h.b16 %v1023
        %v4558 = vunpack.c.l.b16 %v1024
        %v4559 = vunpack.c.l.b16 %v1025
        %v4560 = vunpack.c.h.b16 %v1025
        %v4561 = vunpack.c.l.b16 %v1026
        %v4562 = vunpack.c.h.b16 %v1026
        %v4563 = vunpack.c.l.b16 %v1027
        %v4564 = vunpack.c.h.b16 %v1027
        %v4565 = vunpack.c.l.b16 %v1028
        %v4566 = vunpack.c.h.b16 %v1028
        %v4567 = vunpack.c.l.b16 %v1029
        %v4568 = vunpack.c.l.b16 %v1030
        %v4569 = vunpack.c.h.b16 %v1030
        %v4570 = vunpack.c.l.b16 %v1031
        %v4571 = vunpack.c.h.b16 %v1031
        %v4572 = vunpack.c.l.b16 %v1032
        %v4573 = vunpack.c.h.b16 %v1032
        %v4574 = vunpack.c.l.b16 %v1033
        %v4575 = vunpack.c.h.b16 %v1033
        %v4576 = vunpack.c.l.b16 %v1034
        %v4577 = vunpack.c.l.b16 %v1035
        %v4578 = vunpack.c.h.b16 %v1035
        %v4579 = vunpack.c.l.b16 %v1036
        %v4580 = vunpack.c.h.b16 %v1036
        %v4581 = vunpack.c.l.b16 %v1037
        %v4582 = vunpack.c.h.b16 %v1037
        %v4583 = vunpack.c.l.b16 %v1038
        %v4584 = vunpack.c.h.b16 %v1038
        %v4585 = vunpack.c.l.b16 %v1039
        %v4586 = vunpack.c.l.b16 %v1040
        %v4587 = vunpack.c.h.b16 %v1040
        %v4588 = vunpack.c.l.b16 %v1041
        %v4589 = vunpack.c.h.b16 %v1041
        %v4590 = vunpack.c.l.b16 %v1042
        %v4591 = vunpack.c.h.b16 %v1042
        %v4592 = vunpack.c.l.b16 %v1043
        %v4593 = vunpack.c.h.b16 %v1043
        %v4594 = vunpack.c.l.b16 %v1044
        %v4595 = vunpack.c.l.b16 %v1045
        %v4596 = vunpack.c.h.b16 %v1045
        %v4597 = vunpack.c.l.b16 %v1046
        %v4598 = vunpack.c.h.b16 %v1046
        %v4599 = vunpack.c.l.b16 %v1047
        %v4600 = vunpack.c.h.b16 %v1047
        %v4601 = vunpack.c.l.b16 %v1048
        %v4602 = vunpack.c.h.b16 %v1048
        %v4603 = vunpack.c.l.b16 %v1049
        %v4604 = vunpack.c.l.b16 %v1050
        %v4605 = vunpack.c.h.b16 %v1050
        %v4606 = vunpack.c.l.b16 %v1051
        %v4607 = vunpack.c.h.b16 %v1051
        %v4608 = vunpack.c.l.b16 %v1052
        %v4609 = vunpack.c.h.b16 %v1052
        %v4610 = vunpack.c.l.b16 %v1053
        %v4611 = vunpack.c.h.b16 %v1053
        %v4612 = vunpack.c.l.b16 %v1054
        %v4613 = vunpack.c.l.b16 %v1055
        %v4614 = vunpack.c.h.b16 %v1055
        %v4615 = vunpack.c.l.b16 %v1056
        %v4616 = vunpack.c.h.b16 %v1056
        %v4617 = vunpack.c.l.b16 %v1057
        %v4618 = vunpack.c.h.b16 %v1057
        %v4619 = vunpack.c.l.b16 %v1058
        %v4620 = vunpack.c.h.b16 %v1058
        %v4621 = vunpack.c.l.b16 %v1059
        %v4622 = vunpack.c.l.b16 %v1060
        %v4623 = vunpack.c.h.b16 %v1060
        %v4624 = vunpack.c.l.b16 %v1061
        %v4625 = vunpack.c.h.b16 %v1061
        %v4626 = vunpack.c.l.b16 %v1062
        %v4627 = vunpack.c.h.b16 %v1062
        %v4628 = vunpack.c.l.b16 %v1063
        %v4629 = vunpack.c.h.b16 %v1063
        %v4630 = vunpack.c.l.b16 %v1064
        %v4631 = vunpack.c.l.b16 %v1065
        %v4632 = vunpack.c.h.b16 %v1065
        %v4633 = vunpack.c.l.b16 %v1066
        %v4634 = vunpack.c.h.b16 %v1066
        %v4635 = vunpack.c.l.b16 %v1067
        %v4636 = vunpack.c.h.b16 %v1067
        %v4637 = vunpack.c.l.b16 %v1068
        %v4638 = vunpack.c.h.b16 %v1068
        %v4639 = vunpack.c.l.b16 %v1069
        %v4640 = vunpack.c.l.b16 %v1070
        %v4641 = vunpack.c.h.b16 %v1070
        %v4642 = vunpack.c.l.b16 %v1071
        %v4643 = vunpack.c.h.b16 %v1071
        %v4644 = vunpack.c.l.b16 %v1072
        %v4645 = vunpack.c.h.b16 %v1072
        %v4646 = vunpack.c.l.b16 %v1073
        %v4647 = vunpack.c.h.b16 %v1073
        %v4648 = vunpack.c.l.b16 %v1074
        %v4649 = vunpack.c.l.b16 %v1075
        %v4650 = vunpack.c.h.b16 %v1075
        %v4651 = vunpack.c.l.b16 %v1076
        %v4652 = vunpack.c.h.b16 %v1076
        %v4653 = vunpack.c.l.b16 %v1077
        %v4654 = vunpack.c.h.b16 %v1077
        %v4655 = vunpack.c.l.b16 %v1078
        %v4656 = vunpack.c.h.b16 %v1078
        %v4657 = vunpack.c.l.b16 %v1079
        %v4658 = vunpack.c.l.b16 %v1080
        %v4659 = vunpack.c.h.b16 %v1080
        %v4660 = vunpack.c.l.b16 %v1081
        %v4661 = vunpack.c.h.b16 %v1081
        %v4662 = vunpack.c.l.b16 %v1082
        %v4663 = vunpack.c.h.b16 %v1082
        %v4664 = vunpack.c.l.b16 %v1083
        %v4665 = vunpack.c.h.b16 %v1083
        %v4666 = vunpack.c.l.b16 %v1084
        %v4667 = vunpack.c.l.b16 %v1085
        %v4668 = vunpack.c.h.b16 %v1085
        %v4669 = vunpack.c.l.b16 %v1086
        %v4670 = vunpack.c.h.b16 %v1086
        %v4671 = vunpack.c.l.b16 %v1087
        %v4672 = vunpack.c.h.b16 %v1087
        %v4673 = vunpack.c.l.b16 %v1088
        %v4674 = vunpack.c.h.b16 %v1088
        %v4675 = vunpack.c.l.b16 %v1089
        %v4676 = vunpack.c.l.b16 %v1090
        %v4677 = vunpack.c.h.b16 %v1090
        %v4678 = vunpack.c.l.b16 %v1091
        %v4679 = vunpack.c.h.b16 %v1091
        %v4680 = vunpack.c.l.b16 %v1092
        %v4681 = vunpack.c.h.b16 %v1092
        %v4682 = vunpack.c.l.b16 %v1093
        %v4683 = vunpack.c.h.b16 %v1093
        %v4684 = vunpack.c.l.b16 %v1094
        %v4685 = vunpack.c.l.b16 %v1095
        %v4686 = vunpack.c.h.b16 %v1095
        %v4687 = vunpack.c.l.b16 %v1096
        %v4688 = vunpack.c.h.b16 %v1096
        %v4689 = vunpack.c.l.b16 %v1097
        %v4690 = vunpack.c.h.b16 %v1097
        %v4691 = vunpack.c.l.b16 %v1098
        %v4692 = vunpack.c.h.b16 %v1098
        %v4693 = vunpack.c.l.b16 %v1099
        %v4694 = vunpack.c.l.b16 %v1100
        %v4695 = vunpack.c.h.b16 %v1100
        %v4696 = vunpack.c.l.b16 %v1101
        %v4697 = vunpack.c.h.b16 %v1101
        %v4698 = vunpack.c.l.b16 %v1102
        %v4699 = vunpack.c.h.b16 %v1102
        %v4700 = vunpack.c.l.b16 %v1103
        %v4701 = vunpack.c.h.b16 %v1103
        %v4702 = vunpack.c.l.b16 %v1104
        %v4703 = vunpack.c.l.b16 %v1105
        %v4704 = vunpack.c.h.b16 %v1105
        %v4705 = vunpack.c.l.b16 %v1106
        %v4706 = vunpack.c.h.b16 %v1106
        %v4707 = vunpack.c.l.b16 %v1107
        %v4708 = vunpack.c.h.b16 %v1107
        %v4709 = vunpack.c.l.b16 %v1108
        %v4710 = vunpack.c.h.b16 %v1108
        %v4711 = vunpack.c.l.b16 %v1109
        %v4712 = vunpack.c.l.b16 %v1110
        %v4713 = vunpack.c.h.b16 %v1110
        %v4714 = vunpack.c.l.b16 %v1111
        %v4715 = vunpack.c.h.b16 %v1111
        %v4716 = vunpack.c.l.b16 %v1112
        %v4717 = vunpack.c.h.b16 %v1112
        %v4718 = vunpack.c.l.b16 %v1113
        %v4719 = vunpack.c.h.b16 %v1113
        %v4720 = vunpack.c.l.b16 %v1114
        %v4721 = vunpack.c.l.b16 %v1115
        %v4722 = vunpack.c.h.b16 %v1115
        %v4723 = vunpack.c.l.b16 %v1116
        %v4724 = vunpack.c.h.b16 %v1116
        %v4725 = vunpack.c.l.b16 %v1117
        %v4726 = vunpack.c.h.b16 %v1117
        %v4727 = vunpack.c.l.b16 %v1118
        %v4728 = vunpack.c.h.b16 %v1118
        %v4729 = vunpack.c.l.b16 %v1119
        %v4730 = vunpack.c.l.b16 %v1120
        %v4731 = vunpack.c.h.b16 %v1120
        %v4732 = vunpack.c.l.b16 %v1121
        %v4733 = vunpack.c.h.b16 %v1121
        %v4734 = vunpack.c.l.b16 %v1122
        %v4735 = vunpack.c.h.b16 %v1122
        %v4736 = vunpack.c.l.b16 %v1123
        %v4737 = vunpack.c.h.b16 %v1123
        %v4738 = vunpack.c.l.b16 %v1124
        %v4739 = vunpack.c.l.b16 %v1125
        %v4740 = vunpack.c.h.b16 %v1125
        %v4741 = vunpack.c.l.b16 %v1126
        %v4742 = vunpack.c.h.b16 %v1126
        %v4743 = vunpack.c.l.b16 %v1127
        %v4744 = vunpack.c.h.b16 %v1127
        %v4745 = vunpack.c.l.b16 %v1128
        %v4746 = vunpack.c.h.b16 %v1128
        %v4747 = vunpack.c.l.b16 %v1129
        %v4748 = vunpack.c.l.b16 %v1130
        %v4749 = vunpack.c.h.b16 %v1130
        %v4750 = vunpack.c.l.b16 %v1131
        %v4751 = vunpack.c.h.b16 %v1131
        %v4752 = vunpack.c.l.b16 %v1132
        %v4753 = vunpack.c.h.b16 %v1132
        %v4754 = vunpack.c.l.b16 %v1133
        %v4755 = vunpack.c.h.b16 %v1133
        %v4756 = vunpack.c.l.b16 %v1134
        %v4757 = vunpack.c.l.b16 %v1135
        %v4758 = vunpack.c.h.b16 %v1135
        %v4759 = vunpack.c.l.b16 %v1136
        %v4760 = vunpack.c.h.b16 %v1136
        %v4761 = vunpack.c.l.b16 %v1137
        %v4762 = vunpack.c.h.b16 %v1137
        %v4763 = vunpack.c.l.b16 %v1138
        %v4764 = vunpack.c.h.b16 %v1138
        %v4765 = vunpack.c.l.b16 %v1139
        %v4766 = vunpack.c.l.b16 %v1140
        %v4767 = vunpack.c.h.b16 %v1140
        %v4768 = vunpack.c.l.b16 %v1141
        %v4769 = vunpack.c.h.b16 %v1141
        %v4770 = vunpack.c.l.b16 %v1142
        %v4771 = vunpack.c.h.b16 %v1142
        %v4772 = vunpack.c.l.b16 %v1143
        %v4773 = vunpack.c.h.b16 %v1143
        %v4774 = vunpack.c.l.b16 %v1144
        %v4775 = vunpack.c.l.b16 %v1145
        %v4776 = vunpack.c.h.b16 %v1145
        %v4777 = vunpack.c.l.b16 %v1146
        %v4778 = vunpack.c.h.b16 %v1146
        %v4779 = vunpack.c.l.b16 %v1147
        %v4780 = vunpack.c.h.b16 %v1147
        %v4781 = vunpack.c.l.b16 %v1148
        %v4782 = vunpack.c.h.b16 %v1148
        %v4783 = vunpack.c.l.b16 %v1149
        %v4784 = vunpack.c.l.b16 %v1150
        %v4785 = vunpack.c.h.b16 %v1150
        %v4786 = vunpack.c.l.b16 %v1151
        %v4787 = vunpack.c.h.b16 %v1151
        %v4788 = vunpack.c.l.b16 %v1152
        %v4789 = vunpack.c.h.b16 %v1152
        %v4790 = vunpack.c.l.b16 %v1153
        %v4791 = vunpack.c.h.b16 %v1153
        %v4792 = vunpack.c.l.b16 %v1154
        %v4793 = vunpack.c.l.b16 %v1155
        %v4794 = vunpack.c.h.b16 %v1155
        %v4795 = vunpack.c.l.b16 %v1156
        %v4796 = vunpack.c.h.b16 %v1156
        %v4797 = vunpack.c.l.b16 %v1157
        %v4798 = vunpack.c.h.b16 %v1157
        %v4799 = vunpack.c.l.b16 %v1158
        %v4800 = vunpack.c.h.b16 %v1158
        %v4801 = vunpack.c.l.b16 %v1159
        %v4802 = vunpack.c.l.b16 %v1160
        %v4803 = vunpack.c.h.b16 %v1160
        %v4804 = vunpack.c.l.b16 %v1161
        %v4805 = vunpack.c.h.b16 %v1161
        %v4806 = vunpack.c.l.b16 %v1162
        %v4807 = vunpack.c.h.b16 %v1162
        %v4808 = vunpack.c.l.b16 %v1163
        %v4809 = vunpack.c.h.b16 %v1163
        %v4810 = vunpack.c.l.b16 %v1164
        %v4811 = vunpack.c.l.b16 %v1165
        %v4812 = vunpack.c.h.b16 %v1165
        %v4813 = vunpack.c.l.b16 %v1166
        %v4814 = vunpack.c.h.b16 %v1166
        %v4815 = vunpack.c.l.b16 %v1167
        %v4816 = vunpack.c.h.b16 %v1167
        %v4817 = vunpack.c.l.b16 %v1168
        %v4818 = vunpack.c.h.b16 %v1168
        %v4819 = vunpack.c.l.b16 %v1169
        %v4820 = vunpack.c.l.b16 %v1170
        %v4821 = vunpack.c.h.b16 %v1170
        %v4822 = vunpack.c.l.b16 %v1171
        %v4823 = vunpack.c.h.b16 %v1171
        %v4824 = vunpack.c.l.b16 %v1172
        %v4825 = vunpack.c.h.b16 %v1172
        %v4826 = vunpack.c.l.b16 %v1173
        %v4827 = vunpack.c.h.b16 %v1173
        %v4828 = vunpack.c.l.b16 %v1174
        %v4829 = vunpack.c.l.b16 %v1175
        %v4830 = vunpack.c.h.b16 %v1175
        %v4831 = vunpack.c.l.b16 %v1176
        %v4832 = vunpack.c.h.b16 %v1176
        %v4833 = vunpack.c.l.b16 %v1177
        %v4834 = vunpack.c.h.b16 %v1177
        %v4835 = vunpack.c.l.b16 %v1178
        %v4836 = vunpack.c.h.b16 %v1178
        %v4837 = vunpack.c.l.b16 %v1179
        %v4838 = vunpack.c.l.b16 %v1180
        %v4839 = vunpack.c.h.b16 %v1180
        %v4840 = vunpack.c.l.b16 %v1181
        %v4841 = vunpack.c.h.b16 %v1181
        %v4842 = vunpack.c.l.b16 %v1182
        %v4843 = vunpack.c.h.b16 %v1182
        %v4844 = vunpack.c.l.b16 %v1183
        %v4845 = vunpack.c.h.b16 %v1183
        %v4846 = vunpack.c.l.b16 %v1184
        %v4847 = vunpack.c.l.b16 %v1185
        %v4848 = vunpack.c.h.b16 %v1185
        %v4849 = vunpack.c.l.b16 %v1186
        %v4850 = vunpack.c.h.b16 %v1186
        %v4851 = vunpack.c.l.b16 %v1187
        %v4852 = vunpack.c.h.b16 %v1187
        %v4853 = vunpack.c.l.b16 %v1188
        %v4854 = vunpack.c.h.b16 %v1188
        %v4855 = vunpack.c.l.b16 %v1189
        %v4856 = vunpack.c.l.b16 %v1190
        %v4857 = vunpack.c.h.b16 %v1190
        %v4858 = vunpack.c.l.b16 %v1191
        %v4859 = vunpack.c.h.b16 %v1191
        %v4860 = vunpack.c.l.b16 %v1192
        %v4861 = vunpack.c.h.b16 %v1192
        %v4862 = vunpack.c.l.b16 %v1193
        %v4863 = vunpack.c.h.b16 %v1193
        %v4864 = vunpack.c.l.b16 %v1194
        %v4865 = vunpack.c.l.b16 %v1195
        %v4866 = vunpack.c.h.b16 %v1195
        %v4867 = vunpack.c.l.b16 %v1196
        %v4868 = vunpack.c.h.b16 %v1196
        %v4869 = vunpack.c.l.b16 %v1197
        %v4870 = vunpack.c.h.b16 %v1197
        %v4871 = vunpack.c.l.b16 %v1198
        %v4872 = vunpack.c.h.b16 %v1198
        %v4873 = vunpack.c.l.b16 %v1199
        %v4874 = vunpack.c.l.b16 %v1200
        %v4875 = vunpack.c.h.b16 %v1200
        %v4876 = vunpack.c.l.b16 %v1201
        %v4877 = vunpack.c.h.b16 %v1201
        %v4878 = vunpack.c.l.b16 %v1202
        %v4879 = vunpack.c.h.b16 %v1202
        %v4880 = vunpack.c.l.b16 %v1203
        %v4881 = vunpack.c.h.b16 %v1203
        %v4882 = vunpack.c.l.b16 %v1204
        %v4883 = vunpack.c.l.b16 %v1205
        %v4884 = vunpack.c.h.b16 %v1205
        %v4885 = vunpack.c.l.b16 %v1206
        %v4886 = vunpack.c.h.b16 %v1206
        %v4887 = vunpack.c.l.b16 %v1207
        %v4888 = vunpack.c.h.b16 %v1207
        %v4889 = vunpack.c.l.b16 %v1208
        %v4890 = vunpack.c.h.b16 %v1208
        %v4891 = vunpack.c.l.b16 %v1209
        %v4892 = vunpack.c.l.b16 %v1210
        %v4893 = vunpack.c.h.b16 %v1210
        %v4894 = vunpack.c.l.b16 %v1211
        %v4895 = vunpack.c.h.b16 %v1211
        %v4896 = vunpack.c.l.b16 %v1212
        %v4897 = vunpack.c.h.b16 %v1212
        %v4898 = vunpack.c.l.b16 %v1213
        %v4899 = vunpack.c.h.b16 %v1213
        %v4900 = vunpack.c.l.b16 %v1214
        %v4901 = vunpack.c.l.b16 %v1215
        %v4902 = vunpack.c.h.b16 %v1215
        %v4903 = vunpack.c.l.b16 %v1216
        %v4904 = vunpack.c.h.b16 %v1216
        %v4905 = vunpack.c.l.b16 %v1217
        %v4906 = vunpack.c.h.b16 %v1217
        %v4907 = vunpack.c.l.b16 %v1218
        %v4908 = vunpack.c.h.b16 %v1218
        %v4909 = vunpack.c.l.b16 %v1219
        %v4910 = vunpack.c.l.b16 %v1220
        %v4911 = vunpack.c.h.b16 %v1220
        %v4912 = vunpack.c.l.b16 %v1221
        %v4913 = vunpack.c.h.b16 %v1221
        %v4914 = vunpack.c.l.b16 %v1222
        %v4915 = vunpack.c.h.b16 %v1222
        %v4916 = vunpack.c.l.b16 %v1223
        %v4917 = vunpack.c.h.b16 %v1223
        %v4918 = vunpack.c.l.b16 %v1224
        %v4919 = vunpack.c.l.b16 %v1225
        %v4920 = vunpack.c.h.b16 %v1225
        %v4921 = vunpack.c.l.b16 %v1226
        %v4922 = vunpack.c.h.b16 %v1226
        %v4923 = vunpack.c.l.b16 %v1227
        %v4924 = vunpack.c.h.b16 %v1227
        %v4925 = vunpack.c.l.b16 %v1228
        %v4926 = vunpack.c.h.b16 %v1228
        %v4927 = vunpack.c.l.b16 %v1229
        %v4928 = vunpack.c.l.b16 %v1230
        %v4929 = vunpack.c.h.b16 %v1230
        %v4930 = vunpack.c.l.b16 %v1231
        %v4931 = vunpack.c.h.b16 %v1231
        %v4932 = vunpack.c.l.b16 %v1232
        %v4933 = vunpack.c.h.b16 %v1232
        %v4934 = vunpack.c.l.b16 %v1233
        %v4935 = vunpack.c.h.b16 %v1233
        %v4936 = vunpack.c.l.b16 %v1234
        %v4937 = vunpack.c.l.b16 %v1235
        %v4938 = vunpack.c.h.b16 %v1235
        %v4939 = vunpack.c.l.b16 %v1236
        %v4940 = vunpack.c.h.b16 %v1236
        %v4941 = vunpack.c.l.b16 %v1237
        %v4942 = vunpack.c.h.b16 %v1237
        %v4943 = vunpack.c.l.b16 %v1238
        %v4944 = vunpack.c.h.b16 %v1238
        %v4945 = vunpack.c.l.b16 %v1239
        %v4946 = vunpack.c.l.b16 %v1240
        %v4947 = vunpack.c.h.b16 %v1240
        %v4948 = vunpack.c.l.b16 %v1241
        %v4949 = vunpack.c.h.b16 %v1241
        %v4950 = vunpack.c.l.b16 %v1242
        %v4951 = vunpack.c.h.b16 %v1242
        %v4952 = vunpack.c.l.b16 %v1243
        %v4953 = vunpack.c.h.b16 %v1243
        %v4954 = vunpack.c.l.b16 %v1244
        %v4955 = vunpack.c.l.b16 %v1245
        %v4956 = vunpack.c.h.b16 %v1245
        %v4957 = vunpack.c.l.b16 %v1246
        %v4958 = vunpack.c.h.b16 %v1246
        %v4959 = vunpack.c.l.b16 %v1247
        %v4960 = vunpack.c.h.b16 %v1247
        %v4961 = vunpack.c.l.b16 %v1248
        %v4962 = vunpack.c.h.b16 %v1248
        %v4963 = vunpack.c.l.b16 %v1249
        %v4964 = vunpack.c.l.b16 %v1250
        %v4965 = vunpack.c.h.b16 %v1250
        %v4966 = vunpack.c.l.b16 %v1251
        %v4967 = vunpack.c.h.b16 %v1251
        %v4968 = vunpack.c.l.b16 %v1252
        %v4969 = vunpack.c.h.b16 %v1252
        %v4970 = vunpack.c.l.b16 %v1253
        %v4971 = vunpack.c.h.b16 %v1253
        %v4972 = vunpack.c.l.b16 %v1254
        %v4973 = vunpack.c.l.b16 %v1255
        %v4974 = vunpack.c.h.b16 %v1255
        %v4975 = vunpack.c.l.b16 %v1256
        %v4976 = vunpack.c.h.b16 %v1256
        %v4977 = vunpack.c.l.b16 %v1257
        %v4978 = vunpack.c.h.b16 %v1257
        %v4979 = vunpack.c.l.b16 %v1258
        %v4980 = vunpack.c.h.b16 %v1258
        %v4981 = vunpack.c.l.b16 %v1259
        %v4982 = vunpack.c.l.b16 %v1260
        %v4983 = vunpack.c.h.b16 %v1260
        %v4984 = vunpack.c.l.b16 %v1261
        %v4985 = vunpack.c.h.b16 %v1261
        %v4986 = vunpack.c.l.b16 %v1262
        %v4987 = vunpack.c.h.b16 %v1262
        %v4988 = vunpack.c.l.b16 %v1263
        %v4989 = vunpack.c.h.b16 %v1263
        %v4990 = vunpack.c.l.b16 %v1264
        %v4991 = vunpack.c.l.b16 %v1265
        %v4992 = vunpack.c.h.b16 %v1265
        %v4993 = vunpack.c.l.b16 %v1266
        %v4994 = vunpack.c.h.b16 %v1266
        %v4995 = vunpack.c.l.b16 %v1267
        %v4996 = vunpack.c.h.b16 %v1267
        %v4997 = vunpack.c.l.b16 %v1268
        %v4998 = vunpack.c.h.b16 %v1268
        %v4999 = vunpack.c.l.b16 %v1269
        %v5000 = vunpack.c.l.b16 %v1270
        %v5001 = vunpack.c.h.b16 %v1270
        %v5002 = vunpack.c.l.b16 %v1271
        %v5003 = vunpack.c.h.b16 %v1271
        %v5004 = vunpack.c.l.b16 %v1272
        %v5005 = vunpack.c.h.b16 %v1272
        %v5006 = vunpack.c.l.b16 %v1273
        %v5007 = vunpack.c.h.b16 %v1273
        %v5008 = vunpack.c.l.b16 %v1274
        %v5009 = vunpack.c.l.b16 %v1275
        %v5010 = vunpack.c.h.b16 %v1275
        %v5011 = vunpack.c.l.b16 %v1276
        %v5012 = vunpack.c.h.b16 %v1276
        %v5013 = vunpack.c.l.b16 %v1277
        %v5014 = vunpack.c.h.b16 %v1277
        %v5015 = vunpack.c.l.b16 %v1278
        %v5016 = vunpack.c.h.b16 %v1278
        %v5017 = vunpack.c.l.b16 %v1279
        %v5018 = vunpack.c.l.b16 %v1280
        %v5019 = vunpack.c.h.b16 %v1280
        %v5020 = vunpack.c.l.b16 %v1281
        %v5021 = vunpack.c.h.b16 %v1281
        %v5022 = vunpack.c.l.b16 %v1282
        %v5023 = vunpack.c.h.b16 %v1282
        %v5024 = vunpack.c.l.b16 %v1283
        %v5025 = vunpack.c.h.b16 %v1283
        %v5026 = vunpack.c.l.b16 %v1284
        %v5027 = vunpack.c.l.b16 %v1285
        %v5028 = vunpack.c.h.b16 %v1285
        %v5029 = vunpack.c.l.b16 %v1286
        %v5030 = vunpack.c.h.b16 %v1286
        %v5031 = vunpack.c.l.b16 %v1287
        %v5032 = vunpack.c.h.b16 %v1287
        %v5033 = vunpack.c.l.b16 %v1288
        %v5034 = vunpack.c.h.b16 %v1288
        %v5035 = vunpack.c.l.b16 %v1289
        %v5036 = vunpack.c.l.b16 %v1290
        %v5037 = vunpack.c.h.b16 %v1290
        %v5038 = vunpack.c.l.b16 %v1291
        %v5039 = vunpack.c.h.b16 %v1291
        %v5040 = vunpack.c.l.b16 %v1292
        %v5041 = vunpack.c.h.b16 %v1292
        %v5042 = vunpack.c.l.b16 %v1293
        %v5043 = vunpack.c.h.b16 %v1293
        %v5044 = vunpack.c.l.b16 %v1294
        %v5045 = vunpack.c.l.b16 %v1295
        %v5046 = vunpack.c.h.b16 %v1295
        %v5047 = vunpack.c.l.b16 %v1296
        %v5048 = vunpack.c.h.b16 %v1296
        %v5049 = vunpack.c.l.b16 %v1297
        %v5050 = vunpack.c.h.b16 %v1297
        %v5051 = vunpack.c.l.b16 %v1298
        %v5052 = vunpack.c.h.b16 %v1298
        %v5053 = vunpack.c.l.b16 %v1299
        %v5054 = vunpack.c.l.b16 %v1300
        %v5055 = vunpack.c.h.b16 %v1300
        %v5056 = vunpack.c.l.b16 %v1301
        %v5057 = vunpack.c.h.b16 %v1301
        %v5058 = vunpack.c.l.b16 %v1302
        %v5059 = vunpack.c.h.b16 %v1302
        %v5060 = vunpack.c.l.b16 %v1303
        %v5061 = vunpack.c.h.b16 %v1303
        %v5062 = vunpack.c.l.b16 %v1304
        %v5063 = vunpack.c.l.b16 %v1305
        %v5064 = vunpack.c.h.b16 %v1305
        %v5065 = vunpack.c.l.b16 %v1306
        %v5066 = vunpack.c.h.b16 %v1306
        %v5067 = vunpack.c.l.b16 %v1307
        %v5068 = vunpack.c.h.b16 %v1307
        %v5069 = vunpack.c.l.b16 %v1308
        %v5070 = vunpack.c.h.b16 %v1308
        %v5071 = vunpack.c.l.b16 %v1309
        %v5072 = vunpack.c.l.b16 %v1310
        %v5073 = vunpack.c.h.b16 %v1310
        %v5074 = vunpack.c.l.b16 %v1311
        %v5075 = vunpack.c.h.b16 %v1311
        %v5076 = vunpack.c.l.b16 %v1312
        %v5077 = vunpack.c.h.b16 %v1312
        %v5078 = vunpack.c.l.b16 %v1313
        %v5079 = vunpack.c.h.b16 %v1313
        %v5080 = vunpack.c.l.b16 %v1314
        %v5081 = vunpack.c.l.b16 %v1315
        %v5082 = vunpack.c.h.b16 %v1315
        %v5083 = vunpack.c.l.b16 %v1316
        %v5084 = vunpack.c.h.b16 %v1316
        %v5085 = vunpack.c.l.b16 %v1317
        %v5086 = vunpack.c.h.b16 %v1317
        %v5087 = vunpack.c.l.b16 %v1318
        %v5088 = vunpack.c.h.b16 %v1318
        %v5089 = vunpack.c.l.b16 %v1319
        %v5090 = vunpack.c.l.b16 %v1320
        %v5091 = vunpack.c.h.b16 %v1320
        %v5092 = vunpack.c.l.b16 %v1321
        %v5093 = vunpack.c.h.b16 %v1321
        %v5094 = vunpack.c.l.b16 %v1322
        %v5095 = vunpack.c.h.b16 %v1322
        %v5096 = vunpack.c.l.b16 %v1323
        %v5097 = vunpack.c.h.b16 %v1323
        %v5098 = vunpack.c.l.b16 %v1324
        %v5099 = vunpack.c.l.b16 %v1325
        %v5100 = vunpack.c.h.b16 %v1325
        %v5101 = vunpack.c.l.b16 %v1326
        %v5102 = vunpack.c.h.b16 %v1326
        %v5103 = vunpack.c.l.b16 %v1327
        %v5104 = vunpack.c.h.b16 %v1327
        %v5105 = vunpack.c.l.b16 %v1328
        %v5106 = vunpack.c.h.b16 %v1328
        %v5107 = vunpack.c.l.b16 %v1329
        %v5108 = vunpack.c.l.b16 %v1330
        %v5109 = vunpack.c.h.b16 %v1330
        %v5110 = vunpack.c.l.b16 %v1331
        %v5111 = vunpack.c.h.b16 %v1331
        %v5112 = vunpack.c.l.b16 %v1332
        %v5113 = vunpack.c.h.b16 %v1332
        %v5114 = vunpack.c.l.b16 %v1333
        %v5115 = vunpack.c.h.b16 %v1333
        %v5116 = vunpack.c.l.b16 %v1334
        %v5117 = vunpack.c.l.b16 %v1335
        %v5118 = vunpack.c.h.b16 %v1335
        %v5119 = vunpack.c.l.b16 %v1336
        %v5120 = vunpack.c.h.b16 %v1336
        %v5121 = vunpack.c.l.b16 %v1337
        %v5122 = vunpack.c.h.b16 %v1337
        %v5123 = vunpack.c.l.b16 %v1338
        %v5124 = vunpack.c.h.b16 %v1338
        %v5125 = vunpack.c.l.b16 %v1339
        %v5126 = vunpack.c.l.b16 %v1340
        %v5127 = vunpack.c.h.b16 %v1340
        %v5128 = vunpack.c.l.b16 %v1341
        %v5129 = vunpack.c.h.b16 %v1341
        %v5130 = vunpack.c.l.b16 %v1342
        %v5131 = vunpack.c.h.b16 %v1342
        %v5132 = vunpack.c.l.b16 %v1343
        %v5133 = vunpack.c.h.b16 %v1343
        %v5134 = vunpack.c.l.b16 %v1344
        %v5135 = vunpack.c.l.b16 %v1345
        %v5136 = vunpack.c.h.b16 %v1345
        %v5137 = vunpack.c.l.b16 %v1346
        %v5138 = vunpack.c.h.b16 %v1346
        %v5139 = vunpack.c.l.b16 %v1347
        %v5140 = vunpack.c.h.b16 %v1347
        %v5141 = vunpack.c.l.b16 %v1348
        %v5142 = vunpack.c.h.b16 %v1348
        %v5143 = vunpack.c.l.b16 %v1349
        %v5144 = vunpack.c.l.b16 %v1350
        %v5145 = vunpack.c.h.b16 %v1350
        %v5146 = vunpack.c.l.b16 %v1351
        %v5147 = vunpack.c.h.b16 %v1351
        %v5148 = vunpack.c.l.b16 %v1352
        %v5149 = vunpack.c.h.b16 %v1352
        %v5150 = vunpack.c.l.b16 %v1353
        %v5151 = vunpack.c.h.b16 %v1353
        %v5152 = vunpack.c.l.b16 %v1354
        %v5153 = vunpack.c.l.b16 %v1355
        %v5154 = vunpack.c.h.b16 %v1355
        %v5155 = vunpack.c.l.b16 %v1356
        %v5156 = vunpack.c.h.b16 %v1356
        %v5157 = vunpack.c.l.b16 %v1357
        %v5158 = vunpack.c.h.b16 %v1357
        %v5159 = vunpack.c.l.b16 %v1358
        %v5160 = vunpack.c.h.b16 %v1358
        %v5161 = vunpack.c.l.b16 %v1359
        %v5162 = vunpack.c.l.b16 %v1360
        %v5163 = vunpack.c.h.b16 %v1360
        %v5164 = vunpack.c.l.b16 %v1361
        %v5165 = vunpack.c.h.b16 %v1361
        %v5166 = vunpack.c.l.b16 %v1362
        %v5167 = vunpack.c.h.b16 %v1362
        %v5168 = vunpack.c.l.b16 %v1363
        %v5169 = vunpack.c.h.b16 %v1363
        %v5170 = vunpack.c.l.b16 %v1364
        %v5171 = vunpack.c.l.b16 %v1365
        %v5172 = vunpack.c.h.b16 %v1365
        %v5173 = vunpack.c.l.b16 %v1366
        %v5174 = vunpack.c.h.b16 %v1366
        %v5175 = vunpack.c.l.b16 %v1367
        %v5176 = vunpack.c.h.b16 %v1367
        %v5177 = vunpack.c.l.b16 %v1368
        %v5178 = vunpack.c.h.b16 %v1368
        %v5179 = vunpack.c.l.b16 %v1369
        %v5180 = vunpack.c.l.b16 %v1370
        %v5181 = vunpack.c.h.b16 %v1370
        %v5182 = vunpack.c.l.b16 %v1371
        %v5183 = vunpack.c.h.b16 %v1371
        %v5184 = vunpack.c.l.b16 %v1372
        %v5185 = vunpack.c.h.b16 %v1372
        %v5186 = vunpack.c.l.b16 %v1373
        %v5187 = vunpack.c.h.b16 %v1373
        %v5188 = vunpack.c.l.b16 %v1374
        %v5189 = vunpack.c.l.b16 %v1375
        %v5190 = vunpack.c.h.b16 %v1375
        %v5191 = vunpack.c.l.b16 %v1376
        %v5192 = vunpack.c.h.b16 %v1376
        %v5193 = vunpack.c.l.b16 %v1377
        %v5194 = vunpack.c.h.b16 %v1377
        %v5195 = vunpack.c.l.b16 %v1378
        %v5196 = vunpack.c.h.b16 %v1378
        %v5197 = vunpack.c.l.b16 %v1379
        %v5198 = vunpack.c.l.b16 %v1380
        %v5199 = vunpack.c.h.b16 %v1380
        %v5200 = vunpack.c.l.b16 %v1381
        %v5201 = vunpack.c.h.b16 %v1381
        %v5202 = vunpack.c.l.b16 %v1382
        %v5203 = vunpack.c.h.b16 %v1382
        %v5204 = vunpack.c.l.b16 %v1383
        %v5205 = vunpack.c.h.b16 %v1383
        %v5206 = vunpack.c.l.b16 %v1384
        %v5207 = vunpack.c.l.b16 %v1385
        %v5208 = vunpack.c.h.b16 %v1385
        %v5209 = vunpack.c.l.b16 %v1386
        %v5210 = vunpack.c.h.b16 %v1386
        %v5211 = vunpack.c.l.b16 %v1387
        %v5212 = vunpack.c.h.b16 %v1387
        %v5213 = vunpack.c.l.b16 %v1388
        %v5214 = vunpack.c.h.b16 %v1388
        %v5215 = vunpack.c.l.b16 %v1389
        %v5216 = vunpack.c.l.b16 %v1390
        %v5217 = vunpack.c.h.b16 %v1390
        %v5218 = vunpack.c.l.b16 %v1391
        %v5219 = vunpack.c.h.b16 %v1391
        %v5220 = vunpack.c.l.b16 %v1392
        %v5221 = vunpack.c.h.b16 %v1392
        %v5222 = vunpack.c.l.b16 %v1393
        %v5223 = vunpack.c.h.b16 %v1393
        %v5224 = vunpack.c.l.b16 %v1394
        %v5225 = vunpack.c.l.b16 %v1395
        %v5226 = vunpack.c.h.b16 %v1395
        %v5227 = vunpack.c.l.b16 %v1396
        %v5228 = vunpack.c.h.b16 %v1396
        %v5229 = vunpack.c.l.b16 %v1397
        %v5230 = vunpack.c.h.b16 %v1397
        %v5231 = vunpack.c.l.b16 %v1398
        %v5232 = vunpack.c.h.b16 %v1398
        %v5233 = vunpack.c.l.b16 %v1399
        %v5234 = vunpack.c.l.b16 %v1400
        %v5235 = vunpack.c.h.b16 %v1400
        %v5236 = vunpack.c.l.b16 %v1401
        %v5237 = vunpack.c.h.b16 %v1401
        %v5238 = vunpack.c.l.b16 %v1402
        %v5239 = vunpack.c.h.b16 %v1402
        %v5240 = vunpack.c.l.b16 %v1403
        %v5241 = vunpack.c.h.b16 %v1403
        %v5242 = vunpack.c.l.b16 %v1404
        %v5243 = vunpack.c.l.b16 %v1405
        %v5244 = vunpack.c.h.b16 %v1405
        %v5245 = vunpack.c.l.b16 %v1406
        %v5246 = vunpack.c.h.b16 %v1406
        %v5247 = vunpack.c.l.b16 %v1407
        %v5248 = vunpack.c.h.b16 %v1407
        %v5249 = vunpack.c.l.b16 %v1408
        %v5250 = vunpack.c.h.b16 %v1408
        %v5251 = vunpack.c.l.b16 %v1409
        %v5252 = vunpack.c.l.b16 %v1410
        %v5253 = vunpack.c.h.b16 %v1410
        %v5254 = vunpack.c.l.b16 %v1411
        %v5255 = vunpack.c.h.b16 %v1411
        %v5256 = vunpack.c.l.b16 %v1412
        %v5257 = vunpack.c.h.b16 %v1412
        %v5258 = vunpack.c.l.b16 %v1413
        %v5259 = vunpack.c.h.b16 %v1413
        %v5260 = vunpack.c.l.b16 %v1414
        %v5261 = vunpack.c.l.b16 %v1415
        %v5262 = vunpack.c.h.b16 %v1415
        %v5263 = vunpack.c.l.b16 %v1416
        %v5264 = vunpack.c.h.b16 %v1416
        %v5265 = vunpack.c.l.b16 %v1417
        %v5266 = vunpack.c.h.b16 %v1417
        %v5267 = vunpack.c.l.b16 %v1418
        %v5268 = vunpack.c.h.b16 %v1418
        %v5269 = vunpack.c.l.b16 %v1419
        %v5270 = vunpack.c.l.b16 %v1420
        %v5271 = vunpack.c.h.b16 %v1420
        %v5272 = vunpack.c.l.b16 %v1421
        %v5273 = vunpack.c.h.b16 %v1421
        %v5274 = vunpack.c.l.b16 %v1422
        %v5275 = vunpack.c.h.b16 %v1422
        %v5276 = vunpack.c.l.b16 %v1423
        %v5277 = vunpack.c.h.b16 %v1423
        %v5278 = vunpack.c.l.b16 %v1424
        %v5279 = vunpack.c.l.b16 %v1425
        %v5280 = vunpack.c.h.b16 %v1425
        %v5281 = vunpack.c.l.b16 %v1426
        %v5282 = vunpack.c.h.b16 %v1426
        %v5283 = vunpack.c.l.b16 %v1427
        %v5284 = vunpack.c.h.b16 %v1427
        %v5285 = vunpack.c.l.b16 %v1428
        %v5286 = vunpack.c.h.b16 %v1428
        %v5287 = vunpack.c.l.b16 %v1429
        %v5288 = vunpack.c.l.b16 %v1430
        %v5289 = vunpack.c.h.b16 %v1430
        %v5290 = vunpack.c.l.b16 %v1431
        %v5291 = vunpack.c.h.b16 %v1431
        %v5292 = vunpack.c.l.b16 %v1432
        %v5293 = vunpack.c.h.b16 %v1432
        %v5294 = vunpack.c.l.b16 %v1433
        %v5295 = vunpack.c.h.b16 %v1433
        %v5296 = vunpack.c.l.b16 %v1434
        %v5297 = vunpack.c.l.b16 %v1435
        %v5298 = vunpack.c.h.b16 %v1435
        %v5299 = vunpack.c.l.b16 %v1436
        %v5300 = vunpack.c.h.b16 %v1436
        %v5301 = vunpack.c.l.b16 %v1437
        %v5302 = vunpack.c.h.b16 %v1437
        %v5303 = vunpack.c.l.b16 %v1438
        %v5304 = vunpack.c.h.b16 %v1438
        %v5305 = vunpack.c.l.b16 %v1439
        %v5306 = vunpack.c.l.b16 %v1440
        %v5307 = vunpack.c.h.b16 %v1440
        %v5308 = vunpack.c.l.b16 %v1441
        %v5309 = vunpack.c.h.b16 %v1441
        %v5310 = vunpack.c.l.b16 %v1442
        %v5311 = vunpack.c.h.b16 %v1442
        %v5312 = vunpack.c.l.b16 %v1443
        %v5313 = vunpack.c.h.b16 %v1443
        %v5314 = vunpack.c.l.b16 %v1444
        %v5315 = vunpack.c.l.b16 %v1445
        %v5316 = vunpack.c.h.b16 %v1445
        %v5317 = vunpack.c.l.b16 %v1446
        %v5318 = vunpack.c.h.b16 %v1446
        %v5319 = vunpack.c.l.b16 %v1447
        %v5320 = vunpack.c.h.b16 %v1447
        %v5321 = vunpack.c.l.b16 %v1448
        %v5322 = vunpack.c.h.b16 %v1448
        %v5323 = vunpack.c.l.b16 %v1449
        %v5324 = vunpack.c.l.b16 %v1450
        %v5325 = vunpack.c.h.b16 %v1450
        %v5326 = vunpack.c.l.b16 %v1451
        %v5327 = vunpack.c.h.b16 %v1451
        %v5328 = vunpack.c.l.b16 %v1452
        %v5329 = vunpack.c.h.b16 %v1452
        %v5330 = vunpack.c.l.b16 %v1453
        %v5331 = vunpack.c.h.b16 %v1453
        %v5332 = vunpack.c.l.b16 %v1454
        %v5333 = vunpack.c.l.b16 %v1455
        %v5334 = vunpack.c.h.b16 %v1455
        %v5335 = vunpack.c.l.b16 %v1456
        %v5336 = vunpack.c.h.b16 %v1456
        %v5337 = vunpack.c.l.b16 %v1457
        %v5338 = vunpack.c.h.b16 %v1457
        %v5339 = vunpack.c.l.b16 %v1458
        %v5340 = vunpack.c.h.b16 %v1458
        %v5341 = vunpack.c.l.b16 %v1459
        %v5342 = vunpack.c.l.b16 %v1460
        %v5343 = vunpack.c.h.b16 %v1460
        %v5344 = vunpack.c.l.b16 %v1461
        %v5345 = vunpack.c.h.b16 %v1461
        %v5346 = vunpack.c.l.b16 %v1462
        %v5347 = vunpack.c.h.b16 %v1462
        %v5348 = vunpack.c.l.b16 %v1463
        %v5349 = vunpack.c.h.b16 %v1463
        %v5350 = vunpack.c.l.b16 %v1464
        %v5351 = vunpack.c.l.b16 %v1465
        %v5352 = vunpack.c.h.b16 %v1465
        %v5353 = vunpack.c.l.b16 %v1466
        %v5354 = vunpack.c.h.b16 %v1466
        %v5355 = vunpack.c.l.b16 %v1467
        %v5356 = vunpack.c.h.b16 %v1467
        %v5357 = vunpack.c.l.b16 %v1468
        %v5358 = vunpack.c.h.b16 %v1468
        %v5359 = vunpack.c.l.b16 %v1469
        %v5360 = vunpack.c.l.b16 %v1470
        %v5361 = vunpack.c.h.b16 %v1470
        %v5362 = vunpack.c.l.b16 %v1471
        %v5363 = vunpack.c.h.b16 %v1471
        %v5364 = vunpack.c.l.b16 %v1472
        %v5365 = vunpack.c.h.b16 %v1472
        %v5366 = vunpack.c.l.b16 %v1473
        %v5367 = vunpack.c.h.b16 %v1473
        %v5368 = vunpack.c.l.b16 %v1474
        %v5369 = vunpack.c.l.b16 %v1475
        %v5370 = vunpack.c.h.b16 %v1475
        %v5371 = vunpack.c.l.b16 %v1476
        %v5372 = vunpack.c.h.b16 %v1476
        %v5373 = vunpack.c.l.b16 %v1477
        %v5374 = vunpack.c.h.b16 %v1477
        %v5375 = vunpack.c.l.b16 %v1478
        %v5376 = vunpack.c.h.b16 %v1478
        %v5377 = vunpack.c.l.b16 %v1479
        %v5378 = vunpack.c.l.b16 %v1480
        %v5379 = vunpack.c.h.b16 %v1480
        %v5380 = vunpack.c.l.b16 %v1481
        %v5381 = vunpack.c.h.b16 %v1481
        %v5382 = vunpack.c.l.b16 %v1482
        %v5383 = vunpack.c.h.b16 %v1482
        %v5384 = vunpack.c.l.b16 %v1483
        %v5385 = vunpack.c.h.b16 %v1483
        %v5386 = vunpack.c.l.b16 %v1484
        %v5387 = vunpack.c.l.b16 %v1485
        %v5388 = vunpack.c.h.b16 %v1485
        %v5389 = vunpack.c.l.b16 %v1486
        %v5390 = vunpack.c.h.b16 %v1486
        %v5391 = vunpack.c.l.b16 %v1487
        %v5392 = vunpack.c.h.b16 %v1487
        %v5393 = vunpack.c.l.b16 %v1488
        %v5394 = vunpack.c.h.b16 %v1488
        %v5395 = vunpack.c.l.b16 %v1489
        %v5396 = vunpack.c.l.b16 %v1490
        %v5397 = vunpack.c.h.b16 %v1490
        %v5398 = vunpack.c.l.b16 %v1491
        %v5399 = vunpack.c.h.b16 %v1491
        %v5400 = vunpack.c.l.b16 %v1492
        %v5401 = vunpack.c.h.b16 %v1492
        %v5402 = vunpack.c.l.b16 %v1493
        %v5403 = vunpack.c.h.b16 %v1493
        %v5404 = vunpack.c.l.b16 %v1494
        %v5405 = vunpack.c.l.b16 %v1495
        %v5406 = vunpack.c.h.b16 %v1495
        %v5407 = vunpack.c.l.b16 %v1496
        %v5408 = vunpack.c.h.b16 %v1496
        %v5409 = vunpack.c.l.b16 %v1497
        %v5410 = vunpack.c.h.b16 %v1497
        %v5411 = vunpack.c.l.b16 %v1498
        %v5412 = vunpack.c.h.b16 %v1498
        %v5413 = vunpack.c.l.b16 %v1499
        %v5414 = vunpack.c.l.b16 %v1500
        %v5415 = vunpack.c.h.b16 %v1500
        %v5416 = vunpack.c.l.b16 %v1501
        %v5417 = vunpack.c.h.b16 %v1501
        %v5418 = vunpack.c.l.b16 %v1502
        %v5419 = vunpack.c.h.b16 %v1502
        %v5420 = vunpack.c.l.b16 %v1503
        %v5421 = vunpack.c.h.b16 %v1503
        %v5422 = vunpack.c.l.b16 %v1504
        %v5423 = vunpack.c.l.b16 %v1505
        %v5424 = vunpack.c.h.b16 %v1505
        %v5425 = vunpack.c.l.b16 %v1506
        %v5426 = vunpack.c.h.b16 %v1506
        %v5427 = vunpack.c.l.b16 %v1507
        %v5428 = vunpack.c.h.b16 %v1507
        %v5429 = vunpack.c.l.b16 %v1508
        %v5430 = vunpack.c.h.b16 %v1508
        %v5431 = vunpack.c.l.b16 %v1509
        %v5432 = vunpack.c.l.b16 %v1510
        %v5433 = vunpack.c.h.b16 %v1510
        %v5434 = vunpack.c.l.b16 %v1511
        %v5435 = vunpack.c.h.b16 %v1511
        %v5436 = vunpack.c.l.b16 %v1512
        %v5437 = vunpack.c.h.b16 %v1512
        %v5438 = vunpack.c.l.b16 %v1513
        %v5439 = vunpack.c.h.b16 %v1513
        %v5440 = vunpack.c.l.b16 %v1514
        %v5441 = vunpack.c.l.b16 %v1515
        %v5442 = vunpack.c.h.b16 %v1515
        %v5443 = vunpack.c.l.b16 %v1516
        %v5444 = vunpack.c.h.b16 %v1516
        %v5445 = vunpack.c.l.b16 %v1517
        %v5446 = vunpack.c.h.b16 %v1517
        %v5447 = vunpack.c.l.b16 %v1518
        %v5448 = vunpack.c.h.b16 %v1518
        %v5449 = vunpack.c.l.b16 %v1519
        %v5450 = vunpack.c.l.b16 %v1520
        %v5451 = vunpack.c.h.b16 %v1520
        %v5452 = vunpack.c.l.b16 %v1521
        %v5453 = vunpack.c.h.b16 %v1521
        %v5454 = vunpack.c.l.b16 %v1522
        %v5455 = vunpack.c.h.b16 %v1522
        %v5456 = vunpack.c.l.b16 %v1523
        %v5457 = vunpack.c.h.b16 %v1523
        %v5458 = vunpack.c.l.b16 %v1524
        %v5459 = vunpack.c.l.b16 %v1525
        %v5460 = vunpack.c.h.b16 %v1525
        %v5461 = vunpack.c.l.b16 %v1526
        %v5462 = vunpack.c.h.b16 %v1526
        %v5463 = vunpack.c.l.b16 %v1527
        %v5464 = vunpack.c.h.b16 %v1527
        %v5465 = vunpack.c.l.b16 %v1528
        %v5466 = vunpack.c.h.b16 %v1528
        %v5467 = vunpack.c.l.b16 %v1529
        %v5468 = vunpack.c.l.b16 %v1530
        %v5469 = vunpack.c.h.b16 %v1530
        %v5470 = vunpack.c.l.b16 %v1531
        %v5471 = vunpack.c.h.b16 %v1531
        %v5472 = vunpack.c.l.b16 %v1532
        %v5473 = vunpack.c.h.b16 %v1532
        %v5474 = vunpack.c.l.b16 %v1533
        %v5475 = vunpack.c.h.b16 %v1533
        %v5476 = vunpack.c.l.b16 %v1534
        %v5477 = vunpack.c.l.b16 %v1535
        %v5478 = vunpack.c.h.b16 %v1535
        %v5479 = vunpack.c.l.b16 %v1536
        %v5480 = vunpack.c.h.b16 %v1536
        %v5481 = vunpack.c.l.b16 %v1537
        %v5482 = vunpack.c.h.b16 %v1537
        %v5483 = vunpack.c.l.b16 %v1538
        %v5484 = vunpack.c.h.b16 %v1538
        %v5485 = vunpack.c.l.b16 %v1539
        %v5486 = vunpack.c.l.b16 %v1540
        %v5487 = vunpack.c.h.b16 %v1540
        %v5488 = vunpack.c.l.b16 %v1541
        %v5489 = vunpack.c.h.b16 %v1541
        %v5490 = vunpack.c.l.b16 %v1542
        %v5491 = vunpack.c.h.b16 %v1542
        %v5492 = vunpack.c.l.b16 %v1543
        %v5493 = vunpack.c.h.b16 %v1543
        %v5494 = vunpack.c.l.b16 %v1544
        %v5495 = vunpack.c.l.b16 %v1545
        %v5496 = vunpack.c.h.b16 %v1545
        %v5497 = vunpack.c.l.b16 %v1546
        %v5498 = vunpack.c.h.b16 %v1546
        %v5499 = vunpack.c.l.b16 %v1547
        %v5500 = vunpack.c.h.b16 %v1547
        %v5501 = vunpack.c.l.b16 %v1548
        %v5502 = vunpack.c.h.b16 %v1548
        %v5503 = vunpack.c.l.b16 %v1549
        %v5504 = vunpack.c.l.b16 %v1550
        %v5505 = vunpack.c.h.b16 %v1550
        %v5506 = vunpack.c.l.b16 %v1551
        %v5507 = vunpack.c.h.b16 %v1551
        %v5508 = vunpack.c.l.b16 %v1552
        %v5509 = vunpack.c.h.b16 %v1552
        %v5510 = vunpack.c.l.b16 %v1553
        %v5511 = vunpack.c.h.b16 %v1553
        %v5512 = vunpack.c.l.b16 %v1554
        %v5513 = vunpack.c.l.b16 %v1555
        %v5514 = vunpack.c.h.b16 %v1555
        %v5515 = vunpack.c.l.b16 %v1556
        %v5516 = vunpack.c.h.b16 %v1556
        %v5517 = vunpack.c.l.b16 %v1557
        %v5518 = vunpack.c.h.b16 %v1557
        %v5519 = vunpack.c.l.b16 %v1558
        %v5520 = vunpack.c.h.b16 %v1558
        %v5521 = vunpack.c.l.b16 %v1559
        %v5522 = vunpack.c.l.b16 %v1560
        %v5523 = vunpack.c.h.b16 %v1560
        %v5524 = vunpack.c.l.b16 %v1561
        %v5525 = vunpack.c.h.b16 %v1561
        %v5526 = vunpack.c.l.b16 %v1562
        %v5527 = vunpack.c.h.b16 %v1562
        %v5528 = vunpack.c.l.b16 %v1563
        %v5529 = vunpack.c.h.b16 %v1563
        %v5530 = vunpack.c.l.b16 %v1564
        %v5531 = vunpack.c.l.b16 %v1565
        %v5532 = vunpack.c.h.b16 %v1565
        %v5533 = vunpack.c.l.b16 %v1566
        %v5534 = vunpack.c.h.b16 %v1566
        %v5535 = vunpack.c.l.b16 %v1567
        %v5536 = vunpack.c.h.b16 %v1567
        %v5537 = vunpack.c.l.b16 %v1568
        %v5538 = vunpack.c.h.b16 %v1568
        %v5539 = vunpack.c.l.b16 %v1569
        %v5540 = vunpack.c.l.b16 %v1570
        %v5541 = vunpack.c.h.b16 %v1570
        %v5542 = vunpack.c.l.b16 %v1571
        %v5543 = vunpack.c.h.b16 %v1571
        %v5544 = vunpack.c.l.b16 %v1572
        %v5545 = vunpack.c.h.b16 %v1572
        %v5546 = vunpack.c.l.b16 %v1573
        %v5547 = vunpack.c.h.b16 %v1573
        %v5548 = vunpack.c.l.b16 %v1574
        %v5549 = vunpack.c.l.b16 %v1575
        %v5550 = vunpack.c.h.b16 %v1575
        %v5551 = vunpack.c.l.b16 %v1576
        %v5552 = vunpack.c.h.b16 %v1576
        %v5553 = vunpack.c.l.b16 %v1577
        %v5554 = vunpack.c.h.b16 %v1577
        %v5555 = vunpack.c.l.b16 %v1578
        %v5556 = vunpack.c.h.b16 %v1578
        %v5557 = vunpack.c.l.b16 %v1579
        %v5558 = vunpack.c.l.b16 %v1580
        %v5559 = vunpack.c.h.b16 %v1580
        %v5560 = vunpack.c.l.b16 %v1581
        %v5561 = vunpack.c.h.b16 %v1581
        %v5562 = vunpack.c.l.b16 %v1582
        %v5563 = vunpack.c.h.b16 %v1582
        %v5564 = vunpack.c.l.b16 %v1583
        %v5565 = vunpack.c.h.b16 %v1583
        %v5566 = vunpack.c.l.b16 %v1584
        %v5567 = vunpack.c.l.b16 %v1585
        %v5568 = vunpack.c.h.b16 %v1585
        %v5569 = vunpack.c.l.b16 %v1586
        %v5570 = vunpack.c.h.b16 %v1586
        %v5571 = vunpack.c.l.b16 %v1587
        %v5572 = vunpack.c.h.b16 %v1587
        %v5573 = vunpack.c.l.b16 %v1588
        %v5574 = vunpack.c.h.b16 %v1588
        %v5575 = vunpack.c.l.b16 %v1589
        %v5576 = vunpack.c.l.b16 %v1590
        %v5577 = vunpack.c.h.b16 %v1590
        %v5578 = vunpack.c.l.b16 %v1591
        %v5579 = vunpack.c.h.b16 %v1591
        %v5580 = vunpack.c.l.b16 %v1592
        %v5581 = vunpack.c.h.b16 %v1592
        %v5582 = vunpack.c.l.b16 %v1593
        %v5583 = vunpack.c.h.b16 %v1593
        %v5584 = vunpack.c.l.b16 %v1594
        %v5585 = vunpack.c.l.b16 %v1595
        %v5586 = vunpack.c.h.b16 %v1595
        %v5587 = vunpack.c.l.b16 %v1596
        %v5588 = vunpack.c.h.b16 %v1596
        %v5589 = vunpack.c.l.b16 %v1597
        %v5590 = vunpack.c.h.b16 %v1597
        %v5591 = vunpack.c.l.b16 %v1598
        %v5592 = vunpack.c.h.b16 %v1598
        %v5593 = vunpack.c.l.b16 %v1599
        %v5594 = vunpack.c.l.b16 %v1600
        %v5595 = vunpack.c.h.b16 %v1600
        %v5596 = vunpack.c.l.b16 %v1601
        %v5597 = vunpack.c.h.b16 %v1601
        %v5598 = vunpack.c.l.b16 %v1602
        %v5599 = vunpack.c.h.b16 %v1602
        %v5600 = vunpack.c.l.b16 %v1603
        %v5601 = vunpack.c.h.b16 %v1603
        %v5602 = vunpack.c.l.b16 %v1604
        %v5603 = vunpack.c.l.b16 %v1605
        %v5604 = vunpack.c.h.b16 %v1605
        %v5605 = vunpack.c.l.b16 %v1606
        %v5606 = vunpack.c.h.b16 %v1606
        %v5607 = vunpack.c.l.b16 %v1607
        %v5608 = vunpack.c.h.b16 %v1607
        %v5609 = vunpack.c.l.b16 %v1608
        %v5610 = vunpack.c.h.b16 %v1608
        %v5611 = vunpack.c.l.b16 %v1609
        %v5612 = vunpack.c.l.b16 %v1610
        %v5613 = vunpack.c.h.b16 %v1610
        %v5614 = vunpack.c.l.b16 %v1611
        %v5615 = vunpack.c.h.b16 %v1611
        %v5616 = vunpack.c.l.b16 %v1612
        %v5617 = vunpack.c.h.b16 %v1612
        %v5618 = vunpack.c.l.b16 %v1613
        %v5619 = vunpack.c.h.b16 %v1613
        %v5620 = vunpack.c.l.b16 %v1614
        %v5621 = vunpack.c.l.b16 %v1615
        %v5622 = vunpack.c.h.b16 %v1615
        %v5623 = vunpack.c.l.b16 %v1616
        %v5624 = vunpack.c.h.b16 %v1616
        %v5625 = vunpack.c.l.b16 %v1617
        %v5626 = vunpack.c.h.b16 %v1617
        %v5627 = vunpack.c.l.b16 %v1618
        %v5628 = vunpack.c.h.b16 %v1618
        %v5629 = vunpack.c.l.b16 %v1619
        %v5630 = vunpack.c.l.b16 %v1620
        %v5631 = vunpack.c.h.b16 %v1620
        %v5632 = vunpack.c.l.b16 %v1621
        %v5633 = vunpack.c.h.b16 %v1621
        %v5634 = vunpack.c.l.b16 %v1622
        %v5635 = vunpack.c.h.b16 %v1622
        %v5636 = vunpack.c.l.b16 %v1623
        %v5637 = vunpack.c.h.b16 %v1623
        %v5638 = vunpack.c.l.b16 %v1624
        %v5639 = vunpack.c.l.b16 %v1625
        %v5640 = vunpack.c.h.b16 %v1625
        %v5641 = vunpack.c.l.b16 %v1626
        %v5642 = vunpack.c.h.b16 %v1626
        %v5643 = vunpack.c.l.b16 %v1627
        %v5644 = vunpack.c.h.b16 %v1627
        %v5645 = vunpack.c.l.b16 %v1628
        %v5646 = vunpack.c.h.b16 %v1628
        %v5647 = vunpack.c.l.b16 %v1629
        %v5648 = vunpack.c.l.b16 %v1630
        %v5649 = vunpack.c.h.b16 %v1630
        %v5650 = vunpack.c.l.b16 %v1631
        %v5651 = vunpack.c.h.b16 %v1631
        %v5652 = vunpack.c.l.b16 %v1632
        %v5653 = vunpack.c.h.b16 %v1632
        %v5654 = vunpack.c.l.b16 %v1633
        %v5655 = vunpack.c.h.b16 %v1633
        %v5656 = vunpack.c.l.b16 %v1634
        %v5657 = vunpack.c.l.b16 %v1635
        %v5658 = vunpack.c.h.b16 %v1635
        %v5659 = vunpack.c.l.b16 %v1636
        %v5660 = vunpack.c.h.b16 %v1636
        %v5661 = vunpack.c.l.b16 %v1637
        %v5662 = vunpack.c.h.b16 %v1637
        %v5663 = vunpack.c.l.b16 %v1638
        %v5664 = vunpack.c.h.b16 %v1638
        %v5665 = vunpack.c.l.b16 %v1639
        %v5666 = vunpack.c.l.b16 %v1640
        %v5667 = vunpack.c.h.b16 %v1640
        %v5668 = vunpack.c.l.b16 %v1641
        %v5669 = vunpack.c.h.b16 %v1641
        %v5670 = vunpack.c.l.b16 %v1642
        %v5671 = vunpack.c.h.b16 %v1642
        %v5672 = vunpack.c.l.b16 %v1643
        %v5673 = vunpack.c.h.b16 %v1643
        %v5674 = vunpack.c.l.b16 %v1644
        %v5675 = vunpack.c.l.b16 %v1645
        %v5676 = vunpack.c.h.b16 %v1645
        %v5677 = vunpack.c.l.b16 %v1646
        %v5678 = vunpack.c.h.b16 %v1646
        %v5679 = vunpack.c.l.b16 %v1647
        %v5680 = vunpack.c.h.b16 %v1647
        %v5681 = vunpack.c.l.b16 %v1648
        %v5682 = vunpack.c.h.b16 %v1648
        %v5683 = vunpack.c.l.b16 %v1649
        %v5684 = vunpack.c.l.b16 %v1650
        %v5685 = vunpack.c.h.b16 %v1650
        %v5686 = vunpack.c.l.b16 %v1651
        %v5687 = vunpack.c.h.b16 %v1651
        %v5688 = vunpack.c.l.b16 %v1652
        %v5689 = vunpack.c.h.b16 %v1652
        %v5690 = vunpack.c.l.b16 %v1653
        %v5691 = vunpack.c.h.b16 %v1653
        %v5692 = vunpack.c.l.b16 %v1654
        %v5693 = vunpack.c.l.b16 %v1655
        %v5694 = vunpack.c.h.b16 %v1655
        %v5695 = vunpack.c.l.b16 %v1656
        %v5696 = vunpack.c.h.b16 %v1656
        %v5697 = vunpack.c.l.b16 %v1657
        %v5698 = vunpack.c.h.b16 %v1657
        %v5699 = vunpack.c.l.b16 %v1658
        %v5700 = vunpack.c.h.b16 %v1658
        %v5701 = vunpack.c.l.b16 %v1659
        %v5702 = vunpack.c.l.b16 %v1660
        %v5703 = vunpack.c.h.b16 %v1660
        %v5704 = vunpack.c.l.b16 %v1661
        %v5705 = vunpack.c.h.b16 %v1661
        %v5706 = vunpack.c.l.b16 %v1662
        %v5707 = vunpack.c.h.b16 %v1662
        %v5708 = vunpack.c.l.b16 %v1663
        %v5709 = vunpack.c.h.b16 %v1663
        %v5710 = vunpack.c.l.b16 %v1664
        %v5711 = vunpack.c.l.b16 %v1665
        %v5712 = vunpack.c.h.b16 %v1665
        %v5713 = vunpack.c.l.b16 %v1666
        %v5714 = vunpack.c.h.b16 %v1666
        %v5715 = vunpack.c.l.b16 %v1667
        %v5716 = vunpack.c.h.b16 %v1667
        %v5717 = vunpack.c.l.b16 %v1668
        %v5718 = vunpack.c.h.b16 %v1668
        %v5719 = vunpack.c.l.b16 %v1669
        %v5720 = vunpack.c.l.b16 %v1670
        %v5721 = vunpack.c.h.b16 %v1670
        %v5722 = vunpack.c.l.b16 %v1671
        %v5723 = vunpack.c.h.b16 %v1671
        %v5724 = vunpack.c.l.b16 %v1672
        %v5725 = vunpack.c.h.b16 %v1672
        %v5726 = vunpack.c.l.b16 %v1673
        %v5727 = vunpack.c.h.b16 %v1673
        %v5728 = vunpack.c.l.b16 %v1674
        %v5729 = vunpack.c.l.b16 %v1675
        %v5730 = vunpack.c.h.b16 %v1675
        %v5731 = vunpack.c.l.b16 %v1676
        %v5732 = vunpack.c.h.b16 %v1676
        %v5733 = vunpack.c.l.b16 %v1677
        %v5734 = vunpack.c.h.b16 %v1677
        %v5735 = vunpack.c.l.b16 %v1678
        %v5736 = vunpack.c.h.b16 %v1678
        %v5737 = vunpack.c.l.b16 %v1679
        %v5738 = vunpack.c.l.b16 %v1680
        %v5739 = vunpack.c.h.b16 %v1680
        %v5740 = vunpack.c.l.b16 %v1681
        %v5741 = vunpack.c.h.b16 %v1681
        %v5742 = vunpack.c.l.b16 %v1682
        %v5743 = vunpack.c.h.b16 %v1682
        %v5744 = vunpack.c.l.b16 %v1683
        %v5745 = vunpack.c.h.b16 %v1683
        %v5746 = vunpack.c.l.b16 %v1684
        %v5747 = vunpack.c.l.b16 %v1685
        %v5748 = vunpack.c.h.b16 %v1685
        %v5749 = vunpack.c.l.b16 %v1686
        %v5750 = vunpack.c.h.b16 %v1686
        %v5751 = vunpack.c.l.b16 %v1687
        %v5752 = vunpack.c.h.b16 %v1687
        %v5753 = vunpack.c.l.b16 %v1688
        %v5754 = vunpack.c.h.b16 %v1688
        %v5755 = vunpack.c.l.b16 %v1689
        %v5756 = vunpack.c.l.b16 %v1690
        %v5757 = vunpack.c.h.b16 %v1690
        %v5758 = vunpack.c.l.b16 %v1691
        %v5759 = vunpack.c.h.b16 %v1691
        %v5760 = vunpack.c.l.b16 %v1692
        %v5761 = vunpack.c.h.b16 %v1692
        %v5762 = vunpack.c.l.b16 %v1693
        %v5763 = vunpack.c.h.b16 %v1693
        %v5764 = vunpack.c.l.b16 %v1694
        %v5765 = vunpack.c.l.b16 %v1695
        %v5766 = vunpack.c.h.b16 %v1695
        %v5767 = vunpack.c.l.b16 %v1696
        %v5768 = vunpack.c.h.b16 %v1696
        %v5769 = vunpack.c.l.b16 %v1697
        %v5770 = vunpack.c.h.b16 %v1697
        %v5771 = vunpack.c.l.b16 %v1698
        %v5772 = vunpack.c.h.b16 %v1698
        %v5773 = vunpack.c.l.b16 %v1699
        %v5774 = vunpack.c.l.b16 %v1700
        %v5775 = vunpack.c.h.b16 %v1700
        %v5776 = vunpack.c.l.b16 %v1701
        %v5777 = vunpack.c.h.b16 %v1701
        %v5778 = vunpack.c.l.b16 %v1702
        %v5779 = vunpack.c.h.b16 %v1702
        %v5780 = vunpack.c.l.b16 %v1703
        %v5781 = vunpack.c.h.b16 %v1703
        %v5782 = vunpack.c.l.b16 %v1704
        %v5783 = vunpack.c.l.b16 %v1705
        %v5784 = vunpack.c.h.b16 %v1705
        %v5785 = vunpack.c.l.b16 %v1706
        %v5786 = vunpack.c.h.b16 %v1706
        %v5787 = vunpack.c.l.b16 %v1707
        %v5788 = vunpack.c.h.b16 %v1707
        %v5789 = vunpack.c.l.b16 %v1708
        %v5790 = vunpack.c.h.b16 %v1708
        %v5791 = vunpack.c.l.b16 %v1709
        %v5792 = vunpack.c.l.b16 %v1710
        %v5793 = vunpack.c.h.b16 %v1710
        %v5794 = vunpack.c.l.b16 %v1711
        %v5795 = vunpack.c.h.b16 %v1711
        %v5796 = vunpack.c.l.b16 %v1712
        %v5797 = vunpack.c.h.b16 %v1712
        %v5798 = vunpack.c.l.b16 %v1713
        %v5799 = vunpack.c.h.b16 %v1713
        %v5800 = vunpack.c.l.b16 %v1714
        %v5801 = vunpack.c.l.b16 %v1715
        %v5802 = vunpack.c.h.b16 %v1715
        %v5803 = vunpack.c.l.b16 %v1716
        %v5804 = vunpack.c.h.b16 %v1716
        %v5805 = vunpack.c.l.b16 %v1717
        %v5806 = vunpack.c.h.b16 %v1717
        %v5807 = vunpack.c.l.b16 %v1718
        %v5808 = vunpack.c.h.b16 %v1718
        %v5809 = vunpack.c.l.b16 %v1719
        %v5810 = vunpack.c.l.b16 %v1720
        %v5811 = vunpack.c.h.b16 %v1720
        %v5812 = vunpack.c.l.b16 %v1721
        %v5813 = vunpack.c.h.b16 %v1721
        %v5814 = vunpack.c.l.b16 %v1722
        %v5815 = vunpack.c.h.b16 %v1722
        %v5816 = vunpack.c.l.b16 %v1723
        %v5817 = vunpack.c.h.b16 %v1723
        %v5818 = vunpack.c.l.b16 %v1724
        %v5819 = vunpack.c.l.b16 %v1725
        %v5820 = vunpack.c.h.b16 %v1725
        %v5821 = vunpack.c.l.b16 %v1726
        %v5822 = vunpack.c.h.b16 %v1726
        %v5823 = vunpack.c.l.b16 %v1727
        %v5824 = vunpack.c.h.b16 %v1727
        %v5825 = vunpack.c.l.b16 %v1728
        %v5826 = vunpack.c.h.b16 %v1728
        %v5827 = vunpack.c.l.b16 %v1729
        %v5828 = vunpack.c.l.b16 %v1730
        %v5829 = vunpack.c.h.b16 %v1730
        %v5830 = vunpack.c.l.b16 %v1731
        %v5831 = vunpack.c.h.b16 %v1731
        %v5832 = vunpack.c.l.b16 %v1732
        %v5833 = vunpack.c.h.b16 %v1732
        %v5834 = vunpack.c.l.b16 %v1733
        %v5835 = vunpack.c.h.b16 %v1733
        %v5836 = vunpack.c.l.b16 %v1734
        %v5837 = vunpack.c.l.b16 %v1735
        %v5838 = vunpack.c.h.b16 %v1735
        %v5839 = vunpack.c.l.b16 %v1736
        %v5840 = vunpack.c.h.b16 %v1736
        %v5841 = vunpack.c.l.b16 %v1737
        %v5842 = vunpack.c.h.b16 %v1737
        %v5843 = vunpack.c.l.b16 %v1738
        %v5844 = vunpack.c.h.b16 %v1738
        %v5845 = vunpack.c.l.b16 %v1739
        %v5846 = vunpack.c.l.b16 %v1740
        %v5847 = vunpack.c.h.b16 %v1740
        %v5848 = vunpack.c.l.b16 %v1741
        %v5849 = vunpack.c.h.b16 %v1741
        %v5850 = vunpack.c.l.b16 %v1742
        %v5851 = vunpack.c.h.b16 %v1742
        %v5852 = vunpack.c.l.b16 %v1743
        %v5853 = vunpack.c.h.b16 %v1743
        %v5854 = vunpack.c.l.b16 %v1744
        %v5855 = vunpack.c.l.b16 %v1745
        %v5856 = vunpack.c.h.b16 %v1745
        %v5857 = vunpack.c.l.b16 %v1746
        %v5858 = vunpack.c.h.b16 %v1746
        %v5859 = vunpack.c.l.b16 %v1747
        %v5860 = vunpack.c.h.b16 %v1747
        %v5861 = vunpack.c.l.b16 %v1748
        %v5862 = vunpack.c.h.b16 %v1748
        %v5863 = vunpack.c.l.b16 %v1749
        %v5864 = vunpack.c.l.b16 %v1750
        %v5865 = vunpack.c.h.b16 %v1750
        %v5866 = vunpack.c.l.b16 %v1751
        %v5867 = vunpack.c.h.b16 %v1751
        %v5868 = vunpack.c.l.b16 %v1752
        %v5869 = vunpack.c.h.b16 %v1752
        %v5870 = vunpack.c.l.b16 %v1753
        %v5871 = vunpack.c.h.b16 %v1753
        %v5872 = vunpack.c.l.b16 %v1754
        %v5873 = vunpack.c.l.b16 %v1755
        %v5874 = vunpack.c.h.b16 %v1755
        %v5875 = vunpack.c.l.b16 %v1756
        %v5876 = vunpack.c.h.b16 %v1756
        %v5877 = vunpack.c.l.b16 %v1757
        %v5878 = vunpack.c.h.b16 %v1757
        %v5879 = vunpack.c.l.b16 %v1758
        %v5880 = vunpack.c.h.b16 %v1758
        %v5881 = vunpack.c.l.b16 %v1759
        %v5882 = vunpack.c.l.b16 %v1760
        %v5883 = vunpack.c.h.b16 %v1760
        %v5884 = vunpack.c.l.b16 %v1761
        %v5885 = vunpack.c.h.b16 %v1761
        %v5886 = vunpack.c.l.b16 %v1762
        %v5887 = vunpack.c.h.b16 %v1762
        %v5888 = vunpack.c.l.b16 %v1763
        %v5889 = vunpack.c.h.b16 %v1763
        %v5890 = vunpack.c.l.b16 %v1764
        %v5891 = vunpack.c.l.b16 %v1765
        %v5892 = vunpack.c.h.b16 %v1765
        %v5893 = vunpack.c.l.b16 %v1766
        %v5894 = vunpack.c.h.b16 %v1766
        %v5895 = vunpack.c.l.b16 %v1767
        %v5896 = vunpack.c.h.b16 %v1767
        %v5897 = vunpack.c.l.b16 %v1768
        %v5898 = vunpack.c.h.b16 %v1768
        %v5899 = vunpack.c.l.b16 %v1769
        %v5900 = vunpack.c.l.b16 %v1770
        %v5901 = vunpack.c.h.b16 %v1770
        %v5902 = vunpack.c.l.b16 %v1771
        %v5903 = vunpack.c.h.b16 %v1771
        %v5904 = vunpack.c.l.b16 %v1772
        %v5905 = vunpack.c.h.b16 %v1772
        %v5906 = vunpack.c.l.b16 %v1773
        %v5907 = vunpack.c.h.b16 %v1773
        %v5908 = vunpack.c.l.b16 %v1774
        %v5909 = vunpack.c.l.b16 %v1775
        %v5910 = vunpack.c.h.b16 %v1775
        %v5911 = vunpack.c.l.b16 %v1776
        %v5912 = vunpack.c.h.b16 %v1776
        %v5913 = vunpack.c.l.b16 %v1777
        %v5914 = vunpack.c.h.b16 %v1777
        %v5915 = vunpack.c.l.b16 %v1778
        %v5916 = vunpack.c.h.b16 %v1778
        %v5917 = vunpack.c.l.b16 %v1779
        %v5918 = vunpack.c.l.b16 %v1780
        %v5919 = vunpack.c.h.b16 %v1780
        %v5920 = vunpack.c.l.b16 %v1781
        %v5921 = vunpack.c.h.b16 %v1781
        %v5922 = vunpack.c.l.b16 %v1782
        %v5923 = vunpack.c.h.b16 %v1782
        %v5924 = vunpack.c.l.b16 %v1783
        %v5925 = vunpack.c.h.b16 %v1783
        %v5926 = vunpack.c.l.b16 %v1784
        %v5927 = vunpack.c.l.b16 %v1785
        %v5928 = vunpack.c.h.b16 %v1785
        %v5929 = vunpack.c.l.b16 %v1786
        %v5930 = vunpack.c.h.b16 %v1786
        %v5931 = vunpack.c.l.b16 %v1787
        %v5932 = vunpack.c.h.b16 %v1787
        %v5933 = vunpack.c.l.b16 %v1788
        %v5934 = vunpack.c.h.b16 %v1788
        %v5935 = vunpack.c.l.b16 %v1789
        %v5936 = vunpack.c.l.b16 %v1790
        %v5937 = vunpack.c.h.b16 %v1790
        %v5938 = vunpack.c.l.b16 %v1791
        %v5939 = vunpack.c.h.b16 %v1791
        %v5940 = vunpack.c.l.b16 %v1792
        %v5941 = vunpack.c.h.b16 %v1792
        %v5942 = vunpack.c.l.b16 %v1793
        %v5943 = vunpack.c.h.b16 %v1793
        %v5944 = vunpack.c.l.b16 %v1794
        %v5945 = vunpack.c.l.b16 %v1795
        %v5946 = vunpack.c.h.b16 %v1795
        %v5947 = vunpack.c.l.b16 %v1796
        %v5948 = vunpack.c.h.b16 %v1796
        %v5949 = vunpack.c.l.b16 %v1797
        %v5950 = vunpack.c.h.b16 %v1797
        %v5951 = vunpack.c.l.b16 %v1798
        %v5952 = vunpack.c.h.b16 %v1798
        %v5953 = vunpack.c.l.b16 %v1799
        %v5954 = vunpack.c.l.b16 %v1800
        %v5955 = vunpack.c.h.b16 %v1800
        %v5956 = vunpack.c.l.b16 %v1801
        %v5957 = vunpack.c.h.b16 %v1801
        %v5958 = vunpack.c.l.b16 %v1802
        %v5959 = vunpack.c.h.b16 %v1802
        %v5960 = vunpack.c.l.b16 %v1803
        %v5961 = vunpack.c.h.b16 %v1803
        %v5962 = vunpack.c.l.b16 %v1804
        %v5963 = vunpack.c.l.b16 %v1805
        %v5964 = vunpack.c.h.b16 %v1805
        %v5965 = vunpack.c.l.b16 %v1806
        %v5966 = vunpack.c.h.b16 %v1806
        %v5967 = vunpack.c.l.b16 %v1807
        %v5968 = vunpack.c.h.b16 %v1807
        %v5969 = vunpack.c.l.b16 %v1808
        %v5970 = vunpack.c.h.b16 %v1808
        %v5971 = vunpack.c.l.b16 %v1809
        %v5972 = vunpack.c.l.b16 %v1810
        %v5973 = vunpack.c.h.b16 %v1810
        %v5974 = vunpack.c.l.b16 %v1811
        %v5975 = vunpack.c.h.b16 %v1811
        %v5976 = vunpack.c.l.b16 %v1812
        %v5977 = vunpack.c.h.b16 %v1812
        %v5978 = vunpack.c.l.b16 %v1813
        %v5979 = vunpack.c.h.b16 %v1813
        %v5980 = vunpack.c.l.b16 %v1814
        %v5981 = vunpack.c.l.b16 %v1815
        %v5982 = vunpack.c.h.b16 %v1815
        %v5983 = vunpack.c.l.b16 %v1816
        %v5984 = vunpack.c.h.b16 %v1816
        %v5985 = vunpack.c.l.b16 %v1817
        %v5986 = vunpack.c.h.b16 %v1817
        %v5987 = vunpack.c.l.b16 %v1818
        %v5988 = vunpack.c.h.b16 %v1818
        %v5989 = vunpack.c.l.b16 %v1819
        %v5990 = vunpack.c.l.b16 %v1820
        %v5991 = vunpack.c.h.b16 %v1820
        %v5992 = vunpack.c.l.b16 %v1821
        %v5993 = vunpack.c.h.b16 %v1821
        %v5994 = vunpack.c.l.b16 %v1822
        %v5995 = vunpack.c.h.b16 %v1822
        %v5996 = vunpack.c.l.b16 %v1823
        %v5997 = vunpack.c.h.b16 %v1823
        %v5998 = vunpack.c.l.b16 %v1824
        %v5999 = vunpack.c.l.b16 %v1825
        %v6000 = vunpack.c.h.b16 %v1825
        %v6001 = vunpack.c.l.b16 %v1826
        %v6002 = vunpack.c.h.b16 %v1826
        %v6003 = vunpack.c.l.b16 %v1827
        %v6004 = vunpack.c.h.b16 %v1827
        %v6005 = vunpack.c.l.b16 %v1828
        %v6006 = vunpack.c.h.b16 %v1828
        %v6007 = vunpack.c.l.b16 %v1829
        %v6008 = vunpack.c.l.b16 %v1830
        %v6009 = vunpack.c.h.b16 %v1830
        %v6010 = vunpack.c.l.b16 %v1831
        %v6011 = vunpack.c.h.b16 %v1831
        %v6012 = vunpack.c.l.b16 %v1832
        %v6013 = vunpack.c.h.b16 %v1832
        %v6014 = vunpack.c.l.b16 %v1833
        %v6015 = vunpack.c.h.b16 %v1833
        %v6016 = vunpack.c.l.b16 %v1834
        %v6017 = vunpack.c.l.b16 %v1835
        %v6018 = vunpack.c.h.b16 %v1835
        %v6019 = vunpack.c.l.b16 %v1836
        %v6020 = vunpack.c.h.b16 %v1836
        %v6021 = vunpack.c.l.b16 %v1837
        %v6022 = vunpack.c.h.b16 %v1837
        %v6023 = vunpack.c.l.b16 %v1838
        %v6024 = vunpack.c.h.b16 %v1838
        %v6025 = vunpack.c.l.b16 %v1839
        %v6026 = vunpack.c.l.b16 %v1840
        %v6027 = vunpack.c.h.b16 %v1840
        %v6028 = vunpack.c.l.b16 %v1841
        %v6029 = vunpack.c.h.b16 %v1841
        %v6030 = vunpack.c.l.b16 %v1842
        %v6031 = vunpack.c.h.b16 %v1842
        %v6032 = vunpack.c.l.b16 %v1843
        %v6033 = vunpack.c.h.b16 %v1843
        %v6034 = vunpack.c.l.b16 %v1844
        %v6035 = vunpack.c.l.b16 %v1845
        %v6036 = vunpack.c.h.b16 %v1845
        %v6037 = vunpack.c.l.b16 %v1846
        %v6038 = vunpack.c.h.b16 %v1846
        %v6039 = vunpack.c.l.b16 %v1847
        %v6040 = vunpack.c.h.b16 %v1847
        %v6041 = vunpack.c.l.b16 %v1848
        %v6042 = vunpack.c.h.b16 %v1848
        %v6043 = vunpack.c.l.b16 %v1849
        %v6044 = vunpack.c.l.b16 %v1850
        %v6045 = vunpack.c.h.b16 %v1850
        %v6046 = vunpack.c.l.b16 %v1851
        %v6047 = vunpack.c.h.b16 %v1851
        %v6048 = vunpack.c.l.b16 %v1852
        %v6049 = vunpack.c.h.b16 %v1852
        %v6050 = vunpack.c.l.b16 %v1853
        %v6051 = vunpack.c.h.b16 %v1853
        %v6052 = vunpack.c.l.b16 %v1854
        %v6053 = vunpack.c.l.b16 %v1855
        %v6054 = vunpack.c.h.b16 %v1855
        %v6055 = vunpack.c.l.b16 %v1856
        %v6056 = vunpack.c.h.b16 %v1856
        %v6057 = vunpack.c.l.b16 %v1857
        %v6058 = vunpack.c.h.b16 %v1857
        %v6059 = vunpack.c.l.b16 %v1858
        %v6060 = vunpack.c.h.b16 %v1858
        %v6061 = vunpack.c.l.b16 %v1859
        %v6062 = vunpack.c.l.b16 %v1860
        %v6063 = vunpack.c.h.b16 %v1860
        %v6064 = vunpack.c.l.b16 %v1861
        %v6065 = vunpack.c.h.b16 %v1861
        %v6066 = vunpack.c.l.b16 %v1862
        %v6067 = vunpack.c.h.b16 %v1862
        %v6068 = vunpack.c.l.b16 %v1863
        %v6069 = vunpack.c.h.b16 %v1863
        %v6070 = vunpack.c.l.b16 %v1864
        %v6071 = vunpack.c.l.b16 %v1865
        %v6072 = vunpack.c.h.b16 %v1865
        %v6073 = vunpack.c.l.b16 %v1866
        %v6074 = vunpack.c.h.b16 %v1866
        %v6075 = vunpack.c.l.b16 %v1867
        %v6076 = vunpack.c.h.b16 %v1867
        %v6077 = vunpack.c.l.b16 %v1868
        %v6078 = vunpack.c.h.b16 %v1868
        %v6079 = vunpack.c.l.b16 %v1869
        %v6080 = vunpack.c.l.b16 %v1870
        %v6081 = vunpack.c.h.b16 %v1870
        %v6082 = vunpack.c.l.b16 %v1871
        %v6083 = vunpack.c.h.b16 %v1871
        %v6084 = vunpack.c.l.b16 %v1872
        %v6085 = vunpack.c.h.b16 %v1872
        %v6086 = vunpack.c.l.b16 %v1873
        %v6087 = vunpack.c.h.b16 %v1873
        %v6088 = vunpack.c.l.b16 %v1874
        %v6089 = vunpack.c.l.b16 %v1875
        %v6090 = vunpack.c.h.b16 %v1875
        %v6091 = vunpack.c.l.b16 %v1876
        %v6092 = vunpack.c.h.b16 %v1876
        %v6093 = vunpack.c.l.b16 %v1877
        %v6094 = vunpack.c.h.b16 %v1877
        %v6095 = vunpack.c.l.b16 %v1878
        %v6096 = vunpack.c.h.b16 %v1878
        %v6097 = vunpack.c.l.b16 %v1879
        %v6098 = vunpack.c.l.b16 %v1880
        %v6099 = vunpack.c.h.b16 %v1880
        %v6100 = vunpack.c.l.b16 %v1881
        %v6101 = vunpack.c.h.b16 %v1881
        %v6102 = vunpack.c.l.b16 %v1882
        %v6103 = vunpack.c.h.b16 %v1882
        %v6104 = vunpack.c.l.b16 %v1883
        %v6105 = vunpack.c.h.b16 %v1883
        %v6106 = vunpack.c.l.b16 %v1884
        %v6107 = vunpack.c.l.b16 %v1885
        %v6108 = vunpack.c.h.b16 %v1885
        %v6109 = vunpack.c.l.b16 %v1886
        %v6110 = vunpack.c.h.b16 %v1886
        %v6111 = vunpack.c.l.b16 %v1887
        %v6112 = vunpack.c.h.b16 %v1887
        %v6113 = vunpack.c.l.b16 %v1888
        %v6114 = vunpack.c.h.b16 %v1888
        %v6115 = vunpack.c.l.b16 %v1889
        %v6116 = vunpack.c.l.b16 %v1890
        %v6117 = vunpack.c.h.b16 %v1890
        %v6118 = vunpack.c.l.b16 %v1891
        %v6119 = vunpack.c.h.b16 %v1891
        %v6120 = vunpack.c.l.b16 %v1892
        %v6121 = vunpack.c.h.b16 %v1892
        %v6122 = vunpack.c.l.b16 %v1893
        %v6123 = vunpack.c.h.b16 %v1893
        %v6124 = vunpack.c.l.b16 %v1894
        %v6125 = vunpack.c.l.b16 %v1895
        %v6126 = vunpack.c.h.b16 %v1895
        %v6127 = vunpack.c.l.b16 %v1896
        %v6128 = vunpack.c.h.b16 %v1896
        %v6129 = vunpack.c.l.b16 %v1897
        %v6130 = vunpack.c.h.b16 %v1897
        %v6131 = vunpack.c.l.b16 %v1898
        %v6132 = vunpack.c.h.b16 %v1898
        %v6133 = vunpack.c.l.b16 %v1899
        %v6134 = vunpack.c.l.b16 %v1900
        %v6135 = vunpack.c.h.b16 %v1900
        %v6136 = vunpack.c.l.b16 %v1901
        %v6137 = vunpack.c.h.b16 %v1901
        %v6138 = vunpack.c.l.b16 %v1902
        %v6139 = vunpack.c.h.b16 %v1902
        %v6140 = vunpack.c.l.b16 %v1903
        %v6141 = vunpack.c.h.b16 %v1903
        %v6142 = vunpack.c.l.b16 %v1904
        %v6143 = vunpack.c.l.b16 %v1905
        %v6144 = vunpack.c.h.b16 %v1905
        %v6145 = vunpack.c.l.b16 %v1906
        %v6146 = vunpack.c.h.b16 %v1906
        %v6147 = vunpack.c.l.b16 %v1907
        %v6148 = vunpack.c.h.b16 %v1907
        %v6149 = vunpack.c.l.b16 %v1908
        %v6150 = vunpack.c.h.b16 %v1908
        %v6151 = vunpack.c.l.b16 %v1909
        %v6152 = vunpack.c.l.b16 %v1910
        %v6153 = vunpack.c.h.b16 %v1910
        %v6154 = vunpack.c.l.b16 %v1911
        %v6155 = vunpack.c.h.b16 %v1911
        %v6156 = vunpack.c.l.b16 %v1912
        %v6157 = vunpack.c.h.b16 %v1912
        %v6158 = vunpack.c.l.b16 %v1913
        %v6159 = vunpack.c.h.b16 %v1913
        %v6160 = vunpack.c.l.b16 %v1914
        %v6161 = vunpack.c.l.b16 %v1915
        %v6162 = vunpack.c.h.b16 %v1915
        %v6163 = vunpack.c.l.b16 %v1916
        %v6164 = vunpack.c.h.b16 %v1916
        %v6165 = vunpack.c.l.b16 %v1917
        %v6166 = vunpack.c.h.b16 %v1917
        %v6167 = vunpack.c.l.b16 %v1918
        %v6168 = vunpack.c.h.b16 %v1918
        %v6169 = vunpack.c.l.b16 %v1919
        %v6170 = vunpack.c.l.b16 %v1920
        %v6171 = vunpack.c.h.b16 %v1920
        %v6172 = vunpack.c.l.b16 %v1921
        %v6173 = vunpack.c.h.b16 %v1921
        %v6174 = vunpack.c.l.b16 %v1922
        %v6175 = vunpack.c.h.b16 %v1922
        %v6176 = vunpack.c.l.b16 %v1923
        %v6177 = vunpack.c.h.b16 %v1923
        %v6178 = vunpack.c.l.b16 %v1924
        %v6179 = vunpack.c.l.b16 %v1925
        %v6180 = vunpack.c.h.b16 %v1925
        %v6181 = vunpack.c.l.b16 %v1926
        %v6182 = vunpack.c.h.b16 %v1926
        %v6183 = vunpack.c.l.b16 %v1927
        %v6184 = vunpack.c.h.b16 %v1927
        %v6185 = vunpack.c.l.b16 %v1928
        %v6186 = vunpack.c.h.b16 %v1928
        %v6187 = vunpack.c.l.b16 %v1929
        %v6188 = vunpack.c.l.b16 %v1930
        %v6189 = vunpack.c.h.b16 %v1930
        %v6190 = vunpack.c.l.b16 %v1931
        %v6191 = vunpack.c.h.b16 %v1931
        %v6192 = vunpack.c.l.b16 %v1932
        %v6193 = vunpack.c.h.b16 %v1932
        %v6194 = vunpack.c.l.b16 %v1933
        %v6195 = vunpack.c.h.b16 %v1933
        %v6196 = vunpack.c.l.b16 %v1934
        %v6197 = vpack.c.b16 %v3614, %v3605
        %v6198 = vpack.c.b16 %v3615, %v3606
        %v6199 = vpack.c.b16 %v3616, %v3607
        %v6200 = vpack.c.b16 %v3617, %v3608
        %v6201 = vpack.c.b16 %v3618, %v3609
        %v6202 = vpack.c.b16 %v3619, %v3610
        %v6203 = vpack.c.b16 %v3620, %v3611
        %v6204 = vpack.c.b16 %v3621, %v3612
        %v6205 = vpack.c.b16 %v3622, %v3613
        %v6206 = vpack.c.b16 %v3632, %v3623
        %v6207 = vpack.c.b16 %v3633, %v3624
        %v6208 = vpack.c.b16 %v3634, %v3625
        %v6209 = vpack.c.b16 %v3635, %v3626
        %v6210 = vpack.c.b16 %v3636, %v3627
        %v6211 = vpack.c.b16 %v3637, %v3628
        %v6212 = vpack.c.b16 %v3638, %v3629
        %v6213 = vpack.c.b16 %v3639, %v3630
        %v6214 = vpack.c.b16 %v3640, %v3631
        %v6215 = vpack.c.b16 %v3650, %v3641
        %v6216 = vpack.c.b16 %v3651, %v3642
        %v6217 = vpack.c.b16 %v3652, %v3643
        %v6218 = vpack.c.b16 %v3653, %v3644
        %v6219 = vpack.c.b16 %v3654, %v3645
        %v6220 = vpack.c.b16 %v3655, %v3646
        %v6221 = vpack.c.b16 %v3656, %v3647
        %v6222 = vpack.c.b16 %v3657, %v3648
        %v6223 = vpack.c.b16 %v3658, %v3649
        %v6224 = vpack.c.b16 %v3668, %v3659
        %v6225 = vpack.c.b16 %v3669, %v3660
        %v6226 = vpack.c.b16 %v3670, %v3661
        %v6227 = vpack.c.b16 %v3671, %v3662
        %v6228 = vpack.c.b16 %v3672, %v3663
        %v6229 = vpack.c.b16 %v3673, %v3664
        %v6230 = vpack.c.b16 %v3674, %v3665
        %v6231 = vpack.c.b16 %v3675, %v3666
        %v6232 = vpack.c.b16 %v3676, %v3667
        %v6233 = vpack.c.b16 %v3686, %v3677
        %v6234 = vpack.c.b16 %v3687, %v3678
        %v6235 = vpack.c.b16 %v3688, %v3679
        %v6236 = vpack.c.b16 %v3689, %v3680
        %v6237 = vpack.c.b16 %v3690, %v3681
        %v6238 = vpack.c.b16 %v3691, %v3682
        %v6239 = vpack.c.b16 %v3692, %v3683
        %v6240 = vpack.c.b16 %v3693, %v3684
        %v6241 = vpack.c.b16 %v3694, %v3685
        %v6242 = vpack.c.b16 %v3704, %v3695
        %v6243 = vpack.c.b16 %v3705, %v3696
        %v6244 = vpack.c.b16 %v3706, %v3697
        %v6245 = vpack.c.b16 %v3707, %v3698
        %v6246 = vpack.c.b16 %v3708, %v3699
        %v6247 = vpack.c.b16 %v3709, %v3700
        %v6248 = vpack.c.b16 %v3710, %v3701
        %v6249 = vpack.c.b16 %v3711, %v3702
        %v6250 = vpack.c.b16 %v3712, %v3703
        %v6251 = vpack.c.b16 %v3722, %v3713
        %v6252 = vpack.c.b16 %v3723, %v3714
        %v6253 = vpack.c.b16 %v3724, %v3715
        %v6254 = vpack.c.b16 %v3725, %v3716
        %v6255 = vpack.c.b16 %v3726, %v3717
        %v6256 = vpack.c.b16 %v3727, %v3718
        %v6257 = vpack.c.b16 %v3728, %v3719
        %v6258 = vpack.c.b16 %v3729, %v3720
        %v6259 = vpack.c.b16 %v3730, %v3721
        %v6260 = vpack.c.b16 %v3740, %v3731
        %v6261 = vpack.c.b16 %v3741, %v3732
        %v6262 = vpack.c.b16 %v3742, %v3733
        %v6263 = vpack.c.b16 %v3743, %v3734
        %v6264 = vpack.c.b16 %v3744, %v3735
        %v6265 = vpack.c.b16 %v3745, %v3736
        %v6266 = vpack.c.b16 %v3746, %v3737
        %v6267 = vpack.c.b16 %v3747, %v3738
        %v6268 = vpack.c.b16 %v3748, %v3739
        %v6269 = vpack.c.b16 %v3758, %v3749
        %v6270 = vpack.c.b16 %v3759, %v3750
        %v6271 = vpack.c.b16 %v3760, %v3751
        %v6272 = vpack.c.b16 %v3761, %v3752
        %v6273 = vpack.c.b16 %v3762, %v3753
        %v6274 = vpack.c.b16 %v3763, %v3754
        %v6275 = vpack.c.b16 %v3764, %v3755
        %v6276 = vpack.c.b16 %v3765, %v3756
        %v6277 = vpack.c.b16 %v3766, %v3757
        %v6278 = vpack.c.b16 %v3776, %v3767
        %v6279 = vpack.c.b16 %v3777, %v3768
        %v6280 = vpack.c.b16 %v3778, %v3769
        %v6281 = vpack.c.b16 %v3779, %v3770
        %v6282 = vpack.c.b16 %v3780, %v3771
        %v6283 = vpack.c.b16 %v3781, %v3772
        %v6284 = vpack.c.b16 %v3782, %v3773
        %v6285 = vpack.c.b16 %v3783, %v3774
        %v6286 = vpack.c.b16 %v3784, %v3775
        %v6287 = vpack.c.b16 %v3794, %v3785
        %v6288 = vpack.c.b16 %v3795, %v3786
        %v6289 = vpack.c.b16 %v3796, %v3787
        %v6290 = vpack.c.b16 %v3797, %v3788
        %v6291 = vpack.c.b16 %v3798, %v3789
        %v6292 = vpack.c.b16 %v3799, %v3790
        %v6293 = vpack.c.b16 %v3800, %v3791
        %v6294 = vpack.c.b16 %v3801, %v3792
        %v6295 = vpack.c.b16 %v3802, %v3793
        %v6296 = vpack.c.b16 %v3812, %v3803
        %v6297 = vpack.c.b16 %v3813, %v3804
        %v6298 = vpack.c.b16 %v3814, %v3805
        %v6299 = vpack.c.b16 %v3815, %v3806
        %v6300 = vpack.c.b16 %v3816, %v3807
        %v6301 = vpack.c.b16 %v3817, %v3808
        %v6302 = vpack.c.b16 %v3818, %v3809
        %v6303 = vpack.c.b16 %v3819, %v3810
        %v6304 = vpack.c.b16 %v3820, %v3811
        %v6305 = vpack.c.b16 %v3830, %v3821
        %v6306 = vpack.c.b16 %v3831, %v3822
        %v6307 = vpack.c.b16 %v3832, %v3823
        %v6308 = vpack.c.b16 %v3833, %v3824
        %v6309 = vpack.c.b16 %v3834, %v3825
        %v6310 = vpack.c.b16 %v3835, %v3826
        %v6311 = vpack.c.b16 %v3836, %v3827
        %v6312 = vpack.c.b16 %v3837, %v3828
        %v6313 = vpack.c.b16 %v3838, %v3829
        %v6314 = vpack.c.b16 %v3848, %v3839
        %v6315 = vpack.c.b16 %v3849, %v3840
        %v6316 = vpack.c.b16 %v3850, %v3841
        %v6317 = vpack.c.b16 %v3851, %v3842
        %v6318 = vpack.c.b16 %v3852, %v3843
        %v6319 = vpack.c.b16 %v3853, %v3844
        %v6320 = vpack.c.b16 %v3854, %v3845
        %v6321 = vpack.c.b16 %v3855, %v3846
        %v6322 = vpack.c.b16 %v3856, %v3847
        %v6323 = vpack.c.b16 %v3866, %v3857
        %v6324 = vpack.c.b16 %v3867, %v3858
        %v6325 = vpack.c.b16 %v3868, %v3859
        %v6326 = vpack.c.b16 %v3869, %v3860
        %v6327 = vpack.c.b16 %v3870, %v3861
        %v6328 = vpack.c.b16 %v3871, %v3862
        %v6329 = vpack.c.b16 %v3872, %v3863
        %v6330 = vpack.c.b16 %v3873, %v3864
        %v6331 = vpack.c.b16 %v3874, %v3865
        %v6332 = vpack.c.b16 %v3884, %v3875
        %v6333 = vpack.c.b16 %v3885, %v3876
        %v6334 = vpack.c.b16 %v3886, %v3877
        %v6335 = vpack.c.b16 %v3887, %v3878
        %v6336 = vpack.c.b16 %v3888, %v3879
        %v6337 = vpack.c.b16 %v3889, %v3880
        %v6338 = vpack.c.b16 %v3890, %v3881
        %v6339 = vpack.c.b16 %v3891, %v3882
        %v6340 = vpack.c.b16 %v3892, %v3883
        %v6341 = vpack.c.b16 %v3902, %v3893
        %v6342 = vpack.c.b16 %v3903, %v3894
        %v6343 = vpack.c.b16 %v3904, %v3895
        %v6344 = vpack.c.b16 %v3905, %v3896
        %v6345 = vpack.c.b16 %v3906, %v3897
        %v6346 = vpack.c.b16 %v3907, %v3898
        %v6347 = vpack.c.b16 %v3908, %v3899
        %v6348 = vpack.c.b16 %v3909, %v3900
        %v6349 = vpack.c.b16 %v3910, %v3901
        %v6350 = vpack.c.b16 %v3920, %v3911
        %v6351 = vpack.c.b16 %v3921, %v3912
        %v6352 = vpack.c.b16 %v3922, %v3913
        %v6353 = vpack.c.b16 %v3923, %v3914
        %v6354 = vpack.c.b16 %v3924, %v3915
        %v6355 = vpack.c.b16 %v3925, %v3916
        %v6356 = vpack.c.b16 %v3926, %v3917
        %v6357 = vpack.c.b16 %v3927, %v3918
        %v6358 = vpack.c.b16 %v3928, %v3919
        %v6359 = vpack.c.b16 %v3938, %v3929
        %v6360 = vpack.c.b16 %v3939, %v3930
        %v6361 = vpack.c.b16 %v3940, %v3931
        %v6362 = vpack.c.b16 %v3941, %v3932
        %v6363 = vpack.c.b16 %v3942, %v3933
        %v6364 = vpack.c.b16 %v3943, %v3934
        %v6365 = vpack.c.b16 %v3944, %v3935
        %v6366 = vpack.c.b16 %v3945, %v3936
        %v6367 = vpack.c.b16 %v3946, %v3937
        %v6368 = vpack.c.b16 %v3956, %v3947
        %v6369 = vpack.c.b16 %v3957, %v3948
        %v6370 = vpack.c.b16 %v3958, %v3949
        %v6371 = vpack.c.b16 %v3959, %v3950
        %v6372 = vpack.c.b16 %v3960, %v3951
        %v6373 = vpack.c.b16 %v3961, %v3952
        %v6374 = vpack.c.b16 %v3962, %v3953
        %v6375 = vpack.c.b16 %v3963, %v3954
        %v6376 = vpack.c.b16 %v3964, %v3955
        %v6377 = vpack.c.b16 %v3974, %v3965
        %v6378 = vpack.c.b16 %v3975, %v3966
        %v6379 = vpack.c.b16 %v3976, %v3967
        %v6380 = vpack.c.b16 %v3977, %v3968
        %v6381 = vpack.c.b16 %v3978, %v3969
        %v6382 = vpack.c.b16 %v3979, %v3970
        %v6383 = vpack.c.b16 %v3980, %v3971
        %v6384 = vpack.c.b16 %v3981, %v3972
        %v6385 = vpack.c.b16 %v3982, %v3973
        %v6386 = vpack.c.b16 %v3992, %v3983
        %v6387 = vpack.c.b16 %v3993, %v3984
        %v6388 = vpack.c.b16 %v3994, %v3985
        %v6389 = vpack.c.b16 %v3995, %v3986
        %v6390 = vpack.c.b16 %v3996, %v3987
        %v6391 = vpack.c.b16 %v3997, %v3988
        %v6392 = vpack.c.b16 %v3998, %v3989
        %v6393 = vpack.c.b16 %v3999, %v3990
        %v6394 = vpack.c.b16 %v4000, %v3991
        %v6395 = vpack.c.b16 %v4010, %v4001
        %v6396 = vpack.c.b16 %v4011, %v4002
        %v6397 = vpack.c.b16 %v4012, %v4003
        %v6398 = vpack.c.b16 %v4013, %v4004
        %v6399 = vpack.c.b16 %v4014, %v4005
        %v6400 = vpack.c.b16 %v4015, %v4006
        %v6401 = vpack.c.b16 %v4016, %v4007
        %v6402 = vpack.c.b16 %v4017, %v4008
        %v6403 = vpack.c.b16 %v4018, %v4009
        %v6404 = vpack.c.b16 %v4028, %v4019
        %v6405 = vpack.c.b16 %v4029, %v4020
        %v6406 = vpack.c.b16 %v4030, %v4021
        %v6407 = vpack.c.b16 %v4031, %v4022
        %v6408 = vpack.c.b16 %v4032, %v4023
        %v6409 = vpack.c.b16 %v4033, %v4024
        %v6410 = vpack.c.b16 %v4034, %v4025
        %v6411 = vpack.c.b16 %v4035, %v4026
        %v6412 = vpack.c.b16 %v4036, %v4027
        %v6413 = vpack.c.b16 %v4046, %v4037
        %v6414 = vpack.c.b16 %v4047, %v4038
        %v6415 = vpack.c.b16 %v4048, %v4039
        %v6416 = vpack.c.b16 %v4049, %v4040
        %v6417 = vpack.c.b16 %v4050, %v4041
        %v6418 = vpack.c.b16 %v4051, %v4042
        %v6419 = vpack.c.b16 %v4052, %v4043
        %v6420 = vpack.c.b16 %v4053, %v4044
        %v6421 = vpack.c.b16 %v4054, %v4045
        %v6422 = vpack.c.b16 %v4064, %v4055
        %v6423 = vpack.c.b16 %v4065, %v4056
        %v6424 = vpack.c.b16 %v4066, %v4057
        %v6425 = vpack.c.b16 %v4067, %v4058
        %v6426 = vpack.c.b16 %v4068, %v4059
        %v6427 = vpack.c.b16 %v4069, %v4060
        %v6428 = vpack.c.b16 %v4070, %v4061
        %v6429 = vpack.c.b16 %v4071, %v4062
        %v6430 = vpack.c.b16 %v4072, %v4063
        %v6431 = vpack.c.b16 %v4082, %v4073
        %v6432 = vpack.c.b16 %v4083, %v4074
        %v6433 = vpack.c.b16 %v4084, %v4075
        %v6434 = vpack.c.b16 %v4085, %v4076
        %v6435 = vpack.c.b16 %v4086, %v4077
        %v6436 = vpack.c.b16 %v4087, %v4078
        %v6437 = vpack.c.b16 %v4088, %v4079
        %v6438 = vpack.c.b16 %v4089, %v4080
        %v6439 = vpack.c.b16 %v4090, %v4081
        %v6440 = vpack.c.b16 %v4100, %v4091
        %v6441 = vpack.c.b16 %v4101, %v4092
        %v6442 = vpack.c.b16 %v4102, %v4093
        %v6443 = vpack.c.b16 %v4103, %v4094
        %v6444 = vpack.c.b16 %v4104, %v4095
        %v6445 = vpack.c.b16 %v4105, %v4096
        %v6446 = vpack.c.b16 %v4106, %v4097
        %v6447 = vpack.c.b16 %v4107, %v4098
        %v6448 = vpack.c.b16 %v4108, %v4099
        %v6449 = vpack.c.b16 %v4118, %v4109
        %v6450 = vpack.c.b16 %v4119, %v4110
        %v6451 = vpack.c.b16 %v4120, %v4111
        %v6452 = vpack.c.b16 %v4121, %v4112
        %v6453 = vpack.c.b16 %v4122, %v4113
        %v6454 = vpack.c.b16 %v4123, %v4114
        %v6455 = vpack.c.b16 %v4124, %v4115
        %v6456 = vpack.c.b16 %v4125, %v4116
        %v6457 = vpack.c.b16 %v4126, %v4117
        %v6458 = vpack.c.b16 %v4136, %v4127
        %v6459 = vpack.c.b16 %v4137, %v4128
        %v6460 = vpack.c.b16 %v4138, %v4129
        %v6461 = vpack.c.b16 %v4139, %v4130
        %v6462 = vpack.c.b16 %v4140, %v4131
        %v6463 = vpack.c.b16 %v4141, %v4132
        %v6464 = vpack.c.b16 %v4142, %v4133
        %v6465 = vpack.c.b16 %v4143, %v4134
        %v6466 = vpack.c.b16 %v4144, %v4135
        %v6467 = vpack.c.b16 %v4154, %v4145
        %v6468 = vpack.c.b16 %v4155, %v4146
        %v6469 = vpack.c.b16 %v4156, %v4147
        %v6470 = vpack.c.b16 %v4157, %v4148
        %v6471 = vpack.c.b16 %v4158, %v4149
        %v6472 = vpack.c.b16 %v4159, %v4150
        %v6473 = vpack.c.b16 %v4160, %v4151
        %v6474 = vpack.c.b16 %v4161, %v4152
        %v6475 = vpack.c.b16 %v4162, %v4153
        %v6476 = vpack.c.b16 %v4172, %v4163
        %v6477 = vpack.c.b16 %v4173, %v4164
        %v6478 = vpack.c.b16 %v4174, %v4165
        %v6479 = vpack.c.b16 %v4175, %v4166
        %v6480 = vpack.c.b16 %v4176, %v4167
        %v6481 = vpack.c.b16 %v4177, %v4168
        %v6482 = vpack.c.b16 %v4178, %v4169
        %v6483 = vpack.c.b16 %v4179, %v4170
        %v6484 = vpack.c.b16 %v4180, %v4171
        %v6485 = vpack.c.b16 %v4190, %v4181
        %v6486 = vpack.c.b16 %v4191, %v4182
        %v6487 = vpack.c.b16 %v4192, %v4183
        %v6488 = vpack.c.b16 %v4193, %v4184
        %v6489 = vpack.c.b16 %v4194, %v4185
        %v6490 = vpack.c.b16 %v4195, %v4186
        %v6491 = vpack.c.b16 %v4196, %v4187
        %v6492 = vpack.c.b16 %v4197, %v4188
        %v6493 = vpack.c.b16 %v4198, %v4189
        %v6494 = vpack.c.b16 %v4208, %v4199
        %v6495 = vpack.c.b16 %v4209, %v4200
        %v6496 = vpack.c.b16 %v4210, %v4201
        %v6497 = vpack.c.b16 %v4211, %v4202
        %v6498 = vpack.c.b16 %v4212, %v4203
        %v6499 = vpack.c.b16 %v4213, %v4204
        %v6500 = vpack.c.b16 %v4214, %v4205
        %v6501 = vpack.c.b16 %v4215, %v4206
        %v6502 = vpack.c.b16 %v4216, %v4207
        %v6503 = vpack.c.b16 %v4226, %v4217
        %v6504 = vpack.c.b16 %v4227, %v4218
        %v6505 = vpack.c.b16 %v4228, %v4219
        %v6506 = vpack.c.b16 %v4229, %v4220
        %v6507 = vpack.c.b16 %v4230, %v4221
        %v6508 = vpack.c.b16 %v4231, %v4222
        %v6509 = vpack.c.b16 %v4232, %v4223
        %v6510 = vpack.c.b16 %v4233, %v4224
        %v6511 = vpack.c.b16 %v4234, %v4225
        %v6512 = vpack.c.b16 %v4244, %v4235
        %v6513 = vpack.c.b16 %v4245, %v4236
        %v6514 = vpack.c.b16 %v4246, %v4237
        %v6515 = vpack.c.b16 %v4247, %v4238
        %v6516 = vpack.c.b16 %v4248, %v4239
        %v6517 = vpack.c.b16 %v4249, %v4240
        %v6518 = vpack.c.b16 %v4250, %v4241
        %v6519 = vpack.c.b16 %v4251, %v4242
        %v6520 = vpack.c.b16 %v4252, %v4243
        %v6521 = vpack.c.b16 %v4262, %v4253
        %v6522 = vpack.c.b16 %v4263, %v4254
        %v6523 = vpack.c.b16 %v4264, %v4255
        %v6524 = vpack.c.b16 %v4265, %v4256
        %v6525 = vpack.c.b16 %v4266, %v4257
        %v6526 = vpack.c.b16 %v4267, %v4258
        %v6527 = vpack.c.b16 %v4268, %v4259
        %v6528 = vpack.c.b16 %v4269, %v4260
        %v6529 = vpack.c.b16 %v4270, %v4261
        %v6530 = vpack.c.b16 %v4280, %v4271
        %v6531 = vpack.c.b16 %v4281, %v4272
        %v6532 = vpack.c.b16 %v4282, %v4273
        %v6533 = vpack.c.b16 %v4283, %v4274
        %v6534 = vpack.c.b16 %v4284, %v4275
        %v6535 = vpack.c.b16 %v4285, %v4276
        %v6536 = vpack.c.b16 %v4286, %v4277
        %v6537 = vpack.c.b16 %v4287, %v4278
        %v6538 = vpack.c.b16 %v4288, %v4279
        %v6539 = vpack.c.b16 %v4298, %v4289
        %v6540 = vpack.c.b16 %v4299, %v4290
        %v6541 = vpack.c.b16 %v4300, %v4291
        %v6542 = vpack.c.b16 %v4301, %v4292
        %v6543 = vpack.c.b16 %v4302, %v4293
        %v6544 = vpack.c.b16 %v4303, %v4294
        %v6545 = vpack.c.b16 %v4304, %v4295
        %v6546 = vpack.c.b16 %v4305, %v4296
        %v6547 = vpack.c.b16 %v4306, %v4297
        %v6548 = vpack.c.b16 %v4316, %v4307
        %v6549 = vpack.c.b16 %v4317, %v4308
        %v6550 = vpack.c.b16 %v4318, %v4309
        %v6551 = vpack.c.b16 %v4319, %v4310
        %v6552 = vpack.c.b16 %v4320, %v4311
        %v6553 = vpack.c.b16 %v4321, %v4312
        %v6554 = vpack.c.b16 %v4322, %v4313
        %v6555 = vpack.c.b16 %v4323, %v4314
        %v6556 = vpack.c.b16 %v4324, %v4315
        %v6557 = vpack.c.b16 %v4334, %v4325
        %v6558 = vpack.c.b16 %v4335, %v4326
        %v6559 = vpack.c.b16 %v4336, %v4327
        %v6560 = vpack.c.b16 %v4337, %v4328
        %v6561 = vpack.c.b16 %v4338, %v4329
        %v6562 = vpack.c.b16 %v4339, %v4330
        %v6563 = vpack.c.b16 %v4340, %v4331
        %v6564 = vpack.c.b16 %v4341, %v4332
        %v6565 = vpack.c.b16 %v4342, %v4333
        %v6566 = vpack.c.b16 %v4352, %v4343
        %v6567 = vpack.c.b16 %v4353, %v4344
        %v6568 = vpack.c.b16 %v4354, %v4345
        %v6569 = vpack.c.b16 %v4355, %v4346
        %v6570 = vpack.c.b16 %v4356, %v4347
        %v6571 = vpack.c.b16 %v4357, %v4348
        %v6572 = vpack.c.b16 %v4358, %v4349
        %v6573 = vpack.c.b16 %v4359, %v4350
        %v6574 = vpack.c.b16 %v4360, %v4351
        %v6575 = vpack.c.b16 %v4370, %v4361
        %v6576 = vpack.c.b16 %v4371, %v4362
        %v6577 = vpack.c.b16 %v4372, %v4363
        %v6578 = vpack.c.b16 %v4373, %v4364
        %v6579 = vpack.c.b16 %v4374, %v4365
        %v6580 = vpack.c.b16 %v4375, %v4366
        %v6581 = vpack.c.b16 %v4376, %v4367
        %v6582 = vpack.c.b16 %v4377, %v4368
        %v6583 = vpack.c.b16 %v4378, %v4369
        %v6584 = vpack.c.b16 %v4388, %v4379
        %v6585 = vpack.c.b16 %v4389, %v4380
        %v6586 = vpack.c.b16 %v4390, %v4381
        %v6587 = vpack.c.b16 %v4391, %v4382
        %v6588 = vpack.c.b16 %v4392, %v4383
        %v6589 = vpack.c.b16 %v4393, %v4384
        %v6590 = vpack.c.b16 %v4394, %v4385
        %v6591 = vpack.c.b16 %v4395, %v4386
        %v6592 = vpack.c.b16 %v4396, %v4387
        %v6593 = vpack.c.b16 %v4406, %v4397
        %v6594 = vpack.c.b16 %v4407, %v4398
        %v6595 = vpack.c.b16 %v4408, %v4399
        %v6596 = vpack.c.b16 %v4409, %v4400
        %v6597 = vpack.c.b16 %v4410, %v4401
        %v6598 = vpack.c.b16 %v4411, %v4402
        %v6599 = vpack.c.b16 %v4412, %v4403
        %v6600 = vpack.c.b16 %v4413, %v4404
        %v6601 = vpack.c.b16 %v4414, %v4405
        %v6602 = vpack.c.b16 %v4424, %v4415
        %v6603 = vpack.c.b16 %v4425, %v4416
        %v6604 = vpack.c.b16 %v4426, %v4417
        %v6605 = vpack.c.b16 %v4427, %v4418
        %v6606 = vpack.c.b16 %v4428, %v4419
        %v6607 = vpack.c.b16 %v4429, %v4420
        %v6608 = vpack.c.b16 %v4430, %v4421
        %v6609 = vpack.c.b16 %v4431, %v4422
        %v6610 = vpack.c.b16 %v4432, %v4423
        %v6611 = vpack.c.b16 %v4442, %v4433
        %v6612 = vpack.c.b16 %v4443, %v4434
        %v6613 = vpack.c.b16 %v4444, %v4435
        %v6614 = vpack.c.b16 %v4445, %v4436
        %v6615 = vpack.c.b16 %v4446, %v4437
        %v6616 = vpack.c.b16 %v4447, %v4438
        %v6617 = vpack.c.b16 %v4448, %v4439
        %v6618 = vpack.c.b16 %v4449, %v4440
        %v6619 = vpack.c.b16 %v4450, %v4441
        %v6620 = vpack.c.b16 %v4460, %v4451
        %v6621 = vpack.c.b16 %v4461, %v4452
        %v6622 = vpack.c.b16 %v4462, %v4453
        %v6623 = vpack.c.b16 %v4463, %v4454
        %v6624 = vpack.c.b16 %v4464, %v4455
        %v6625 = vpack.c.b16 %v4465, %v4456
        %v6626 = vpack.c.b16 %v4466, %v4457
        %v6627 = vpack.c.b16 %v4467, %v4458
        %v6628 = vpack.c.b16 %v4468, %v4459
        %v6629 = vpack.c.b16 %v4478, %v4469
        %v6630 = vpack.c.b16 %v4479, %v4470
        %v6631 = vpack.c.b16 %v4480, %v4471
        %v6632 = vpack.c.b16 %v4481, %v4472
        %v6633 = vpack.c.b16 %v4482, %v4473
        %v6634 = vpack.c.b16 %v4483, %v4474
        %v6635 = vpack.c.b16 %v4484, %v4475
        %v6636 = vpack.c.b16 %v4485, %v4476
        %v6637 = vpack.c.b16 %v4486, %v4477
        %v6638 = vpack.c.b16 %v4496, %v4487
        %v6639 = vpack.c.b16 %v4497, %v4488
        %v6640 = vpack.c.b16 %v4498, %v4489
        %v6641 = vpack.c.b16 %v4499, %v4490
        %v6642 = vpack.c.b16 %v4500, %v4491
        %v6643 = vpack.c.b16 %v4501, %v4492
        %v6644 = vpack.c.b16 %v4502, %v4493
        %v6645 = vpack.c.b16 %v4503, %v4494
        %v6646 = vpack.c.b16 %v4504, %v4495
        %v6647 = vpack.c.b16 %v4514, %v4505
        %v6648 = vpack.c.b16 %v4515, %v4506
        %v6649 = vpack.c.b16 %v4516, %v4507
        %v6650 = vpack.c.b16 %v4517, %v4508
        %v6651 = vpack.c.b16 %v4518, %v4509
        %v6652 = vpack.c.b16 %v4519, %v4510
        %v6653 = vpack.c.b16 %v4520, %v4511
        %v6654 = vpack.c.b16 %v4521, %v4512
        %v6655 = vpack.c.b16 %v4522, %v4513
        %v6656 = vpack.c.b16 %v4532, %v4523
        %v6657 = vpack.c.b16 %v4533, %v4524
        %v6658 = vpack.c.b16 %v4534, %v4525
        %v6659 = vpack.c.b16 %v4535, %v4526
        %v6660 = vpack.c.b16 %v4536, %v4527
        %v6661 = vpack.c.b16 %v4537, %v4528
        %v6662 = vpack.c.b16 %v4538, %v4529
        %v6663 = vpack.c.b16 %v4539, %v4530
        %v6664 = vpack.c.b16 %v4540, %v4531
        %v6665 = vpack.c.b16 %v4550, %v4541
        %v6666 = vpack.c.b16 %v4551, %v4542
        %v6667 = vpack.c.b16 %v4552, %v4543
        %v6668 = vpack.c.b16 %v4553, %v4544
        %v6669 = vpack.c.b16 %v4554, %v4545
        %v6670 = vpack.c.b16 %v4555, %v4546
        %v6671 = vpack.c.b16 %v4556, %v4547
        %v6672 = vpack.c.b16 %v4557, %v4548
        %v6673 = vpack.c.b16 %v4558, %v4549
        %v6674 = vpack.c.b16 %v4568, %v4559
        %v6675 = vpack.c.b16 %v4569, %v4560
        %v6676 = vpack.c.b16 %v4570, %v4561
        %v6677 = vpack.c.b16 %v4571, %v4562
        %v6678 = vpack.c.b16 %v4572, %v4563
        %v6679 = vpack.c.b16 %v4573, %v4564
        %v6680 = vpack.c.b16 %v4574, %v4565
        %v6681 = vpack.c.b16 %v4575, %v4566
        %v6682 = vpack.c.b16 %v4576, %v4567
        %v6683 = vpack.c.b16 %v4586, %v4577
        %v6684 = vpack.c.b16 %v4587, %v4578
        %v6685 = vpack.c.b16 %v4588, %v4579
        %v6686 = vpack.c.b16 %v4589, %v4580
        %v6687 = vpack.c.b16 %v4590, %v4581
        %v6688 = vpack.c.b16 %v4591, %v4582
        %v6689 = vpack.c.b16 %v4592, %v4583
        %v6690 = vpack.c.b16 %v4593, %v4584
        %v6691 = vpack.c.b16 %v4594, %v4585
        %v6692 = vpack.c.b16 %v4604, %v4595
        %v6693 = vpack.c.b16 %v4605, %v4596
        %v6694 = vpack.c.b16 %v4606, %v4597
        %v6695 = vpack.c.b16 %v4607, %v4598
        %v6696 = vpack.c.b16 %v4608, %v4599
        %v6697 = vpack.c.b16 %v4609, %v4600
        %v6698 = vpack.c.b16 %v4610, %v4601
        %v6699 = vpack.c.b16 %v4611, %v4602
        %v6700 = vpack.c.b16 %v4612, %v4603
        %v6701 = vpack.c.b16 %v4622, %v4613
        %v6702 = vpack.c.b16 %v4623, %v4614
        %v6703 = vpack.c.b16 %v4624, %v4615
        %v6704 = vpack.c.b16 %v4625, %v4616
        %v6705 = vpack.c.b16 %v4626, %v4617
        %v6706 = vpack.c.b16 %v4627, %v4618
        %v6707 = vpack.c.b16 %v4628, %v4619
        %v6708 = vpack.c.b16 %v4629, %v4620
        %v6709 = vpack.c.b16 %v4630, %v4621
        %v6710 = vpack.c.b16 %v4640, %v4631
        %v6711 = vpack.c.b16 %v4641, %v4632
        %v6712 = vpack.c.b16 %v4642, %v4633
        %v6713 = vpack.c.b16 %v4643, %v4634
        %v6714 = vpack.c.b16 %v4644, %v4635
        %v6715 = vpack.c.b16 %v4645, %v4636
        %v6716 = vpack.c.b16 %v4646, %v4637
        %v6717 = vpack.c.b16 %v4647, %v4638
        %v6718 = vpack.c.b16 %v4648, %v4639
        %v6719 = vpack.c.b16 %v4658, %v4649
        %v6720 = vpack.c.b16 %v4659, %v4650
        %v6721 = vpack.c.b16 %v4660, %v4651
        %v6722 = vpack.c.b16 %v4661, %v4652
        %v6723 = vpack.c.b16 %v4662, %v4653
        %v6724 = vpack.c.b16 %v4663, %v4654
        %v6725 = vpack.c.b16 %v4664, %v4655
        %v6726 = vpack.c.b16 %v4665, %v4656
        %v6727 = vpack.c.b16 %v4666, %v4657
        %v6728 = vpack.c.b16 %v4676, %v4667
        %v6729 = vpack.c.b16 %v4677, %v4668
        %v6730 = vpack.c.b16 %v4678, %v4669
        %v6731 = vpack.c.b16 %v4679, %v4670
        %v6732 = vpack.c.b16 %v4680, %v4671
        %v6733 = vpack.c.b16 %v4681, %v4672
        %v6734 = vpack.c.b16 %v4682, %v4673
        %v6735 = vpack.c.b16 %v4683, %v4674
        %v6736 = vpack.c.b16 %v4684, %v4675
        %v6737 = vpack.c.b16 %v4694, %v4685
        %v6738 = vpack.c.b16 %v4695, %v4686
        %v6739 = vpack.c.b16 %v4696, %v4687
        %v6740 = vpack.c.b16 %v4697, %v4688
        %v6741 = vpack.c.b16 %v4698, %v4689
        %v6742 = vpack.c.b16 %v4699, %v4690
        %v6743 = vpack.c.b16 %v4700, %v4691
        %v6744 = vpack.c.b16 %v4701, %v4692
        %v6745 = vpack.c.b16 %v4702, %v4693
        %v6746 = vpack.c.b16 %v4712, %v4703
        %v6747 = vpack.c.b16 %v4713, %v4704
        %v6748 = vpack.c.b16 %v4714, %v4705
        %v6749 = vpack.c.b16 %v4715, %v4706
        %v6750 = vpack.c.b16 %v4716, %v4707
        %v6751 = vpack.c.b16 %v4717, %v4708
        %v6752 = vpack.c.b16 %v4718, %v4709
        %v6753 = vpack.c.b16 %v4719, %v4710
        %v6754 = vpack.c.b16 %v4720, %v4711
        %v6755 = vpack.c.b16 %v4730, %v4721
        %v6756 = vpack.c.b16 %v4731, %v4722
        %v6757 = vpack.c.b16 %v4732, %v4723
        %v6758 = vpack.c.b16 %v4733, %v4724
        %v6759 = vpack.c.b16 %v4734, %v4725
        %v6760 = vpack.c.b16 %v4735, %v4726
        %v6761 = vpack.c.b16 %v4736, %v4727
        %v6762 = vpack.c.b16 %v4737, %v4728
        %v6763 = vpack.c.b16 %v4738, %v4729
        %v6764 = vpack.c.b16 %v4748, %v4739
        %v6765 = vpack.c.b16 %v4749, %v4740
        %v6766 = vpack.c.b16 %v4750, %v4741
        %v6767 = vpack.c.b16 %v4751, %v4742
        %v6768 = vpack.c.b16 %v4752, %v4743
        %v6769 = vpack.c.b16 %v4753, %v4744
        %v6770 = vpack.c.b16 %v4754, %v4745
        %v6771 = vpack.c.b16 %v4755, %v4746
        %v6772 = vpack.c.b16 %v4756, %v4747
        %v6773 = vpack.c.b16 %v4766, %v4757
        %v6774 = vpack.c.b16 %v4767, %v4758
        %v6775 = vpack.c.b16 %v4768, %v4759
        %v6776 = vpack.c.b16 %v4769, %v4760
        %v6777 = vpack.c.b16 %v4770, %v4761
        %v6778 = vpack.c.b16 %v4771, %v4762
        %v6779 = vpack.c.b16 %v4772, %v4763
        %v6780 = vpack.c.b16 %v4773, %v4764
        %v6781 = vpack.c.b16 %v4774, %v4765
        %v6782 = vpack.c.b16 %v4784, %v4775
        %v6783 = vpack.c.b16 %v4785, %v4776
        %v6784 = vpack.c.b16 %v4786, %v4777
        %v6785 = vpack.c.b16 %v4787, %v4778
        %v6786 = vpack.c.b16 %v4788, %v4779
        %v6787 = vpack.c.b16 %v4789, %v4780
        %v6788 = vpack.c.b16 %v4790, %v4781
        %v6789 = vpack.c.b16 %v4791, %v4782
        %v6790 = vpack.c.b16 %v4792, %v4783
        %v6791 = vpack.c.b16 %v4802, %v4793
        %v6792 = vpack.c.b16 %v4803, %v4794
        %v6793 = vpack.c.b16 %v4804, %v4795
        %v6794 = vpack.c.b16 %v4805, %v4796
        %v6795 = vpack.c.b16 %v4806, %v4797
        %v6796 = vpack.c.b16 %v4807, %v4798
        %v6797 = vpack.c.b16 %v4808, %v4799
        %v6798 = vpack.c.b16 %v4809, %v4800
        %v6799 = vpack.c.b16 %v4810, %v4801
        %v6800 = vpack.c.b16 %v4820, %v4811
        %v6801 = vpack.c.b16 %v4821, %v4812
        %v6802 = vpack.c.b16 %v4822, %v4813
        %v6803 = vpack.c.b16 %v4823, %v4814
        %v6804 = vpack.c.b16 %v4824, %v4815
        %v6805 = vpack.c.b16 %v4825, %v4816
        %v6806 = vpack.c.b16 %v4826, %v4817
        %v6807 = vpack.c.b16 %v4827, %v4818
        %v6808 = vpack.c.b16 %v4828, %v4819
        %v6809 = vpack.c.b16 %v4838, %v4829
        %v6810 = vpack.c.b16 %v4839, %v4830
        %v6811 = vpack.c.b16 %v4840, %v4831
        %v6812 = vpack.c.b16 %v4841, %v4832
        %v6813 = vpack.c.b16 %v4842, %v4833
        %v6814 = vpack.c.b16 %v4843, %v4834
        %v6815 = vpack.c.b16 %v4844, %v4835
        %v6816 = vpack.c.b16 %v4845, %v4836
        %v6817 = vpack.c.b16 %v4846, %v4837
        %v6818 = vpack.c.b16 %v4856, %v4847
        %v6819 = vpack.c.b16 %v4857, %v4848
        %v6820 = vpack.c.b16 %v4858, %v4849
        %v6821 = vpack.c.b16 %v4859, %v4850
        %v6822 = vpack.c.b16 %v4860, %v4851
        %v6823 = vpack.c.b16 %v4861, %v4852
        %v6824 = vpack.c.b16 %v4862, %v4853
        %v6825 = vpack.c.b16 %v4863, %v4854
        %v6826 = vpack.c.b16 %v4864, %v4855
        %v6827 = vpack.c.b16 %v4874, %v4865
        %v6828 = vpack.c.b16 %v4875, %v4866
        %v6829 = vpack.c.b16 %v4876, %v4867
        %v6830 = vpack.c.b16 %v4877, %v4868
        %v6831 = vpack.c.b16 %v4878, %v4869
        %v6832 = vpack.c.b16 %v4879, %v4870
        %v6833 = vpack.c.b16 %v4880, %v4871
        %v6834 = vpack.c.b16 %v4881, %v4872
        %v6835 = vpack.c.b16 %v4882, %v4873
        %v6836 = vpack.c.b16 %v4892, %v4883
        %v6837 = vpack.c.b16 %v4893, %v4884
        %v6838 = vpack.c.b16 %v4894, %v4885
        %v6839 = vpack.c.b16 %v4895, %v4886
        %v6840 = vpack.c.b16 %v4896, %v4887
        %v6841 = vpack.c.b16 %v4897, %v4888
        %v6842 = vpack.c.b16 %v4898, %v4889
        %v6843 = vpack.c.b16 %v4899, %v4890
        %v6844 = vpack.c.b16 %v4900, %v4891
        %v6845 = vpack.c.b16 %v4910, %v4901
        %v6846 = vpack.c.b16 %v4911, %v4902
        %v6847 = vpack.c.b16 %v4912, %v4903
        %v6848 = vpack.c.b16 %v4913, %v4904
        %v6849 = vpack.c.b16 %v4914, %v4905
        %v6850 = vpack.c.b16 %v4915, %v4906
        %v6851 = vpack.c.b16 %v4916, %v4907
        %v6852 = vpack.c.b16 %v4917, %v4908
        %v6853 = vpack.c.b16 %v4918, %v4909
        %v6854 = vpack.c.b16 %v4928, %v4919
        %v6855 = vpack.c.b16 %v4929, %v4920
        %v6856 = vpack.c.b16 %v4930, %v4921
        %v6857 = vpack.c.b16 %v4931, %v4922
        %v6858 = vpack.c.b16 %v4932, %v4923
        %v6859 = vpack.c.b16 %v4933, %v4924
        %v6860 = vpack.c.b16 %v4934, %v4925
        %v6861 = vpack.c.b16 %v4935, %v4926
        %v6862 = vpack.c.b16 %v4936, %v4927
        %v6863 = vpack.c.b16 %v4946, %v4937
        %v6864 = vpack.c.b16 %v4947, %v4938
        %v6865 = vpack.c.b16 %v4948, %v4939
        %v6866 = vpack.c.b16 %v4949, %v4940
        %v6867 = vpack.c.b16 %v4950, %v4941
        %v6868 = vpack.c.b16 %v4951, %v4942
        %v6869 = vpack.c.b16 %v4952, %v4943
        %v6870 = vpack.c.b16 %v4953, %v4944
        %v6871 = vpack.c.b16 %v4954, %v4945
        %v6872 = vpack.c.b16 %v4964, %v4955
        %v6873 = vpack.c.b16 %v4965, %v4956
        %v6874 = vpack.c.b16 %v4966, %v4957
        %v6875 = vpack.c.b16 %v4967, %v4958
        %v6876 = vpack.c.b16 %v4968, %v4959
        %v6877 = vpack.c.b16 %v4969, %v4960
        %v6878 = vpack.c.b16 %v4970, %v4961
        %v6879 = vpack.c.b16 %v4971, %v4962
        %v6880 = vpack.c.b16 %v4972, %v4963
        %v6881 = vpack.c.b16 %v4982, %v4973
        %v6882 = vpack.c.b16 %v4983, %v4974
        %v6883 = vpack.c.b16 %v4984, %v4975
        %v6884 = vpack.c.b16 %v4985, %v4976
        %v6885 = vpack.c.b16 %v4986, %v4977
        %v6886 = vpack.c.b16 %v4987, %v4978
        %v6887 = vpack.c.b16 %v4988, %v4979
        %v6888 = vpack.c.b16 %v4989, %v4980
        %v6889 = vpack.c.b16 %v4990, %v4981
        %v6890 = vpack.c.b16 %v5000, %v4991
        %v6891 = vpack.c.b16 %v5001, %v4992
        %v6892 = vpack.c.b16 %v5002, %v4993
        %v6893 = vpack.c.b16 %v5003, %v4994
        %v6894 = vpack.c.b16 %v5004, %v4995
        %v6895 = vpack.c.b16 %v5005, %v4996
        %v6896 = vpack.c.b16 %v5006, %v4997
        %v6897 = vpack.c.b16 %v5007, %v4998
        %v6898 = vpack.c.b16 %v5008, %v4999
        %v6899 = vpack.c.b16 %v5018, %v5009
        %v6900 = vpack.c.b16 %v5019, %v5010
        %v6901 = vpack.c.b16 %v5020, %v5011
        %v6902 = vpack.c.b16 %v5021, %v5012
        %v6903 = vpack.c.b16 %v5022, %v5013
        %v6904 = vpack.c.b16 %v5023, %v5014
        %v6905 = vpack.c.b16 %v5024, %v5015
        %v6906 = vpack.c.b16 %v5025, %v5016
        %v6907 = vpack.c.b16 %v5026, %v5017
        %v6908 = vpack.c.b16 %v5036, %v5027
        %v6909 = vpack.c.b16 %v5037, %v5028
        %v6910 = vpack.c.b16 %v5038, %v5029
        %v6911 = vpack.c.b16 %v5039, %v5030
        %v6912 = vpack.c.b16 %v5040, %v5031
        %v6913 = vpack.c.b16 %v5041, %v5032
        %v6914 = vpack.c.b16 %v5042, %v5033
        %v6915 = vpack.c.b16 %v5043, %v5034
        %v6916 = vpack.c.b16 %v5044, %v5035
        %v6917 = vpack.c.b16 %v5054, %v5045
        %v6918 = vpack.c.b16 %v5055, %v5046
        %v6919 = vpack.c.b16 %v5056, %v5047
        %v6920 = vpack.c.b16 %v5057, %v5048
        %v6921 = vpack.c.b16 %v5058, %v5049
        %v6922 = vpack.c.b16 %v5059, %v5050
        %v6923 = vpack.c.b16 %v5060, %v5051
        %v6924 = vpack.c.b16 %v5061, %v5052
        %v6925 = vpack.c.b16 %v5062, %v5053
        %v6926 = vpack.c.b16 %v5072, %v5063
        %v6927 = vpack.c.b16 %v5073, %v5064
        %v6928 = vpack.c.b16 %v5074, %v5065
        %v6929 = vpack.c.b16 %v5075, %v5066
        %v6930 = vpack.c.b16 %v5076, %v5067
        %v6931 = vpack.c.b16 %v5077, %v5068
        %v6932 = vpack.c.b16 %v5078, %v5069
        %v6933 = vpack.c.b16 %v5079, %v5070
        %v6934 = vpack.c.b16 %v5080, %v5071
        %v6935 = vpack.c.b16 %v5090, %v5081
        %v6936 = vpack.c.b16 %v5091, %v5082
        %v6937 = vpack.c.b16 %v5092, %v5083
        %v6938 = vpack.c.b16 %v5093, %v5084
        %v6939 = vpack.c.b16 %v5094, %v5085
        %v6940 = vpack.c.b16 %v5095, %v5086
        %v6941 = vpack.c.b16 %v5096, %v5087
        %v6942 = vpack.c.b16 %v5097, %v5088
        %v6943 = vpack.c.b16 %v5098, %v5089
        %v6944 = vpack.c.b16 %v5108, %v5099
        %v6945 = vpack.c.b16 %v5109, %v5100
        %v6946 = vpack.c.b16 %v5110, %v5101
        %v6947 = vpack.c.b16 %v5111, %v5102
        %v6948 = vpack.c.b16 %v5112, %v5103
        %v6949 = vpack.c.b16 %v5113, %v5104
        %v6950 = vpack.c.b16 %v5114, %v5105
        %v6951 = vpack.c.b16 %v5115, %v5106
        %v6952 = vpack.c.b16 %v5116, %v5107
        %v6953 = vpack.c.b16 %v5126, %v5117
        %v6954 = vpack.c.b16 %v5127, %v5118
        %v6955 = vpack.c.b16 %v5128, %v5119
        %v6956 = vpack.c.b16 %v5129, %v5120
        %v6957 = vpack.c.b16 %v5130, %v5121
        %v6958 = vpack.c.b16 %v5131, %v5122
        %v6959 = vpack.c.b16 %v5132, %v5123
        %v6960 = vpack.c.b16 %v5133, %v5124
        %v6961 = vpack.c.b16 %v5134, %v5125
        %v6962 = vpack.c.b16 %v5144, %v5135
        %v6963 = vpack.c.b16 %v5145, %v5136
        %v6964 = vpack.c.b16 %v5146, %v5137
        %v6965 = vpack.c.b16 %v5147, %v5138
        %v6966 = vpack.c.b16 %v5148, %v5139
        %v6967 = vpack.c.b16 %v5149, %v5140
        %v6968 = vpack.c.b16 %v5150, %v5141
        %v6969 = vpack.c.b16 %v5151, %v5142
        %v6970 = vpack.c.b16 %v5152, %v5143
        %v6971 = vpack.c.b16 %v5162, %v5153
        %v6972 = vpack.c.b16 %v5163, %v5154
        %v6973 = vpack.c.b16 %v5164, %v5155
        %v6974 = vpack.c.b16 %v5165, %v5156
        %v6975 = vpack.c.b16 %v5166, %v5157
        %v6976 = vpack.c.b16 %v5167, %v5158
        %v6977 = vpack.c.b16 %v5168, %v5159
        %v6978 = vpack.c.b16 %v5169, %v5160
        %v6979 = vpack.c.b16 %v5170, %v5161
        %v6980 = vpack.c.b16 %v5180, %v5171
        %v6981 = vpack.c.b16 %v5181, %v5172
        %v6982 = vpack.c.b16 %v5182, %v5173
        %v6983 = vpack.c.b16 %v5183, %v5174
        %v6984 = vpack.c.b16 %v5184, %v5175
        %v6985 = vpack.c.b16 %v5185, %v5176
        %v6986 = vpack.c.b16 %v5186, %v5177
        %v6987 = vpack.c.b16 %v5187, %v5178
        %v6988 = vpack.c.b16 %v5188, %v5179
        %v6989 = vpack.c.b16 %v5198, %v5189
        %v6990 = vpack.c.b16 %v5199, %v5190
        %v6991 = vpack.c.b16 %v5200, %v5191
        %v6992 = vpack.c.b16 %v5201, %v5192
        %v6993 = vpack.c.b16 %v5202, %v5193
        %v6994 = vpack.c.b16 %v5203, %v5194
        %v6995 = vpack.c.b16 %v5204, %v5195
        %v6996 = vpack.c.b16 %v5205, %v5196
        %v6997 = vpack.c.b16 %v5206, %v5197
        %v6998 = vpack.c.b16 %v5216, %v5207
        %v6999 = vpack.c.b16 %v5217, %v5208
        %v7000 = vpack.c.b16 %v5218, %v5209
        %v7001 = vpack.c.b16 %v5219, %v5210
        %v7002 = vpack.c.b16 %v5220, %v5211
        %v7003 = vpack.c.b16 %v5221, %v5212
        %v7004 = vpack.c.b16 %v5222, %v5213
        %v7005 = vpack.c.b16 %v5223, %v5214
        %v7006 = vpack.c.b16 %v5224, %v5215
        %v7007 = vpack.c.b16 %v5234, %v5225
        %v7008 = vpack.c.b16 %v5235, %v5226
        %v7009 = vpack.c.b16 %v5236, %v5227
        %v7010 = vpack.c.b16 %v5237, %v5228
        %v7011 = vpack.c.b16 %v5238, %v5229
        %v7012 = vpack.c.b16 %v5239, %v5230
        %v7013 = vpack.c.b16 %v5240, %v5231
        %v7014 = vpack.c.b16 %v5241, %v5232
        %v7015 = vpack.c.b16 %v5242, %v5233
        %v7016 = vpack.c.b16 %v5252, %v5243
        %v7017 = vpack.c.b16 %v5253, %v5244
        %v7018 = vpack.c.b16 %v5254, %v5245
        %v7019 = vpack.c.b16 %v5255, %v5246
        %v7020 = vpack.c.b16 %v5256, %v5247
        %v7021 = vpack.c.b16 %v5257, %v5248
        %v7022 = vpack.c.b16 %v5258, %v5249
        %v7023 = vpack.c.b16 %v5259, %v5250
        %v7024 = vpack.c.b16 %v5260, %v5251
        %v7025 = vpack.c.b16 %v5270, %v5261
        %v7026 = vpack.c.b16 %v5271, %v5262
        %v7027 = vpack.c.b16 %v5272, %v5263
        %v7028 = vpack.c.b16 %v5273, %v5264
        %v7029 = vpack.c.b16 %v5274, %v5265
        %v7030 = vpack.c.b16 %v5275, %v5266
        %v7031 = vpack.c.b16 %v5276, %v5267
        %v7032 = vpack.c.b16 %v5277, %v5268
        %v7033 = vpack.c.b16 %v5278, %v5269
        %v7034 = vpack.c.b16 %v5288, %v5279
        %v7035 = vpack.c.b16 %v5289, %v5280
        %v7036 = vpack.c.b16 %v5290, %v5281
        %v7037 = vpack.c.b16 %v5291, %v5282
        %v7038 = vpack.c.b16 %v5292, %v5283
        %v7039 = vpack.c.b16 %v5293, %v5284
        %v7040 = vpack.c.b16 %v5294, %v5285
        %v7041 = vpack.c.b16 %v5295, %v5286
        %v7042 = vpack.c.b16 %v5296, %v5287
        %v7043 = vpack.c.b16 %v5306, %v5297
        %v7044 = vpack.c.b16 %v5307, %v5298
        %v7045 = vpack.c.b16 %v5308, %v5299
        %v7046 = vpack.c.b16 %v5309, %v5300
        %v7047 = vpack.c.b16 %v5310, %v5301
        %v7048 = vpack.c.b16 %v5311, %v5302
        %v7049 = vpack.c.b16 %v5312, %v5303
        %v7050 = vpack.c.b16 %v5313, %v5304
        %v7051 = vpack.c.b16 %v5314, %v5305
        %v7052 = vpack.c.b16 %v5324, %v5315
        %v7053 = vpack.c.b16 %v5325, %v5316
        %v7054 = vpack.c.b16 %v5326, %v5317
        %v7055 = vpack.c.b16 %v5327, %v5318
        %v7056 = vpack.c.b16 %v5328, %v5319
        %v7057 = vpack.c.b16 %v5329, %v5320
        %v7058 = vpack.c.b16 %v5330, %v5321
        %v7059 = vpack.c.b16 %v5331, %v5322
        %v7060 = vpack.c.b16 %v5332, %v5323
        %v7061 = vpack.c.b16 %v5342, %v5333
        %v7062 = vpack.c.b16 %v5343, %v5334
        %v7063 = vpack.c.b16 %v5344, %v5335
        %v7064 = vpack.c.b16 %v5345, %v5336
        %v7065 = vpack.c.b16 %v5346, %v5337
        %v7066 = vpack.c.b16 %v5347, %v5338
        %v7067 = vpack.c.b16 %v5348, %v5339
        %v7068 = vpack.c.b16 %v5349, %v5340
        %v7069 = vpack.c.b16 %v5350, %v5341
        %v7070 = vpack.c.b16 %v5360, %v5351
        %v7071 = vpack.c.b16 %v5361, %v5352
        %v7072 = vpack.c.b16 %v5362, %v5353
        %v7073 = vpack.c.b16 %v5363, %v5354
        %v7074 = vpack.c.b16 %v5364, %v5355
        %v7075 = vpack.c.b16 %v5365, %v5356
        %v7076 = vpack.c.b16 %v5366, %v5357
        %v7077 = vpack.c.b16 %v5367, %v5358
        %v7078 = vpack.c.b16 %v5368, %v5359
        %v7079 = vpack.c.b16 %v5378, %v5369
        %v7080 = vpack.c.b16 %v5379, %v5370
        %v7081 = vpack.c.b16 %v5380, %v5371
        %v7082 = vpack.c.b16 %v5381, %v5372
        %v7083 = vpack.c.b16 %v5382, %v5373
        %v7084 = vpack.c.b16 %v5383, %v5374
        %v7085 = vpack.c.b16 %v5384, %v5375
        %v7086 = vpack.c.b16 %v5385, %v5376
        %v7087 = vpack.c.b16 %v5386, %v5377
        %v7088 = vpack.c.b16 %v5396, %v5387
        %v7089 = vpack.c.b16 %v5397, %v5388
        %v7090 = vpack.c.b16 %v5398, %v5389
        %v7091 = vpack.c.b16 %v5399, %v5390
        %v7092 = vpack.c.b16 %v5400, %v5391
        %v7093 = vpack.c.b16 %v5401, %v5392
        %v7094 = vpack.c.b16 %v5402, %v5393
        %v7095 = vpack.c.b16 %v5403, %v5394
        %v7096 = vpack.c.b16 %v5404, %v5395
        %v7097 = vpack.c.b16 %v5414, %v5405
        %v7098 = vpack.c.b16 %v5415, %v5406
        %v7099 = vpack.c.b16 %v5416, %v5407
        %v7100 = vpack.c.b16 %v5417, %v5408
        %v7101 = vpack.c.b16 %v5418, %v5409
        %v7102 = vpack.c.b16 %v5419, %v5410
        %v7103 = vpack.c.b16 %v5420, %v5411
        %v7104 = vpack.c.b16 %v5421, %v5412
        %v7105 = vpack.c.b16 %v5422, %v5413
        %v7106 = vpack.c.b16 %v5432, %v5423
        %v7107 = vpack.c.b16 %v5433, %v5424
        %v7108 = vpack.c.b16 %v5434, %v5425
        %v7109 = vpack.c.b16 %v5435, %v5426
        %v7110 = vpack.c.b16 %v5436, %v5427
        %v7111 = vpack.c.b16 %v5437, %v5428
        %v7112 = vpack.c.b16 %v5438, %v5429
        %v7113 = vpack.c.b16 %v5439, %v5430
        %v7114 = vpack.c.b16 %v5440, %v5431
        %v7115 = vpack.c.b16 %v5450, %v5441
        %v7116 = vpack.c.b16 %v5451, %v5442
        %v7117 = vpack.c.b16 %v5452, %v5443
        %v7118 = vpack.c.b16 %v5453, %v5444
        %v7119 = vpack.c.b16 %v5454, %v5445
        %v7120 = vpack.c.b16 %v5455, %v5446
        %v7121 = vpack.c.b16 %v5456, %v5447
        %v7122 = vpack.c.b16 %v5457, %v5448
        %v7123 = vpack.c.b16 %v5458, %v5449
        %v7124 = vpack.c.b16 %v5468, %v5459
        %v7125 = vpack.c.b16 %v5469, %v5460
        %v7126 = vpack.c.b16 %v5470, %v5461
        %v7127 = vpack.c.b16 %v5471, %v5462
        %v7128 = vpack.c.b16 %v5472, %v5463
        %v7129 = vpack.c.b16 %v5473, %v5464
        %v7130 = vpack.c.b16 %v5474, %v5465
        %v7131 = vpack.c.b16 %v5475, %v5466
        %v7132 = vpack.c.b16 %v5476, %v5467
        %v7133 = vpack.c.b16 %v5486, %v5477
        %v7134 = vpack.c.b16 %v5487, %v5478
        %v7135 = vpack.c.b16 %v5488, %v5479
        %v7136 = vpack.c.b16 %v5489, %v5480
        %v7137 = vpack.c.b16 %v5490, %v5481
        %v7138 = vpack.c.b16 %v5491, %v5482
        %v7139 = vpack.c.b16 %v5492, %v5483
        %v7140 = vpack.c.b16 %v5493, %v5484
        %v7141 = vpack.c.b16 %v5494, %v5485
        %v7142 = vpack.c.b16 %v5504, %v5495
        %v7143 = vpack.c.b16 %v5505, %v5496
        %v7144 = vpack.c.b16 %v5506, %v5497
        %v7145 = vpack.c.b16 %v5507, %v5498
        %v7146 = vpack.c.b16 %v5508, %v5499
        %v7147 = vpack.c.b16 %v5509, %v5500
        %v7148 = vpack.c.b16 %v5510, %v5501
        %v7149 = vpack.c.b16 %v5511, %v5502
        %v7150 = vpack.c.b16 %v5512, %v5503
        %v7151 = vpack.c.b16 %v5522, %v5513
        %v7152 = vpack.c.b16 %v5523, %v5514
        %v7153 = vpack.c.b16 %v5524, %v5515
        %v7154 = vpack.c.b16 %v5525, %v5516
        %v7155 = vpack.c.b16 %v5526, %v5517
        %v7156 = vpack.c.b16 %v5527, %v5518
        %v7157 = vpack.c.b16 %v5528, %v5519
        %v7158 = vpack.c.b16 %v5529, %v5520
        %v7159 = vpack.c.b16 %v5530, %v5521
        %v7160 = vpack.c.b16 %v5540, %v5531
        %v7161 = vpack.c.b16 %v5541, %v5532
        %v7162 = vpack.c.b16 %v5542, %v5533
        %v7163 = vpack.c.b16 %v5543, %v5534
        %v7164 = vpack.c.b16 %v5544, %v5535
        %v7165 = vpack.c.b16 %v5545, %v5536
        %v7166 = vpack.c.b16 %v5546, %v5537
        %v7167 = vpack.c.b16 %v5547, %v5538
        %v7168 = vpack.c.b16 %v5548, %v5539
        %v7169 = vpack.c.b16 %v5558, %v5549
        %v7170 = vpack.c.b16 %v5559, %v5550
        %v7171 = vpack.c.b16 %v5560, %v5551
        %v7172 = vpack.c.b16 %v5561, %v5552
        %v7173 = vpack.c.b16 %v5562, %v5553
        %v7174 = vpack.c.b16 %v5563, %v5554
        %v7175 = vpack.c.b16 %v5564, %v5555
        %v7176 = vpack.c.b16 %v5565, %v5556
        %v7177 = vpack.c.b16 %v5566, %v5557
        %v7178 = vpack.c.b16 %v5576, %v5567
        %v7179 = vpack.c.b16 %v5577, %v5568
        %v7180 = vpack.c.b16 %v5578, %v5569
        %v7181 = vpack.c.b16 %v5579, %v5570
        %v7182 = vpack.c.b16 %v5580, %v5571
        %v7183 = vpack.c.b16 %v5581, %v5572
        %v7184 = vpack.c.b16 %v5582, %v5573
        %v7185 = vpack.c.b16 %v5583, %v5574
        %v7186 = vpack.c.b16 %v5584, %v5575
        %v7187 = vpack.c.b16 %v5594, %v5585
        %v7188 = vpack.c.b16 %v5595, %v5586
        %v7189 = vpack.c.b16 %v5596, %v5587
        %v7190 = vpack.c.b16 %v5597, %v5588
        %v7191 = vpack.c.b16 %v5598, %v5589
        %v7192 = vpack.c.b16 %v5599, %v5590
        %v7193 = vpack.c.b16 %v5600, %v5591
        %v7194 = vpack.c.b16 %v5601, %v5592
        %v7195 = vpack.c.b16 %v5602, %v5593
        %v7196 = vpack.c.b16 %v5612, %v5603
        %v7197 = vpack.c.b16 %v5613, %v5604
        %v7198 = vpack.c.b16 %v5614, %v5605
        %v7199 = vpack.c.b16 %v5615, %v5606
        %v7200 = vpack.c.b16 %v5616, %v5607
        %v7201 = vpack.c.b16 %v5617, %v5608
        %v7202 = vpack.c.b16 %v5618, %v5609
        %v7203 = vpack.c.b16 %v5619, %v5610
        %v7204 = vpack.c.b16 %v5620, %v5611
        %v7205 = vpack.c.b16 %v5630, %v5621
        %v7206 = vpack.c.b16 %v5631, %v5622
        %v7207 = vpack.c.b16 %v5632, %v5623
        %v7208 = vpack.c.b16 %v5633, %v5624
        %v7209 = vpack.c.b16 %v5634, %v5625
        %v7210 = vpack.c.b16 %v5635, %v5626
        %v7211 = vpack.c.b16 %v5636, %v5627
        %v7212 = vpack.c.b16 %v5637, %v5628
        %v7213 = vpack.c.b16 %v5638, %v5629
        %v7214 = vpack.c.b16 %v5648, %v5639
        %v7215 = vpack.c.b16 %v5649, %v5640
        %v7216 = vpack.c.b16 %v5650, %v5641
        %v7217 = vpack.c.b16 %v5651, %v5642
        %v7218 = vpack.c.b16 %v5652, %v5643
        %v7219 = vpack.c.b16 %v5653, %v5644
        %v7220 = vpack.c.b16 %v5654, %v5645
        %v7221 = vpack.c.b16 %v5655, %v5646
        %v7222 = vpack.c.b16 %v5656, %v5647
        %v7223 = vpack.c.b16 %v5666, %v5657
        %v7224 = vpack.c.b16 %v5667, %v5658
        %v7225 = vpack.c.b16 %v5668, %v5659
        %v7226 = vpack.c.b16 %v5669, %v5660
        %v7227 = vpack.c.b16 %v5670, %v5661
        %v7228 = vpack.c.b16 %v5671, %v5662
        %v7229 = vpack.c.b16 %v5672, %v5663
        %v7230 = vpack.c.b16 %v5673, %v5664
        %v7231 = vpack.c.b16 %v5674, %v5665
        %v7232 = vpack.c.b16 %v5684, %v5675
        %v7233 = vpack.c.b16 %v5685, %v5676
        %v7234 = vpack.c.b16 %v5686, %v5677
        %v7235 = vpack.c.b16 %v5687, %v5678
        %v7236 = vpack.c.b16 %v5688, %v5679
        %v7237 = vpack.c.b16 %v5689, %v5680
        %v7238 = vpack.c.b16 %v5690, %v5681
        %v7239 = vpack.c.b16 %v5691, %v5682
        %v7240 = vpack.c.b16 %v5692, %v5683
        %v7241 = vpack.c.b16 %v5702, %v5693
        %v7242 = vpack.c.b16 %v5703, %v5694
        %v7243 = vpack.c.b16 %v5704, %v5695
        %v7244 = vpack.c.b16 %v5705, %v5696
        %v7245 = vpack.c.b16 %v5706, %v5697
        %v7246 = vpack.c.b16 %v5707, %v5698
        %v7247 = vpack.c.b16 %v5708, %v5699
        %v7248 = vpack.c.b16 %v5709, %v5700
        %v7249 = vpack.c.b16 %v5710, %v5701
        %v7250 = vpack.c.b16 %v5720, %v5711
        %v7251 = vpack.c.b16 %v5721, %v5712
        %v7252 = vpack.c.b16 %v5722, %v5713
        %v7253 = vpack.c.b16 %v5723, %v5714
        %v7254 = vpack.c.b16 %v5724, %v5715
        %v7255 = vpack.c.b16 %v5725, %v5716
        %v7256 = vpack.c.b16 %v5726, %v5717
        %v7257 = vpack.c.b16 %v5727, %v5718
        %v7258 = vpack.c.b16 %v5728, %v5719
        %v7259 = vpack.c.b16 %v5738, %v5729
        %v7260 = vpack.c.b16 %v5739, %v5730
        %v7261 = vpack.c.b16 %v5740, %v5731
        %v7262 = vpack.c.b16 %v5741, %v5732
        %v7263 = vpack.c.b16 %v5742, %v5733
        %v7264 = vpack.c.b16 %v5743, %v5734
        %v7265 = vpack.c.b16 %v5744, %v5735
        %v7266 = vpack.c.b16 %v5745, %v5736
        %v7267 = vpack.c.b16 %v5746, %v5737
        %v7268 = vpack.c.b16 %v5756, %v5747
        %v7269 = vpack.c.b16 %v5757, %v5748
        %v7270 = vpack.c.b16 %v5758, %v5749
        %v7271 = vpack.c.b16 %v5759, %v5750
        %v7272 = vpack.c.b16 %v5760, %v5751
        %v7273 = vpack.c.b16 %v5761, %v5752
        %v7274 = vpack.c.b16 %v5762, %v5753
        %v7275 = vpack.c.b16 %v5763, %v5754
        %v7276 = vpack.c.b16 %v5764, %v5755
        %v7277 = vpack.c.b16 %v5774, %v5765
        %v7278 = vpack.c.b16 %v5775, %v5766
        %v7279 = vpack.c.b16 %v5776, %v5767
        %v7280 = vpack.c.b16 %v5777, %v5768
        %v7281 = vpack.c.b16 %v5778, %v5769
        %v7282 = vpack.c.b16 %v5779, %v5770
        %v7283 = vpack.c.b16 %v5780, %v5771
        %v7284 = vpack.c.b16 %v5781, %v5772
        %v7285 = vpack.c.b16 %v5782, %v5773
        %v7286 = vpack.c.b16 %v5792, %v5783
        %v7287 = vpack.c.b16 %v5793, %v5784
        %v7288 = vpack.c.b16 %v5794, %v5785
        %v7289 = vpack.c.b16 %v5795, %v5786
        %v7290 = vpack.c.b16 %v5796, %v5787
        %v7291 = vpack.c.b16 %v5797, %v5788
        %v7292 = vpack.c.b16 %v5798, %v5789
        %v7293 = vpack.c.b16 %v5799, %v5790
        %v7294 = vpack.c.b16 %v5800, %v5791
        %v7295 = vpack.c.b16 %v5810, %v5801
        %v7296 = vpack.c.b16 %v5811, %v5802
        %v7297 = vpack.c.b16 %v5812, %v5803
        %v7298 = vpack.c.b16 %v5813, %v5804
        %v7299 = vpack.c.b16 %v5814, %v5805
        %v7300 = vpack.c.b16 %v5815, %v5806
        %v7301 = vpack.c.b16 %v5816, %v5807
        %v7302 = vpack.c.b16 %v5817, %v5808
        %v7303 = vpack.c.b16 %v5818, %v5809
        %v7304 = vpack.c.b16 %v5828, %v5819
        %v7305 = vpack.c.b16 %v5829, %v5820
        %v7306 = vpack.c.b16 %v5830, %v5821
        %v7307 = vpack.c.b16 %v5831, %v5822
        %v7308 = vpack.c.b16 %v5832, %v5823
        %v7309 = vpack.c.b16 %v5833, %v5824
        %v7310 = vpack.c.b16 %v5834, %v5825
        %v7311 = vpack.c.b16 %v5835, %v5826
        %v7312 = vpack.c.b16 %v5836, %v5827
        %v7313 = vpack.c.b16 %v5846, %v5837
        %v7314 = vpack.c.b16 %v5847, %v5838
        %v7315 = vpack.c.b16 %v5848, %v5839
        %v7316 = vpack.c.b16 %v5849, %v5840
        %v7317 = vpack.c.b16 %v5850, %v5841
        %v7318 = vpack.c.b16 %v5851, %v5842
        %v7319 = vpack.c.b16 %v5852, %v5843
        %v7320 = vpack.c.b16 %v5853, %v5844
        %v7321 = vpack.c.b16 %v5854, %v5845
        %v7322 = vpack.c.b16 %v5864, %v5855
        %v7323 = vpack.c.b16 %v5865, %v5856
        %v7324 = vpack.c.b16 %v5866, %v5857
        %v7325 = vpack.c.b16 %v5867, %v5858
        %v7326 = vpack.c.b16 %v5868, %v5859
        %v7327 = vpack.c.b16 %v5869, %v5860
        %v7328 = vpack.c.b16 %v5870, %v5861
        %v7329 = vpack.c.b16 %v5871, %v5862
        %v7330 = vpack.c.b16 %v5872, %v5863
        %v7331 = vpack.c.b16 %v5882, %v5873
        %v7332 = vpack.c.b16 %v5883, %v5874
        %v7333 = vpack.c.b16 %v5884, %v5875
        %v7334 = vpack.c.b16 %v5885, %v5876
        %v7335 = vpack.c.b16 %v5886, %v5877
        %v7336 = vpack.c.b16 %v5887, %v5878
        %v7337 = vpack.c.b16 %v5888, %v5879
        %v7338 = vpack.c.b16 %v5889, %v5880
        %v7339 = vpack.c.b16 %v5890, %v5881
        %v7340 = vpack.c.b16 %v5900, %v5891
        %v7341 = vpack.c.b16 %v5901, %v5892
        %v7342 = vpack.c.b16 %v5902, %v5893
        %v7343 = vpack.c.b16 %v5903, %v5894
        %v7344 = vpack.c.b16 %v5904, %v5895
        %v7345 = vpack.c.b16 %v5905, %v5896
        %v7346 = vpack.c.b16 %v5906, %v5897
        %v7347 = vpack.c.b16 %v5907, %v5898
        %v7348 = vpack.c.b16 %v5908, %v5899
        %v7349 = vpack.c.b16 %v5918, %v5909
        %v7350 = vpack.c.b16 %v5919, %v5910
        %v7351 = vpack.c.b16 %v5920, %v5911
        %v7352 = vpack.c.b16 %v5921, %v5912
        %v7353 = vpack.c.b16 %v5922, %v5913
        %v7354 = vpack.c.b16 %v5923, %v5914
        %v7355 = vpack.c.b16 %v5924, %v5915
        %v7356 = vpack.c.b16 %v5925, %v5916
        %v7357 = vpack.c.b16 %v5926, %v5917
        %v7358 = vpack.c.b16 %v5936, %v5927
        %v7359 = vpack.c.b16 %v5937, %v5928
        %v7360 = vpack.c.b16 %v5938, %v5929
        %v7361 = vpack.c.b16 %v5939, %v5930
        %v7362 = vpack.c.b16 %v5940, %v5931
        %v7363 = vpack.c.b16 %v5941, %v5932
        %v7364 = vpack.c.b16 %v5942, %v5933
        %v7365 = vpack.c.b16 %v5943, %v5934
        %v7366 = vpack.c.b16 %v5944, %v5935
        %v7367 = vpack.c.b16 %v5954, %v5945
        %v7368 = vpack.c.b16 %v5955, %v5946
        %v7369 = vpack.c.b16 %v5956, %v5947
        %v7370 = vpack.c.b16 %v5957, %v5948
        %v7371 = vpack.c.b16 %v5958, %v5949
        %v7372 = vpack.c.b16 %v5959, %v5950
        %v7373 = vpack.c.b16 %v5960, %v5951
        %v7374 = vpack.c.b16 %v5961, %v5952
        %v7375 = vpack.c.b16 %v5962, %v5953
        %v7376 = vpack.c.b16 %v5972, %v5963
        %v7377 = vpack.c.b16 %v5973, %v5964
        %v7378 = vpack.c.b16 %v5974, %v5965
        %v7379 = vpack.c.b16 %v5975, %v5966
        %v7380 = vpack.c.b16 %v5976, %v5967
        %v7381 = vpack.c.b16 %v5977, %v5968
        %v7382 = vpack.c.b16 %v5978, %v5969
        %v7383 = vpack.c.b16 %v5979, %v5970
        %v7384 = vpack.c.b16 %v5980, %v5971
        %v7385 = vpack.c.b16 %v5990, %v5981
        %v7386 = vpack.c.b16 %v5991, %v5982
        %v7387 = vpack.c.b16 %v5992, %v5983
        %v7388 = vpack.c.b16 %v5993, %v5984
        %v7389 = vpack.c.b16 %v5994, %v5985
        %v7390 = vpack.c.b16 %v5995, %v5986
        %v7391 = vpack.c.b16 %v5996, %v5987
        %v7392 = vpack.c.b16 %v5997, %v5988
        %v7393 = vpack.c.b16 %v5998, %v5989
        %v7394 = vpack.c.b16 %v6008, %v5999
        %v7395 = vpack.c.b16 %v6009, %v6000
        %v7396 = vpack.c.b16 %v6010, %v6001
        %v7397 = vpack.c.b16 %v6011, %v6002
        %v7398 = vpack.c.b16 %v6012, %v6003
        %v7399 = vpack.c.b16 %v6013, %v6004
        %v7400 = vpack.c.b16 %v6014, %v6005
        %v7401 = vpack.c.b16 %v6015, %v6006
        %v7402 = vpack.c.b16 %v6016, %v6007
        %v7403 = vpack.c.b16 %v6026, %v6017
        %v7404 = vpack.c.b16 %v6027, %v6018
        %v7405 = vpack.c.b16 %v6028, %v6019
        %v7406 = vpack.c.b16 %v6029, %v6020
        %v7407 = vpack.c.b16 %v6030, %v6021
        %v7408 = vpack.c.b16 %v6031, %v6022
        %v7409 = vpack.c.b16 %v6032, %v6023
        %v7410 = vpack.c.b16 %v6033, %v6024
        %v7411 = vpack.c.b16 %v6034, %v6025
        %v7412 = vpack.c.b16 %v6044, %v6035
        %v7413 = vpack.c.b16 %v6045, %v6036
        %v7414 = vpack.c.b16 %v6046, %v6037
        %v7415 = vpack.c.b16 %v6047, %v6038
        %v7416 = vpack.c.b16 %v6048, %v6039
        %v7417 = vpack.c.b16 %v6049, %v6040
        %v7418 = vpack.c.b16 %v6050, %v6041
        %v7419 = vpack.c.b16 %v6051, %v6042
        %v7420 = vpack.c.b16 %v6052, %v6043
        %v7421 = vpack.c.b16 %v6062, %v6053
        %v7422 = vpack.c.b16 %v6063, %v6054
        %v7423 = vpack.c.b16 %v6064, %v6055
        %v7424 = vpack.c.b16 %v6065, %v6056
        %v7425 = vpack.c.b16 %v6066, %v6057
        %v7426 = vpack.c.b16 %v6067, %v6058
        %v7427 = vpack.c.b16 %v6068, %v6059
        %v7428 = vpack.c.b16 %v6069, %v6060
        %v7429 = vpack.c.b16 %v6070, %v6061
        %v7430 = vpack.c.b16 %v6080, %v6071
        %v7431 = vpack.c.b16 %v6081, %v6072
        %v7432 = vpack.c.b16 %v6082, %v6073
        %v7433 = vpack.c.b16 %v6083, %v6074
        %v7434 = vpack.c.b16 %v6084, %v6075
        %v7435 = vpack.c.b16 %v6085, %v6076
        %v7436 = vpack.c.b16 %v6086, %v6077
        %v7437 = vpack.c.b16 %v6087, %v6078
        %v7438 = vpack.c.b16 %v6088, %v6079
        %v7439 = vpack.c.b16 %v6098, %v6089
        %v7440 = vpack.c.b16 %v6099, %v6090
        %v7441 = vpack.c.b16 %v6100, %v6091
        %v7442 = vpack.c.b16 %v6101, %v6092
        %v7443 = vpack.c.b16 %v6102, %v6093
        %v7444 = vpack.c.b16 %v6103, %v6094
        %v7445 = vpack.c.b16 %v6104, %v6095
        %v7446 = vpack.c.b16 %v6105, %v6096
        %v7447 = vpack.c.b16 %v6106, %v6097
        %v7448 = vpack.c.b16 %v6116, %v6107
        %v7449 = vpack.c.b16 %v6117, %v6108
        %v7450 = vpack.c.b16 %v6118, %v6109
        %v7451 = vpack.c.b16 %v6119, %v6110
        %v7452 = vpack.c.b16 %v6120, %v6111
        %v7453 = vpack.c.b16 %v6121, %v6112
        %v7454 = vpack.c.b16 %v6122, %v6113
        %v7455 = vpack.c.b16 %v6123, %v6114
        %v7456 = vpack.c.b16 %v6124, %v6115
        %v7457 = vpack.c.b16 %v6134, %v6125
        %v7458 = vpack.c.b16 %v6135, %v6126
        %v7459 = vpack.c.b16 %v6136, %v6127
        %v7460 = vpack.c.b16 %v6137, %v6128
        %v7461 = vpack.c.b16 %v6138, %v6129
        %v7462 = vpack.c.b16 %v6139, %v6130
        %v7463 = vpack.c.b16 %v6140, %v6131
        %v7464 = vpack.c.b16 %v6141, %v6132
        %v7465 = vpack.c.b16 %v6142, %v6133
        %v7466 = vpack.c.b16 %v6152, %v6143
        %v7467 = vpack.c.b16 %v6153, %v6144
        %v7468 = vpack.c.b16 %v6154, %v6145
        %v7469 = vpack.c.b16 %v6155, %v6146
        %v7470 = vpack.c.b16 %v6156, %v6147
        %v7471 = vpack.c.b16 %v6157, %v6148
        %v7472 = vpack.c.b16 %v6158, %v6149
        %v7473 = vpack.c.b16 %v6159, %v6150
        %v7474 = vpack.c.b16 %v6160, %v6151
        %v7475 = vpack.c.b16 %v6170, %v6161
        %v7476 = vpack.c.b16 %v6171, %v6162
        %v7477 = vpack.c.b16 %v6172, %v6163
        %v7478 = vpack.c.b16 %v6173, %v6164
        %v7479 = vpack.c.b16 %v6174, %v6165
        %v7480 = vpack.c.b16 %v6175, %v6166
        %v7481 = vpack.c.b16 %v6176, %v6167
        %v7482 = vpack.c.b16 %v6177, %v6168
        %v7483 = vpack.c.b16 %v6178, %v6169
        %v7484 = vpack.c.b16 %v6188, %v6179
        %v7485 = vpack.c.b16 %v6189, %v6180
        %v7486 = vpack.c.b16 %v6190, %v6181
        %v7487 = vpack.c.b16 %v6191, %v6182
        %v7488 = vpack.c.b16 %v6192, %v6183
        %v7489 = vpack.c.b16 %v6193, %v6184
        %v7490 = vpack.c.b16 %v6194, %v6185
        %v7491 = vpack.c.b16 %v6195, %v6186
        %v7492 = vpack.c.b16 %v6196, %v6187
        %8789 = vmatprep.subr.bf16.mxu0 %v6198
        %8790 = vmatpush1.bf16.msra.mxu0 %v6197
        %8791 = vmatprep.subr.bf16.mxu0 %v6207
        %8792 = vmatpush1.bf16.msra.mxu0 %v6206
        %8793 = vmatprep.subr.bf16.mxu0 %v6216
        %8794 = vmatpush1.bf16.msra.mxu0 %v6215
        %8795 = vmatprep.subr.bf16.mxu0 %v6225
        %8796 = vmatpush1.bf16.msra.mxu0 %v6224
        %8797 = vmatprep.subr.bf16.mxu0 %v6234
        %8798 = vmatpush1.bf16.msra.mxu0 %v6233
        %8799 = vmatprep.subr.bf16.mxu0 %v6243
        %8800 = vmatpush1.bf16.msra.mxu0 %v6242
        %8801 = vmatprep.subr.bf16.mxu0 %v6252
        %8802 = vmatpush1.bf16.msra.mxu0 %v6251
        %8803 = vmatprep.subr.bf16.mxu0 %v6261
        %8804 = vmatpush1.bf16.msra.mxu0 %v6260
        %8805 = vmatprep.subr.bf16.mxu0 %v6270
        %8806 = vmatpush1.bf16.msra.mxu0 %v6269
        %8807 = vmatprep.subr.bf16.mxu0 %v6279
        %8808 = vmatpush1.bf16.msra.mxu0 %v6278
        %8809 = vmatprep.subr.bf16.mxu0 %v6288
        %8810 = vmatpush1.bf16.msra.mxu0 %v6287
        %8811 = vmatprep.subr.bf16.mxu0 %v6297
        %8812 = vmatpush1.bf16.msra.mxu0 %v6296
        %8813 = vmatprep.subr.bf16.mxu0 %v6306
        %8814 = vmatpush1.bf16.msra.mxu0 %v6305
        %8815 = vmatprep.subr.bf16.mxu0 %v6315
        %8816 = vmatpush1.bf16.msra.mxu0 %v6314
        %8817 = vmatprep.subr.bf16.mxu0 %v6324
        %8818 = vmatpush1.bf16.msra.mxu0 %v6323
        %8819 = vmatprep.subr.bf16.mxu0 %v6333
        %8820 = vmatpush1.bf16.msra.mxu0 %v6332
        %8821 = vmatprep.mubr.bf16.mxu0 %v2064
        %8822 = vmatmul.mubr.bf16.gmra.mrb[0].mxu0 %v2050
        %v8823 = vpop.f32.mrb[0].mxu0
        %v8824 = vadd.f32 %v1991, %v8823
        %v8825 = vpop.f32.mrb[0].mxu0
        %v8826 = vadd.f32 %v1995, %v8825
        %v8827 = vpop.f32.mrb[0].mxu0
        %v8828 = vpop.f32.mrb[0].mxu0
        %8829 = vdwg.mxu0
        %8830 = vmatprep.subr.bf16.mxu0 %v6342
        %8831 = vmatpush1.bf16.msra.mxu0 %v6341
        %8832 = vmatprep.subr.bf16.mxu0 %v6351
        %8833 = vmatpush1.bf16.msra.mxu0 %v6350
        %8834 = vmatprep.subr.bf16.mxu0 %v6360
        %8835 = vmatpush1.bf16.msra.mxu0 %v6359
        %8836 = vmatprep.subr.bf16.mxu0 %v6369
        %8837 = vmatpush1.bf16.msra.mxu0 %v6368
        %8838 = vmatprep.subr.bf16.mxu0 %v6378
        %8839 = vmatpush1.bf16.msra.mxu0 %v6377
        %8840 = vmatprep.subr.bf16.mxu0 %v6387
        %8841 = vmatpush1.bf16.msra.mxu0 %v6386
        %8842 = vmatprep.subr.bf16.mxu0 %v6396
        %8843 = vmatpush1.bf16.msra.mxu0 %v6395
        %8844 = vmatprep.subr.bf16.mxu0 %v6405
        %8845 = vmatpush1.bf16.msra.mxu0 %v6404
        %8846 = vmatprep.subr.bf16.mxu0 %v6414
        %8847 = vmatpush1.bf16.msra.mxu0 %v6413
        %8848 = vmatprep.subr.bf16.mxu0 %v6423
        %8849 = vmatpush1.bf16.msra.mxu0 %v6422
        %8850 = vmatprep.subr.bf16.mxu0 %v6432
        %8851 = vmatpush1.bf16.msra.mxu0 %v6431
        %8852 = vmatprep.subr.bf16.mxu0 %v6441
        %8853 = vmatpush1.bf16.msra.mxu0 %v6440
        %8854 = vmatprep.subr.bf16.mxu0 %v6450
        %8855 = vmatpush1.bf16.msra.mxu0 %v6449
        %8856 = vmatprep.subr.bf16.mxu0 %v6459
        %8857 = vmatpush1.bf16.msra.mxu0 %v6458
        %8858 = vmatprep.subr.bf16.mxu0 %v6468
        %8859 = vmatpush1.bf16.msra.mxu0 %v6467
        %8860 = vmatprep.subr.bf16.mxu0 %v6477
        %8861 = vmatpush1.bf16.msra.mxu0 %v6476
        %8862 = vmatprep.mubr.bf16.mxu0 %v2074
        %8863 = vmatmul.mubr.bf16.gmra.mrb[0].mxu0 %v2072
        %v8864 = vpop.f32.mrb[0].mxu0
        %v8865 = vadd.f32 %v8824, %v8864
        %v8866 = vpop.f32.mrb[0].mxu0
        %v8867 = vadd.f32 %v8826, %v8866
        %v8868 = vpop.f32.mrb[0].mxu0
        %v8869 = vpop.f32.mrb[0].mxu0
        %8870 = vdwg.mxu0
        %8871 = vmatprep.subr.bf16.mxu0 %v6486
        %8872 = vmatpush1.bf16.msra.mxu0 %v6485
        %8873 = vmatprep.subr.bf16.mxu0 %v6495
        %8874 = vmatpush1.bf16.msra.mxu0 %v6494
        %8875 = vmatprep.subr.bf16.mxu0 %v6504
        %8876 = vmatpush1.bf16.msra.mxu0 %v6503
        %8877 = vmatprep.subr.bf16.mxu0 %v6513
        %8878 = vmatpush1.bf16.msra.mxu0 %v6512
        %8879 = vmatprep.subr.bf16.mxu0 %v6522
        %8880 = vmatpush1.bf16.msra.mxu0 %v6521
        %8881 = vmatprep.subr.bf16.mxu0 %v6531
        %8882 = vmatpush1.bf16.msra.mxu0 %v6530
        %8883 = vmatprep.subr.bf16.mxu0 %v6540
        %8884 = vmatpush1.bf16.msra.mxu0 %v6539
        %8885 = vmatprep.subr.bf16.mxu0 %v6549
        %8886 = vmatpush1.bf16.msra.mxu0 %v6548
        %8887 = vmatprep.subr.bf16.mxu0 %v6558
        %8888 = vmatpush1.bf16.msra.mxu0 %v6557
        %8889 = vmatprep.subr.bf16.mxu0 %v6567
        %8890 = vmatpush1.bf16.msra.mxu0 %v6566
        %8891 = vmatprep.subr.bf16.mxu0 %v6576
        %8892 = vmatpush1.bf16.msra.mxu0 %v6575
        %8893 = vmatprep.subr.bf16.mxu0 %v6585
        %8894 = vmatpush1.bf16.msra.mxu0 %v6584
        %8895 = vmatprep.subr.bf16.mxu0 %v6594
        %8896 = vmatpush1.bf16.msra.mxu0 %v6593
        %8897 = vmatprep.subr.bf16.mxu0 %v6603
        %8898 = vmatpush1.bf16.msra.mxu0 %v6602
        %8899 = vmatprep.subr.bf16.mxu0 %v6612
        %8900 = vmatpush1.bf16.msra.mxu0 %v6611
        %8901 = vmatprep.subr.bf16.mxu0 %v6621
        %8902 = vmatpush1.bf16.msra.mxu0 %v6620
        %8903 = vmatprep.mubr.bf16.mxu0 %v2071
        %8904 = vmatmul.mubr.bf16.gmra.mrb[0].mxu0 %v2057
        %v8905 = vpop.f32.mrb[0].mxu0
        %v8906 = vadd.f32 %v8865, %v8905
        %v8907 = vpop.f32.mrb[0].mxu0
        %v8908 = vadd.f32 %v8867, %v8907
        %v8909 = vpop.f32.mrb[0].mxu0
        %v8910 = vpop.f32.mrb[0].mxu0
        %8911 = vdwg.mxu0
        %8912 = vmatprep.subr.bf16.mxu0 %v6630
        %8913 = vmatpush1.bf16.msra.mxu0 %v6629
        %8914 = vmatprep.subr.bf16.mxu0 %v6639
        %8915 = vmatpush1.bf16.msra.mxu0 %v6638
        %8916 = vmatprep.subr.bf16.mxu0 %v6648
        %8917 = vmatpush1.bf16.msra.mxu0 %v6647
        %8918 = vmatprep.subr.bf16.mxu0 %v6657
        %8919 = vmatpush1.bf16.msra.mxu0 %v6656
        %8920 = vmatprep.subr.bf16.mxu0 %v6666
        %8921 = vmatpush1.bf16.msra.mxu0 %v6665
        %8922 = vmatprep.subr.bf16.mxu0 %v6675
        %8923 = vmatpush1.bf16.msra.mxu0 %v6674
        %8924 = vmatprep.subr.bf16.mxu0 %v6684
        %8925 = vmatpush1.bf16.msra.mxu0 %v6683
        %8926 = vmatprep.subr.bf16.mxu0 %v6693
        %8927 = vmatpush1.bf16.msra.mxu0 %v6692
        %8928 = vmatprep.subr.bf16.mxu0 %v6702
        %8929 = vmatpush1.bf16.msra.mxu0 %v6701
        %8930 = vmatprep.subr.bf16.mxu0 %v6711
        %8931 = vmatpush1.bf16.msra.mxu0 %v6710
        %8932 = vmatprep.subr.bf16.mxu0 %v6720
        %8933 = vmatpush1.bf16.msra.mxu0 %v6719
        %8934 = vmatprep.subr.bf16.mxu0 %v6729
        %8935 = vmatpush1.bf16.msra.mxu0 %v6728
        %8936 = vmatprep.subr.bf16.mxu0 %v6738
        %8937 = vmatpush1.bf16.msra.mxu0 %v6737
        %8938 = vmatprep.subr.bf16.mxu0 %v6747
        %8939 = vmatpush1.bf16.msra.mxu0 %v6746
        %8940 = vmatprep.subr.bf16.mxu0 %v6756
        %8941 = vmatpush1.bf16.msra.mxu0 %v6755
        %8942 = vmatprep.subr.bf16.mxu0 %v6765
        %8943 = vmatpush1.bf16.msra.mxu0 %v6764
        %8944 = vmatprep.mubr.bf16.mxu0 %v2075
        %8945 = vmatmul.mubr.bf16.gmra.mrb[0].mxu0 %v2073
        %v8946 = vpop.f32.mrb[0].mxu0
        %v8947 = vadd.f32 %v8906, %v8946
        %v8948 = vpop.f32.mrb[0].mxu0
        %v8949 = vadd.f32 %v8908, %v8948
        %v8950 = vpop.f32.mrb[0].mxu0
        %v8951 = vpop.f32.mrb[0].mxu0
        %8952 = vdwg.mxu0
        %8953 = vmatprep.subr.bf16.mxu0 %v6774
        %8954 = vmatpush1.bf16.msra.mxu0 %v6773
        %8955 = vmatprep.subr.bf16.mxu0 %v6783
        %8956 = vmatpush1.bf16.msra.mxu0 %v6782
        %8957 = vmatprep.subr.bf16.mxu0 %v6792
        %8958 = vmatpush1.bf16.msra.mxu0 %v6791
        %8959 = vmatprep.subr.bf16.mxu0 %v6801
        %8960 = vmatpush1.bf16.msra.mxu0 %v6800
        %8961 = vmatprep.subr.bf16.mxu0 %v6810
        %8962 = vmatpush1.bf16.msra.mxu0 %v6809
        %8963 = vmatprep.subr.bf16.mxu0 %v6819
        %8964 = vmatpush1.bf16.msra.mxu0 %v6818
        %8965 = vmatprep.subr.bf16.mxu0 %v6828
        %8966 = vmatpush1.bf16.msra.mxu0 %v6827
        %8967 = vmatprep.subr.bf16.mxu0 %v6837
        %8968 = vmatpush1.bf16.msra.mxu0 %v6836
        %8969 = vmatprep.subr.bf16.mxu0 %v6846
        %8970 = vmatpush1.bf16.msra.mxu0 %v6845
        %8971 = vmatprep.subr.bf16.mxu0 %v6855
        %8972 = vmatpush1.bf16.msra.mxu0 %v6854
        %8973 = vmatprep.subr.bf16.mxu0 %v6864
        %8974 = vmatpush1.bf16.msra.mxu0 %v6863
        %8975 = vmatprep.subr.bf16.mxu0 %v6873
        %8976 = vmatpush1.bf16.msra.mxu0 %v6872
        %8977 = vmatprep.subr.bf16.mxu0 %v6882
        %8978 = vmatpush1.bf16.msra.mxu0 %v6881
        %8979 = vmatprep.subr.bf16.mxu0 %v6891
        %8980 = vmatpush1.bf16.msra.mxu0 %v6890
        %8981 = vmatprep.subr.bf16.mxu0 %v6900
        %8982 = vmatpush1.bf16.msra.mxu0 %v6899
        %8983 = vmatprep.subr.bf16.mxu0 %v6909
        %8984 = vmatpush1.bf16.msra.mxu0 %v6908
        %8985 = vmatprep.mubr.bf16.mxu0 %v2113
        %8986 = vmatmul.mubr.bf16.gmra.mrb[0].mxu0 %v2099
        %v8987 = vpop.f32.mrb[0].mxu0
        %v8988 = vadd.f32 %v8947, %v8987
        %v8989 = vpop.f32.mrb[0].mxu0
        %v8990 = vadd.f32 %v8949, %v8989
        %v8991 = vpop.f32.mrb[0].mxu0
        %v8992 = vpop.f32.mrb[0].mxu0
        %8993 = vdwg.mxu0
        %8994 = vmatprep.subr.bf16.mxu0 %v6918
        %8995 = vmatpush1.bf16.msra.mxu0 %v6917
        %8996 = vmatprep.subr.bf16.mxu0 %v6927
        %8997 = vmatpush1.bf16.msra.mxu0 %v6926
        %8998 = vmatprep.subr.bf16.mxu0 %v6936
        %8999 = vmatpush1.bf16.msra.mxu0 %v6935
        %9000 = vmatprep.subr.bf16.mxu0 %v6945
        %9001 = vmatpush1.bf16.msra.mxu0 %v6944
        %9002 = vmatprep.subr.bf16.mxu0 %v6954
        %9003 = vmatpush1.bf16.msra.mxu0 %v6953
        %9004 = vmatprep.subr.bf16.mxu0 %v6963
        %9005 = vmatpush1.bf16.msra.mxu0 %v6962
        %9006 = vmatprep.subr.bf16.mxu0 %v6972
        %9007 = vmatpush1.bf16.msra.mxu0 %v6971
        %9008 = vmatprep.subr.bf16.mxu0 %v6981
        %9009 = vmatpush1.bf16.msra.mxu0 %v6980
        %9010 = vmatprep.subr.bf16.mxu0 %v6990
        %9011 = vmatpush1.bf16.msra.mxu0 %v6989
        %9012 = vmatprep.subr.bf16.mxu0 %v6999
        %9013 = vmatpush1.bf16.msra.mxu0 %v6998
        %9014 = vmatprep.subr.bf16.mxu0 %v7008
        %9015 = vmatpush1.bf16.msra.mxu0 %v7007
        %9016 = vmatprep.subr.bf16.mxu0 %v7017
        %9017 = vmatpush1.bf16.msra.mxu0 %v7016
        %9018 = vmatprep.subr.bf16.mxu0 %v7026
        %9019 = vmatpush1.bf16.msra.mxu0 %v7025
        %9020 = vmatprep.subr.bf16.mxu0 %v7035
        %9021 = vmatpush1.bf16.msra.mxu0 %v7034
        %9022 = vmatprep.subr.bf16.mxu0 %v7044
        %9023 = vmatpush1.bf16.msra.mxu0 %v7043
        %9024 = vmatprep.subr.bf16.mxu0 %v7053
        %9025 = vmatpush1.bf16.msra.mxu0 %v7052
        %9026 = vmatprep.mubr.bf16.mxu0 %v2123
        %9027 = vmatmul.mubr.bf16.gmra.mrb[0].mxu0 %v2121
        %v9028 = vpop.f32.mrb[0].mxu0
        %v9029 = vadd.f32 %v8988, %v9028
        %v9030 = vpop.f32.mrb[0].mxu0
        %v9031 = vadd.f32 %v8990, %v9030
        %v9032 = vpop.f32.mrb[0].mxu0
        %v9033 = vpop.f32.mrb[0].mxu0
        %9034 = vdwg.mxu0
        %9035 = vmatprep.subr.bf16.mxu0 %v7062
        %9036 = vmatpush1.bf16.msra.mxu0 %v7061
        %9037 = vmatprep.subr.bf16.mxu0 %v7071
        %9038 = vmatpush1.bf16.msra.mxu0 %v7070
        %9039 = vmatprep.subr.bf16.mxu0 %v7080
        %9040 = vmatpush1.bf16.msra.mxu0 %v7079
        %9041 = vmatprep.subr.bf16.mxu0 %v7089
        %9042 = vmatpush1.bf16.msra.mxu0 %v7088
        %9043 = vmatprep.subr.bf16.mxu0 %v7098
        %9044 = vmatpush1.bf16.msra.mxu0 %v7097
        %9045 = vmatprep.subr.bf16.mxu0 %v7107
        %9046 = vmatpush1.bf16.msra.mxu0 %v7106
        %9047 = vmatprep.subr.bf16.mxu0 %v7116
        %9048 = vmatpush1.bf16.msra.mxu0 %v7115
        %9049 = vmatprep.subr.bf16.mxu0 %v7125
        %9050 = vmatpush1.bf16.msra.mxu0 %v7124
        %9051 = vmatprep.subr.bf16.mxu0 %v7134
        %9052 = vmatpush1.bf16.msra.mxu0 %v7133
        %9053 = vmatprep.subr.bf16.mxu0 %v7143
        %9054 = vmatpush1.bf16.msra.mxu0 %v7142
        %9055 = vmatprep.subr.bf16.mxu0 %v7152
        %9056 = vmatpush1.bf16.msra.mxu0 %v7151
        %9057 = vmatprep.subr.bf16.mxu0 %v7161
        %9058 = vmatpush1.bf16.msra.mxu0 %v7160
        %9059 = vmatprep.subr.bf16.mxu0 %v7170
        %9060 = vmatpush1.bf16.msra.mxu0 %v7169
        %9061 = vmatprep.subr.bf16.mxu0 %v7179
        %9062 = vmatpush1.bf16.msra.mxu0 %v7178
        %9063 = vmatprep.subr.bf16.mxu0 %v7188
        %9064 = vmatpush1.bf16.msra.mxu0 %v7187
        %9065 = vmatprep.subr.bf16.mxu0 %v7197
        %9066 = vmatpush1.bf16.msra.mxu0 %v7196
        %9067 = vmatprep.mubr.bf16.mxu0 %v2120
        %9068 = vmatmul.mubr.bf16.gmra.mrb[0].mxu0 %v2106
        %v9069 = vpop.f32.mrb[0].mxu0
        %v9070 = vadd.f32 %v9029, %v9069
        %v9071 = vpop.f32.mrb[0].mxu0
        %v9072 = vadd.f32 %v9031, %v9071
        %v9073 = vpop.f32.mrb[0].mxu0
        %v9074 = vpop.f32.mrb[0].mxu0
        %9075 = vdwg.mxu0
        %9076 = vmatprep.subr.bf16.mxu0 %v7206
        %9077 = vmatpush1.bf16.msra.mxu0 %v7205
        %9078 = vmatprep.subr.bf16.mxu0 %v7215
        %9079 = vmatpush1.bf16.msra.mxu0 %v7214
        %9080 = vmatprep.subr.bf16.mxu0 %v7224
        %9081 = vmatpush1.bf16.msra.mxu0 %v7223
        %9082 = vmatprep.subr.bf16.mxu0 %v7233
        %9083 = vmatpush1.bf16.msra.mxu0 %v7232
        %9084 = vmatprep.subr.bf16.mxu0 %v7242
        %9085 = vmatpush1.bf16.msra.mxu0 %v7241
        %9086 = vmatprep.subr.bf16.mxu0 %v7251
        %9087 = vmatpush1.bf16.msra.mxu0 %v7250
        %9088 = vmatprep.subr.bf16.mxu0 %v7260
        %9089 = vmatpush1.bf16.msra.mxu0 %v7259
        %9090 = vmatprep.subr.bf16.mxu0 %v7269
        %9091 = vmatpush1.bf16.msra.mxu0 %v7268
        %9092 = vmatprep.subr.bf16.mxu0 %v7278
        %9093 = vmatpush1.bf16.msra.mxu0 %v7277
        %9094 = vmatprep.subr.bf16.mxu0 %v7287
        %9095 = vmatpush1.bf16.msra.mxu0 %v7286
        %9096 = vmatprep.subr.bf16.mxu0 %v7296
        %9097 = vmatpush1.bf16.msra.mxu0 %v7295
        %9098 = vmatprep.subr.bf16.mxu0 %v7305
        %9099 = vmatpush1.bf16.msra.mxu0 %v7304
        %9100 = vmatprep.subr.bf16.mxu0 %v7314
        %9101 = vmatpush1.bf16.msra.mxu0 %v7313
        %9102 = vmatprep.subr.bf16.mxu0 %v7323
        %9103 = vmatpush1.bf16.msra.mxu0 %v7322
        %9104 = vmatprep.subr.bf16.mxu0 %v7332
        %9105 = vmatpush1.bf16.msra.mxu0 %v7331
        %9106 = vmatprep.subr.bf16.mxu0 %v7341
        %9107 = vmatpush1.bf16.msra.mxu0 %v7340
        %9108 = vmatprep.mubr.bf16.mxu0 %v2124
        %9109 = vmatmul.mubr.bf16.gmra.mrb[0].mxu0 %v2122
        %v9110 = vpop.f32.mrb[0].mxu0
        %v9111 = vadd.f32 %v9070, %v9110
        %v9112 = vpop.f32.mrb[0].mxu0
        %v9113 = vadd.f32 %v9072, %v9112
        %v9114 = vpop.f32.mrb[0].mxu0
        %v9115 = vpop.f32.mrb[0].mxu0
        %9116 = vdwg.mxu0
        %9117 = vmatprep.subr.bf16.mxu0 %v7350
        %9118 = vmatpush1.bf16.msra.mxu0 %v7349
        %9119 = vmatprep.subr.bf16.mxu0 %v7359
        %9120 = vmatpush1.bf16.msra.mxu0 %v7358
        %9121 = vmatprep.subr.bf16.mxu0 %v7368
        %9122 = vmatpush1.bf16.msra.mxu0 %v7367
        %9123 = vmatprep.subr.bf16.mxu0 %v7377
        %9124 = vmatpush1.bf16.msra.mxu0 %v7376
        %9125 = vmatprep.subr.bf16.mxu0 %v7386
        %9126 = vmatpush1.bf16.msra.mxu0 %v7385
        %9127 = vmatprep.subr.bf16.mxu0 %v7395
        %9128 = vmatpush1.bf16.msra.mxu0 %v7394
        %9129 = vmatprep.subr.bf16.mxu0 %v7404
        %9130 = vmatpush1.bf16.msra.mxu0 %v7403
        %9131 = vmatprep.subr.bf16.mxu0 %v7413
        %9132 = vmatpush1.bf16.msra.mxu0 %v7412
        %9133 = vmatprep.subr.bf16.mxu0 %v7422
        %9134 = vmatpush1.bf16.msra.mxu0 %v7421
        %9135 = vmatprep.subr.bf16.mxu0 %v7431
        %9136 = vmatpush1.bf16.msra.mxu0 %v7430
        %9137 = vmatprep.subr.bf16.mxu0 %v7440
        %9138 = vmatpush1.bf16.msra.mxu0 %v7439
        %9139 = vmatprep.subr.bf16.mxu0 %v7449
        %9140 = vmatpush1.bf16.msra.mxu0 %v7448
        %9141 = vmatprep.subr.bf16.mxu0 %v7458
        %9142 = vmatpush1.bf16.msra.mxu0 %v7457
        %9143 = vmatprep.subr.bf16.mxu0 %v7467
        %9144 = vmatpush1.bf16.msra.mxu0 %v7466
        %9145 = vmatprep.subr.bf16.mxu0 %v7476
        %9146 = vmatpush1.bf16.msra.mxu0 %v7475
        %9147 = vmatprep.subr.bf16.mxu0 %v7485
        %9148 = vmatpush1.bf16.msra.mxu0 %v7484
        %9149 = vmatprep.mubr.bf16.mxu0 %v2146
        %9150 = vmatmul.mubr.bf16.gmra.mrb[0].mxu0 %v2139
        %v9151 = vpop.f32.mrb[0].mxu0
        %v9152 = vadd.f32 %v9111, %v9151
        %v9153 = vpop.f32.mrb[0].mxu0
        %v9154 = vadd.f32 %v9113, %v9153
        %v9155 = vpop.f32.mrb[0].mxu0
        %v9156 = vpop.f32.mrb[0].mxu0
        %9157 = vdwg.mxu0
        %9158 = vmatprep.subr.bf16.mxu0 %v6200
        %9159 = vmatpush1.bf16.msra.mxu0 %v6199
        %9160 = vmatprep.subr.bf16.mxu0 %v6209
        %9161 = vmatpush1.bf16.msra.mxu0 %v6208
        %9162 = vmatprep.subr.bf16.mxu0 %v6218
        %9163 = vmatpush1.bf16.msra.mxu0 %v6217
        %9164 = vmatprep.subr.bf16.mxu0 %v6227
        %9165 = vmatpush1.bf16.msra.mxu0 %v6226
        %9166 = vmatprep.subr.bf16.mxu0 %v6236
        %9167 = vmatpush1.bf16.msra.mxu0 %v6235
        %9168 = vmatprep.subr.bf16.mxu0 %v6245
        %9169 = vmatpush1.bf16.msra.mxu0 %v6244
        %9170 = vmatprep.subr.bf16.mxu0 %v6254
        %9171 = vmatpush1.bf16.msra.mxu0 %v6253
        %9172 = vmatprep.subr.bf16.mxu0 %v6263
        %9173 = vmatpush1.bf16.msra.mxu0 %v6262
        %9174 = vmatprep.subr.bf16.mxu0 %v6272
        %9175 = vmatpush1.bf16.msra.mxu0 %v6271
        %9176 = vmatprep.subr.bf16.mxu0 %v6281
        %9177 = vmatpush1.bf16.msra.mxu0 %v6280
        %9178 = vmatprep.subr.bf16.mxu0 %v6290
        %9179 = vmatpush1.bf16.msra.mxu0 %v6289
        %9180 = vmatprep.subr.bf16.mxu0 %v6299
        %9181 = vmatpush1.bf16.msra.mxu0 %v6298
        %9182 = vmatprep.subr.bf16.mxu0 %v6308
        %9183 = vmatpush1.bf16.msra.mxu0 %v6307
        %9184 = vmatprep.subr.bf16.mxu0 %v6317
        %9185 = vmatpush1.bf16.msra.mxu0 %v6316
        %9186 = vmatprep.subr.bf16.mxu0 %v6326
        %9187 = vmatpush1.bf16.msra.mxu0 %v6325
        %9188 = vmatprep.subr.bf16.mxu0 %v6335
        %9189 = vmatpush1.bf16.msra.mxu0 %v6334
        %9190 = vmatprep.mubr.bf16.mxu0 %v2064
        %9191 = vmatmul.mubr.bf16.gmra.mrb[0].mxu0 %v2050
        %v9192 = vpop.f32.mrb[0].mxu0
        %v9193 = vadd.f32 %v1999, %v9192
        %v9194 = vpop.f32.mrb[0].mxu0
        %v9195 = vadd.f32 %v2003, %v9194
        %v9196 = vpop.f32.mrb[0].mxu0
        %v9197 = vpop.f32.mrb[0].mxu0
        %9198 = vdwg.mxu0
        %9199 = vmatprep.subr.bf16.mxu0 %v6344
        %9200 = vmatpush1.bf16.msra.mxu0 %v6343
        %9201 = vmatprep.subr.bf16.mxu0 %v6353
        %9202 = vmatpush1.bf16.msra.mxu0 %v6352
        %9203 = vmatprep.subr.bf16.mxu0 %v6362
        %9204 = vmatpush1.bf16.msra.mxu0 %v6361
        %9205 = vmatprep.subr.bf16.mxu0 %v6371
        %9206 = vmatpush1.bf16.msra.mxu0 %v6370
        %9207 = vmatprep.subr.bf16.mxu0 %v6380
        %9208 = vmatpush1.bf16.msra.mxu0 %v6379
        %9209 = vmatprep.subr.bf16.mxu0 %v6389
        %9210 = vmatpush1.bf16.msra.mxu0 %v6388
        %9211 = vmatprep.subr.bf16.mxu0 %v6398
        %9212 = vmatpush1.bf16.msra.mxu0 %v6397
        %9213 = vmatprep.subr.bf16.mxu0 %v6407
        %9214 = vmatpush1.bf16.msra.mxu0 %v6406
        %9215 = vmatprep.subr.bf16.mxu0 %v6416
        %9216 = vmatpush1.bf16.msra.mxu0 %v6415
        %9217 = vmatprep.subr.bf16.mxu0 %v6425
        %9218 = vmatpush1.bf16.msra.mxu0 %v6424
        %9219 = vmatprep.subr.bf16.mxu0 %v6434
        %9220 = vmatpush1.bf16.msra.mxu0 %v6433
        %9221 = vmatprep.subr.bf16.mxu0 %v6443
        %9222 = vmatpush1.bf16.msra.mxu0 %v6442
        %9223 = vmatprep.subr.bf16.mxu0 %v6452
        %9224 = vmatpush1.bf16.msra.mxu0 %v6451
        %9225 = vmatprep.subr.bf16.mxu0 %v6461
        %9226 = vmatpush1.bf16.msra.mxu0 %v6460
        %9227 = vmatprep.subr.bf16.mxu0 %v6470
        %9228 = vmatpush1.bf16.msra.mxu0 %v6469
        %9229 = vmatprep.subr.bf16.mxu0 %v6479
        %9230 = vmatpush1.bf16.msra.mxu0 %v6478
        %9231 = vmatprep.mubr.bf16.mxu0 %v2074
        %9232 = vmatmul.mubr.bf16.gmra.mrb[0].mxu0 %v2072
        %v9233 = vpop.f32.mrb[0].mxu0
        %v9234 = vadd.f32 %v9193, %v9233
        %v9235 = vpop.f32.mrb[0].mxu0
        %v9236 = vadd.f32 %v9195, %v9235
        %v9237 = vpop.f32.mrb[0].mxu0
        %v9238 = vpop.f32.mrb[0].mxu0
        %9239 = vdwg.mxu0
        %9240 = vmatprep.subr.bf16.mxu0 %v6488
        %9241 = vmatpush1.bf16.msra.mxu0 %v6487
        %9242 = vmatprep.subr.bf16.mxu0 %v6497
        %9243 = vmatpush1.bf16.msra.mxu0 %v6496
        %9244 = vmatprep.subr.bf16.mxu0 %v6506
        %9245 = vmatpush1.bf16.msra.mxu0 %v6505
        %9246 = vmatprep.subr.bf16.mxu0 %v6515
        %9247 = vmatpush1.bf16.msra.mxu0 %v6514
        %9248 = vmatprep.subr.bf16.mxu0 %v6524
        %9249 = vmatpush1.bf16.msra.mxu0 %v6523
        %9250 = vmatprep.subr.bf16.mxu0 %v6533
        %9251 = vmatpush1.bf16.msra.mxu0 %v6532
        %9252 = vmatprep.subr.bf16.mxu0 %v6542
        %9253 = vmatpush1.bf16.msra.mxu0 %v6541
        %9254 = vmatprep.subr.bf16.mxu0 %v6551
        %9255 = vmatpush1.bf16.msra.mxu0 %v6550
        %9256 = vmatprep.subr.bf16.mxu0 %v6560
        %9257 = vmatpush1.bf16.msra.mxu0 %v6559
        %9258 = vmatprep.subr.bf16.mxu0 %v6569
        %9259 = vmatpush1.bf16.msra.mxu0 %v6568
        %9260 = vmatprep.subr.bf16.mxu0 %v6578
        %9261 = vmatpush1.bf16.msra.mxu0 %v6577
        %9262 = vmatprep.subr.bf16.mxu0 %v6587
        %9263 = vmatpush1.bf16.msra.mxu0 %v6586
        %9264 = vmatprep.subr.bf16.mxu0 %v6596
        %9265 = vmatpush1.bf16.msra.mxu0 %v6595
        %9266 = vmatprep.subr.bf16.mxu0 %v6605
        %9267 = vmatpush1.bf16.msra.mxu0 %v6604
        %9268 = vmatprep.subr.bf16.mxu0 %v6614
        %9269 = vmatpush1.bf16.msra.mxu0 %v6613
        %9270 = vmatprep.subr.bf16.mxu0 %v6623
        %9271 = vmatpush1.bf16.msra.mxu0 %v6622
        %9272 = vmatprep.mubr.bf16.mxu0 %v2071
        %9273 = vmatmul.mubr.bf16.gmra.mrb[0].mxu0 %v2057
        %v9274 = vpop.f32.mrb[0].mxu0
        %v9275 = vadd.f32 %v9234, %v9274
        %v9276 = vpop.f32.mrb[0].mxu0
        %v9277 = vadd.f32 %v9236, %v9276
        %v9278 = vpop.f32.mrb[0].mxu0
        %v9279 = vpop.f32.mrb[0].mxu0
        %9280 = vdwg.mxu0
        %9281 = vmatprep.subr.bf16.mxu0 %v6632
        %9282 = vmatpush1.bf16.msra.mxu0 %v6631
        %9283 = vmatprep.subr.bf16.mxu0 %v6641
        %9284 = vmatpush1.bf16.msra.mxu0 %v6640
        %9285 = vmatprep.subr.bf16.mxu0 %v6650
        %9286 = vmatpush1.bf16.msra.mxu0 %v6649
        %9287 = vmatprep.subr.bf16.mxu0 %v6659
        %9288 = vmatpush1.bf16.msra.mxu0 %v6658
        %9289 = vmatprep.subr.bf16.mxu0 %v6668
        %9290 = vmatpush1.bf16.msra.mxu0 %v6667
        %9291 = vmatprep.subr.bf16.mxu0 %v6677
        %9292 = vmatpush1.bf16.msra.mxu0 %v6676
        %9293 = vmatprep.subr.bf16.mxu0 %v6686
        %9294 = vmatpush1.bf16.msra.mxu0 %v6685
        %9295 = vmatprep.subr.bf16.mxu0 %v6695
        %9296 = vmatpush1.bf16.msra.mxu0 %v6694
        %9297 = vmatprep.subr.bf16.mxu0 %v6704
        %9298 = vmatpush1.bf16.msra.mxu0 %v6703
        %9299 = vmatprep.subr.bf16.mxu0 %v6713
        %9300 = vmatpush1.bf16.msra.mxu0 %v6712
        %9301 = vmatprep.subr.bf16.mxu0 %v6722
        %9302 = vmatpush1.bf16.msra.mxu0 %v6721
        %9303 = vmatprep.subr.bf16.mxu0 %v6731
        %9304 = vmatpush1.bf16.msra.mxu0 %v6730
        %9305 = vmatprep.subr.bf16.mxu0 %v6740
        %9306 = vmatpush1.bf16.msra.mxu0 %v6739
        %9307 = vmatprep.subr.bf16.mxu0 %v6749
        %9308 = vmatpush1.bf16.msra.mxu0 %v6748
        %9309 = vmatprep.subr.bf16.mxu0 %v6758
        %9310 = vmatpush1.bf16.msra.mxu0 %v6757
        %9311 = vmatprep.subr.bf16.mxu0 %v6767
        %9312 = vmatpush1.bf16.msra.mxu0 %v6766
        %9313 = vmatprep.mubr.bf16.mxu0 %v2075
        %9314 = vmatmul.mubr.bf16.gmra.mrb[0].mxu0 %v2073
        %v9315 = vpop.f32.mrb[0].mxu0
        %v9316 = vadd.f32 %v9275, %v9315
        %v9317 = vpop.f32.mrb[0].mxu0
        %v9318 = vadd.f32 %v9277, %v9317
        %v9319 = vpop.f32.mrb[0].mxu0
        %v9320 = vpop.f32.mrb[0].mxu0
        %9321 = vdwg.mxu0
        %9322 = vmatprep.subr.bf16.mxu0 %v6776
        %9323 = vmatpush1.bf16.msra.mxu0 %v6775
        %9324 = vmatprep.subr.bf16.mxu0 %v6785
        %9325 = vmatpush1.bf16.msra.mxu0 %v6784
        %9326 = vmatprep.subr.bf16.mxu0 %v6794
        %9327 = vmatpush1.bf16.msra.mxu0 %v6793
        %9328 = vmatprep.subr.bf16.mxu0 %v6803
        %9329 = vmatpush1.bf16.msra.mxu0 %v6802
        %9330 = vmatprep.subr.bf16.mxu0 %v6812
        %9331 = vmatpush1.bf16.msra.mxu0 %v6811
        %9332 = vmatprep.subr.bf16.mxu0 %v6821
        %9333 = vmatpush1.bf16.msra.mxu0 %v6820
        %9334 = vmatprep.subr.bf16.mxu0 %v6830
        %9335 = vmatpush1.bf16.msra.mxu0 %v6829
        %9336 = vmatprep.subr.bf16.mxu0 %v6839
        %9337 = vmatpush1.bf16.msra.mxu0 %v6838
        %9338 = vmatprep.subr.bf16.mxu0 %v6848
        %9339 = vmatpush1.bf16.msra.mxu0 %v6847
        %9340 = vmatprep.subr.bf16.mxu0 %v6857
        %9341 = vmatpush1.bf16.msra.mxu0 %v6856
        %9342 = vmatprep.subr.bf16.mxu0 %v6866
        %9343 = vmatpush1.bf16.msra.mxu0 %v6865
        %9344 = vmatprep.subr.bf16.mxu0 %v6875
        %9345 = vmatpush1.bf16.msra.mxu0 %v6874
        %9346 = vmatprep.subr.bf16.mxu0 %v6884
        %9347 = vmatpush1.bf16.msra.mxu0 %v6883
        %9348 = vmatprep.subr.bf16.mxu0 %v6893
        %9349 = vmatpush1.bf16.msra.mxu0 %v6892
        %9350 = vmatprep.subr.bf16.mxu0 %v6902
        %9351 = vmatpush1.bf16.msra.mxu0 %v6901
        %9352 = vmatprep.subr.bf16.mxu0 %v6911
        %9353 = vmatpush1.bf16.msra.mxu0 %v6910
        %9354 = vmatprep.mubr.bf16.mxu0 %v2113
        %9355 = vmatmul.mubr.bf16.gmra.mrb[0].mxu0 %v2099
        %v9356 = vpop.f32.mrb[0].mxu0
        %v9357 = vadd.f32 %v9316, %v9356
        %v9358 = vpop.f32.mrb[0].mxu0
        %v9359 = vadd.f32 %v9318, %v9358
        %v9360 = vpop.f32.mrb[0].mxu0
        %v9361 = vpop.f32.mrb[0].mxu0
        %9362 = vdwg.mxu0
        %9363 = vmatprep.subr.bf16.mxu0 %v6920
        %9364 = vmatpush1.bf16.msra.mxu0 %v6919
        %9365 = vmatprep.subr.bf16.mxu0 %v6929
        %9366 = vmatpush1.bf16.msra.mxu0 %v6928
        %9367 = vmatprep.subr.bf16.mxu0 %v6938
        %9368 = vmatpush1.bf16.msra.mxu0 %v6937
        %9369 = vmatprep.subr.bf16.mxu0 %v6947
        %9370 = vmatpush1.bf16.msra.mxu0 %v6946
        %9371 = vmatprep.subr.bf16.mxu0 %v6956
        %9372 = vmatpush1.bf16.msra.mxu0 %v6955
        %9373 = vmatprep.subr.bf16.mxu0 %v6965
        %9374 = vmatpush1.bf16.msra.mxu0 %v6964
        %9375 = vmatprep.subr.bf16.mxu0 %v6974
        %9376 = vmatpush1.bf16.msra.mxu0 %v6973
        %9377 = vmatprep.subr.bf16.mxu0 %v6983
        %9378 = vmatpush1.bf16.msra.mxu0 %v6982
        %9379 = vmatprep.subr.bf16.mxu0 %v6992
        %9380 = vmatpush1.bf16.msra.mxu0 %v6991
        %9381 = vmatprep.subr.bf16.mxu0 %v7001
        %9382 = vmatpush1.bf16.msra.mxu0 %v7000
        %9383 = vmatprep.subr.bf16.mxu0 %v7010
        %9384 = vmatpush1.bf16.msra.mxu0 %v7009
        %9385 = vmatprep.subr.bf16.mxu0 %v7019
        %9386 = vmatpush1.bf16.msra.mxu0 %v7018
        %9387 = vmatprep.subr.bf16.mxu0 %v7028
        %9388 = vmatpush1.bf16.msra.mxu0 %v7027
        %9389 = vmatprep.subr.bf16.mxu0 %v7037
        %9390 = vmatpush1.bf16.msra.mxu0 %v7036
        %9391 = vmatprep.subr.bf16.mxu0 %v7046
        %9392 = vmatpush1.bf16.msra.mxu0 %v7045
        %9393 = vmatprep.subr.bf16.mxu0 %v7055
        %9394 = vmatpush1.bf16.msra.mxu0 %v7054
        %9395 = vmatprep.mubr.bf16.mxu0 %v2123
        %9396 = vmatmul.mubr.bf16.gmra.mrb[0].mxu0 %v2121
        %v9397 = vpop.f32.mrb[0].mxu0
        %v9398 = vadd.f32 %v9357, %v9397
        %v9399 = vpop.f32.mrb[0].mxu0
        %v9400 = vadd.f32 %v9359, %v9399
        %v9401 = vpop.f32.mrb[0].mxu0
        %v9402 = vpop.f32.mrb[0].mxu0
        %9403 = vdwg.mxu0
        %9404 = vmatprep.subr.bf16.mxu0 %v7064
        %9405 = vmatpush1.bf16.msra.mxu0 %v7063
        %9406 = vmatprep.subr.bf16.mxu0 %v7073
        %9407 = vmatpush1.bf16.msra.mxu0 %v7072
        %9408 = vmatprep.subr.bf16.mxu0 %v7082
        %9409 = vmatpush1.bf16.msra.mxu0 %v7081
        %9410 = vmatprep.subr.bf16.mxu0 %v7091
        %9411 = vmatpush1.bf16.msra.mxu0 %v7090
        %9412 = vmatprep.subr.bf16.mxu0 %v7100
        %9413 = vmatpush1.bf16.msra.mxu0 %v7099
        %9414 = vmatprep.subr.bf16.mxu0 %v7109
        %9415 = vmatpush1.bf16.msra.mxu0 %v7108
        %9416 = vmatprep.subr.bf16.mxu0 %v7118
        %9417 = vmatpush1.bf16.msra.mxu0 %v7117
        %9418 = vmatprep.subr.bf16.mxu0 %v7127
        %9419 = vmatpush1.bf16.msra.mxu0 %v7126
        %9420 = vmatprep.subr.bf16.mxu0 %v7136
        %9421 = vmatpush1.bf16.msra.mxu0 %v7135
        %9422 = vmatprep.subr.bf16.mxu0 %v7145
        %9423 = vmatpush1.bf16.msra.mxu0 %v7144
        %9424 = vmatprep.subr.bf16.mxu0 %v7154
        %9425 = vmatpush1.bf16.msra.mxu0 %v7153
        %9426 = vmatprep.subr.bf16.mxu0 %v7163
        %9427 = vmatpush1.bf16.msra.mxu0 %v7162
        %9428 = vmatprep.subr.bf16.mxu0 %v7172
        %9429 = vmatpush1.bf16.msra.mxu0 %v7171
        %9430 = vmatprep.subr.bf16.mxu0 %v7181
        %9431 = vmatpush1.bf16.msra.mxu0 %v7180
        %9432 = vmatprep.subr.bf16.mxu0 %v7190
        %9433 = vmatpush1.bf16.msra.mxu0 %v7189
        %9434 = vmatprep.subr.bf16.mxu0 %v7199
        %9435 = vmatpush1.bf16.msra.mxu0 %v7198
        %9436 = vmatprep.mubr.bf16.mxu0 %v2120
        %9437 = vmatmul.mubr.bf16.gmra.mrb[0].mxu0 %v2106
        %v9438 = vpop.f32.mrb[0].mxu0
        %v9439 = vadd.f32 %v9398, %v9438
        %v9440 = vpop.f32.mrb[0].mxu0
        %v9441 = vadd.f32 %v9400, %v9440
        %v9442 = vpop.f32.mrb[0].mxu0
        %v9443 = vpop.f32.mrb[0].mxu0
        %9444 = vdwg.mxu0
        %9445 = vmatprep.subr.bf16.mxu0 %v7208
        %9446 = vmatpush1.bf16.msra.mxu0 %v7207
        %9447 = vmatprep.subr.bf16.mxu0 %v7217
        %9448 = vmatpush1.bf16.msra.mxu0 %v7216
        %9449 = vmatprep.subr.bf16.mxu0 %v7226
        %9450 = vmatpush1.bf16.msra.mxu0 %v7225
        %9451 = vmatprep.subr.bf16.mxu0 %v7235
        %9452 = vmatpush1.bf16.msra.mxu0 %v7234
        %9453 = vmatprep.subr.bf16.mxu0 %v7244
        %9454 = vmatpush1.bf16.msra.mxu0 %v7243
        %9455 = vmatprep.subr.bf16.mxu0 %v7253
        %9456 = vmatpush1.bf16.msra.mxu0 %v7252
        %9457 = vmatprep.subr.bf16.mxu0 %v7262
        %9458 = vmatpush1.bf16.msra.mxu0 %v7261
        %9459 = vmatprep.subr.bf16.mxu0 %v7271
        %9460 = vmatpush1.bf16.msra.mxu0 %v7270
        %9461 = vmatprep.subr.bf16.mxu0 %v7280
        %9462 = vmatpush1.bf16.msra.mxu0 %v7279
        %9463 = vmatprep.subr.bf16.mxu0 %v7289
        %9464 = vmatpush1.bf16.msra.mxu0 %v7288
        %9465 = vmatprep.subr.bf16.mxu0 %v7298
        %9466 = vmatpush1.bf16.msra.mxu0 %v7297
        %9467 = vmatprep.subr.bf16.mxu0 %v7307
        %9468 = vmatpush1.bf16.msra.mxu0 %v7306
        %9469 = vmatprep.subr.bf16.mxu0 %v7316
        %9470 = vmatpush1.bf16.msra.mxu0 %v7315
        %9471 = vmatprep.subr.bf16.mxu0 %v7325
        %9472 = vmatpush1.bf16.msra.mxu0 %v7324
        %9473 = vmatprep.subr.bf16.mxu0 %v7334
        %9474 = vmatpush1.bf16.msra.mxu0 %v7333
        %9475 = vmatprep.subr.bf16.mxu0 %v7343
        %9476 = vmatpush1.bf16.msra.mxu0 %v7342
        %9477 = vmatprep.mubr.bf16.mxu0 %v2124
        %9478 = vmatmul.mubr.bf16.gmra.mrb[0].mxu0 %v2122
        %v9479 = vpop.f32.mrb[0].mxu0
        %v9480 = vadd.f32 %v9439, %v9479
        %v9481 = vpop.f32.mrb[0].mxu0
        %v9482 = vadd.f32 %v9441, %v9481
        %v9483 = vpop.f32.mrb[0].mxu0
        %v9484 = vpop.f32.mrb[0].mxu0
        %9485 = vdwg.mxu0
        %9486 = vmatprep.subr.bf16.mxu0 %v7352
        %9487 = vmatpush1.bf16.msra.mxu0 %v7351
        %9488 = vmatprep.subr.bf16.mxu0 %v7361
        %9489 = vmatpush1.bf16.msra.mxu0 %v7360
        %9490 = vmatprep.subr.bf16.mxu0 %v7370
        %9491 = vmatpush1.bf16.msra.mxu0 %v7369
        %9492 = vmatprep.subr.bf16.mxu0 %v7379
        %9493 = vmatpush1.bf16.msra.mxu0 %v7378
        %9494 = vmatprep.subr.bf16.mxu0 %v7388
        %9495 = vmatpush1.bf16.msra.mxu0 %v7387
        %9496 = vmatprep.subr.bf16.mxu0 %v7397
        %9497 = vmatpush1.bf16.msra.mxu0 %v7396
        %9498 = vmatprep.subr.bf16.mxu0 %v7406
        %9499 = vmatpush1.bf16.msra.mxu0 %v7405
        %9500 = vmatprep.subr.bf16.mxu0 %v7415
        %9501 = vmatpush1.bf16.msra.mxu0 %v7414
        %9502 = vmatprep.subr.bf16.mxu0 %v7424
        %9503 = vmatpush1.bf16.msra.mxu0 %v7423
        %9504 = vmatprep.subr.bf16.mxu0 %v7433
        %9505 = vmatpush1.bf16.msra.mxu0 %v7432
        %9506 = vmatprep.subr.bf16.mxu0 %v7442
        %9507 = vmatpush1.bf16.msra.mxu0 %v7441
        %9508 = vmatprep.subr.bf16.mxu0 %v7451
        %9509 = vmatpush1.bf16.msra.mxu0 %v7450
        %9510 = vmatprep.subr.bf16.mxu0 %v7460
        %9511 = vmatpush1.bf16.msra.mxu0 %v7459
        %9512 = vmatprep.subr.bf16.mxu0 %v7469
        %9513 = vmatpush1.bf16.msra.mxu0 %v7468
        %9514 = vmatprep.subr.bf16.mxu0 %v7478
        %9515 = vmatpush1.bf16.msra.mxu0 %v7477
        %9516 = vmatprep.subr.bf16.mxu0 %v7487
        %9517 = vmatpush1.bf16.msra.mxu0 %v7486
        %9518 = vmatprep.mubr.bf16.mxu0 %v2146
        %9519 = vmatmul.mubr.bf16.gmra.mrb[0].mxu0 %v2139
        %v9520 = vpop.f32.mrb[0].mxu0
        %v9521 = vadd.f32 %v9480, %v9520
        %v9522 = vpop.f32.mrb[0].mxu0
        %v9523 = vadd.f32 %v9482, %v9522
        %v9524 = vpop.f32.mrb[0].mxu0
        %v9525 = vpop.f32.mrb[0].mxu0
        %9526 = vdwg.mxu0
        %9527 = vmatprep.subr.bf16.mxu0 %v6202
        %9528 = vmatpush1.bf16.msra.mxu0 %v6201
        %9529 = vmatprep.subr.bf16.mxu0 %v6211
        %9530 = vmatpush1.bf16.msra.mxu0 %v6210
        %9531 = vmatprep.subr.bf16.mxu0 %v6220
        %9532 = vmatpush1.bf16.msra.mxu0 %v6219
        %9533 = vmatprep.subr.bf16.mxu0 %v6229
        %9534 = vmatpush1.bf16.msra.mxu0 %v6228
        %9535 = vmatprep.subr.bf16.mxu0 %v6238
        %9536 = vmatpush1.bf16.msra.mxu0 %v6237
        %9537 = vmatprep.subr.bf16.mxu0 %v6247
        %9538 = vmatpush1.bf16.msra.mxu0 %v6246
        %9539 = vmatprep.subr.bf16.mxu0 %v6256
        %9540 = vmatpush1.bf16.msra.mxu0 %v6255
        %9541 = vmatprep.subr.bf16.mxu0 %v6265
        %9542 = vmatpush1.bf16.msra.mxu0 %v6264
        %9543 = vmatprep.subr.bf16.mxu0 %v6274
        %9544 = vmatpush1.bf16.msra.mxu0 %v6273
        %9545 = vmatprep.subr.bf16.mxu0 %v6283
        %9546 = vmatpush1.bf16.msra.mxu0 %v6282
        %9547 = vmatprep.subr.bf16.mxu0 %v6292
        %9548 = vmatpush1.bf16.msra.mxu0 %v6291
        %9549 = vmatprep.subr.bf16.mxu0 %v6301
        %9550 = vmatpush1.bf16.msra.mxu0 %v6300
        %9551 = vmatprep.subr.bf16.mxu0 %v6310
        %9552 = vmatpush1.bf16.msra.mxu0 %v6309
        %9553 = vmatprep.subr.bf16.mxu0 %v6319
        %9554 = vmatpush1.bf16.msra.mxu0 %v6318
        %9555 = vmatprep.subr.bf16.mxu0 %v6328
        %9556 = vmatpush1.bf16.msra.mxu0 %v6327
        %9557 = vmatprep.subr.bf16.mxu0 %v6337
        %9558 = vmatpush1.bf16.msra.mxu0 %v6336
        %9559 = vmatprep.mubr.bf16.mxu0 %v2064
        %9560 = vmatmul.mubr.bf16.gmra.mrb[0].mxu0 %v2050
        %v9561 = vpop.f32.mrb[0].mxu0
        %v9562 = vadd.f32 %v2007, %v9561
        %v9563 = vpop.f32.mrb[0].mxu0
        %v9564 = vadd.f32 %v2011, %v9563
        %v9565 = vpop.f32.mrb[0].mxu0
        %v9566 = vpop.f32.mrb[0].mxu0
        %9567 = vdwg.mxu0
        %9568 = vmatprep.subr.bf16.mxu0 %v6346
        %9569 = vmatpush1.bf16.msra.mxu0 %v6345
        %9570 = vmatprep.subr.bf16.mxu0 %v6355
        %9571 = vmatpush1.bf16.msra.mxu0 %v6354
        %9572 = vmatprep.subr.bf16.mxu0 %v6364
        %9573 = vmatpush1.bf16.msra.mxu0 %v6363
        %9574 = vmatprep.subr.bf16.mxu0 %v6373
        %9575 = vmatpush1.bf16.msra.mxu0 %v6372
        %9576 = vmatprep.subr.bf16.mxu0 %v6382
        %9577 = vmatpush1.bf16.msra.mxu0 %v6381
        %9578 = vmatprep.subr.bf16.mxu0 %v6391
        %9579 = vmatpush1.bf16.msra.mxu0 %v6390
        %9580 = vmatprep.subr.bf16.mxu0 %v6400
        %9581 = vmatpush1.bf16.msra.mxu0 %v6399
        %9582 = vmatprep.subr.bf16.mxu0 %v6409
        %9583 = vmatpush1.bf16.msra.mxu0 %v6408
        %9584 = vmatprep.subr.bf16.mxu0 %v6418
        %9585 = vmatpush1.bf16.msra.mxu0 %v6417
        %9586 = vmatprep.subr.bf16.mxu0 %v6427
        %9587 = vmatpush1.bf16.msra.mxu0 %v6426
        %9588 = vmatprep.subr.bf16.mxu0 %v6436
        %9589 = vmatpush1.bf16.msra.mxu0 %v6435
        %9590 = vmatprep.subr.bf16.mxu0 %v6445
        %9591 = vmatpush1.bf16.msra.mxu0 %v6444
        %9592 = vmatprep.subr.bf16.mxu0 %v6454
        %9593 = vmatpush1.bf16.msra.mxu0 %v6453
        %9594 = vmatprep.subr.bf16.mxu0 %v6463
        %9595 = vmatpush1.bf16.msra.mxu0 %v6462
        %9596 = vmatprep.subr.bf16.mxu0 %v6472
        %9597 = vmatpush1.bf16.msra.mxu0 %v6471
        %9598 = vmatprep.subr.bf16.mxu0 %v6481
        %9599 = vmatpush1.bf16.msra.mxu0 %v6480
        %9600 = vmatprep.mubr.bf16.mxu0 %v2074
        %9601 = vmatmul.mubr.bf16.gmra.mrb[0].mxu0 %v2072
        %v9602 = vpop.f32.mrb[0].mxu0
        %v9603 = vadd.f32 %v9562, %v9602
        %v9604 = vpop.f32.mrb[0].mxu0
        %v9605 = vadd.f32 %v9564, %v9604
        %v9606 = vpop.f32.mrb[0].mxu0
        %v9607 = vpop.f32.mrb[0].mxu0
        %9608 = vdwg.mxu0
        %9609 = vmatprep.subr.bf16.mxu0 %v6490
        %9610 = vmatpush1.bf16.msra.mxu0 %v6489
        %9611 = vmatprep.subr.bf16.mxu0 %v6499
        %9612 = vmatpush1.bf16.msra.mxu0 %v6498
        %9613 = vmatprep.subr.bf16.mxu0 %v6508
        %9614 = vmatpush1.bf16.msra.mxu0 %v6507
        %9615 = vmatprep.subr.bf16.mxu0 %v6517
        %9616 = vmatpush1.bf16.msra.mxu0 %v6516
        %9617 = vmatprep.subr.bf16.mxu0 %v6526
        %9618 = vmatpush1.bf16.msra.mxu0 %v6525
        %9619 = vmatprep.subr.bf16.mxu0 %v6535
        %9620 = vmatpush1.bf16.msra.mxu0 %v6534
        %9621 = vmatprep.subr.bf16.mxu0 %v6544
        %9622 = vmatpush1.bf16.msra.mxu0 %v6543
        %9623 = vmatprep.subr.bf16.mxu0 %v6553
        %9624 = vmatpush1.bf16.msra.mxu0 %v6552
        %9625 = vmatprep.subr.bf16.mxu0 %v6562
        %9626 = vmatpush1.bf16.msra.mxu0 %v6561
        %9627 = vmatprep.subr.bf16.mxu0 %v6571
        %9628 = vmatpush1.bf16.msra.mxu0 %v6570
        %9629 = vmatprep.subr.bf16.mxu0 %v6580
        %9630 = vmatpush1.bf16.msra.mxu0 %v6579
        %9631 = vmatprep.subr.bf16.mxu0 %v6589
        %9632 = vmatpush1.bf16.msra.mxu0 %v6588
        %9633 = vmatprep.subr.bf16.mxu0 %v6598
        %9634 = vmatpush1.bf16.msra.mxu0 %v6597
        %9635 = vmatprep.subr.bf16.mxu0 %v6607
        %9636 = vmatpush1.bf16.msra.mxu0 %v6606
        %9637 = vmatprep.subr.bf16.mxu0 %v6616
        %9638 = vmatpush1.bf16.msra.mxu0 %v6615
        %9639 = vmatprep.subr.bf16.mxu0 %v6625
        %9640 = vmatpush1.bf16.msra.mxu0 %v6624
        %9641 = vmatprep.mubr.bf16.mxu0 %v2071
        %9642 = vmatmul.mubr.bf16.gmra.mrb[0].mxu0 %v2057
        %v9643 = vpop.f32.mrb[0].mxu0
        %v9644 = vadd.f32 %v9603, %v9643
        %v9645 = vpop.f32.mrb[0].mxu0
        %v9646 = vadd.f32 %v9605, %v9645
        %v9647 = vpop.f32.mrb[0].mxu0
        %v9648 = vpop.f32.mrb[0].mxu0
        %9649 = vdwg.mxu0
        %9650 = vmatprep.subr.bf16.mxu0 %v6634
        %9651 = vmatpush1.bf16.msra.mxu0 %v6633
        %9652 = vmatprep.subr.bf16.mxu0 %v6643
        %9653 = vmatpush1.bf16.msra.mxu0 %v6642
        %9654 = vmatprep.subr.bf16.mxu0 %v6652
        %9655 = vmatpush1.bf16.msra.mxu0 %v6651
        %9656 = vmatprep.subr.bf16.mxu0 %v6661
        %9657 = vmatpush1.bf16.msra.mxu0 %v6660
        %9658 = vmatprep.subr.bf16.mxu0 %v6670
        %9659 = vmatpush1.bf16.msra.mxu0 %v6669
        %9660 = vmatprep.subr.bf16.mxu0 %v6679
        %9661 = vmatpush1.bf16.msra.mxu0 %v6678
        %9662 = vmatprep.subr.bf16.mxu0 %v6688
        %9663 = vmatpush1.bf16.msra.mxu0 %v6687
        %9664 = vmatprep.subr.bf16.mxu0 %v6697
        %9665 = vmatpush1.bf16.msra.mxu0 %v6696
        %9666 = vmatprep.subr.bf16.mxu0 %v6706
        %9667 = vmatpush1.bf16.msra.mxu0 %v6705
        %9668 = vmatprep.subr.bf16.mxu0 %v6715
        %9669 = vmatpush1.bf16.msra.mxu0 %v6714
        %9670 = vmatprep.subr.bf16.mxu0 %v6724
        %9671 = vmatpush1.bf16.msra.mxu0 %v6723
        %9672 = vmatprep.subr.bf16.mxu0 %v6733
        %9673 = vmatpush1.bf16.msra.mxu0 %v6732
        %9674 = vmatprep.subr.bf16.mxu0 %v6742
        %9675 = vmatpush1.bf16.msra.mxu0 %v6741
        %9676 = vmatprep.subr.bf16.mxu0 %v6751
        %9677 = vmatpush1.bf16.msra.mxu0 %v6750
        %9678 = vmatprep.subr.bf16.mxu0 %v6760
        %9679 = vmatpush1.bf16.msra.mxu0 %v6759
        %9680 = vmatprep.subr.bf16.mxu0 %v6769
        %9681 = vmatpush1.bf16.msra.mxu0 %v6768
        %9682 = vmatprep.mubr.bf16.mxu0 %v2075
        %9683 = vmatmul.mubr.bf16.gmra.mrb[0].mxu0 %v2073
        %v9684 = vpop.f32.mrb[0].mxu0
        %v9685 = vadd.f32 %v9644, %v9684
        %v9686 = vpop.f32.mrb[0].mxu0
        %v9687 = vadd.f32 %v9646, %v9686
        %v9688 = vpop.f32.mrb[0].mxu0
        %v9689 = vpop.f32.mrb[0].mxu0
        %9690 = vdwg.mxu0
        %9691 = vmatprep.subr.bf16.mxu0 %v6778
        %9692 = vmatpush1.bf16.msra.mxu0 %v6777
        %9693 = vmatprep.subr.bf16.mxu0 %v6787
        %9694 = vmatpush1.bf16.msra.mxu0 %v6786
        %9695 = vmatprep.subr.bf16.mxu0 %v6796
        %9696 = vmatpush1.bf16.msra.mxu0 %v6795
        %9697 = vmatprep.subr.bf16.mxu0 %v6805
        %9698 = vmatpush1.bf16.msra.mxu0 %v6804
        %9699 = vmatprep.subr.bf16.mxu0 %v6814
        %9700 = vmatpush1.bf16.msra.mxu0 %v6813
        %9701 = vmatprep.subr.bf16.mxu0 %v6823
        %9702 = vmatpush1.bf16.msra.mxu0 %v6822
        %9703 = vmatprep.subr.bf16.mxu0 %v6832
        %9704 = vmatpush1.bf16.msra.mxu0 %v6831
        %9705 = vmatprep.subr.bf16.mxu0 %v6841
        %9706 = vmatpush1.bf16.msra.mxu0 %v6840
        %9707 = vmatprep.subr.bf16.mxu0 %v6850
        %9708 = vmatpush1.bf16.msra.mxu0 %v6849
        %9709 = vmatprep.subr.bf16.mxu0 %v6859
        %9710 = vmatpush1.bf16.msra.mxu0 %v6858
        %9711 = vmatprep.subr.bf16.mxu0 %v6868
        %9712 = vmatpush1.bf16.msra.mxu0 %v6867
        %9713 = vmatprep.subr.bf16.mxu0 %v6877
        %9714 = vmatpush1.bf16.msra.mxu0 %v6876
        %9715 = vmatprep.subr.bf16.mxu0 %v6886
        %9716 = vmatpush1.bf16.msra.mxu0 %v6885
        %9717 = vmatprep.subr.bf16.mxu0 %v6895
        %9718 = vmatpush1.bf16.msra.mxu0 %v6894
        %9719 = vmatprep.subr.bf16.mxu0 %v6904
        %9720 = vmatpush1.bf16.msra.mxu0 %v6903
        %9721 = vmatprep.subr.bf16.mxu0 %v6913
        %9722 = vmatpush1.bf16.msra.mxu0 %v6912
        %9723 = vmatprep.mubr.bf16.mxu0 %v2113
        %9724 = vmatmul.mubr.bf16.gmra.mrb[0].mxu0 %v2099
        %v9725 = vpop.f32.mrb[0].mxu0
        %v9726 = vadd.f32 %v9685, %v9725
        %v9727 = vpop.f32.mrb[0].mxu0
        %v9728 = vadd.f32 %v9687, %v9727
        %v9729 = vpop.f32.mrb[0].mxu0
        %v9730 = vpop.f32.mrb[0].mxu0
        %9731 = vdwg.mxu0
        %9732 = vmatprep.subr.bf16.mxu0 %v6922
        %9733 = vmatpush1.bf16.msra.mxu0 %v6921
        %9734 = vmatprep.subr.bf16.mxu0 %v6931
        %9735 = vmatpush1.bf16.msra.mxu0 %v6930
        %9736 = vmatprep.subr.bf16.mxu0 %v6940
        %9737 = vmatpush1.bf16.msra.mxu0 %v6939
        %9738 = vmatprep.subr.bf16.mxu0 %v6949
        %9739 = vmatpush1.bf16.msra.mxu0 %v6948
        %9740 = vmatprep.subr.bf16.mxu0 %v6958
        %9741 = vmatpush1.bf16.msra.mxu0 %v6957
        %9742 = vmatprep.subr.bf16.mxu0 %v6967
        %9743 = vmatpush1.bf16.msra.mxu0 %v6966
        %9744 = vmatprep.subr.bf16.mxu0 %v6976
        %9745 = vmatpush1.bf16.msra.mxu0 %v6975
        %9746 = vmatprep.subr.bf16.mxu0 %v6985
        %9747 = vmatpush1.bf16.msra.mxu0 %v6984
        %9748 = vmatprep.subr.bf16.mxu0 %v6994
        %9749 = vmatpush1.bf16.msra.mxu0 %v6993
        %9750 = vmatprep.subr.bf16.mxu0 %v7003
        %9751 = vmatpush1.bf16.msra.mxu0 %v7002
        %9752 = vmatprep.subr.bf16.mxu0 %v7012
        %9753 = vmatpush1.bf16.msra.mxu0 %v7011
        %9754 = vmatprep.subr.bf16.mxu0 %v7021
        %9755 = vmatpush1.bf16.msra.mxu0 %v7020
        %9756 = vmatprep.subr.bf16.mxu0 %v7030
        %9757 = vmatpush1.bf16.msra.mxu0 %v7029
        %9758 = vmatprep.subr.bf16.mxu0 %v7039
        %9759 = vmatpush1.bf16.msra.mxu0 %v7038
        %9760 = vmatprep.subr.bf16.mxu0 %v7048
        %9761 = vmatpush1.bf16.msra.mxu0 %v7047
        %9762 = vmatprep.subr.bf16.mxu0 %v7057
        %9763 = vmatpush1.bf16.msra.mxu0 %v7056
        %9764 = vmatprep.mubr.bf16.mxu0 %v2123
        %9765 = vmatmul.mubr.bf16.gmra.mrb[0].mxu0 %v2121
        %v9766 = vpop.f32.mrb[0].mxu0
        %v9767 = vadd.f32 %v9726, %v9766
        %v9768 = vpop.f32.mrb[0].mxu0
        %v9769 = vadd.f32 %v9728, %v9768
        %v9770 = vpop.f32.mrb[0].mxu0
        %v9771 = vpop.f32.mrb[0].mxu0
        %9772 = vdwg.mxu0
        %9773 = vmatprep.subr.bf16.mxu0 %v7066
        %9774 = vmatpush1.bf16.msra.mxu0 %v7065
        %9775 = vmatprep.subr.bf16.mxu0 %v7075
        %9776 = vmatpush1.bf16.msra.mxu0 %v7074
        %9777 = vmatprep.subr.bf16.mxu0 %v7084
        %9778 = vmatpush1.bf16.msra.mxu0 %v7083
        %9779 = vmatprep.subr.bf16.mxu0 %v7093
        %9780 = vmatpush1.bf16.msra.mxu0 %v7092
        %9781 = vmatprep.subr.bf16.mxu0 %v7102
        %9782 = vmatpush1.bf16.msra.mxu0 %v7101
        %9783 = vmatprep.subr.bf16.mxu0 %v7111
        %9784 = vmatpush1.bf16.msra.mxu0 %v7110
        %9785 = vmatprep.subr.bf16.mxu0 %v7120
        %9786 = vmatpush1.bf16.msra.mxu0 %v7119
        %9787 = vmatprep.subr.bf16.mxu0 %v7129
        %9788 = vmatpush1.bf16.msra.mxu0 %v7128
        %9789 = vmatprep.subr.bf16.mxu0 %v7138
        %9790 = vmatpush1.bf16.msra.mxu0 %v7137
        %9791 = vmatprep.subr.bf16.mxu0 %v7147
        %9792 = vmatpush1.bf16.msra.mxu0 %v7146
        %9793 = vmatprep.subr.bf16.mxu0 %v7156
        %9794 = vmatpush1.bf16.msra.mxu0 %v7155
        %9795 = vmatprep.subr.bf16.mxu0 %v7165
        %9796 = vmatpush1.bf16.msra.mxu0 %v7164
        %9797 = vmatprep.subr.bf16.mxu0 %v7174
        %9798 = vmatpush1.bf16.msra.mxu0 %v7173
        %9799 = vmatprep.subr.bf16.mxu0 %v7183
        %9800 = vmatpush1.bf16.msra.mxu0 %v7182
        %9801 = vmatprep.subr.bf16.mxu0 %v7192
        %9802 = vmatpush1.bf16.msra.mxu0 %v7191
        %9803 = vmatprep.subr.bf16.mxu0 %v7201
        %9804 = vmatpush1.bf16.msra.mxu0 %v7200
        %9805 = vmatprep.mubr.bf16.mxu0 %v2120
        %9806 = vmatmul.mubr.bf16.gmra.mrb[0].mxu0 %v2106
        %v9807 = vpop.f32.mrb[0].mxu0
        %v9808 = vadd.f32 %v9767, %v9807
        %v9809 = vpop.f32.mrb[0].mxu0
        %v9810 = vadd.f32 %v9769, %v9809
        %v9811 = vpop.f32.mrb[0].mxu0
        %v9812 = vpop.f32.mrb[0].mxu0
        %9813 = vdwg.mxu0
        %9814 = vmatprep.subr.bf16.mxu0 %v7210
        %9815 = vmatpush1.bf16.msra.mxu0 %v7209
        %9816 = vmatprep.subr.bf16.mxu0 %v7219
        %9817 = vmatpush1.bf16.msra.mxu0 %v7218
        %9818 = vmatprep.subr.bf16.mxu0 %v7228
        %9819 = vmatpush1.bf16.msra.mxu0 %v7227
        %9820 = vmatprep.subr.bf16.mxu0 %v7237
        %9821 = vmatpush1.bf16.msra.mxu0 %v7236
        %9822 = vmatprep.subr.bf16.mxu0 %v7246
        %9823 = vmatpush1.bf16.msra.mxu0 %v7245
        %9824 = vmatprep.subr.bf16.mxu0 %v7255
        %9825 = vmatpush1.bf16.msra.mxu0 %v7254
        %9826 = vmatprep.subr.bf16.mxu0 %v7264
        %9827 = vmatpush1.bf16.msra.mxu0 %v7263
        %9828 = vmatprep.subr.bf16.mxu0 %v7273
        %9829 = vmatpush1.bf16.msra.mxu0 %v7272
        %9830 = vmatprep.subr.bf16.mxu0 %v7282
        %9831 = vmatpush1.bf16.msra.mxu0 %v7281
        %9832 = vmatprep.subr.bf16.mxu0 %v7291
        %9833 = vmatpush1.bf16.msra.mxu0 %v7290
        %9834 = vmatprep.subr.bf16.mxu0 %v7300
        %9835 = vmatpush1.bf16.msra.mxu0 %v7299
        %9836 = vmatprep.subr.bf16.mxu0 %v7309
        %9837 = vmatpush1.bf16.msra.mxu0 %v7308
        %9838 = vmatprep.subr.bf16.mxu0 %v7318
        %9839 = vmatpush1.bf16.msra.mxu0 %v7317
        %9840 = vmatprep.subr.bf16.mxu0 %v7327
        %9841 = vmatpush1.bf16.msra.mxu0 %v7326
        %9842 = vmatprep.subr.bf16.mxu0 %v7336
        %9843 = vmatpush1.bf16.msra.mxu0 %v7335
        %9844 = vmatprep.subr.bf16.mxu0 %v7345
        %9845 = vmatpush1.bf16.msra.mxu0 %v7344
        %9846 = vmatprep.mubr.bf16.mxu0 %v2124
        %9847 = vmatmul.mubr.bf16.gmra.mrb[0].mxu0 %v2122
        %v9848 = vpop.f32.mrb[0].mxu0
        %v9849 = vadd.f32 %v9808, %v9848
        %v9850 = vpop.f32.mrb[0].mxu0
        %v9851 = vadd.f32 %v9810, %v9850
        %v9852 = vpop.f32.mrb[0].mxu0
        %v9853 = vpop.f32.mrb[0].mxu0
        %9854 = vdwg.mxu0
        %9855 = vmatprep.subr.bf16.mxu0 %v7354
        %9856 = vmatpush1.bf16.msra.mxu0 %v7353
        %9857 = vmatprep.subr.bf16.mxu0 %v7363
        %9858 = vmatpush1.bf16.msra.mxu0 %v7362
        %9859 = vmatprep.subr.bf16.mxu0 %v7372
        %9860 = vmatpush1.bf16.msra.mxu0 %v7371
        %9861 = vmatprep.subr.bf16.mxu0 %v7381
        %9862 = vmatpush1.bf16.msra.mxu0 %v7380
        %9863 = vmatprep.subr.bf16.mxu0 %v7390
        %9864 = vmatpush1.bf16.msra.mxu0 %v7389
        %9865 = vmatprep.subr.bf16.mxu0 %v7399
        %9866 = vmatpush1.bf16.msra.mxu0 %v7398
        %9867 = vmatprep.subr.bf16.mxu0 %v7408
        %9868 = vmatpush1.bf16.msra.mxu0 %v7407
        %9869 = vmatprep.subr.bf16.mxu0 %v7417
        %9870 = vmatpush1.bf16.msra.mxu0 %v7416
        %9871 = vmatprep.subr.bf16.mxu0 %v7426
        %9872 = vmatpush1.bf16.msra.mxu0 %v7425
        %9873 = vmatprep.subr.bf16.mxu0 %v7435
        %9874 = vmatpush1.bf16.msra.mxu0 %v7434
        %9875 = vmatprep.subr.bf16.mxu0 %v7444
        %9876 = vmatpush1.bf16.msra.mxu0 %v7443
        %9877 = vmatprep.subr.bf16.mxu0 %v7453
        %9878 = vmatpush1.bf16.msra.mxu0 %v7452
        %9879 = vmatprep.subr.bf16.mxu0 %v7462
        %9880 = vmatpush1.bf16.msra.mxu0 %v7461
        %9881 = vmatprep.subr.bf16.mxu0 %v7471
        %9882 = vmatpush1.bf16.msra.mxu0 %v7470
        %9883 = vmatprep.subr.bf16.mxu0 %v7480
        %9884 = vmatpush1.bf16.msra.mxu0 %v7479
        %9885 = vmatprep.subr.bf16.mxu0 %v7489
        %9886 = vmatpush1.bf16.msra.mxu0 %v7488
        %9887 = vmatprep.mubr.bf16.mxu0 %v2146
        %9888 = vmatmul.mubr.bf16.gmra.mrb[0].mxu0 %v2139
        %v9889 = vpop.f32.mrb[0].mxu0
        %v9890 = vadd.f32 %v9849, %v9889
        %v9891 = vpop.f32.mrb[0].mxu0
        %v9892 = vadd.f32 %v9851, %v9891
        %v9893 = vpop.f32.mrb[0].mxu0
        %v9894 = vpop.f32.mrb[0].mxu0
        %9895 = vdwg.mxu0
        %9896 = vmatprep.subr.bf16.mxu0 %v6204
        %9897 = vmatpush1.bf16.msra.mxu0 %v6203
        %9898 = vmatprep.subr.bf16.mxu0 %v6213
        %9899 = vmatpush1.bf16.msra.mxu0 %v6212
        %9900 = vmatprep.subr.bf16.mxu0 %v6222
        %9901 = vmatpush1.bf16.msra.mxu0 %v6221
        %9902 = vmatprep.subr.bf16.mxu0 %v6231
        %9903 = vmatpush1.bf16.msra.mxu0 %v6230
        %9904 = vmatprep.subr.bf16.mxu0 %v6240
        %9905 = vmatpush1.bf16.msra.mxu0 %v6239
        %9906 = vmatprep.subr.bf16.mxu0 %v6249
        %9907 = vmatpush1.bf16.msra.mxu0 %v6248
        %9908 = vmatprep.subr.bf16.mxu0 %v6258
        %9909 = vmatpush1.bf16.msra.mxu0 %v6257
        %9910 = vmatprep.subr.bf16.mxu0 %v6267
        %9911 = vmatpush1.bf16.msra.mxu0 %v6266
        %9912 = vmatprep.subr.bf16.mxu0 %v6276
        %9913 = vmatpush1.bf16.msra.mxu0 %v6275
        %9914 = vmatprep.subr.bf16.mxu0 %v6285
        %9915 = vmatpush1.bf16.msra.mxu0 %v6284
        %9916 = vmatprep.subr.bf16.mxu0 %v6294
        %9917 = vmatpush1.bf16.msra.mxu0 %v6293
        %9918 = vmatprep.subr.bf16.mxu0 %v6303
        %9919 = vmatpush1.bf16.msra.mxu0 %v6302
        %9920 = vmatprep.subr.bf16.mxu0 %v6312
        %9921 = vmatpush1.bf16.msra.mxu0 %v6311
        %9922 = vmatprep.subr.bf16.mxu0 %v6321
        %9923 = vmatpush1.bf16.msra.mxu0 %v6320
        %9924 = vmatprep.subr.bf16.mxu0 %v6330
        %9925 = vmatpush1.bf16.msra.mxu0 %v6329
        %9926 = vmatprep.subr.bf16.mxu0 %v6339
        %9927 = vmatpush1.bf16.msra.mxu0 %v6338
        %9928 = vmatprep.mubr.bf16.mxu0 %v2064
        %9929 = vmatmul.mubr.bf16.gmra.mrb[0].mxu0 %v2050
        %v9930 = vpop.f32.mrb[0].mxu0
        %v9931 = vadd.f32 %v2015, %v9930
        %v9932 = vpop.f32.mrb[0].mxu0
        %v9933 = vadd.f32 %v2019, %v9932
        %v9934 = vpop.f32.mrb[0].mxu0
        %v9935 = vpop.f32.mrb[0].mxu0
        %9936 = vdwg.mxu0
        %9937 = vmatprep.subr.bf16.mxu0 %v6348
        %9938 = vmatpush1.bf16.msra.mxu0 %v6347
        %9939 = vmatprep.subr.bf16.mxu0 %v6357
        %9940 = vmatpush1.bf16.msra.mxu0 %v6356
        %9941 = vmatprep.subr.bf16.mxu0 %v6366
        %9942 = vmatpush1.bf16.msra.mxu0 %v6365
        %9943 = vmatprep.subr.bf16.mxu0 %v6375
        %9944 = vmatpush1.bf16.msra.mxu0 %v6374
        %9945 = vmatprep.subr.bf16.mxu0 %v6384
        %9946 = vmatpush1.bf16.msra.mxu0 %v6383
        %9947 = vmatprep.subr.bf16.mxu0 %v6393
        %9948 = vmatpush1.bf16.msra.mxu0 %v6392
        %9949 = vmatprep.subr.bf16.mxu0 %v6402
        %9950 = vmatpush1.bf16.msra.mxu0 %v6401
        %9951 = vmatprep.subr.bf16.mxu0 %v6411
        %9952 = vmatpush1.bf16.msra.mxu0 %v6410
        %9953 = vmatprep.subr.bf16.mxu0 %v6420
        %9954 = vmatpush1.bf16.msra.mxu0 %v6419
        %9955 = vmatprep.subr.bf16.mxu0 %v6429
        %9956 = vmatpush1.bf16.msra.mxu0 %v6428
        %9957 = vmatprep.subr.bf16.mxu0 %v6438
        %9958 = vmatpush1.bf16.msra.mxu0 %v6437
        %9959 = vmatprep.subr.bf16.mxu0 %v6447
        %9960 = vmatpush1.bf16.msra.mxu0 %v6446
        %9961 = vmatprep.subr.bf16.mxu0 %v6456
        %9962 = vmatpush1.bf16.msra.mxu0 %v6455
        %9963 = vmatprep.subr.bf16.mxu0 %v6465
        %9964 = vmatpush1.bf16.msra.mxu0 %v6464
        %9965 = vmatprep.subr.bf16.mxu0 %v6474
        %9966 = vmatpush1.bf16.msra.mxu0 %v6473
        %9967 = vmatprep.subr.bf16.mxu0 %v6483
        %9968 = vmatpush1.bf16.msra.mxu0 %v6482
        %9969 = vmatprep.mubr.bf16.mxu0 %v2074
        %9970 = vmatmul.mubr.bf16.gmra.mrb[0].mxu0 %v2072
        %v9971 = vpop.f32.mrb[0].mxu0
        %v9972 = vadd.f32 %v9931, %v9971
        %v9973 = vpop.f32.mrb[0].mxu0
        %v9974 = vadd.f32 %v9933, %v9973
        %v9975 = vpop.f32.mrb[0].mxu0
        %v9976 = vpop.f32.mrb[0].mxu0
        %9977 = vdwg.mxu0
        %9978 = vmatprep.subr.bf16.mxu0 %v6492
        %9979 = vmatpush1.bf16.msra.mxu0 %v6491
        %9980 = vmatprep.subr.bf16.mxu0 %v6501
        %9981 = vmatpush1.bf16.msra.mxu0 %v6500
        %9982 = vmatprep.subr.bf16.mxu0 %v6510
        %9983 = vmatpush1.bf16.msra.mxu0 %v6509
        %9984 = vmatprep.subr.bf16.mxu0 %v6519
        %9985 = vmatpush1.bf16.msra.mxu0 %v6518
        %9986 = vmatprep.subr.bf16.mxu0 %v6528
        %9987 = vmatpush1.bf16.msra.mxu0 %v6527
        %9988 = vmatprep.subr.bf16.mxu0 %v6537
        %9989 = vmatpush1.bf16.msra.mxu0 %v6536
        %9990 = vmatprep.subr.bf16.mxu0 %v6546
        %9991 = vmatpush1.bf16.msra.mxu0 %v6545
        %9992 = vmatprep.subr.bf16.mxu0 %v6555
        %9993 = vmatpush1.bf16.msra.mxu0 %v6554
        %9994 = vmatprep.subr.bf16.mxu0 %v6564
        %9995 = vmatpush1.bf16.msra.mxu0 %v6563
        %9996 = vmatprep.subr.bf16.mxu0 %v6573
        %9997 = vmatpush1.bf16.msra.mxu0 %v6572
        %9998 = vmatprep.subr.bf16.mxu0 %v6582
        %9999 = vmatpush1.bf16.msra.mxu0 %v6581
        %10000 = vmatprep.subr.bf16.mxu0 %v6591
        %10001 = vmatpush1.bf16.msra.mxu0 %v6590
        %10002 = vmatprep.subr.bf16.mxu0 %v6600
        %10003 = vmatpush1.bf16.msra.mxu0 %v6599
        %10004 = vmatprep.subr.bf16.mxu0 %v6609
        %10005 = vmatpush1.bf16.msra.mxu0 %v6608
        %10006 = vmatprep.subr.bf16.mxu0 %v6618
        %10007 = vmatpush1.bf16.msra.mxu0 %v6617
        %10008 = vmatprep.subr.bf16.mxu0 %v6627
        %10009 = vmatpush1.bf16.msra.mxu0 %v6626
        %10010 = vmatprep.mubr.bf16.mxu0 %v2071
        %10011 = vmatmul.mubr.bf16.gmra.mrb[0].mxu0 %v2057
        %v10012 = vpop.f32.mrb[0].mxu0
        %v10013 = vadd.f32 %v9972, %v10012
        %v10014 = vpop.f32.mrb[0].mxu0
        %v10015 = vadd.f32 %v9974, %v10014
        %v10016 = vpop.f32.mrb[0].mxu0
        %v10017 = vpop.f32.mrb[0].mxu0
        %10018 = vdwg.mxu0
        %10019 = vmatprep.subr.bf16.mxu0 %v6636
        %10020 = vmatpush1.bf16.msra.mxu0 %v6635
        %10021 = vmatprep.subr.bf16.mxu0 %v6645
        %10022 = vmatpush1.bf16.msra.mxu0 %v6644
        %10023 = vmatprep.subr.bf16.mxu0 %v6654
        %10024 = vmatpush1.bf16.msra.mxu0 %v6653
        %10025 = vmatprep.subr.bf16.mxu0 %v6663
        %10026 = vmatpush1.bf16.msra.mxu0 %v6662
        %10027 = vmatprep.subr.bf16.mxu0 %v6672
        %10028 = vmatpush1.bf16.msra.mxu0 %v6671
        %10029 = vmatprep.subr.bf16.mxu0 %v6681
        %10030 = vmatpush1.bf16.msra.mxu0 %v6680
        %10031 = vmatprep.subr.bf16.mxu0 %v6690
        %10032 = vmatpush1.bf16.msra.mxu0 %v6689
        %10033 = vmatprep.subr.bf16.mxu0 %v6699
        %10034 = vmatpush1.bf16.msra.mxu0 %v6698
        %10035 = vmatprep.subr.bf16.mxu0 %v6708
        %10036 = vmatpush1.bf16.msra.mxu0 %v6707
        %10037 = vmatprep.subr.bf16.mxu0 %v6717
        %10038 = vmatpush1.bf16.msra.mxu0 %v6716
        %10039 = vmatprep.subr.bf16.mxu0 %v6726
        %10040 = vmatpush1.bf16.msra.mxu0 %v6725
        %10041 = vmatprep.subr.bf16.mxu0 %v6735
        %10042 = vmatpush1.bf16.msra.mxu0 %v6734
        %10043 = vmatprep.subr.bf16.mxu0 %v6744
        %10044 = vmatpush1.bf16.msra.mxu0 %v6743
        %10045 = vmatprep.subr.bf16.mxu0 %v6753
        %10046 = vmatpush1.bf16.msra.mxu0 %v6752
        %10047 = vmatprep.subr.bf16.mxu0 %v6762
        %10048 = vmatpush1.bf16.msra.mxu0 %v6761
        %10049 = vmatprep.subr.bf16.mxu0 %v6771
        %10050 = vmatpush1.bf16.msra.mxu0 %v6770
        %10051 = vmatprep.mubr.bf16.mxu0 %v2075
        %10052 = vmatmul.mubr.bf16.gmra.mrb[0].mxu0 %v2073
        %v10053 = vpop.f32.mrb[0].mxu0
        %v10054 = vadd.f32 %v10013, %v10053
        %v10055 = vpop.f32.mrb[0].mxu0
        %v10056 = vadd.f32 %v10015, %v10055
        %v10057 = vpop.f32.mrb[0].mxu0
        %v10058 = vpop.f32.mrb[0].mxu0
        %10059 = vdwg.mxu0
        %10060 = vmatprep.subr.bf16.mxu0 %v6780
        %10061 = vmatpush1.bf16.msra.mxu0 %v6779
        %10062 = vmatprep.subr.bf16.mxu0 %v6789
        %10063 = vmatpush1.bf16.msra.mxu0 %v6788
        %10064 = vmatprep.subr.bf16.mxu0 %v6798
        %10065 = vmatpush1.bf16.msra.mxu0 %v6797
        %10066 = vmatprep.subr.bf16.mxu0 %v6807
        %10067 = vmatpush1.bf16.msra.mxu0 %v6806
        %10068 = vmatprep.subr.bf16.mxu0 %v6816
        %10069 = vmatpush1.bf16.msra.mxu0 %v6815
        %10070 = vmatprep.subr.bf16.mxu0 %v6825
        %10071 = vmatpush1.bf16.msra.mxu0 %v6824
        %10072 = vmatprep.subr.bf16.mxu0 %v6834
        %10073 = vmatpush1.bf16.msra.mxu0 %v6833
        %10074 = vmatprep.subr.bf16.mxu0 %v6843
        %10075 = vmatpush1.bf16.msra.mxu0 %v6842
        %10076 = vmatprep.subr.bf16.mxu0 %v6852
        %10077 = vmatpush1.bf16.msra.mxu0 %v6851
        %10078 = vmatprep.subr.bf16.mxu0 %v6861
        %10079 = vmatpush1.bf16.msra.mxu0 %v6860
        %10080 = vmatprep.subr.bf16.mxu0 %v6870
        %10081 = vmatpush1.bf16.msra.mxu0 %v6869
        %10082 = vmatprep.subr.bf16.mxu0 %v6879
        %10083 = vmatpush1.bf16.msra.mxu0 %v6878
        %10084 = vmatprep.subr.bf16.mxu0 %v6888
        %10085 = vmatpush1.bf16.msra.mxu0 %v6887
        %10086 = vmatprep.subr.bf16.mxu0 %v6897
        %10087 = vmatpush1.bf16.msra.mxu0 %v6896
        %10088 = vmatprep.subr.bf16.mxu0 %v6906
        %10089 = vmatpush1.bf16.msra.mxu0 %v6905
        %10090 = vmatprep.subr.bf16.mxu0 %v6915
        %10091 = vmatpush1.bf16.msra.mxu0 %v6914
        %10092 = vmatprep.mubr.bf16.mxu0 %v2113
        %10093 = vmatmul.mubr.bf16.gmra.mrb[0].mxu0 %v2099
        %v10094 = vpop.f32.mrb[0].mxu0
        %v10095 = vadd.f32 %v10054, %v10094
        %v10096 = vpop.f32.mrb[0].mxu0
        %v10097 = vadd.f32 %v10056, %v10096
        %v10098 = vpop.f32.mrb[0].mxu0
        %v10099 = vpop.f32.mrb[0].mxu0
        %10100 = vdwg.mxu0
        %10101 = vmatprep.subr.bf16.mxu0 %v6924
        %10102 = vmatpush1.bf16.msra.mxu0 %v6923
        %10103 = vmatprep.subr.bf16.mxu0 %v6933
        %10104 = vmatpush1.bf16.msra.mxu0 %v6932
        %10105 = vmatprep.subr.bf16.mxu0 %v6942
        %10106 = vmatpush1.bf16.msra.mxu0 %v6941
        %10107 = vmatprep.subr.bf16.mxu0 %v6951
        %10108 = vmatpush1.bf16.msra.mxu0 %v6950
        %10109 = vmatprep.subr.bf16.mxu0 %v6960
        %10110 = vmatpush1.bf16.msra.mxu0 %v6959
        %10111 = vmatprep.subr.bf16.mxu0 %v6969
        %10112 = vmatpush1.bf16.msra.mxu0 %v6968
        %10113 = vmatprep.subr.bf16.mxu0 %v6978
        %10114 = vmatpush1.bf16.msra.mxu0 %v6977
        %10115 = vmatprep.subr.bf16.mxu0 %v6987
        %10116 = vmatpush1.bf16.msra.mxu0 %v6986
        %10117 = vmatprep.subr.bf16.mxu0 %v6996
        %10118 = vmatpush1.bf16.msra.mxu0 %v6995
        %10119 = vmatprep.subr.bf16.mxu0 %v7005
        %10120 = vmatpush1.bf16.msra.mxu0 %v7004
        %10121 = vmatprep.subr.bf16.mxu0 %v7014
        %10122 = vmatpush1.bf16.msra.mxu0 %v7013
        %10123 = vmatprep.subr.bf16.mxu0 %v7023
        %10124 = vmatpush1.bf16.msra.mxu0 %v7022
        %10125 = vmatprep.subr.bf16.mxu0 %v7032
        %10126 = vmatpush1.bf16.msra.mxu0 %v7031
        %10127 = vmatprep.subr.bf16.mxu0 %v7041
        %10128 = vmatpush1.bf16.msra.mxu0 %v7040
        %10129 = vmatprep.subr.bf16.mxu0 %v7050
        %10130 = vmatpush1.bf16.msra.mxu0 %v7049
        %10131 = vmatprep.subr.bf16.mxu0 %v7059
        %10132 = vmatpush1.bf16.msra.mxu0 %v7058
        %10133 = vmatprep.mubr.bf16.mxu0 %v2123
        %10134 = vmatmul.mubr.bf16.gmra.mrb[0].mxu0 %v2121
        %v10135 = vpop.f32.mrb[0].mxu0
        %v10136 = vadd.f32 %v10095, %v10135
        %v10137 = vpop.f32.mrb[0].mxu0
        %v10138 = vadd.f32 %v10097, %v10137
        %v10139 = vpop.f32.mrb[0].mxu0
        %v10140 = vpop.f32.mrb[0].mxu0
        %10141 = vdwg.mxu0
        %10142 = vmatprep.subr.bf16.mxu0 %v7068
        %10143 = vmatpush1.bf16.msra.mxu0 %v7067
        %10144 = vmatprep.subr.bf16.mxu0 %v7077
        %10145 = vmatpush1.bf16.msra.mxu0 %v7076
        %10146 = vmatprep.subr.bf16.mxu0 %v7086
        %10147 = vmatpush1.bf16.msra.mxu0 %v7085
        %10148 = vmatprep.subr.bf16.mxu0 %v7095
        %10149 = vmatpush1.bf16.msra.mxu0 %v7094
        %10150 = vmatprep.subr.bf16.mxu0 %v7104
        %10151 = vmatpush1.bf16.msra.mxu0 %v7103
        %10152 = vmatprep.subr.bf16.mxu0 %v7113
        %10153 = vmatpush1.bf16.msra.mxu0 %v7112
        %10154 = vmatprep.subr.bf16.mxu0 %v7122
        %10155 = vmatpush1.bf16.msra.mxu0 %v7121
        %10156 = vmatprep.subr.bf16.mxu0 %v7131
        %10157 = vmatpush1.bf16.msra.mxu0 %v7130
        %10158 = vmatprep.subr.bf16.mxu0 %v7140
        %10159 = vmatpush1.bf16.msra.mxu0 %v7139
        %10160 = vmatprep.subr.bf16.mxu0 %v7149
        %10161 = vmatpush1.bf16.msra.mxu0 %v7148
        %10162 = vmatprep.subr.bf16.mxu0 %v7158
        %10163 = vmatpush1.bf16.msra.mxu0 %v7157
        %10164 = vmatprep.subr.bf16.mxu0 %v7167
        %10165 = vmatpush1.bf16.msra.mxu0 %v7166
        %10166 = vmatprep.subr.bf16.mxu0 %v7176
        %10167 = vmatpush1.bf16.msra.mxu0 %v7175
        %10168 = vmatprep.subr.bf16.mxu0 %v7185
        %10169 = vmatpush1.bf16.msra.mxu0 %v7184
        %10170 = vmatprep.subr.bf16.mxu0 %v7194
        %10171 = vmatpush1.bf16.msra.mxu0 %v7193
        %10172 = vmatprep.subr.bf16.mxu0 %v7203
        %10173 = vmatpush1.bf16.msra.mxu0 %v7202
        %10174 = vmatprep.mubr.bf16.mxu0 %v2120
        %10175 = vmatmul.mubr.bf16.gmra.mrb[0].mxu0 %v2106
        %v10176 = vpop.f32.mrb[0].mxu0
        %v10177 = vadd.f32 %v10136, %v10176
        %v10178 = vpop.f32.mrb[0].mxu0
        %v10179 = vadd.f32 %v10138, %v10178
        %v10180 = vpop.f32.mrb[0].mxu0
        %v10181 = vpop.f32.mrb[0].mxu0
        %10182 = vdwg.mxu0
        %10183 = vmatprep.subr.bf16.mxu0 %v7212
        %10184 = vmatpush1.bf16.msra.mxu0 %v7211
        %10185 = vmatprep.subr.bf16.mxu0 %v7221
        %10186 = vmatpush1.bf16.msra.mxu0 %v7220
        %10187 = vmatprep.subr.bf16.mxu0 %v7230
        %10188 = vmatpush1.bf16.msra.mxu0 %v7229
        %10189 = vmatprep.subr.bf16.mxu0 %v7239
        %10190 = vmatpush1.bf16.msra.mxu0 %v7238
        %10191 = vmatprep.subr.bf16.mxu0 %v7248
        %10192 = vmatpush1.bf16.msra.mxu0 %v7247
        %10193 = vmatprep.subr.bf16.mxu0 %v7257
        %10194 = vmatpush1.bf16.msra.mxu0 %v7256
        %10195 = vmatprep.subr.bf16.mxu0 %v7266
        %10196 = vmatpush1.bf16.msra.mxu0 %v7265
        %10197 = vmatprep.subr.bf16.mxu0 %v7275
        %10198 = vmatpush1.bf16.msra.mxu0 %v7274
        %10199 = vmatprep.subr.bf16.mxu0 %v7284
        %10200 = vmatpush1.bf16.msra.mxu0 %v7283
        %10201 = vmatprep.subr.bf16.mxu0 %v7293
        %10202 = vmatpush1.bf16.msra.mxu0 %v7292
        %10203 = vmatprep.subr.bf16.mxu0 %v7302
        %10204 = vmatpush1.bf16.msra.mxu0 %v7301
        %10205 = vmatprep.subr.bf16.mxu0 %v7311
        %10206 = vmatpush1.bf16.msra.mxu0 %v7310
        %10207 = vmatprep.subr.bf16.mxu0 %v7320
        %10208 = vmatpush1.bf16.msra.mxu0 %v7319
        %10209 = vmatprep.subr.bf16.mxu0 %v7329
        %10210 = vmatpush1.bf16.msra.mxu0 %v7328
        %10211 = vmatprep.subr.bf16.mxu0 %v7338
        %10212 = vmatpush1.bf16.msra.mxu0 %v7337
        %10213 = vmatprep.subr.bf16.mxu0 %v7347
        %10214 = vmatpush1.bf16.msra.mxu0 %v7346
        %10215 = vmatprep.mubr.bf16.mxu0 %v2124
        %10216 = vmatmul.mubr.bf16.gmra.mrb[0].mxu0 %v2122
        %v10217 = vpop.f32.mrb[0].mxu0
        %v10218 = vadd.f32 %v10177, %v10217
        %v10219 = vpop.f32.mrb[0].mxu0
        %v10220 = vadd.f32 %v10179, %v10219
        %v10221 = vpop.f32.mrb[0].mxu0
        %v10222 = vpop.f32.mrb[0].mxu0
        %10223 = vdwg.mxu0
        %10224 = vmatprep.subr.bf16.mxu0 %v7356
        %10225 = vmatpush1.bf16.msra.mxu0 %v7355
        %10226 = vmatprep.subr.bf16.mxu0 %v7365
        %10227 = vmatpush1.bf16.msra.mxu0 %v7364
        %10228 = vmatprep.subr.bf16.mxu0 %v7374
        %10229 = vmatpush1.bf16.msra.mxu0 %v7373
        %10230 = vmatprep.subr.bf16.mxu0 %v7383
        %10231 = vmatpush1.bf16.msra.mxu0 %v7382
        %10232 = vmatprep.subr.bf16.mxu0 %v7392
        %10233 = vmatpush1.bf16.msra.mxu0 %v7391
        %10234 = vmatprep.subr.bf16.mxu0 %v7401
        %10235 = vmatpush1.bf16.msra.mxu0 %v7400
        %10236 = vmatprep.subr.bf16.mxu0 %v7410
        %10237 = vmatpush1.bf16.msra.mxu0 %v7409
        %10238 = vmatprep.subr.bf16.mxu0 %v7419
        %10239 = vmatpush1.bf16.msra.mxu0 %v7418
        %10240 = vmatprep.subr.bf16.mxu0 %v7428
        %10241 = vmatpush1.bf16.msra.mxu0 %v7427
        %10242 = vmatprep.subr.bf16.mxu0 %v7437
        %10243 = vmatpush1.bf16.msra.mxu0 %v7436
        %10244 = vmatprep.subr.bf16.mxu0 %v7446
        %10245 = vmatpush1.bf16.msra.mxu0 %v7445
        %10246 = vmatprep.subr.bf16.mxu0 %v7455
        %10247 = vmatpush1.bf16.msra.mxu0 %v7454
        %10248 = vmatprep.subr.bf16.mxu0 %v7464
        %10249 = vmatpush1.bf16.msra.mxu0 %v7463
        %10250 = vmatprep.subr.bf16.mxu0 %v7473
        %10251 = vmatpush1.bf16.msra.mxu0 %v7472
        %10252 = vmatprep.subr.bf16.mxu0 %v7482
        %10253 = vmatpush1.bf16.msra.mxu0 %v7481
        %10254 = vmatprep.subr.bf16.mxu0 %v7491
        %10255 = vmatpush1.bf16.msra.mxu0 %v7490
        %10256 = vmatprep.mubr.bf16.mxu0 %v2146
        %10257 = vmatmul.mubr.bf16.gmra.mrb[0].mxu0 %v2139
        %v10258 = vpop.f32.mrb[0].mxu0
        %v10259 = vadd.f32 %v10218, %v10258
        %v10260 = vpop.f32.mrb[0].mxu0
        %v10261 = vadd.f32 %v10220, %v10260
        %v10262 = vpop.f32.mrb[0].mxu0
        %v10263 = vpop.f32.mrb[0].mxu0
        %10264 = vdwg.mxu0
        %10265 = vmatprep.subr.bf16.mxu0 0
        %10266 = vmatpush1.bf16.msra.mxu0 %v6205
        %10267 = vmatprep.subr.bf16.mxu0 0
        %10268 = vmatpush1.bf16.msra.mxu0 %v6214
        %10269 = vmatprep.subr.bf16.mxu0 0
        %10270 = vmatpush1.bf16.msra.mxu0 %v6223
        %10271 = vmatprep.subr.bf16.mxu0 0
        %10272 = vmatpush1.bf16.msra.mxu0 %v6232
        %10273 = vmatprep.subr.bf16.mxu0 0
        %10274 = vmatpush1.bf16.msra.mxu0 %v6241
        %10275 = vmatprep.subr.bf16.mxu0 0
        %10276 = vmatpush1.bf16.msra.mxu0 %v6250
        %10277 = vmatprep.subr.bf16.mxu0 0
        %10278 = vmatpush1.bf16.msra.mxu0 %v6259
        %10279 = vmatprep.subr.bf16.mxu0 0
        %10280 = vmatpush1.bf16.msra.mxu0 %v6268
        %10281 = vmatprep.subr.bf16.mxu0 0
        %10282 = vmatpush1.bf16.msra.mxu0 %v6277
        %10283 = vmatprep.subr.bf16.mxu0 0
        %10284 = vmatpush1.bf16.msra.mxu0 %v6286
        %10285 = vmatprep.subr.bf16.mxu0 0
        %10286 = vmatpush1.bf16.msra.mxu0 %v6295
        %10287 = vmatprep.subr.bf16.mxu0 0
        %10288 = vmatpush1.bf16.msra.mxu0 %v6304
        %10289 = vmatprep.subr.bf16.mxu0 0
        %10290 = vmatpush1.bf16.msra.mxu0 %v6313
        %10291 = vmatprep.subr.bf16.mxu0 0
        %10292 = vmatpush1.bf16.msra.mxu0 %v6322
        %10293 = vmatprep.subr.bf16.mxu0 0
        %10294 = vmatpush1.bf16.msra.mxu0 %v6331
        %10295 = vmatprep.subr.bf16.mxu0 0
        %10296 = vmatpush1.bf16.msra.mxu0 %v6340
        %10297 = vmatprep.mubr.bf16.mxu0 %v2064
        %10298 = vmatmul.mubr.bf16.gmra.mrb[0].mxu0 %v2050
        %v10299 = vpop.f32.mrb[0].mxu0
        %v10300 = vadd.f32 %v2023, %v10299
        %v10301 = vpop.f32.mrb[0].mxu0
        %v10302 = vpop.f32.mrb[0].mxu0
        %v10303 = vpop.f32.mrb[0].mxu0
        %10304 = vdwg.mxu0
        %10305 = vmatprep.subr.bf16.mxu0 0
        %10306 = vmatpush1.bf16.msra.mxu0 %v6349
        %10307 = vmatprep.subr.bf16.mxu0 0
        %10308 = vmatpush1.bf16.msra.mxu0 %v6358
        %10309 = vmatprep.subr.bf16.mxu0 0
        %10310 = vmatpush1.bf16.msra.mxu0 %v6367
        %10311 = vmatprep.subr.bf16.mxu0 0
        %10312 = vmatpush1.bf16.msra.mxu0 %v6376
        %10313 = vmatprep.subr.bf16.mxu0 0
        %10314 = vmatpush1.bf16.msra.mxu0 %v6385
        %10315 = vmatprep.subr.bf16.mxu0 0
        %10316 = vmatpush1.bf16.msra.mxu0 %v6394
        %10317 = vmatprep.subr.bf16.mxu0 0
        %10318 = vmatpush1.bf16.msra.mxu0 %v6403
        %10319 = vmatprep.subr.bf16.mxu0 0
        %10320 = vmatpush1.bf16.msra.mxu0 %v6412
        %10321 = vmatprep.subr.bf16.mxu0 0
        %10322 = vmatpush1.bf16.msra.mxu0 %v6421
        %10323 = vmatprep.subr.bf16.mxu0 0
        %10324 = vmatpush1.bf16.msra.mxu0 %v6430
        %10325 = vmatprep.subr.bf16.mxu0 0
        %10326 = vmatpush1.bf16.msra.mxu0 %v6439
        %10327 = vmatprep.subr.bf16.mxu0 0
        %10328 = vmatpush1.bf16.msra.mxu0 %v6448
        %10329 = vmatprep.subr.bf16.mxu0 0
        %10330 = vmatpush1.bf16.msra.mxu0 %v6457
        %10331 = vmatprep.subr.bf16.mxu0 0
        %10332 = vmatpush1.bf16.msra.mxu0 %v6466
        %10333 = vmatprep.subr.bf16.mxu0 0
        %10334 = vmatpush1.bf16.msra.mxu0 %v6475
        %10335 = vmatprep.subr.bf16.mxu0 0
        %10336 = vmatpush1.bf16.msra.mxu0 %v6484
        %10337 = vmatprep.mubr.bf16.mxu0 %v2074
        %10338 = vmatmul.mubr.bf16.gmra.mrb[0].mxu0 %v2072
        %v10339 = vpop.f32.mrb[0].mxu0
        %v10340 = vadd.f32 %v10300, %v10339
        %v10341 = vpop.f32.mrb[0].mxu0
        %v10342 = vpop.f32.mrb[0].mxu0
        %v10343 = vpop.f32.mrb[0].mxu0
        %10344 = vdwg.mxu0
        %10345 = vmatprep.subr.bf16.mxu0 0
        %10346 = vmatpush1.bf16.msra.mxu0 %v6493
        %10347 = vmatprep.subr.bf16.mxu0 0
        %10348 = vmatpush1.bf16.msra.mxu0 %v6502
        %10349 = vmatprep.subr.bf16.mxu0 0
        %10350 = vmatpush1.bf16.msra.mxu0 %v6511
        %10351 = vmatprep.subr.bf16.mxu0 0
        %10352 = vmatpush1.bf16.msra.mxu0 %v6520
        %10353 = vmatprep.subr.bf16.mxu0 0
        %10354 = vmatpush1.bf16.msra.mxu0 %v6529
        %10355 = vmatprep.subr.bf16.mxu0 0
        %10356 = vmatpush1.bf16.msra.mxu0 %v6538
        %10357 = vmatprep.subr.bf16.mxu0 0
        %10358 = vmatpush1.bf16.msra.mxu0 %v6547
        %10359 = vmatprep.subr.bf16.mxu0 0
        %10360 = vmatpush1.bf16.msra.mxu0 %v6556
        %10361 = vmatprep.subr.bf16.mxu0 0
        %10362 = vmatpush1.bf16.msra.mxu0 %v6565
        %10363 = vmatprep.subr.bf16.mxu0 0
        %10364 = vmatpush1.bf16.msra.mxu0 %v6574
        %10365 = vmatprep.subr.bf16.mxu0 0
        %10366 = vmatpush1.bf16.msra.mxu0 %v6583
        %10367 = vmatprep.subr.bf16.mxu0 0
        %10368 = vmatpush1.bf16.msra.mxu0 %v6592
        %10369 = vmatprep.subr.bf16.mxu0 0
        %10370 = vmatpush1.bf16.msra.mxu0 %v6601
        %10371 = vmatprep.subr.bf16.mxu0 0
        %10372 = vmatpush1.bf16.msra.mxu0 %v6610
        %10373 = vmatprep.subr.bf16.mxu0 0
        %10374 = vmatpush1.bf16.msra.mxu0 %v6619
        %10375 = vmatprep.subr.bf16.mxu0 0
        %10376 = vmatpush1.bf16.msra.mxu0 %v6628
        %10377 = vmatprep.mubr.bf16.mxu0 %v2071
        %10378 = vmatmul.mubr.bf16.gmra.mrb[0].mxu0 %v2057
        %v10379 = vpop.f32.mrb[0].mxu0
        %v10380 = vadd.f32 %v10340, %v10379
        %v10381 = vpop.f32.mrb[0].mxu0
        %v10382 = vpop.f32.mrb[0].mxu0
        %v10383 = vpop.f32.mrb[0].mxu0
        %10384 = vdwg.mxu0
        %10385 = vmatprep.subr.bf16.mxu0 0
        %10386 = vmatpush1.bf16.msra.mxu0 %v6637
        %10387 = vmatprep.subr.bf16.mxu0 0
        %10388 = vmatpush1.bf16.msra.mxu0 %v6646
        %10389 = vmatprep.subr.bf16.mxu0 0
        %10390 = vmatpush1.bf16.msra.mxu0 %v6655
        %10391 = vmatprep.subr.bf16.mxu0 0
        %10392 = vmatpush1.bf16.msra.mxu0 %v6664
        %10393 = vmatprep.subr.bf16.mxu0 0
        %10394 = vmatpush1.bf16.msra.mxu0 %v6673
        %10395 = vmatprep.subr.bf16.mxu0 0
        %10396 = vmatpush1.bf16.msra.mxu0 %v6682
        %10397 = vmatprep.subr.bf16.mxu0 0
        %10398 = vmatpush1.bf16.msra.mxu0 %v6691
        %10399 = vmatprep.subr.bf16.mxu0 0
        %10400 = vmatpush1.bf16.msra.mxu0 %v6700
        %10401 = vmatprep.subr.bf16.mxu0 0
        %10402 = vmatpush1.bf16.msra.mxu0 %v6709
        %10403 = vmatprep.subr.bf16.mxu0 0
        %10404 = vmatpush1.bf16.msra.mxu0 %v6718
        %10405 = vmatprep.subr.bf16.mxu0 0
        %10406 = vmatpush1.bf16.msra.mxu0 %v6727
        %10407 = vmatprep.subr.bf16.mxu0 0
        %10408 = vmatpush1.bf16.msra.mxu0 %v6736
        %10409 = vmatprep.subr.bf16.mxu0 0
        %10410 = vmatpush1.bf16.msra.mxu0 %v6745
        %10411 = vmatprep.subr.bf16.mxu0 0
        %10412 = vmatpush1.bf16.msra.mxu0 %v6754
        %10413 = vmatprep.subr.bf16.mxu0 0
        %10414 = vmatpush1.bf16.msra.mxu0 %v6763
        %10415 = vmatprep.subr.bf16.mxu0 0
        %10416 = vmatpush1.bf16.msra.mxu0 %v6772
        %10417 = vmatprep.mubr.bf16.mxu0 %v2075
        %10418 = vmatmul.mubr.bf16.gmra.mrb[0].mxu0 %v2073
        %v10419 = vpop.f32.mrb[0].mxu0
        %v10420 = vadd.f32 %v10380, %v10419
        %v10421 = vpop.f32.mrb[0].mxu0
        %v10422 = vpop.f32.mrb[0].mxu0
        %v10423 = vpop.f32.mrb[0].mxu0
        %10424 = vdwg.mxu0
        %10425 = vmatprep.subr.bf16.mxu0 0
        %10426 = vmatpush1.bf16.msra.mxu0 %v6781
        %10427 = vmatprep.subr.bf16.mxu0 0
        %10428 = vmatpush1.bf16.msra.mxu0 %v6790
        %10429 = vmatprep.subr.bf16.mxu0 0
        %10430 = vmatpush1.bf16.msra.mxu0 %v6799
        %10431 = vmatprep.subr.bf16.mxu0 0
        %10432 = vmatpush1.bf16.msra.mxu0 %v6808
        %10433 = vmatprep.subr.bf16.mxu0 0
        %10434 = vmatpush1.bf16.msra.mxu0 %v6817
        %10435 = vmatprep.subr.bf16.mxu0 0
        %10436 = vmatpush1.bf16.msra.mxu0 %v6826
        %10437 = vmatprep.subr.bf16.mxu0 0
        %10438 = vmatpush1.bf16.msra.mxu0 %v6835
        %10439 = vmatprep.subr.bf16.mxu0 0
        %10440 = vmatpush1.bf16.msra.mxu0 %v6844
        %10441 = vmatprep.subr.bf16.mxu0 0
        %10442 = vmatpush1.bf16.msra.mxu0 %v6853
        %10443 = vmatprep.subr.bf16.mxu0 0
        %10444 = vmatpush1.bf16.msra.mxu0 %v6862
        %10445 = vmatprep.subr.bf16.mxu0 0
        %10446 = vmatpush1.bf16.msra.mxu0 %v6871
        %10447 = vmatprep.subr.bf16.mxu0 0
        %10448 = vmatpush1.bf16.msra.mxu0 %v6880
        %10449 = vmatprep.subr.bf16.mxu0 0
        %10450 = vmatpush1.bf16.msra.mxu0 %v6889
        %10451 = vmatprep.subr.bf16.mxu0 0
        %10452 = vmatpush1.bf16.msra.mxu0 %v6898
        %10453 = vmatprep.subr.bf16.mxu0 0
        %10454 = vmatpush1.bf16.msra.mxu0 %v6907
        %10455 = vmatprep.subr.bf16.mxu0 0
        %10456 = vmatpush1.bf16.msra.mxu0 %v6916
        %10457 = vmatprep.mubr.bf16.mxu0 %v2113
        %10458 = vmatmul.mubr.bf16.gmra.mrb[0].mxu0 %v2099
        %v10459 = vpop.f32.mrb[0].mxu0
        %v10460 = vadd.f32 %v10420, %v10459
        %v10461 = vpop.f32.mrb[0].mxu0
        %v10462 = vpop.f32.mrb[0].mxu0
        %v10463 = vpop.f32.mrb[0].mxu0
        %10464 = vdwg.mxu0
        %10465 = vmatprep.subr.bf16.mxu0 0
        %10466 = vmatpush1.bf16.msra.mxu0 %v6925
        %10467 = vmatprep.subr.bf16.mxu0 0
        %10468 = vmatpush1.bf16.msra.mxu0 %v6934
        %10469 = vmatprep.subr.bf16.mxu0 0
        %10470 = vmatpush1.bf16.msra.mxu0 %v6943
        %10471 = vmatprep.subr.bf16.mxu0 0
        %10472 = vmatpush1.bf16.msra.mxu0 %v6952
        %10473 = vmatprep.subr.bf16.mxu0 0
        %10474 = vmatpush1.bf16.msra.mxu0 %v6961
        %10475 = vmatprep.subr.bf16.mxu0 0
        %10476 = vmatpush1.bf16.msra.mxu0 %v6970
        %10477 = vmatprep.subr.bf16.mxu0 0
        %10478 = vmatpush1.bf16.msra.mxu0 %v6979
        %10479 = vmatprep.subr.bf16.mxu0 0
        %10480 = vmatpush1.bf16.msra.mxu0 %v6988
        %10481 = vmatprep.subr.bf16.mxu0 0
        %10482 = vmatpush1.bf16.msra.mxu0 %v6997
        %10483 = vmatprep.subr.bf16.mxu0 0
        %10484 = vmatpush1.bf16.msra.mxu0 %v7006
        %10485 = vmatprep.subr.bf16.mxu0 0
        %10486 = vmatpush1.bf16.msra.mxu0 %v7015
        %10487 = vmatprep.subr.bf16.mxu0 0
        %10488 = vmatpush1.bf16.msra.mxu0 %v7024
        %10489 = vmatprep.subr.bf16.mxu0 0
        %10490 = vmatpush1.bf16.msra.mxu0 %v7033
        %10491 = vmatprep.subr.bf16.mxu0 0
        %10492 = vmatpush1.bf16.msra.mxu0 %v7042
        %10493 = vmatprep.subr.bf16.mxu0 0
        %10494 = vmatpush1.bf16.msra.mxu0 %v7051
        %10495 = vmatprep.subr.bf16.mxu0 0
        %10496 = vmatpush1.bf16.msra.mxu0 %v7060
        %10497 = vmatprep.mubr.bf16.mxu0 %v2123
        %10498 = vmatmul.mubr.bf16.gmra.mrb[0].mxu0 %v2121
        %v10499 = vpop.f32.mrb[0].mxu0
        %v10500 = vadd.f32 %v10460, %v10499
        %v10501 = vpop.f32.mrb[0].mxu0
        %v10502 = vpop.f32.mrb[0].mxu0
        %v10503 = vpop.f32.mrb[0].mxu0
        %10504 = vdwg.mxu0
        %10505 = vmatprep.subr.bf16.mxu0 0
        %10506 = vmatpush1.bf16.msra.mxu0 %v7069
        %10507 = vmatprep.subr.bf16.mxu0 0
        %10508 = vmatpush1.bf16.msra.mxu0 %v7078
        %10509 = vmatprep.subr.bf16.mxu0 0
        %10510 = vmatpush1.bf16.msra.mxu0 %v7087
        %10511 = vmatprep.subr.bf16.mxu0 0
        %10512 = vmatpush1.bf16.msra.mxu0 %v7096
        %10513 = vmatprep.subr.bf16.mxu0 0
        %10514 = vmatpush1.bf16.msra.mxu0 %v7105
        %10515 = vmatprep.subr.bf16.mxu0 0
        %10516 = vmatpush1.bf16.msra.mxu0 %v7114
        %10517 = vmatprep.subr.bf16.mxu0 0
        %10518 = vmatpush1.bf16.msra.mxu0 %v7123
        %10519 = vmatprep.subr.bf16.mxu0 0
        %10520 = vmatpush1.bf16.msra.mxu0 %v7132
        %10521 = vmatprep.subr.bf16.mxu0 0
        %10522 = vmatpush1.bf16.msra.mxu0 %v7141
        %10523 = vmatprep.subr.bf16.mxu0 0
        %10524 = vmatpush1.bf16.msra.mxu0 %v7150
        %10525 = vmatprep.subr.bf16.mxu0 0
        %10526 = vmatpush1.bf16.msra.mxu0 %v7159
        %10527 = vmatprep.subr.bf16.mxu0 0
        %10528 = vmatpush1.bf16.msra.mxu0 %v7168
        %10529 = vmatprep.subr.bf16.mxu0 0
        %10530 = vmatpush1.bf16.msra.mxu0 %v7177
        %10531 = vmatprep.subr.bf16.mxu0 0
        %10532 = vmatpush1.bf16.msra.mxu0 %v7186
        %10533 = vmatprep.subr.bf16.mxu0 0
        %10534 = vmatpush1.bf16.msra.mxu0 %v7195
        %10535 = vmatprep.subr.bf16.mxu0 0
        %10536 = vmatpush1.bf16.msra.mxu0 %v7204
        %10537 = vmatprep.mubr.bf16.mxu0 %v2120
        %10538 = vmatmul.mubr.bf16.gmra.mrb[0].mxu0 %v2106
        %v10539 = vpop.f32.mrb[0].mxu0
        %v10540 = vadd.f32 %v10500, %v10539
        %v10541 = vpop.f32.mrb[0].mxu0
        %v10542 = vpop.f32.mrb[0].mxu0
        %v10543 = vpop.f32.mrb[0].mxu0
        %10544 = vdwg.mxu0
        %10545 = vmatprep.subr.bf16.mxu0 0
        %10546 = vmatpush1.bf16.msra.mxu0 %v7213
        %10547 = vmatprep.subr.bf16.mxu0 0
        %10548 = vmatpush1.bf16.msra.mxu0 %v7222
        %10549 = vmatprep.subr.bf16.mxu0 0
        %10550 = vmatpush1.bf16.msra.mxu0 %v7231
        %10551 = vmatprep.subr.bf16.mxu0 0
        %10552 = vmatpush1.bf16.msra.mxu0 %v7240
        %10553 = vmatprep.subr.bf16.mxu0 0
        %10554 = vmatpush1.bf16.msra.mxu0 %v7249
        %10555 = vmatprep.subr.bf16.mxu0 0
        %10556 = vmatpush1.bf16.msra.mxu0 %v7258
        %10557 = vmatprep.subr.bf16.mxu0 0
        %10558 = vmatpush1.bf16.msra.mxu0 %v7267
        %10559 = vmatprep.subr.bf16.mxu0 0
        %10560 = vmatpush1.bf16.msra.mxu0 %v7276
        %10561 = vmatprep.subr.bf16.mxu0 0
        %10562 = vmatpush1.bf16.msra.mxu0 %v7285
        %10563 = vmatprep.subr.bf16.mxu0 0
        %10564 = vmatpush1.bf16.msra.mxu0 %v7294
        %10565 = vmatprep.subr.bf16.mxu0 0
        %10566 = vmatpush1.bf16.msra.mxu0 %v7303
        %10567 = vmatprep.subr.bf16.mxu0 0
        %10568 = vmatpush1.bf16.msra.mxu0 %v7312
        %10569 = vmatprep.subr.bf16.mxu0 0
        %10570 = vmatpush1.bf16.msra.mxu0 %v7321
        %10571 = vmatprep.subr.bf16.mxu0 0
        %10572 = vmatpush1.bf16.msra.mxu0 %v7330
        %10573 = vmatprep.subr.bf16.mxu0 0
        %10574 = vmatpush1.bf16.msra.mxu0 %v7339
        %10575 = vmatprep.subr.bf16.mxu0 0
        %10576 = vmatpush1.bf16.msra.mxu0 %v7348
        %10577 = vmatprep.mubr.bf16.mxu0 %v2124
        %10578 = vmatmul.mubr.bf16.gmra.mrb[0].mxu0 %v2122
        %v10579 = vpop.f32.mrb[0].mxu0
        %v10580 = vadd.f32 %v10540, %v10579
        %v10581 = vpop.f32.mrb[0].mxu0
        %v10582 = vpop.f32.mrb[0].mxu0
        %v10583 = vpop.f32.mrb[0].mxu0
        %10584 = vdwg.mxu0
        %10585 = vmatprep.subr.bf16.mxu0 0
        %10586 = vmatpush1.bf16.msra.mxu0 %v7357
        %10587 = vmatprep.subr.bf16.mxu0 0
        %10588 = vmatpush1.bf16.msra.mxu0 %v7366
        %10589 = vmatprep.subr.bf16.mxu0 0
        %10590 = vmatpush1.bf16.msra.mxu0 %v7375
        %10591 = vmatprep.subr.bf16.mxu0 0
        %10592 = vmatpush1.bf16.msra.mxu0 %v7384
        %10593 = vmatprep.subr.bf16.mxu0 0
        %10594 = vmatpush1.bf16.msra.mxu0 %v7393
        %10595 = vmatprep.subr.bf16.mxu0 0
        %10596 = vmatpush1.bf16.msra.mxu0 %v7402
        %10597 = vmatprep.subr.bf16.mxu0 0
        %10598 = vmatpush1.bf16.msra.mxu0 %v7411
        %10599 = vmatprep.subr.bf16.mxu0 0
        %10600 = vmatpush1.bf16.msra.mxu0 %v7420
        %10601 = vmatprep.subr.bf16.mxu0 0
        %10602 = vmatpush1.bf16.msra.mxu0 %v7429
        %10603 = vmatprep.subr.bf16.mxu0 0
        %10604 = vmatpush1.bf16.msra.mxu0 %v7438
        %10605 = vmatprep.subr.bf16.mxu0 0
        %10606 = vmatpush1.bf16.msra.mxu0 %v7447
        %10607 = vmatprep.subr.bf16.mxu0 0
        %10608 = vmatpush1.bf16.msra.mxu0 %v7456
        %10609 = vmatprep.subr.bf16.mxu0 0
        %10610 = vmatpush1.bf16.msra.mxu0 %v7465
        %10611 = vmatprep.subr.bf16.mxu0 0
        %10612 = vmatpush1.bf16.msra.mxu0 %v7474
        %10613 = vmatprep.subr.bf16.mxu0 0
        %10614 = vmatpush1.bf16.msra.mxu0 %v7483
        %10615 = vmatprep.subr.bf16.mxu0 0
        %10616 = vmatpush1.bf16.msra.mxu0 %v7492
        %10617 = vmatprep.mubr.bf16.mxu0 %v2146
        %10618 = vmatmul.mubr.bf16.gmra.mrb[0].mxu0 %v2139
        %v10619 = vpop.f32.mrb[0].mxu0
        %v10620 = vadd.f32 %v10580, %v10619
        %v10621 = vpop.f32.mrb[0].mxu0
        %v10622 = vpop.f32.mrb[0].mxu0
        %v10623 = vpop.f32.mrb[0].mxu0
        %10624 = vdwg.mxu0
        %s10625 = smul.u32 %s22, 1152
        %p10626 = scmp.lt.s32.totalorder %s21, 2
        // Predicated region
        $region41: #{neural_network_forward.1} parent=31 // pred_check
          %p10627 = pneg %p10626
        $region42: #{neural_network_forward.1} parent=31 // pred_check_branch
          %10629 = sbr.rel (%p10627) target = $region44
        $region43: #{neural_network_forward.1} parent=31 // pred_region
          %v10630 = vmax.f32 %v9152, 0.0
          %v10631 = vmax.f32 %v9154, 0.0
          %v10632 = vmax.f32 %v9521, 0.0
          %v10633 = vmax.f32 %v9523, 0.0
          %v10634 = vmax.f32 %v9890, 0.0
          %v10635 = vmax.f32 %v9892, 0.0
          %v10636 = vmax.f32 %v10259, 0.0
          %v10637 = vmax.f32 %v10261, 0.0
          %v10638 = vmax.f32 %v10620, 0.0
          %v10639 = vpack.c.bf16 %v10630, %v10630
          %v10640 = vpack.c.bf16 %v10631, %v10631
          %v10641 = vpack.c.bf16 %v10632, %v10632
          %v10642 = vpack.c.bf16 %v10633, %v10633
          %v10643 = vpack.c.bf16 %v10634, %v10634
          %v10644 = vpack.c.bf16 %v10635, %v10635
          %v10645 = vpack.c.bf16 %v10636, %v10636
          %v10646 = vpack.c.bf16 %v10637, %v10637
          %v10647 = vpack.c.bf16 %v10638, %v10638
          %v10657 = vcombine.low %v10639, %v10640
          %v10658 = vcombine.low %v10641, %v10642
          %v10659 = vcombine.low %v10643, %v10644
          %v10660 = vcombine.low %v10645, %v10646
          %v10662 = vunpack.c.l.s4 1966171168
          %v10663 = vunpack.c.0.s8 %v10662
          %v10664 = vlaneseq
          %v10665 = vshrl.u32 %v10664, 7
          %v10666 = vsub.s32 %v10663, %v10665
          %v10667 = vrot.slane %v10657, %v10666
          %v10669 = vunpack.c.l.s4 1966171168
          %v10670 = vunpack.c.0.s8 %v10669
          %v10671 = vlaneseq
          %v10672 = vshrl.u32 %v10671, 7
          %v10673 = vsub.s32 %v10670, %v10672
          %v10674 = vrot.slane %v10658, %v10673
          %v10676 = vunpack.c.l.s4 1966171168
          %v10677 = vunpack.c.0.s8 %v10676
          %v10678 = vlaneseq
          %v10679 = vshrl.u32 %v10678, 7
          %v10680 = vsub.s32 %v10677, %v10679
          %v10681 = vrot.slane %v10659, %v10680
          %v10683 = vunpack.c.l.s4 1966171168
          %v10684 = vunpack.c.0.s8 %v10683
          %v10685 = vlaneseq
          %v10686 = vshrl.u32 %v10685, 7
          %v10687 = vsub.s32 %v10684, %v10686
          %v10688 = vrot.slane %v10660, %v10687
          %v10689 = vcombine.low %v10667, %v10674
          %v10690 = vcombine.low %v10681, %v10688
          %v10692 = vunpack.c.l.s4 1966171168
          %v10693 = vunpack.c.0.s8 %v10692
          %v10694 = vlaneseq
          %v10695 = vshrl.u32 %v10694, 7
          %v10696 = vsub.s32 %v10693, %v10695
          %v10697 = vrot.slane %v10689, %v10696
          %v10699 = vunpack.c.l.s4 1966171168
          %v10700 = vunpack.c.0.s8 %v10699
          %v10701 = vlaneseq
          %v10702 = vshrl.u32 %v10701, 7
          %v10703 = vsub.s32 %v10700, %v10702
          %v10704 = vrot.slane %v10690, %v10703
          %v10705 = vcombine.low %v10697, %v10704
          %v10707 = vunpack.c.l.s4 1966171168
          %v10708 = vunpack.c.0.s8 %v10707
          %v10709 = vlaneseq
          %v10710 = vshrl.u32 %v10709, 7
          %v10711 = vsub.s32 %v10708, %v10710
          %v10712 = vrot.slane %v10647, %v10711
          %v10714 = vunpack.c.l.s4 1966171168
          %v10715 = vunpack.c.0.s8 %v10714
          %v10716 = vlaneseq
          %v10717 = vshrl.u32 %v10716, 7
          %v10718 = vsub.s32 %v10715, %v10717
          %v10719 = vrot.slane %v10712, %v10718
          %s10722 = sshra.s32 %s10625, 7
          %s10723 = sand.u32 %s10625, 127
          %s10724 = scalar_lea.vmem [#allocation3], %s10722
          %10725 = vst [vmem:[%s10724] sm:$0xff] %v10705
          %10726 = vst [vmem:[%s10724 + $0x8] sm:$0x1] %v10719
        $region44: #{neural_network_forward.1} parent=31 // pred_fallthru
          _
        %p10727 = scmp.eq.s32.totalorder %s21, 2
        // Predicated region
        $region45: #{neural_network_forward.1} parent=31 // pred_check
          %p10728 = pneg %p10727
        $region46: #{neural_network_forward.1} parent=31 // pred_check_branch
          %10730 = sbr.rel (%p10728) target = $region48
        $region47: #{neural_network_forward.1} parent=31 // pred_region
          %v10740 = vcombine.low %v9152, %v9154
          %v10741 = vcombine.low %v9521, %v9523
          %v10743 = vunpack.c.l.s4 1983009808
          %v10744 = vunpack.c.0.s8 %v10743
          %v10745 = vlaneseq
          %v10746 = vshrl.u32 %v10745, 7
          %v10747 = vsub.s32 %v10744, %v10746
          %v10748 = vrot.slane %v10740, %v10747
          %v10750 = vunpack.c.l.s4 1983009808
          %v10751 = vunpack.c.0.s8 %v10750
          %v10752 = vlaneseq
          %v10753 = vshrl.u32 %v10752, 7
          %v10754 = vsub.s32 %v10751, %v10753
          %v10755 = vrot.slane %v10741, %v10754
          %v10756 = vcombine.low %v10748, %v10755
          %v10757 = vcombine.low %v9890, %v9892
          %v10758 = vcombine.low %v10259, %v10261
          %v10760 = vunpack.c.l.s4 1983009808
          %v10761 = vunpack.c.0.s8 %v10760
          %v10762 = vlaneseq
          %v10763 = vshrl.u32 %v10762, 7
          %v10764 = vsub.s32 %v10761, %v10763
          %v10765 = vrot.slane %v10757, %v10764
          %v10767 = vunpack.c.l.s4 1983009808
          %v10768 = vunpack.c.0.s8 %v10767
          %v10769 = vlaneseq
          %v10770 = vshrl.u32 %v10769, 7
          %v10771 = vsub.s32 %v10768, %v10770
          %v10772 = vrot.slane %v10758, %v10771
          %v10773 = vcombine.low %v10765, %v10772
          %v10775 = vunpack.c.l.s4 1983009808
          %v10776 = vunpack.c.0.s8 %v10775
          %v10777 = vlaneseq
          %v10778 = vshrl.u32 %v10777, 7
          %v10779 = vsub.s32 %v10776, %v10778
          %v10780 = vrot.slane %v10620, %v10779
          %s10784 = sshra.s32 %s10625, 7
          %s10785 = sand.u32 %s10625, 127
          %s10786 = smul.addr %s10784, 2
          %s10787 = scalar_lea.vmem %s3, %s10786
          %10788 = vst [vmem:[%s10787] sm:$0xff] %v10756
          %10789 = vst [vmem:[%s10787 + $0x8] sm:$0xff] %v10773
          %10790 = vst [vmem:[%s10787 + $0x10] sm:$0x3] %v10780
        $region48: #{neural_network_forward.1} parent=31 // pred_fallthru
          _
        %p10791 = scmp.eq.s32.totalorder %s22, 1
        %p10792 = pnand %p10791, %p10626
        %p10793 = pneg %p10792
        // Predicated region
        $region49: #{neural_network_forward.1} parent=31 // pred_check
          _
        $region50: #{neural_network_forward.1} parent=31 // pred_check_branch
          %10795 = sbr.rel (%p10792) target = $region52
        $region51: #{neural_network_forward.1} parent=31 // pred_region
          %v10796 = vld [vmem:[#allocation3] sm:$0xff]
          %v10797 = vld [vmem:[#allocation3 + $0x8] sm:$0xff]
          %v10798 = vld [vmem:[#allocation3 + $0x10] sm:$0x3]
          %10799 = vst [vmem:[#allocation2] sm:$0xff] %v10796
          %10800 = vst [vmem:[#allocation2 + $0x8] sm:$0xff] %v10797
          %10801 = vst [vmem:[#allocation2 + $0x10] sm:$0x3] %v10798
        $region52: #{neural_network_forward.1} parent=31 // pred_fallthru
          _
        // Predicated region
        $region53: #{neural_network_forward.1} parent=31 // pred_check
          %p10802 = pneg %p119
        $region54: #{neural_network_forward.1} parent=31 // pred_check_branch
          %10804 = sbr.rel (%p10802) target = $region56
        $region55: #{neural_network_forward.1} parent=31 // pred_region
          _
        $region56: #{neural_network_forward.1} parent=31 // pred_fallthru
          _
        // Predicated region
        $region57: #{neural_network_forward.1} parent=31 // pred_check
          %p10805 = pneg %p119
        $region58: #{neural_network_forward.1} parent=31 // pred_check_branch
          %10807 = sbr.rel (%p10805) target = $region60
        $region59: #{neural_network_forward.1} parent=31 // pred_region
          _
        $region60: #{neural_network_forward.1} parent=31 // pred_fallthru
          _
      $region32: #{neural_network_forward.1} parent=5 // pred_fallthru
        _
      %p10808 = scmp.le.s32.totalorder 2, %s12
      // Predicated region
      $region61: #{neural_network_forward.1} parent=5 // pred_check
        %p10809 = pneg %p10808
      $region62: #{neural_network_forward.1} parent=5 // pred_check_branch
        %10811 = sbr.rel (%p10809) target = $region64
      $region63: #{neural_network_forward.1} parent=5 // pred_region
        %s10812 = ssub.s32 %s12, 2
      $region64: #{neural_network_forward.1} parent=5 // pred_fallthru
        _
    $region6: #{neural_network_forward.1} parent=1 // loop_footer
      %s16 = sadd.s32 1, %s12
    $region7: #{neural_network_forward.1} parent=1 // loop_footer_branch
      %11 = sbr.rel target = $region3
    $region8: #{neural_network_forward.1} parent=1 // loop_exit
      _
    %10813 = vsyncpa [#allocation5], 1
    %s10814 = scalar_lea.sflag [#allocation5], 1
    %10815 = vsyncpa %s10814, 1

</llo_original>
